<compile_context>
chip_gen: v7x
topology: tpu7x:2x2x1
jax: 0.10.0
libtpu: 0.0.40
codegen_flags: <defaults>
</compile_context>

<pallas_src>
import jax
import jax.numpy as jnp
from jax.experimental import pallas as pl
from jax.experimental.pallas import tpu as pltpu

N_EMBED = 384
HIDDEN = 4 * N_EMBED      # 1536
TILE_M = 256              # rows (flattened batch*seq positions) per grid step


def ffn_kernel(x_ref, w1_ref, b1_ref, w2_ref, b2_ref, o_ref):
    # x_ref: (TILE_M, C) f32; w1/w2 already bf16; biases f32.
    x = x_ref[...]
    h = jnp.dot(x.astype(jnp.bfloat16), w1_ref[...],
                preferred_element_type=jnp.float32) + b1_ref[...]
    h = jnp.maximum(h, 0.0)
    y = jnp.dot(h.astype(jnp.bfloat16), w2_ref[...],
                preferred_element_type=jnp.float32) + b2_ref[...]
    o_ref[...] = y
    # TODO(synk): apply training-mode dropout mask here (eval mode = identity).


def feedforward_forward(x, params):
    """x: (..., N_EMBED) float32.  params = (w1, b1, w2, b2), w's in (in, out)."""
    w1, b1, w2, b2 = params
    orig_shape = x.shape
    C = orig_shape[-1]
    assert C == N_EMBED

    # Flatten all leading dims into one row axis so each grid step gets a
    # full-width (TILE_M, C) matmul operand.
    x2 = x.reshape(-1, C)
    M = x2.shape[0]
    Mp = pl.cdiv(M, TILE_M) * TILE_M
    if Mp != M:
        x2 = jnp.pad(x2, ((0, Mp - M), (0, 0)))

    # bf16 matmul operands, f32 accumulation (biases stay f32).
    w1b = w1.astype(jnp.bfloat16)
    w2b = w2.astype(jnp.bfloat16)

    out = pl.pallas_call(
        ffn_kernel,
        grid=(Mp // TILE_M,),
        in_specs=[
            pl.BlockSpec((TILE_M, C), lambda i: (i, 0)),   # x rows
            pl.BlockSpec((C, HIDDEN), lambda i: (0, 0)),   # W1 (constant)
            pl.BlockSpec((1, HIDDEN), lambda i: (0, 0)),   # b1
            pl.BlockSpec((HIDDEN, C), lambda i: (0, 0)),   # W2 (constant)
            pl.BlockSpec((1, C), lambda i: (0, 0)),        # b2
        ],
        out_specs=pl.BlockSpec((TILE_M, C), lambda i: (i, 0)),
        out_shape=jax.ShapeDtypeStruct((Mp, C), jnp.float32),
        compiler_params=pltpu.CompilerParams(
            dimension_semantics=("parallel",),
            vmem_limit_bytes=32 << 20),
    )(x2, w1b, b1, w2b, b2)

    if Mp != M:
        out = out[:M]
    return out.reshape(orig_shape)


def init_params(key):
    ks = jax.random.split(key, 4)
    s = 0.02
    w1 = s * jax.random.normal(ks[0], (N_EMBED, HIDDEN), jnp.float32)
    b1 = 0.01 * jax.random.normal(ks[1], (1, HIDDEN), jnp.float32)
    w2 = s * jax.random.normal(ks[2], (HIDDEN, N_EMBED), jnp.float32)
    b2 = 0.01 * jax.random.normal(ks[3], (1, N_EMBED), jnp.float32)
    return (w1, b1, w2, b2)


def feedforward_reference(x, params):
    """Pure-JAX f32 reference mirroring the PyTorch module (eval mode)."""
    w1, b1, w2, b2 = params
    h = jax.nn.relu(x @ w1 + b1[0])
    return h @ w2 + b2[0]


if __name__ == "__main__":
    key = jax.random.PRNGKey(0)
    k_x, k_p = jax.random.split(key)

    B, T = 8, 64                               # 512 rows -> 2 grid steps of 256
    x = jax.random.normal(k_x, (B, T, N_EMBED), jnp.float32)
    params = init_params(k_p)

    out = jax.block_until_ready(feedforward_forward(x, params))
    ref = feedforward_reference(x, params)

    assert out.shape == (B, T, N_EMBED)
    max_err = jnp.max(jnp.abs(out - ref))
    # Tolerance relaxed slightly for bf16 matmul operands (f32 accumulation).
    assert jnp.allclose(out, ref, atol=1e-2, rtol=1e-2), f"max abs err = {max_err}"

    print("KERNEL_OK")
</pallas_src>

<mosaic_0001>
module attributes {stable_mosaic.version = 11 : i64} {
  func.func @ffn_kernel(%arg0: i32, %arg1: memref<256x384xf32, #tpu.memory_space<vmem>>, %arg2: memref<384x1536xbf16, #tpu.memory_space<vmem>>, %arg3: memref<1x1536xf32, #tpu.memory_space<vmem>>, %arg4: memref<1536x384xbf16, #tpu.memory_space<vmem>>, %arg5: memref<1x384xf32, #tpu.memory_space<vmem>>, %arg6: memref<256x384xf32, #tpu.memory_space<vmem>>) attributes {dimension_semantics = [#tpu.dimension_semantics<parallel>], iteration_bounds = array<i64: 2>, scalar_prefetch = 0 : i64, scratch_operands = 0 : i64, tpu.core_type = #tpu.core_type<tc>, window_params = [{transform_indices = @transform_0, window_bounds = array<i64: 256, 384>}, {pipeline_mode = #tpu.pipeline_mode<synchronous>, transform_indices = @transform_1, window_bounds = array<i64: 384, 1536>}, {pipeline_mode = #tpu.pipeline_mode<synchronous>, transform_indices = @transform_2, window_bounds = array<i64: 1, 1536>}, {pipeline_mode = #tpu.pipeline_mode<synchronous>, transform_indices = @transform_3, window_bounds = array<i64: 1536, 384>}, {pipeline_mode = #tpu.pipeline_mode<synchronous>, transform_indices = @transform_4, window_bounds = array<i64: 1, 384>}, {transform_indices = @transform_5, window_bounds = array<i64: 256, 384>}]} {
    %c0 = arith.constant 0 : index
    %c0_0 = arith.constant 0 : index
    %0 = vector.load %arg1[%c0, %c0_0] : memref<256x384xf32, #tpu.memory_space<vmem>>, vector<256x384xf32>
    %1 = arith.truncf %0 : vector<256x384xf32> to vector<256x384xbf16>
    %c0_1 = arith.constant 0 : index
    %c0_2 = arith.constant 0 : index
    %2 = vector.load %arg2[%c0_1, %c0_2] : memref<384x1536xbf16, #tpu.memory_space<vmem>>, vector<384x1536xbf16>
    %cst = arith.constant dense<0.000000e+00> : vector<256x1536xf32>
    %3 = tpu.matmul %1, %2, %cst {dimension_numbers = #tpu.dot_dimension_numbers<[1], [0], [0], [1], [0, 0, 1, 1], [], []>} : vector<256x384xbf16>, vector<384x1536xbf16>, vector<256x1536xf32> -> vector<256x1536xf32>
    %c0_3 = arith.constant 0 : index
    %c0_4 = arith.constant 0 : index
    %4 = vector.load %arg3[%c0_3, %c0_4] : memref<1x1536xf32, #tpu.memory_space<vmem>>, vector<1x1536xf32>
    %5 = vector.broadcast %4 : vector<1x1536xf32> to vector<256x1536xf32>
    %6 = arith.addf %3, %5 : vector<256x1536xf32>
    %cst_5 = arith.constant 0.000000e+00 : f32
    %7 = vector.broadcast %cst_5 : f32 to vector<256x1536xf32>
    %8 = arith.maximumf %6, %7 : vector<256x1536xf32>
    %9 = arith.truncf %8 : vector<256x1536xf32> to vector<256x1536xbf16>
    %c0_6 = arith.constant 0 : index
    %c0_7 = arith.constant 0 : index
    %10 = vector.load %arg4[%c0_6, %c0_7] : memref<1536x384xbf16, #tpu.memory_space<vmem>>, vector<1536x384xbf16>
    %cst_8 = arith.constant dense<0.000000e+00> : vector<256x384xf32>
    %11 = tpu.matmul %9, %10, %cst_8 {dimension_numbers = #tpu.dot_dimension_numbers<[1], [0], [0], [1], [0, 0, 1, 1], [], []>} : vector<256x1536xbf16>, vector<1536x384xbf16>, vector<256x384xf32> -> vector<256x384xf32>
    %c0_9 = arith.constant 0 : index
    %c0_10 = arith.constant 0 : index
    %12 = vector.load %arg5[%c0_9, %c0_10] : memref<1x384xf32, #tpu.memory_space<vmem>>, vector<1x384xf32>
    %13 = vector.broadcast %12 : vector<1x384xf32> to vector<256x384xf32>
    %14 = arith.addf %11, %13 : vector<256x384xf32>
    %c0_11 = arith.constant 0 : index
    %c0_12 = arith.constant 0 : index
    %15 = vector.load %arg6[%c0_11, %c0_12] : memref<256x384xf32, #tpu.memory_space<vmem>>, vector<256x384xf32>
    tpu.vector_store %arg6[%c0_11, %c0_12], %14 {strides = array<i32>} : memref<256x384xf32, #tpu.memory_space<vmem>>, vector<256x384xf32>,
    return
  }
  func.func @transform_0(%arg0: i32) -> (i32, i32) {
    %c0_i32 = arith.constant 0 : i32
    %c0_i32_0 = arith.constant 0 : i32
    return %arg0, %c0_i32 : i32, i32
  }
  func.func @transform_1(%arg0: i32) -> (i32, i32) {
    %c0_i32 = arith.constant 0 : i32
    %c0_i32_0 = arith.constant 0 : i32
    %c0_i32_1 = arith.constant 0 : i32
    return %c0_i32, %c0_i32_0 : i32, i32
  }
  func.func @transform_2(%arg0: i32) -> (i32, i32) {
    %c0_i32 = arith.constant 0 : i32
    %c0_i32_0 = arith.constant 0 : i32
    %c0_i32_1 = arith.constant 0 : i32
    return %c0_i32, %c0_i32_0 : i32, i32
  }
  func.func @transform_3(%arg0: i32) -> (i32, i32) {
    %c0_i32 = arith.constant 0 : i32
    %c0_i32_0 = arith.constant 0 : i32
    %c0_i32_1 = arith.constant 0 : i32
    return %c0_i32, %c0_i32_0 : i32, i32
  }
  func.func @transform_4(%arg0: i32) -> (i32, i32) {
    %c0_i32 = arith.constant 0 : i32
    %c0_i32_0 = arith.constant 0 : i32
    %c0_i32_1 = arith.constant 0 : i32
    return %c0_i32, %c0_i32_0 : i32, i32
  }
  func.func @transform_5(%arg0: i32) -> (i32, i32) {
    %c0_i32 = arith.constant 0 : i32
    %c0_i32_0 = arith.constant 0 : i32
    return %arg0, %c0_i32 : i32, i32
  }
}

</mosaic_0001>

<llo_original>
// kernel: tpu_custom_call.1
$region0: #{tpu_custom_call.1}
  #allocation0 [shape = 'u32[]', space=smem, size = 0x4, offset = 0x4, fixed_abs, tag = 'smem constant byte address 0x4 - core index']
  #allocation1 [shape = 'u32[144,128]{1,0:T(1,128)}', space=vmem, size = 0x12000, scoped, tag = 'internal scratch']
  %s0 = inlined_call_operand.hbm [shape: f32[512,384], index: 0, kind: input, shape index: {}]
  %s1 = inlined_call_operand.hbm [shape: bf16[384,1536], index: 1, kind: input, shape index: {}]
  %s2 = inlined_call_operand.hbm [shape: f32[1,1536], index: 2, kind: input, shape index: {}]
  %s3 = inlined_call_operand.hbm [shape: bf16[1536,384], index: 3, kind: input, shape index: {}]
  %s4 = inlined_call_operand.hbm [shape: f32[1,384], index: 4, kind: input, shape index: {}]
  %s5 = inlined_call_operand.hbm [shape: f32[512,384], index: 5, kind: output, shape index: {}]
  %s6 = sld [smem:[#allocation0]]
  $region73: #{tpu_custom_call.1} parent=0
    _
  %s8 = ssub.s32 1, %s6
  %s9 = scalar_select 0, %s8, %s6
  $region1: #{tpu_custom_call.1} parent=0
    #allocation2 [shape = 'u8[786432]{0}', space=vmem, size = 0xc0000, scoped, tag = 'input window, operand 0']
    #allocation3 [shape = 's32[2]{0}', space=sflag, size = 0x8, scoped, tag = 'scoped memory for tpu_custom_call.1']
    #allocation4 [shape = 's32[2]{0}', space=sflag, size = 0x8, scoped, tag = 'scoped memory for tpu_custom_call.1']
    #allocation5 [shape = 'u8[1179648]{0}', space=vmem, size = 0x120000, scoped, tag = 'input window, operand 1, single buffered']
    #allocation6 [shape = 's32[1]{0}', space=sflag, size = 0x4, scoped, tag = 'scoped memory for tpu_custom_call.1']
    #allocation7 [shape = 'u8[6144]{0}', space=vmem, size = 0x1800, scoped, tag = 'input window, operand 2, single buffered']
    #allocation8 [shape = 'u8[1179648]{0}', space=vmem, size = 0x120000, scoped, tag = 'input window, operand 3, single buffered']
    #allocation9 [shape = 's32[1]{0}', space=sflag, size = 0x4, scoped, tag = 'scoped memory for tpu_custom_call.1']
    #allocation10 [shape = 'u8[1536]{0}', space=vmem, size = 0x800, scoped, tag = 'input window, operand 4, single buffered']
    #allocation11 [shape = 'u8[786432]{0}', space=vmem, size = 0xc0000, scoped, tag = 'output window, operand 0']
    %10 = vsyncpa [#allocation3], 0
    %s11 = scalar_lea.sflag [#allocation3], 1
    %12 = vsyncpa %s11, 0
    %13 = vsyncpa [#allocation6], 0
    %14 = vsyncpa [#allocation9], 0
    %15 = vsyncpa [#allocation4], 0
    %s16 = scalar_lea.sflag [#allocation4], 1
    %17 = vsyncpa %s16, 0
    loop: start=0, step=1, limit=4
    $region2: #{tpu_custom_call.1} parent=1 // loop_pre_header
      _
    $region3: #{tpu_custom_call.1} parent=1 // loop_header
      %s19 = sphi 0, %s23
      %p20 = scmp.ge.s32.totalorder %s19, 4
      %s29 = sphi 0, %s31
      %s32 = sphi 0, %s29
      %s33 = sphi 0, %s32
      %s49 = sphi 0, %s33
      %s53 = sphi 0, %s53
      %s55 = sphi 0, %s53
      %s56 = sphi 0, %s55
      %s70 = sphi 0, %s56
      %s74 = sphi 0, %s74
      %s76 = sphi 0, %s74
      %s77 = sphi 0, %s76
      %s91 = sphi 0, %s77
      %s95 = sphi 0, %s95
      %s97 = sphi 0, %s95
      %s98 = sphi 0, %s97
      %s112 = sphi 0, %s98
      %s116 = sphi 0, %s116
      %s118 = sphi 0, %s116
      %s119 = sphi 0, %s118
      %s133 = sphi 0, %s119
      %s139 = sphi 0, %s141
      %s142 = sphi 0, %s139
      %s143 = sphi 0, %s142
      %s159 = sphi 0, %s143
    $region4: #{tpu_custom_call.1} parent=1 // loop_header_branch
      %22 = sbr.rel (%p20) target = $region8
    $region5: #{tpu_custom_call.1} parent=1 // loop_body
      %s24 = ssub.s32 %s19, 1
      %s25 = ssub.s32 %s19, 2
      %s26 = sadd.s32 %s19, 1
      %s27 = ssub.s32 %s19, %s26
      %p28 = scmp.eq.s32.totalorder %s27, 0
      %s30 = sadd.s32 %s29, 1
      %s31 = scalar_select %p28, %s29, %s30
      %p34 = pneg %p28
      %p35 = scmp.eq.s32.totalorder %s19, 1
      %p36 = por %p34, %p35
      %p37 = scmp.ne.s32.totalorder %s29, %s32
      %p38 = scmp.eq.s32.totalorder %s19, 0
      %p39 = por %p37, %p38
      %p40 = scmp.ne.s32.totalorder %s29, %s32
      %p41 = scmp.eq.s32.totalorder %s24, 1
      %p42 = por %p40, %p41
      %p43 = scmp.ne.s32.totalorder %s32, %s33
      %p44 = scmp.eq.s32.totalorder %s24, 0
      %p45 = por %p43, %p44
      %p46 = scmp.ne.s32.totalorder %s32, %s33
      %p47 = scmp.eq.s32.totalorder %s25, 1
      %p48 = por %p46, %p47
      %p50 = scmp.ne.s32.totalorder %s33, %s49
      %p51 = scmp.eq.s32.totalorder %s25, 0
      %p52 = por %p50, %p51
      %s54 = sadd.s32 %s53, 1
      %p57 = scmp.eq.s32.totalorder %s19, 1
      %p58 = scmp.ne.s32.totalorder %s53, %s55
      %p59 = scmp.eq.s32.totalorder %s19, 0
      %p60 = por %p58, %p59
      %p61 = scmp.ne.s32.totalorder %s53, %s55
      %p62 = scmp.eq.s32.totalorder %s24, 1
      %p63 = por %p61, %p62
      %p64 = scmp.ne.s32.totalorder %s55, %s56
      %p65 = scmp.eq.s32.totalorder %s24, 0
      %p66 = por %p64, %p65
      %p67 = scmp.ne.s32.totalorder %s55, %s56
      %p68 = scmp.eq.s32.totalorder %s25, 1
      %p69 = por %p67, %p68
      %p71 = scmp.ne.s32.totalorder %s56, %s70
      %p72 = scmp.eq.s32.totalorder %s25, 0
      %p73 = por %p71, %p72
      %s75 = sadd.s32 %s74, 1
      %p78 = scmp.eq.s32.totalorder %s19, 1
      %p79 = scmp.ne.s32.totalorder %s74, %s76
      %p80 = scmp.eq.s32.totalorder %s19, 0
      %p81 = por %p79, %p80
      %p82 = scmp.ne.s32.totalorder %s74, %s76
      %p83 = scmp.eq.s32.totalorder %s24, 1
      %p84 = por %p82, %p83
      %p85 = scmp.ne.s32.totalorder %s76, %s77
      %p86 = scmp.eq.s32.totalorder %s24, 0
      %p87 = por %p85, %p86
      %p88 = scmp.ne.s32.totalorder %s76, %s77
      %p89 = scmp.eq.s32.totalorder %s25, 1
      %p90 = por %p88, %p89
      %p92 = scmp.ne.s32.totalorder %s77, %s91
      %p93 = scmp.eq.s32.totalorder %s25, 0
      %p94 = por %p92, %p93
      %s96 = sadd.s32 %s95, 1
      %p99 = scmp.eq.s32.totalorder %s19, 1
      %p100 = scmp.ne.s32.totalorder %s95, %s97
      %p101 = scmp.eq.s32.totalorder %s19, 0
      %p102 = por %p100, %p101
      %p103 = scmp.ne.s32.totalorder %s95, %s97
      %p104 = scmp.eq.s32.totalorder %s24, 1
      %p105 = por %p103, %p104
      %p106 = scmp.ne.s32.totalorder %s97, %s98
      %p107 = scmp.eq.s32.totalorder %s24, 0
      %p108 = por %p106, %p107
      %p109 = scmp.ne.s32.totalorder %s97, %s98
      %p110 = scmp.eq.s32.totalorder %s25, 1
      %p111 = por %p109, %p110
      %p113 = scmp.ne.s32.totalorder %s98, %s112
      %p114 = scmp.eq.s32.totalorder %s25, 0
      %p115 = por %p113, %p114
      %s117 = sadd.s32 %s116, 1
      %p120 = scmp.eq.s32.totalorder %s19, 1
      %p121 = scmp.ne.s32.totalorder %s116, %s118
      %p122 = scmp.eq.s32.totalorder %s19, 0
      %p123 = por %p121, %p122
      %p124 = scmp.ne.s32.totalorder %s116, %s118
      %p125 = scmp.eq.s32.totalorder %s24, 1
      %p126 = por %p124, %p125
      %p127 = scmp.ne.s32.totalorder %s118, %s119
      %p128 = scmp.eq.s32.totalorder %s24, 0
      %p129 = por %p127, %p128
      %p130 = scmp.ne.s32.totalorder %s118, %s119
      %p131 = scmp.eq.s32.totalorder %s25, 1
      %p132 = por %p130, %p131
      %p134 = scmp.ne.s32.totalorder %s119, %s133
      %p135 = scmp.eq.s32.totalorder %s25, 0
      %p136 = por %p134, %p135
      %s137 = ssub.s32 %s19, %s26
      %p138 = scmp.eq.s32.totalorder %s137, 0
      %s140 = sadd.s32 %s139, 1
      %s141 = scalar_select %p138, %s139, %s140
      %p144 = pneg %p138
      %p145 = scmp.eq.s32.totalorder %s19, 1
      %p146 = por %p144, %p145
      %p147 = scmp.ne.s32.totalorder %s139, %s142
      %p148 = scmp.eq.s32.totalorder %s19, 0
      %p149 = por %p147, %p148
      %p150 = scmp.ne.s32.totalorder %s139, %s142
      %p151 = scmp.eq.s32.totalorder %s24, 1
      %p152 = por %p150, %p151
      %p153 = scmp.ne.s32.totalorder %s142, %s143
      %p154 = scmp.eq.s32.totalorder %s24, 0
      %p155 = por %p153, %p154
      %p156 = scmp.ne.s32.totalorder %s142, %s143
      %p157 = scmp.eq.s32.totalorder %s25, 1
      %p158 = por %p156, %p157
      %p160 = scmp.ne.s32.totalorder %s143, %s159
      %p161 = scmp.eq.s32.totalorder %s25, 0
      %p162 = por %p160, %p161
      %p163 = scmp.le.s32.totalorder 1, %s19
      %p164 = scmp.lt.s32.totalorder %s19, 3
      %p165 = pnand %p163, %p164
      %p166 = pneg %p165
      // Predicated region
      $region9: #{tpu_custom_call.1} parent=5 // pred_check
        _
      $region10: #{tpu_custom_call.1} parent=5 // pred_check_branch
        %168 = sbr.rel (%p165) target = $region12
      $region11: #{tpu_custom_call.1} parent=5 // pred_region
        %s169 = ssub.s32 %s19, 1
        // Predicated region
        $region13: #{tpu_custom_call.1} parent=11 // pred_check
          %p170 = pneg %p66
        $region14: #{tpu_custom_call.1} parent=11 // pred_check_branch
          %172 = sbr.rel (%p170) target = $region16
        $region15: #{tpu_custom_call.1} parent=11 // pred_region
          %s174 = ssub.s32 36864, 36864
          %175 = vsyncadd [#allocation6], %s174
          %s176 = sshll.u32 [#allocation5], 4
          %s177 = int_to_ptr.vmem [resolvable:$true] %s176
          %182 = dma.hbm_to_vmem [thread:$0]  %s1, 36864, %s177, [#allocation6], 768, 768, 48
        $region16: #{tpu_custom_call.1} parent=11 // pred_fallthru
          _
        // Predicated region
        $region17: #{tpu_custom_call.1} parent=11 // pred_check
          %p183 = pneg %p87
        $region18: #{tpu_custom_call.1} parent=11 // pred_check_branch
          %185 = sbr.rel (%p183) target = $region20
        $region19: #{tpu_custom_call.1} parent=11 // pred_region
          %s187 = ssub.s32 192, 192
          %188 = vsyncadd [#allocation6], %s187
          %s190 = sshll.u32 [#allocation7], 4
          %s191 = int_to_ptr.vmem [resolvable:$true] %s190
          %193 = dma.hbm_to_vmem [thread:$0]  %s2, 192, %s191, [#allocation6]
        $region20: #{tpu_custom_call.1} parent=11 // pred_fallthru
          _
        // Predicated region
        $region21: #{tpu_custom_call.1} parent=11 // pred_check
          %p194 = pneg %p108
        $region22: #{tpu_custom_call.1} parent=11 // pred_check_branch
          %196 = sbr.rel (%p194) target = $region24
        $region23: #{tpu_custom_call.1} parent=11 // pred_region
          %s198 = ssub.s32 36864, 36864
          %199 = vsyncadd [#allocation9], %s198
          %s200 = sshll.u32 [#allocation8], 4
          %s201 = int_to_ptr.vmem [resolvable:$true] %s200
          %206 = dma.hbm_to_vmem [thread:$0]  %s3, 36864, %s201, [#allocation9], 192, 192, 12
        $region24: #{tpu_custom_call.1} parent=11 // pred_fallthru
          _
        // Predicated region
        $region25: #{tpu_custom_call.1} parent=11 // pred_check
          %p207 = pneg %p129
        $region26: #{tpu_custom_call.1} parent=11 // pred_check_branch
          %209 = sbr.rel (%p207) target = $region28
        $region27: #{tpu_custom_call.1} parent=11 // pred_region
          %s211 = ssub.s32 48, 48
          %212 = vsyncadd [#allocation9], %s211
          %s214 = sshll.u32 [#allocation10], 4
          %s215 = int_to_ptr.vmem [resolvable:$true] %s214
          %217 = dma.hbm_to_vmem [thread:$0]  %s4, 48, %s215, [#allocation9]
        $region28: #{tpu_custom_call.1} parent=11 // pred_fallthru
          _
      $region12: #{tpu_custom_call.1} parent=5 // pred_fallthru
        _
      %p218 = scmp.lt.s32.totalorder %s19, 2
      // Predicated region
      $region29: #{tpu_custom_call.1} parent=5 // pred_check
        %p219 = pneg %p218
      $region30: #{tpu_custom_call.1} parent=5 // pred_check_branch
        %221 = sbr.rel (%p219) target = $region32
      $region31: #{tpu_custom_call.1} parent=5 // pred_region
        // Predicated region
        $region33: #{tpu_custom_call.1} parent=31 // pred_check
          %p222 = pneg %p39
        $region34: #{tpu_custom_call.1} parent=31 // pred_check_branch
          %224 = sbr.rel (%p222) target = $region36
        $region35: #{tpu_custom_call.1} parent=31 // pred_region
          %s225 = sand.u32 %s29, 1
          %s226 = scalar_lea.sflag [#allocation3], %s225
          %s227 = sand.u32 %s29, 1
          %s228 = smul.addr %s227, 768
          %s229 = scalar_lea.vmem [#allocation2], %s228
          %s230 = smul.u32 32, %s19
          %s232 = ssub.s32 12288, 12288
          %233 = vsyncadd %s226, %s232
          %s234 = smul.addr %s230, 3
          %s235 = smul.addr %s234, 128
          %s236 = scalar_lea.hbm %s0, %s235
          %s237 = sshll.u32 %s229, 4
          %s238 = int_to_ptr.vmem [resolvable:$true] %s237
          %243 = dma.hbm_to_vmem [thread:$0]  %s236, 12288, %s238, %s226, 384, 384, 24
        $region36: #{tpu_custom_call.1} parent=31 // pred_fallthru
          _
      $region32: #{tpu_custom_call.1} parent=5 // pred_fallthru
        _
      %p244 = scmp.le.s32.totalorder 1, %s19
      %p245 = scmp.lt.s32.totalorder %s19, 3
      %p246 = pnand %p244, %p245
      %p247 = pneg %p246
      // Predicated region
      $region37: #{tpu_custom_call.1} parent=5 // pred_check
        _
      $region38: #{tpu_custom_call.1} parent=5 // pred_check_branch
        %249 = sbr.rel (%p246) target = $region40
      $region39: #{tpu_custom_call.1} parent=5 // pred_region
        %s250 = ssub.s32 %s19, 1
        %s251 = sand.u32 %s32, 1
        %s252 = scalar_lea.sflag [#allocation3], %s251
        %s253 = sand.u32 %s32, 1
        %s254 = smul.addr %s253, 768
        %s255 = scalar_lea.vmem [#allocation2], %s254
        // Predicated region
        $region41: #{tpu_custom_call.1} parent=39 // pred_check
          %p256 = pneg %p45
        $region42: #{tpu_custom_call.1} parent=39 // pred_check_branch
          %258 = sbr.rel (%p256) target = $region44
        $region43: #{tpu_custom_call.1} parent=39 // pred_region
          %259 = dma.done %s252, 12288
        $region44: #{tpu_custom_call.1} parent=39 // pred_fallthru
          _
        // Predicated region
        $region45: #{tpu_custom_call.1} parent=39 // pred_check
          %p260 = pneg %p66
        $region46: #{tpu_custom_call.1} parent=39 // pred_check_branch
          %262 = sbr.rel (%p260) target = $region48
        $region47: #{tpu_custom_call.1} parent=39 // pred_region
          %263 = dma.done [#allocation6], 36864
        $region48: #{tpu_custom_call.1} parent=39 // pred_fallthru
          _
        // Predicated region
        $region49: #{tpu_custom_call.1} parent=39 // pred_check
          %p264 = pneg %p87
        $region50: #{tpu_custom_call.1} parent=39 // pred_check_branch
          %266 = sbr.rel (%p264) target = $region52
        $region51: #{tpu_custom_call.1} parent=39 // pred_region
          %267 = dma.done [#allocation6], 192
        $region52: #{tpu_custom_call.1} parent=39 // pred_fallthru
          _
        // Predicated region
        $region53: #{tpu_custom_call.1} parent=39 // pred_check
          %p268 = pneg %p108
        $region54: #{tpu_custom_call.1} parent=39 // pred_check_branch
          %270 = sbr.rel (%p268) target = $region56
        $region55: #{tpu_custom_call.1} parent=39 // pred_region
          %271 = dma.done [#allocation9], 36864
        $region56: #{tpu_custom_call.1} parent=39 // pred_fallthru
          _
        // Predicated region
        $region57: #{tpu_custom_call.1} parent=39 // pred_check
          %p272 = pneg %p129
        $region58: #{tpu_custom_call.1} parent=39 // pred_check_branch
          %274 = sbr.rel (%p272) target = $region60
        $region59: #{tpu_custom_call.1} parent=39 // pred_region
          %275 = dma.done [#allocation9], 48
        $region60: #{tpu_custom_call.1} parent=39 // pred_fallthru
          _
        %s276 = sand.u32 %s32, 1
        %s277 = scalar_lea.sflag [#allocation3], %s276
        %s278 = sand.u32 %s32, 1
        %s279 = smul.addr %s278, 768
        %s280 = scalar_lea.vmem [#allocation2], %s279
        %p281 = pneg %p45
        %p282 = pneg %p42
        %p283 = pneg %p66
        %p284 = pneg %p63
        %p285 = pneg %p87
        %p286 = pneg %p84
        %p287 = pneg %p108
        %p288 = pneg %p105
        %p289 = pneg %p129
        %p290 = pneg %p126
        %p291 = pneg %p155
        %p292 = pneg %p152
        %s293 = sand.u32 %s142, 1
        %s294 = scalar_lea.sflag [#allocation4], %s293
        %s295 = sand.u32 %s142, 1
        %s296 = smul.addr %s295, 768
        %s297 = scalar_lea.vmem [#allocation11], %s296
        %s298 = smul.u32 32, %s24
        %s299 = smul.u32 32, %s24
        %v301 = vld [vmem:[%s255] sm:$0xff]
        %v302 = vld [vmem:[%s255 + $0x8] sm:$0xff]
        %v303 = vld [vmem:[%s255 + $0x10] sm:$0xff]
        %v304 = vld [vmem:[%s255 + $0x18] sm:$0xff]
        %v305 = vld [vmem:[%s255 + $0x20] sm:$0xff]
        %v306 = vld [vmem:[%s255 + $0x28] sm:$0xff]
        %v307 = vld [vmem:[%s255 + $0x30] sm:$0xff]
        %v308 = vld [vmem:[%s255 + $0x38] sm:$0xff]
        %v309 = vld [vmem:[%s255 + $0x40] sm:$0xff]
        %v310 = vld [vmem:[%s255 + $0x48] sm:$0xff]
        %v311 = vld [vmem:[%s255 + $0x50] sm:$0xff]
        %v312 = vld [vmem:[%s255 + $0x58] sm:$0xff]
        %v313 = vld [vmem:[%s255 + $0x60] sm:$0xff]
        %v314 = vld [vmem:[%s255 + $0x68] sm:$0xff]
        %v315 = vld [vmem:[%s255 + $0x70] sm:$0xff]
        %v316 = vld [vmem:[%s255 + $0x78] sm:$0xff]
        %v317 = vld [vmem:[%s255 + $0x80] sm:$0xff]
        %v318 = vld [vmem:[%s255 + $0x88] sm:$0xff]
        %v319 = vld [vmem:[%s255 + $0x90] sm:$0xff]
        %v320 = vld [vmem:[%s255 + $0x98] sm:$0xff]
        %v321 = vld [vmem:[%s255 + $0xa0] sm:$0xff]
        %v322 = vld [vmem:[%s255 + $0xa8] sm:$0xff]
        %v323 = vld [vmem:[%s255 + $0xb0] sm:$0xff]
        %v324 = vld [vmem:[%s255 + $0xb8] sm:$0xff]
        %v325 = vld [vmem:[%s255 + $0xc0] sm:$0xff]
        %v326 = vld [vmem:[%s255 + $0xc8] sm:$0xff]
        %v327 = vld [vmem:[%s255 + $0xd0] sm:$0xff]
        %v328 = vld [vmem:[%s255 + $0xd8] sm:$0xff]
        %v329 = vld [vmem:[%s255 + $0xe0] sm:$0xff]
        %v330 = vld [vmem:[%s255 + $0xe8] sm:$0xff]
        %v331 = vld [vmem:[%s255 + $0xf0] sm:$0xff]
        %v332 = vld [vmem:[%s255 + $0xf8] sm:$0xff]
        %v333 = vld [vmem:[%s255 + $0x100] sm:$0xff]
        %v334 = vld [vmem:[%s255 + $0x108] sm:$0xff]
        %v335 = vld [vmem:[%s255 + $0x110] sm:$0xff]
        %v336 = vld [vmem:[%s255 + $0x118] sm:$0xff]
        %v337 = vld [vmem:[%s255 + $0x120] sm:$0xff]
        %v338 = vld [vmem:[%s255 + $0x128] sm:$0xff]
        %v339 = vld [vmem:[%s255 + $0x130] sm:$0xff]
        %v340 = vld [vmem:[%s255 + $0x138] sm:$0xff]
        %v341 = vld [vmem:[%s255 + $0x140] sm:$0xff]
        %v342 = vld [vmem:[%s255 + $0x148] sm:$0xff]
        %v343 = vld [vmem:[%s255 + $0x150] sm:$0xff]
        %v344 = vld [vmem:[%s255 + $0x158] sm:$0xff]
        %v345 = vld [vmem:[%s255 + $0x160] sm:$0xff]
        %v346 = vld [vmem:[%s255 + $0x168] sm:$0xff]
        %v347 = vld [vmem:[%s255 + $0x170] sm:$0xff]
        %v348 = vld [vmem:[%s255 + $0x178] sm:$0xff]
        %v349 = vld [vmem:[%s255 + $0x180] sm:$0xff]
        %v350 = vld [vmem:[%s255 + $0x188] sm:$0xff]
        %v351 = vld [vmem:[%s255 + $0x190] sm:$0xff]
        %v352 = vld [vmem:[%s255 + $0x198] sm:$0xff]
        %v353 = vld [vmem:[%s255 + $0x1a0] sm:$0xff]
        %v354 = vld [vmem:[%s255 + $0x1a8] sm:$0xff]
        %v355 = vld [vmem:[%s255 + $0x1b0] sm:$0xff]
        %v356 = vld [vmem:[%s255 + $0x1b8] sm:$0xff]
        %v357 = vld [vmem:[%s255 + $0x1c0] sm:$0xff]
        %v358 = vld [vmem:[%s255 + $0x1c8] sm:$0xff]
        %v359 = vld [vmem:[%s255 + $0x1d0] sm:$0xff]
        %v360 = vld [vmem:[%s255 + $0x1d8] sm:$0xff]
        %v361 = vld [vmem:[%s255 + $0x1e0] sm:$0xff]
        %v362 = vld [vmem:[%s255 + $0x1e8] sm:$0xff]
        %v363 = vld [vmem:[%s255 + $0x1f0] sm:$0xff]
        %v364 = vld [vmem:[%s255 + $0x1f8] sm:$0xff]
        %v365 = vld [vmem:[%s255 + $0x200] sm:$0xff]
        %v366 = vld [vmem:[%s255 + $0x208] sm:$0xff]
        %v367 = vld [vmem:[%s255 + $0x210] sm:$0xff]
        %v368 = vld [vmem:[%s255 + $0x218] sm:$0xff]
        %v369 = vld [vmem:[%s255 + $0x220] sm:$0xff]
        %v370 = vld [vmem:[%s255 + $0x228] sm:$0xff]
        %v371 = vld [vmem:[%s255 + $0x230] sm:$0xff]
        %v372 = vld [vmem:[%s255 + $0x238] sm:$0xff]
        %v373 = vld [vmem:[%s255 + $0x240] sm:$0xff]
        %v374 = vld [vmem:[%s255 + $0x248] sm:$0xff]
        %v375 = vld [vmem:[%s255 + $0x250] sm:$0xff]
        %v376 = vld [vmem:[%s255 + $0x258] sm:$0xff]
        %v377 = vld [vmem:[%s255 + $0x260] sm:$0xff]
        %v378 = vld [vmem:[%s255 + $0x268] sm:$0xff]
        %v379 = vld [vmem:[%s255 + $0x270] sm:$0xff]
        %v380 = vld [vmem:[%s255 + $0x278] sm:$0xff]
        %v381 = vld [vmem:[%s255 + $0x280] sm:$0xff]
        %v382 = vld [vmem:[%s255 + $0x288] sm:$0xff]
        %v383 = vld [vmem:[%s255 + $0x290] sm:$0xff]
        %v384 = vld [vmem:[%s255 + $0x298] sm:$0xff]
        %v385 = vld [vmem:[%s255 + $0x2a0] sm:$0xff]
        %v386 = vld [vmem:[%s255 + $0x2a8] sm:$0xff]
        %v387 = vld [vmem:[%s255 + $0x2b0] sm:$0xff]
        %v388 = vld [vmem:[%s255 + $0x2b8] sm:$0xff]
        %v389 = vld [vmem:[%s255 + $0x2c0] sm:$0xff]
        %v390 = vld [vmem:[%s255 + $0x2c8] sm:$0xff]
        %v391 = vld [vmem:[%s255 + $0x2d0] sm:$0xff]
        %v392 = vld [vmem:[%s255 + $0x2d8] sm:$0xff]
        %v393 = vld [vmem:[%s255 + $0x2e0] sm:$0xff]
        %v394 = vld [vmem:[%s255 + $0x2e8] sm:$0xff]
        %v395 = vld [vmem:[%s255 + $0x2f0] sm:$0xff]
        %v396 = vld [vmem:[%s255 + $0x2f8] sm:$0xff]
        %v397 = vpack.c.bf16 %v304, %v301
        %v398 = vpack.c.bf16 %v305, %v302
        %v399 = vpack.c.bf16 %v306, %v303
        %v400 = vpack.c.bf16 %v310, %v307
        %v401 = vpack.c.bf16 %v311, %v308
        %v402 = vpack.c.bf16 %v312, %v309
        %v403 = vpack.c.bf16 %v316, %v313
        %v404 = vpack.c.bf16 %v317, %v314
        %v405 = vpack.c.bf16 %v318, %v315
        %v406 = vpack.c.bf16 %v322, %v319
        %v407 = vpack.c.bf16 %v323, %v320
        %v408 = vpack.c.bf16 %v324, %v321
        %v409 = vpack.c.bf16 %v328, %v325
        %v410 = vpack.c.bf16 %v329, %v326
        %v411 = vpack.c.bf16 %v330, %v327
        %v412 = vpack.c.bf16 %v334, %v331
        %v413 = vpack.c.bf16 %v335, %v332
        %v414 = vpack.c.bf16 %v336, %v333
        %v415 = vpack.c.bf16 %v340, %v337
        %v416 = vpack.c.bf16 %v341, %v338
        %v417 = vpack.c.bf16 %v342, %v339
        %v418 = vpack.c.bf16 %v346, %v343
        %v419 = vpack.c.bf16 %v347, %v344
        %v420 = vpack.c.bf16 %v348, %v345
        %v421 = vpack.c.bf16 %v352, %v349
        %v422 = vpack.c.bf16 %v353, %v350
        %v423 = vpack.c.bf16 %v354, %v351
        %v424 = vpack.c.bf16 %v358, %v355
        %v425 = vpack.c.bf16 %v359, %v356
        %v426 = vpack.c.bf16 %v360, %v357
        %v427 = vpack.c.bf16 %v364, %v361
        %v428 = vpack.c.bf16 %v365, %v362
        %v429 = vpack.c.bf16 %v366, %v363
        %v430 = vpack.c.bf16 %v370, %v367
        %v431 = vpack.c.bf16 %v371, %v368
        %v432 = vpack.c.bf16 %v372, %v369
        %v433 = vpack.c.bf16 %v376, %v373
        %v434 = vpack.c.bf16 %v377, %v374
        %v435 = vpack.c.bf16 %v378, %v375
        %v436 = vpack.c.bf16 %v382, %v379
        %v437 = vpack.c.bf16 %v383, %v380
        %v438 = vpack.c.bf16 %v384, %v381
        %v439 = vpack.c.bf16 %v388, %v385
        %v440 = vpack.c.bf16 %v389, %v386
        %v441 = vpack.c.bf16 %v390, %v387
        %v442 = vpack.c.bf16 %v394, %v391
        %v443 = vpack.c.bf16 %v395, %v392
        %v444 = vpack.c.bf16 %v396, %v393
        %v445 = vld [vmem:[#allocation5] sm:$0xff]
        %v446 = vld [vmem:[#allocation5 + $0x8] sm:$0xff]
        %v447 = vld [vmem:[#allocation5 + $0x10] sm:$0xff]
        %v448 = vld [vmem:[#allocation5 + $0x18] sm:$0xff]
        %v449 = vld [vmem:[#allocation5 + $0x20] sm:$0xff]
        %v450 = vld [vmem:[#allocation5 + $0x28] sm:$0xff]
        %v451 = vld [vmem:[#allocation5 + $0x30] sm:$0xff]
        %v452 = vld [vmem:[#allocation5 + $0x38] sm:$0xff]
        %v453 = vld [vmem:[#allocation5 + $0x40] sm:$0xff]
        %v454 = vld [vmem:[#allocation5 + $0x48] sm:$0xff]
        %v455 = vld [vmem:[#allocation5 + $0x50] sm:$0xff]
        %v456 = vld [vmem:[#allocation5 + $0x58] sm:$0xff]
        %v457 = vld [vmem:[#allocation5 + $0x60] sm:$0xff]
        %v458 = vld [vmem:[#allocation5 + $0x68] sm:$0xff]
        %v459 = vld [vmem:[#allocation5 + $0x70] sm:$0xff]
        %v460 = vld [vmem:[#allocation5 + $0x78] sm:$0xff]
        %v461 = vld [vmem:[#allocation5 + $0x80] sm:$0xff]
        %v462 = vld [vmem:[#allocation5 + $0x88] sm:$0xff]
        %v463 = vld [vmem:[#allocation5 + $0x90] sm:$0xff]
        %v464 = vld [vmem:[#allocation5 + $0x98] sm:$0xff]
        %v465 = vld [vmem:[#allocation5 + $0xa0] sm:$0xff]
        %v466 = vld [vmem:[#allocation5 + $0xa8] sm:$0xff]
        %v467 = vld [vmem:[#allocation5 + $0xb0] sm:$0xff]
        %v468 = vld [vmem:[#allocation5 + $0xb8] sm:$0xff]
        %v469 = vld [vmem:[#allocation5 + $0xc0] sm:$0xff]
        %v470 = vld [vmem:[#allocation5 + $0xc8] sm:$0xff]
        %v471 = vld [vmem:[#allocation5 + $0xd0] sm:$0xff]
        %v472 = vld [vmem:[#allocation5 + $0xd8] sm:$0xff]
        %v473 = vld [vmem:[#allocation5 + $0xe0] sm:$0xff]
        %v474 = vld [vmem:[#allocation5 + $0xe8] sm:$0xff]
        %v475 = vld [vmem:[#allocation5 + $0xf0] sm:$0xff]
        %v476 = vld [vmem:[#allocation5 + $0xf8] sm:$0xff]
        %v477 = vld [vmem:[#allocation5 + $0x100] sm:$0xff]
        %v478 = vld [vmem:[#allocation5 + $0x108] sm:$0xff]
        %v479 = vld [vmem:[#allocation5 + $0x110] sm:$0xff]
        %v480 = vld [vmem:[#allocation5 + $0x118] sm:$0xff]
        %v481 = vld [vmem:[#allocation5 + $0x120] sm:$0xff]
        %v482 = vld [vmem:[#allocation5 + $0x128] sm:$0xff]
        %v483 = vld [vmem:[#allocation5 + $0x130] sm:$0xff]
        %v484 = vld [vmem:[#allocation5 + $0x138] sm:$0xff]
        %v485 = vld [vmem:[#allocation5 + $0x140] sm:$0xff]
        %v486 = vld [vmem:[#allocation5 + $0x148] sm:$0xff]
        %v487 = vld [vmem:[#allocation5 + $0x150] sm:$0xff]
        %v488 = vld [vmem:[#allocation5 + $0x158] sm:$0xff]
        %v489 = vld [vmem:[#allocation5 + $0x160] sm:$0xff]
        %v490 = vld [vmem:[#allocation5 + $0x168] sm:$0xff]
        %v491 = vld [vmem:[#allocation5 + $0x170] sm:$0xff]
        %v492 = vld [vmem:[#allocation5 + $0x178] sm:$0xff]
        %v493 = vld [vmem:[#allocation5 + $0x180] sm:$0xff]
        %v494 = vld [vmem:[#allocation5 + $0x188] sm:$0xff]
        %v495 = vld [vmem:[#allocation5 + $0x190] sm:$0xff]
        %v496 = vld [vmem:[#allocation5 + $0x198] sm:$0xff]
        %v497 = vld [vmem:[#allocation5 + $0x1a0] sm:$0xff]
        %v498 = vld [vmem:[#allocation5 + $0x1a8] sm:$0xff]
        %v499 = vld [vmem:[#allocation5 + $0x1b0] sm:$0xff]
        %v500 = vld [vmem:[#allocation5 + $0x1b8] sm:$0xff]
        %v501 = vld [vmem:[#allocation5 + $0x1c0] sm:$0xff]
        %v502 = vld [vmem:[#allocation5 + $0x1c8] sm:$0xff]
        %v503 = vld [vmem:[#allocation5 + $0x1d0] sm:$0xff]
        %v504 = vld [vmem:[#allocation5 + $0x1d8] sm:$0xff]
        %v505 = vld [vmem:[#allocation5 + $0x1e0] sm:$0xff]
        %v506 = vld [vmem:[#allocation5 + $0x1e8] sm:$0xff]
        %v507 = vld [vmem:[#allocation5 + $0x1f0] sm:$0xff]
        %v508 = vld [vmem:[#allocation5 + $0x1f8] sm:$0xff]
        %v509 = vld [vmem:[#allocation5 + $0x200] sm:$0xff]
        %v510 = vld [vmem:[#allocation5 + $0x208] sm:$0xff]
        %v511 = vld [vmem:[#allocation5 + $0x210] sm:$0xff]
        %v512 = vld [vmem:[#allocation5 + $0x218] sm:$0xff]
        %v513 = vld [vmem:[#allocation5 + $0x220] sm:$0xff]
        %v514 = vld [vmem:[#allocation5 + $0x228] sm:$0xff]
        %v515 = vld [vmem:[#allocation5 + $0x230] sm:$0xff]
        %v516 = vld [vmem:[#allocation5 + $0x238] sm:$0xff]
        %v517 = vld [vmem:[#allocation5 + $0x240] sm:$0xff]
        %v518 = vld [vmem:[#allocation5 + $0x248] sm:$0xff]
        %v519 = vld [vmem:[#allocation5 + $0x250] sm:$0xff]
        %v520 = vld [vmem:[#allocation5 + $0x258] sm:$0xff]
        %v521 = vld [vmem:[#allocation5 + $0x260] sm:$0xff]
        %v522 = vld [vmem:[#allocation5 + $0x268] sm:$0xff]
        %v523 = vld [vmem:[#allocation5 + $0x270] sm:$0xff]
        %v524 = vld [vmem:[#allocation5 + $0x278] sm:$0xff]
        %v525 = vld [vmem:[#allocation5 + $0x280] sm:$0xff]
        %v526 = vld [vmem:[#allocation5 + $0x288] sm:$0xff]
        %v527 = vld [vmem:[#allocation5 + $0x290] sm:$0xff]
        %v528 = vld [vmem:[#allocation5 + $0x298] sm:$0xff]
        %v529 = vld [vmem:[#allocation5 + $0x2a0] sm:$0xff]
        %v530 = vld [vmem:[#allocation5 + $0x2a8] sm:$0xff]
        %v531 = vld [vmem:[#allocation5 + $0x2b0] sm:$0xff]
        %v532 = vld [vmem:[#allocation5 + $0x2b8] sm:$0xff]
        %v533 = vld [vmem:[#allocation5 + $0x2c0] sm:$0xff]
        %v534 = vld [vmem:[#allocation5 + $0x2c8] sm:$0xff]
        %v535 = vld [vmem:[#allocation5 + $0x2d0] sm:$0xff]
        %v536 = vld [vmem:[#allocation5 + $0x2d8] sm:$0xff]
        %v537 = vld [vmem:[#allocation5 + $0x2e0] sm:$0xff]
        %v538 = vld [vmem:[#allocation5 + $0x2e8] sm:$0xff]
        %v539 = vld [vmem:[#allocation5 + $0x2f0] sm:$0xff]
        %v540 = vld [vmem:[#allocation5 + $0x2f8] sm:$0xff]
        %v541 = vld [vmem:[#allocation5 + $0x300] sm:$0xff]
        %v542 = vld [vmem:[#allocation5 + $0x308] sm:$0xff]
        %v543 = vld [vmem:[#allocation5 + $0x310] sm:$0xff]
        %v544 = vld [vmem:[#allocation5 + $0x318] sm:$0xff]
        %v545 = vld [vmem:[#allocation5 + $0x320] sm:$0xff]
        %v546 = vld [vmem:[#allocation5 + $0x328] sm:$0xff]
        %v547 = vld [vmem:[#allocation5 + $0x330] sm:$0xff]
        %v548 = vld [vmem:[#allocation5 + $0x338] sm:$0xff]
        %v549 = vld [vmem:[#allocation5 + $0x340] sm:$0xff]
        %v550 = vld [vmem:[#allocation5 + $0x348] sm:$0xff]
        %v551 = vld [vmem:[#allocation5 + $0x350] sm:$0xff]
        %v552 = vld [vmem:[#allocation5 + $0x358] sm:$0xff]
        %v553 = vld [vmem:[#allocation5 + $0x360] sm:$0xff]
        %v554 = vld [vmem:[#allocation5 + $0x368] sm:$0xff]
        %v555 = vld [vmem:[#allocation5 + $0x370] sm:$0xff]
        %v556 = vld [vmem:[#allocation5 + $0x378] sm:$0xff]
        %v557 = vld [vmem:[#allocation5 + $0x380] sm:$0xff]
        %v558 = vld [vmem:[#allocation5 + $0x388] sm:$0xff]
        %v559 = vld [vmem:[#allocation5 + $0x390] sm:$0xff]
        %v560 = vld [vmem:[#allocation5 + $0x398] sm:$0xff]
        %v561 = vld [vmem:[#allocation5 + $0x3a0] sm:$0xff]
        %v562 = vld [vmem:[#allocation5 + $0x3a8] sm:$0xff]
        %v563 = vld [vmem:[#allocation5 + $0x3b0] sm:$0xff]
        %v564 = vld [vmem:[#allocation5 + $0x3b8] sm:$0xff]
        %v565 = vld [vmem:[#allocation5 + $0x3c0] sm:$0xff]
        %v566 = vld [vmem:[#allocation5 + $0x3c8] sm:$0xff]
        %v567 = vld [vmem:[#allocation5 + $0x3d0] sm:$0xff]
        %v568 = vld [vmem:[#allocation5 + $0x3d8] sm:$0xff]
        %v569 = vld [vmem:[#allocation5 + $0x3e0] sm:$0xff]
        %v570 = vld [vmem:[#allocation5 + $0x3e8] sm:$0xff]
        %v571 = vld [vmem:[#allocation5 + $0x3f0] sm:$0xff]
        %v572 = vld [vmem:[#allocation5 + $0x3f8] sm:$0xff]
        %v573 = vld [vmem:[#allocation5 + $0x400] sm:$0xff]
        %v574 = vld [vmem:[#allocation5 + $0x408] sm:$0xff]
        %v575 = vld [vmem:[#allocation5 + $0x410] sm:$0xff]
        %v576 = vld [vmem:[#allocation5 + $0x418] sm:$0xff]
        %v577 = vld [vmem:[#allocation5 + $0x420] sm:$0xff]
        %v578 = vld [vmem:[#allocation5 + $0x428] sm:$0xff]
        %v579 = vld [vmem:[#allocation5 + $0x430] sm:$0xff]
        %v580 = vld [vmem:[#allocation5 + $0x438] sm:$0xff]
        %v581 = vld [vmem:[#allocation5 + $0x440] sm:$0xff]
        %v582 = vld [vmem:[#allocation5 + $0x448] sm:$0xff]
        %v583 = vld [vmem:[#allocation5 + $0x450] sm:$0xff]
        %v584 = vld [vmem:[#allocation5 + $0x458] sm:$0xff]
        %v585 = vld [vmem:[#allocation5 + $0x460] sm:$0xff]
        %v586 = vld [vmem:[#allocation5 + $0x468] sm:$0xff]
        %v587 = vld [vmem:[#allocation5 + $0x470] sm:$0xff]
        %v588 = vld [vmem:[#allocation5 + $0x478] sm:$0xff]
        %v589 = vld [vmem:[#allocation5 + $0x480] sm:$0xff]
        %v590 = vld [vmem:[#allocation5 + $0x488] sm:$0xff]
        %v591 = vld [vmem:[#allocation5 + $0x490] sm:$0xff]
        %v592 = vld [vmem:[#allocation5 + $0x498] sm:$0xff]
        %v593 = vld [vmem:[#allocation5 + $0x4a0] sm:$0xff]
        %v594 = vld [vmem:[#allocation5 + $0x4a8] sm:$0xff]
        %v595 = vld [vmem:[#allocation5 + $0x4b0] sm:$0xff]
        %v596 = vld [vmem:[#allocation5 + $0x4b8] sm:$0xff]
        %v597 = vld [vmem:[#allocation5 + $0x4c0] sm:$0xff]
        %v598 = vld [vmem:[#allocation5 + $0x4c8] sm:$0xff]
        %v599 = vld [vmem:[#allocation5 + $0x4d0] sm:$0xff]
        %v600 = vld [vmem:[#allocation5 + $0x4d8] sm:$0xff]
        %v601 = vld [vmem:[#allocation5 + $0x4e0] sm:$0xff]
        %v602 = vld [vmem:[#allocation5 + $0x4e8] sm:$0xff]
        %v603 = vld [vmem:[#allocation5 + $0x4f0] sm:$0xff]
        %v604 = vld [vmem:[#allocation5 + $0x4f8] sm:$0xff]
        %v605 = vld [vmem:[#allocation5 + $0x500] sm:$0xff]
        %v606 = vld [vmem:[#allocation5 + $0x508] sm:$0xff]
        %v607 = vld [vmem:[#allocation5 + $0x510] sm:$0xff]
        %v608 = vld [vmem:[#allocation5 + $0x518] sm:$0xff]
        %v609 = vld [vmem:[#allocation5 + $0x520] sm:$0xff]
        %v610 = vld [vmem:[#allocation5 + $0x528] sm:$0xff]
        %v611 = vld [vmem:[#allocation5 + $0x530] sm:$0xff]
        %v612 = vld [vmem:[#allocation5 + $0x538] sm:$0xff]
        %v613 = vld [vmem:[#allocation5 + $0x540] sm:$0xff]
        %v614 = vld [vmem:[#allocation5 + $0x548] sm:$0xff]
        %v615 = vld [vmem:[#allocation5 + $0x550] sm:$0xff]
        %v616 = vld [vmem:[#allocation5 + $0x558] sm:$0xff]
        %v617 = vld [vmem:[#allocation5 + $0x560] sm:$0xff]
        %v618 = vld [vmem:[#allocation5 + $0x568] sm:$0xff]
        %v619 = vld [vmem:[#allocation5 + $0x570] sm:$0xff]
        %v620 = vld [vmem:[#allocation5 + $0x578] sm:$0xff]
        %v621 = vld [vmem:[#allocation5 + $0x580] sm:$0xff]
        %v622 = vld [vmem:[#allocation5 + $0x588] sm:$0xff]
        %v623 = vld [vmem:[#allocation5 + $0x590] sm:$0xff]
        %v624 = vld [vmem:[#allocation5 + $0x598] sm:$0xff]
        %v625 = vld [vmem:[#allocation5 + $0x5a0] sm:$0xff]
        %v626 = vld [vmem:[#allocation5 + $0x5a8] sm:$0xff]
        %v627 = vld [vmem:[#allocation5 + $0x5b0] sm:$0xff]
        %v628 = vld [vmem:[#allocation5 + $0x5b8] sm:$0xff]
        %v629 = vld [vmem:[#allocation5 + $0x5c0] sm:$0xff]
        %v630 = vld [vmem:[#allocation5 + $0x5c8] sm:$0xff]
        %v631 = vld [vmem:[#allocation5 + $0x5d0] sm:$0xff]
        %v632 = vld [vmem:[#allocation5 + $0x5d8] sm:$0xff]
        %v633 = vld [vmem:[#allocation5 + $0x5e0] sm:$0xff]
        %v634 = vld [vmem:[#allocation5 + $0x5e8] sm:$0xff]
        %v635 = vld [vmem:[#allocation5 + $0x5f0] sm:$0xff]
        %v636 = vld [vmem:[#allocation5 + $0x5f8] sm:$0xff]
        %v637 = vld [vmem:[#allocation5 + $0x600] sm:$0xff]
        %v638 = vld [vmem:[#allocation5 + $0x608] sm:$0xff]
        %v639 = vld [vmem:[#allocation5 + $0x610] sm:$0xff]
        %v640 = vld [vmem:[#allocation5 + $0x618] sm:$0xff]
        %v641 = vld [vmem:[#allocation5 + $0x620] sm:$0xff]
        %v642 = vld [vmem:[#allocation5 + $0x628] sm:$0xff]
        %v643 = vld [vmem:[#allocation5 + $0x630] sm:$0xff]
        %v644 = vld [vmem:[#allocation5 + $0x638] sm:$0xff]
        %v645 = vld [vmem:[#allocation5 + $0x640] sm:$0xff]
        %v646 = vld [vmem:[#allocation5 + $0x648] sm:$0xff]
        %v647 = vld [vmem:[#allocation5 + $0x650] sm:$0xff]
        %v648 = vld [vmem:[#allocation5 + $0x658] sm:$0xff]
        %v649 = vld [vmem:[#allocation5 + $0x660] sm:$0xff]
        %v650 = vld [vmem:[#allocation5 + $0x668] sm:$0xff]
        %v651 = vld [vmem:[#allocation5 + $0x670] sm:$0xff]
        %v652 = vld [vmem:[#allocation5 + $0x678] sm:$0xff]
        %v653 = vld [vmem:[#allocation5 + $0x680] sm:$0xff]
        %v654 = vld [vmem:[#allocation5 + $0x688] sm:$0xff]
        %v655 = vld [vmem:[#allocation5 + $0x690] sm:$0xff]
        %v656 = vld [vmem:[#allocation5 + $0x698] sm:$0xff]
        %v657 = vld [vmem:[#allocation5 + $0x6a0] sm:$0xff]
        %v658 = vld [vmem:[#allocation5 + $0x6a8] sm:$0xff]
        %v659 = vld [vmem:[#allocation5 + $0x6b0] sm:$0xff]
        %v660 = vld [vmem:[#allocation5 + $0x6b8] sm:$0xff]
        %v661 = vld [vmem:[#allocation5 + $0x6c0] sm:$0xff]
        %v662 = vld [vmem:[#allocation5 + $0x6c8] sm:$0xff]
        %v663 = vld [vmem:[#allocation5 + $0x6d0] sm:$0xff]
        %v664 = vld [vmem:[#allocation5 + $0x6d8] sm:$0xff]
        %v665 = vld [vmem:[#allocation5 + $0x6e0] sm:$0xff]
        %v666 = vld [vmem:[#allocation5 + $0x6e8] sm:$0xff]
        %v667 = vld [vmem:[#allocation5 + $0x6f0] sm:$0xff]
        %v668 = vld [vmem:[#allocation5 + $0x6f8] sm:$0xff]
        %v669 = vld [vmem:[#allocation5 + $0x700] sm:$0xff]
        %v670 = vld [vmem:[#allocation5 + $0x708] sm:$0xff]
        %v671 = vld [vmem:[#allocation5 + $0x710] sm:$0xff]
        %v672 = vld [vmem:[#allocation5 + $0x718] sm:$0xff]
        %v673 = vld [vmem:[#allocation5 + $0x720] sm:$0xff]
        %v674 = vld [vmem:[#allocation5 + $0x728] sm:$0xff]
        %v675 = vld [vmem:[#allocation5 + $0x730] sm:$0xff]
        %v676 = vld [vmem:[#allocation5 + $0x738] sm:$0xff]
        %v677 = vld [vmem:[#allocation5 + $0x740] sm:$0xff]
        %v678 = vld [vmem:[#allocation5 + $0x748] sm:$0xff]
        %v679 = vld [vmem:[#allocation5 + $0x750] sm:$0xff]
        %v680 = vld [vmem:[#allocation5 + $0x758] sm:$0xff]
        %v681 = vld [vmem:[#allocation5 + $0x760] sm:$0xff]
        %v682 = vld [vmem:[#allocation5 + $0x768] sm:$0xff]
        %v683 = vld [vmem:[#allocation5 + $0x770] sm:$0xff]
        %v684 = vld [vmem:[#allocation5 + $0x778] sm:$0xff]
        %v685 = vld [vmem:[#allocation5 + $0x780] sm:$0xff]
        %v686 = vld [vmem:[#allocation5 + $0x788] sm:$0xff]
        %v687 = vld [vmem:[#allocation5 + $0x790] sm:$0xff]
        %v688 = vld [vmem:[#allocation5 + $0x798] sm:$0xff]
        %v689 = vld [vmem:[#allocation5 + $0x7a0] sm:$0xff]
        %v690 = vld [vmem:[#allocation5 + $0x7a8] sm:$0xff]
        %v691 = vld [vmem:[#allocation5 + $0x7b0] sm:$0xff]
        %v692 = vld [vmem:[#allocation5 + $0x7b8] sm:$0xff]
        %v693 = vld [vmem:[#allocation5 + $0x7c0] sm:$0xff]
        %v694 = vld [vmem:[#allocation5 + $0x7c8] sm:$0xff]
        %v695 = vld [vmem:[#allocation5 + $0x7d0] sm:$0xff]
        %v696 = vld [vmem:[#allocation5 + $0x7d8] sm:$0xff]
        %v697 = vld [vmem:[#allocation5 + $0x7e0] sm:$0xff]
        %v698 = vld [vmem:[#allocation5 + $0x7e8] sm:$0xff]
        %v699 = vld [vmem:[#allocation5 + $0x7f0] sm:$0xff]
        %v700 = vld [vmem:[#allocation5 + $0x7f8] sm:$0xff]
        %v701 = vld [vmem:[#allocation5 + $0x800] sm:$0xff]
        %v702 = vld [vmem:[#allocation5 + $0x808] sm:$0xff]
        %v703 = vld [vmem:[#allocation5 + $0x810] sm:$0xff]
        %v704 = vld [vmem:[#allocation5 + $0x818] sm:$0xff]
        %v705 = vld [vmem:[#allocation5 + $0x820] sm:$0xff]
        %v706 = vld [vmem:[#allocation5 + $0x828] sm:$0xff]
        %v707 = vld [vmem:[#allocation5 + $0x830] sm:$0xff]
        %v708 = vld [vmem:[#allocation5 + $0x838] sm:$0xff]
        %v709 = vld [vmem:[#allocation5 + $0x840] sm:$0xff]
        %v710 = vld [vmem:[#allocation5 + $0x848] sm:$0xff]
        %v711 = vld [vmem:[#allocation5 + $0x850] sm:$0xff]
        %v712 = vld [vmem:[#allocation5 + $0x858] sm:$0xff]
        %v713 = vld [vmem:[#allocation5 + $0x860] sm:$0xff]
        %v714 = vld [vmem:[#allocation5 + $0x868] sm:$0xff]
        %v715 = vld [vmem:[#allocation5 + $0x870] sm:$0xff]
        %v716 = vld [vmem:[#allocation5 + $0x878] sm:$0xff]
        %v717 = vld [vmem:[#allocation5 + $0x880] sm:$0xff]
        %v718 = vld [vmem:[#allocation5 + $0x888] sm:$0xff]
        %v719 = vld [vmem:[#allocation5 + $0x890] sm:$0xff]
        %v720 = vld [vmem:[#allocation5 + $0x898] sm:$0xff]
        %v721 = vld [vmem:[#allocation5 + $0x8a0] sm:$0xff]
        %v722 = vld [vmem:[#allocation5 + $0x8a8] sm:$0xff]
        %v723 = vld [vmem:[#allocation5 + $0x8b0] sm:$0xff]
        %v724 = vld [vmem:[#allocation5 + $0x8b8] sm:$0xff]
        %v725 = vld [vmem:[#allocation5 + $0x8c0] sm:$0xff]
        %v726 = vld [vmem:[#allocation5 + $0x8c8] sm:$0xff]
        %v727 = vld [vmem:[#allocation5 + $0x8d0] sm:$0xff]
        %v728 = vld [vmem:[#allocation5 + $0x8d8] sm:$0xff]
        %v729 = vld [vmem:[#allocation5 + $0x8e0] sm:$0xff]
        %v730 = vld [vmem:[#allocation5 + $0x8e8] sm:$0xff]
        %v731 = vld [vmem:[#allocation5 + $0x8f0] sm:$0xff]
        %v732 = vld [vmem:[#allocation5 + $0x8f8] sm:$0xff]
        %v733 = vld [vmem:[#allocation7] sm:$0xff]
        %v734 = vld [vmem:[#allocation7 + $0x8] sm:$0xf]
        %v737 = vlaneseq
        %v738 = vshrl.u32 %v737, 7
        %v739 = vsub.s32 0, %v738
        %v740 = vrot.slane %v733, %v739
        %v741 = vlaneseq
        %v742 = vshrl.u32 %v741, 7
        %v743 = vsub.s32 1, %v742
        %v744 = vrot.slane %v733, %v743
        %v745 = vlaneseq
        %v746 = vshrl.u32 %v745, 7
        %v747 = vsub.s32 2, %v746
        %v748 = vrot.slane %v733, %v747
        %v749 = vlaneseq
        %v750 = vshrl.u32 %v749, 7
        %v751 = vsub.s32 3, %v750
        %v752 = vrot.slane %v733, %v751
        %v753 = vlaneseq
        %v754 = vshrl.u32 %v753, 7
        %v755 = vsub.s32 4, %v754
        %v756 = vrot.slane %v733, %v755
        %v757 = vlaneseq
        %v758 = vshrl.u32 %v757, 7
        %v759 = vsub.s32 5, %v758
        %v760 = vrot.slane %v733, %v759
        %v761 = vlaneseq
        %v762 = vshrl.u32 %v761, 7
        %v763 = vsub.s32 6, %v762
        %v764 = vrot.slane %v733, %v763
        %v765 = vlaneseq
        %v766 = vshrl.u32 %v765, 7
        %v767 = vsub.s32 7, %v766
        %v768 = vrot.slane %v733, %v767
        %v769 = vlaneseq
        %v770 = vshrl.u32 %v769, 7
        %v771 = vsub.s32 0, %v770
        %v772 = vrot.slane %v734, %v771
        %v773 = vlaneseq
        %v774 = vshrl.u32 %v773, 7
        %v775 = vsub.s32 1, %v774
        %v776 = vrot.slane %v734, %v775
        %v777 = vlaneseq
        %v778 = vshrl.u32 %v777, 7
        %v779 = vsub.s32 2, %v778
        %v780 = vrot.slane %v734, %v779
        %v781 = vlaneseq
        %v782 = vshrl.u32 %v781, 7
        %v783 = vsub.s32 3, %v782
        %v784 = vrot.slane %v734, %v783
        %v1085 = vunpack.c.l.b16 %v445
        %v1086 = vunpack.c.h.b16 %v445
        %v1087 = vunpack.c.l.b16 %v446
        %v1088 = vunpack.c.h.b16 %v446
        %v1089 = vunpack.c.l.b16 %v447
        %v1090 = vunpack.c.h.b16 %v447
        %v1091 = vunpack.c.l.b16 %v448
        %v1092 = vunpack.c.h.b16 %v448
        %v1093 = vunpack.c.l.b16 %v449
        %v1094 = vunpack.c.h.b16 %v449
        %v1095 = vunpack.c.l.b16 %v450
        %v1096 = vunpack.c.h.b16 %v450
        %v1097 = vunpack.c.l.b16 %v451
        %v1098 = vunpack.c.h.b16 %v451
        %v1099 = vunpack.c.l.b16 %v452
        %v1100 = vunpack.c.h.b16 %v452
        %v1101 = vunpack.c.l.b16 %v453
        %v1102 = vunpack.c.h.b16 %v453
        %v1103 = vunpack.c.l.b16 %v454
        %v1104 = vunpack.c.h.b16 %v454
        %v1105 = vunpack.c.l.b16 %v455
        %v1106 = vunpack.c.h.b16 %v455
        %v1107 = vunpack.c.l.b16 %v456
        %v1108 = vunpack.c.h.b16 %v456
        %v1109 = vunpack.c.l.b16 %v457
        %v1110 = vunpack.c.h.b16 %v457
        %v1111 = vunpack.c.l.b16 %v458
        %v1112 = vunpack.c.h.b16 %v458
        %v1113 = vunpack.c.l.b16 %v459
        %v1114 = vunpack.c.h.b16 %v459
        %v1115 = vunpack.c.l.b16 %v460
        %v1116 = vunpack.c.h.b16 %v460
        %v1117 = vunpack.c.l.b16 %v461
        %v1118 = vunpack.c.h.b16 %v461
        %v1119 = vunpack.c.l.b16 %v462
        %v1120 = vunpack.c.h.b16 %v462
        %v1121 = vunpack.c.l.b16 %v463
        %v1122 = vunpack.c.h.b16 %v463
        %v1123 = vunpack.c.l.b16 %v464
        %v1124 = vunpack.c.h.b16 %v464
        %v1125 = vunpack.c.l.b16 %v465
        %v1126 = vunpack.c.h.b16 %v465
        %v1127 = vunpack.c.l.b16 %v466
        %v1128 = vunpack.c.h.b16 %v466
        %v1129 = vunpack.c.l.b16 %v467
        %v1130 = vunpack.c.h.b16 %v467
        %v1131 = vunpack.c.l.b16 %v468
        %v1132 = vunpack.c.h.b16 %v468
        %v1133 = vunpack.c.l.b16 %v469
        %v1134 = vunpack.c.h.b16 %v469
        %v1135 = vunpack.c.l.b16 %v470
        %v1136 = vunpack.c.h.b16 %v470
        %v1137 = vunpack.c.l.b16 %v471
        %v1138 = vunpack.c.h.b16 %v471
        %v1139 = vunpack.c.l.b16 %v472
        %v1140 = vunpack.c.h.b16 %v472
        %v1141 = vunpack.c.l.b16 %v473
        %v1142 = vunpack.c.h.b16 %v473
        %v1143 = vunpack.c.l.b16 %v474
        %v1144 = vunpack.c.h.b16 %v474
        %v1145 = vunpack.c.l.b16 %v475
        %v1146 = vunpack.c.h.b16 %v475
        %v1147 = vunpack.c.l.b16 %v476
        %v1148 = vunpack.c.h.b16 %v476
        %v1149 = vunpack.c.l.b16 %v477
        %v1150 = vunpack.c.h.b16 %v477
        %v1151 = vunpack.c.l.b16 %v478
        %v1152 = vunpack.c.h.b16 %v478
        %v1153 = vunpack.c.l.b16 %v479
        %v1154 = vunpack.c.h.b16 %v479
        %v1155 = vunpack.c.l.b16 %v480
        %v1156 = vunpack.c.h.b16 %v480
        %v1157 = vunpack.c.l.b16 %v481
        %v1158 = vunpack.c.h.b16 %v481
        %v1159 = vunpack.c.l.b16 %v482
        %v1160 = vunpack.c.h.b16 %v482
        %v1161 = vunpack.c.l.b16 %v483
        %v1162 = vunpack.c.h.b16 %v483
        %v1163 = vunpack.c.l.b16 %v484
        %v1164 = vunpack.c.h.b16 %v484
        %v1165 = vunpack.c.l.b16 %v485
        %v1166 = vunpack.c.h.b16 %v485
        %v1167 = vunpack.c.l.b16 %v486
        %v1168 = vunpack.c.h.b16 %v486
        %v1169 = vunpack.c.l.b16 %v487
        %v1170 = vunpack.c.h.b16 %v487
        %v1171 = vunpack.c.l.b16 %v488
        %v1172 = vunpack.c.h.b16 %v488
        %v1173 = vunpack.c.l.b16 %v489
        %v1174 = vunpack.c.h.b16 %v489
        %v1175 = vunpack.c.l.b16 %v490
        %v1176 = vunpack.c.h.b16 %v490
        %v1177 = vunpack.c.l.b16 %v491
        %v1178 = vunpack.c.h.b16 %v491
        %v1179 = vunpack.c.l.b16 %v492
        %v1180 = vunpack.c.h.b16 %v492
        %v1181 = vunpack.c.l.b16 %v493
        %v1182 = vunpack.c.h.b16 %v493
        %v1183 = vunpack.c.l.b16 %v494
        %v1184 = vunpack.c.h.b16 %v494
        %v1185 = vunpack.c.l.b16 %v495
        %v1186 = vunpack.c.h.b16 %v495
        %v1187 = vunpack.c.l.b16 %v496
        %v1188 = vunpack.c.h.b16 %v496
        %v1189 = vunpack.c.l.b16 %v497
        %v1190 = vunpack.c.h.b16 %v497
        %v1191 = vunpack.c.l.b16 %v498
        %v1192 = vunpack.c.h.b16 %v498
        %v1193 = vunpack.c.l.b16 %v499
        %v1194 = vunpack.c.h.b16 %v499
        %v1195 = vunpack.c.l.b16 %v500
        %v1196 = vunpack.c.h.b16 %v500
        %v1197 = vunpack.c.l.b16 %v501
        %v1198 = vunpack.c.h.b16 %v501
        %v1199 = vunpack.c.l.b16 %v502
        %v1200 = vunpack.c.h.b16 %v502
        %v1201 = vunpack.c.l.b16 %v503
        %v1202 = vunpack.c.h.b16 %v503
        %v1203 = vunpack.c.l.b16 %v504
        %v1204 = vunpack.c.h.b16 %v504
        %v1205 = vunpack.c.l.b16 %v505
        %v1206 = vunpack.c.h.b16 %v505
        %v1207 = vunpack.c.l.b16 %v506
        %v1208 = vunpack.c.h.b16 %v506
        %v1209 = vunpack.c.l.b16 %v507
        %v1210 = vunpack.c.h.b16 %v507
        %v1211 = vunpack.c.l.b16 %v508
        %v1212 = vunpack.c.h.b16 %v508
        %v1213 = vunpack.c.l.b16 %v509
        %v1214 = vunpack.c.h.b16 %v509
        %v1215 = vunpack.c.l.b16 %v510
        %v1216 = vunpack.c.h.b16 %v510
        %v1217 = vunpack.c.l.b16 %v511
        %v1218 = vunpack.c.h.b16 %v511
        %v1219 = vunpack.c.l.b16 %v512
        %v1220 = vunpack.c.h.b16 %v512
        %v1221 = vunpack.c.l.b16 %v513
        %v1222 = vunpack.c.h.b16 %v513
        %v1223 = vunpack.c.l.b16 %v514
        %v1224 = vunpack.c.h.b16 %v514
        %v1225 = vunpack.c.l.b16 %v515
        %v1226 = vunpack.c.h.b16 %v515
        %v1227 = vunpack.c.l.b16 %v516
        %v1228 = vunpack.c.h.b16 %v516
        %v1229 = vunpack.c.l.b16 %v517
        %v1230 = vunpack.c.h.b16 %v517
        %v1231 = vunpack.c.l.b16 %v518
        %v1232 = vunpack.c.h.b16 %v518
        %v1233 = vunpack.c.l.b16 %v519
        %v1234 = vunpack.c.h.b16 %v519
        %v1235 = vunpack.c.l.b16 %v520
        %v1236 = vunpack.c.h.b16 %v520
        %v1237 = vunpack.c.l.b16 %v521
        %v1238 = vunpack.c.h.b16 %v521
        %v1239 = vunpack.c.l.b16 %v522
        %v1240 = vunpack.c.h.b16 %v522
        %v1241 = vunpack.c.l.b16 %v523
        %v1242 = vunpack.c.h.b16 %v523
        %v1243 = vunpack.c.l.b16 %v524
        %v1244 = vunpack.c.h.b16 %v524
        %v1245 = vunpack.c.l.b16 %v525
        %v1246 = vunpack.c.h.b16 %v525
        %v1247 = vunpack.c.l.b16 %v526
        %v1248 = vunpack.c.h.b16 %v526
        %v1249 = vunpack.c.l.b16 %v527
        %v1250 = vunpack.c.h.b16 %v527
        %v1251 = vunpack.c.l.b16 %v528
        %v1252 = vunpack.c.h.b16 %v528
        %v1253 = vunpack.c.l.b16 %v529
        %v1254 = vunpack.c.h.b16 %v529
        %v1255 = vunpack.c.l.b16 %v530
        %v1256 = vunpack.c.h.b16 %v530
        %v1257 = vunpack.c.l.b16 %v531
        %v1258 = vunpack.c.h.b16 %v531
        %v1259 = vunpack.c.l.b16 %v532
        %v1260 = vunpack.c.h.b16 %v532
        %v1261 = vunpack.c.l.b16 %v533
        %v1262 = vunpack.c.h.b16 %v533
        %v1263 = vunpack.c.l.b16 %v534
        %v1264 = vunpack.c.h.b16 %v534
        %v1265 = vunpack.c.l.b16 %v535
        %v1266 = vunpack.c.h.b16 %v535
        %v1267 = vunpack.c.l.b16 %v536
        %v1268 = vunpack.c.h.b16 %v536
        %v1269 = vunpack.c.l.b16 %v537
        %v1270 = vunpack.c.h.b16 %v537
        %v1271 = vunpack.c.l.b16 %v538
        %v1272 = vunpack.c.h.b16 %v538
        %v1273 = vunpack.c.l.b16 %v539
        %v1274 = vunpack.c.h.b16 %v539
        %v1275 = vunpack.c.l.b16 %v540
        %v1276 = vunpack.c.h.b16 %v540
        %v1277 = vunpack.c.l.b16 %v541
        %v1278 = vunpack.c.h.b16 %v541
        %v1279 = vunpack.c.l.b16 %v542
        %v1280 = vunpack.c.h.b16 %v542
        %v1281 = vunpack.c.l.b16 %v543
        %v1282 = vunpack.c.h.b16 %v543
        %v1283 = vunpack.c.l.b16 %v544
        %v1284 = vunpack.c.h.b16 %v544
        %v1285 = vunpack.c.l.b16 %v545
        %v1286 = vunpack.c.h.b16 %v545
        %v1287 = vunpack.c.l.b16 %v546
        %v1288 = vunpack.c.h.b16 %v546
        %v1289 = vunpack.c.l.b16 %v547
        %v1290 = vunpack.c.h.b16 %v547
        %v1291 = vunpack.c.l.b16 %v548
        %v1292 = vunpack.c.h.b16 %v548
        %v1293 = vunpack.c.l.b16 %v549
        %v1294 = vunpack.c.h.b16 %v549
        %v1295 = vunpack.c.l.b16 %v550
        %v1296 = vunpack.c.h.b16 %v550
        %v1297 = vunpack.c.l.b16 %v551
        %v1298 = vunpack.c.h.b16 %v551
        %v1299 = vunpack.c.l.b16 %v552
        %v1300 = vunpack.c.h.b16 %v552
        %v1301 = vunpack.c.l.b16 %v553
        %v1302 = vunpack.c.h.b16 %v553
        %v1303 = vunpack.c.l.b16 %v554
        %v1304 = vunpack.c.h.b16 %v554
        %v1305 = vunpack.c.l.b16 %v555
        %v1306 = vunpack.c.h.b16 %v555
        %v1307 = vunpack.c.l.b16 %v556
        %v1308 = vunpack.c.h.b16 %v556
        %v1309 = vunpack.c.l.b16 %v557
        %v1310 = vunpack.c.h.b16 %v557
        %v1311 = vunpack.c.l.b16 %v558
        %v1312 = vunpack.c.h.b16 %v558
        %v1313 = vunpack.c.l.b16 %v559
        %v1314 = vunpack.c.h.b16 %v559
        %v1315 = vunpack.c.l.b16 %v560
        %v1316 = vunpack.c.h.b16 %v560
        %v1317 = vunpack.c.l.b16 %v561
        %v1318 = vunpack.c.h.b16 %v561
        %v1319 = vunpack.c.l.b16 %v562
        %v1320 = vunpack.c.h.b16 %v562
        %v1321 = vunpack.c.l.b16 %v563
        %v1322 = vunpack.c.h.b16 %v563
        %v1323 = vunpack.c.l.b16 %v564
        %v1324 = vunpack.c.h.b16 %v564
        %v1325 = vunpack.c.l.b16 %v565
        %v1326 = vunpack.c.h.b16 %v565
        %v1327 = vunpack.c.l.b16 %v566
        %v1328 = vunpack.c.h.b16 %v566
        %v1329 = vunpack.c.l.b16 %v567
        %v1330 = vunpack.c.h.b16 %v567
        %v1331 = vunpack.c.l.b16 %v568
        %v1332 = vunpack.c.h.b16 %v568
        %v1333 = vunpack.c.l.b16 %v569
        %v1334 = vunpack.c.h.b16 %v569
        %v1335 = vunpack.c.l.b16 %v570
        %v1336 = vunpack.c.h.b16 %v570
        %v1337 = vunpack.c.l.b16 %v571
        %v1338 = vunpack.c.h.b16 %v571
        %v1339 = vunpack.c.l.b16 %v572
        %v1340 = vunpack.c.h.b16 %v572
        %v1341 = vunpack.c.l.b16 %v573
        %v1342 = vunpack.c.h.b16 %v573
        %v1343 = vunpack.c.l.b16 %v574
        %v1344 = vunpack.c.h.b16 %v574
        %v1345 = vunpack.c.l.b16 %v575
        %v1346 = vunpack.c.h.b16 %v575
        %v1347 = vunpack.c.l.b16 %v576
        %v1348 = vunpack.c.h.b16 %v576
        %v1349 = vunpack.c.l.b16 %v577
        %v1350 = vunpack.c.h.b16 %v577
        %v1351 = vunpack.c.l.b16 %v578
        %v1352 = vunpack.c.h.b16 %v578
        %v1353 = vunpack.c.l.b16 %v579
        %v1354 = vunpack.c.h.b16 %v579
        %v1355 = vunpack.c.l.b16 %v580
        %v1356 = vunpack.c.h.b16 %v580
        %v1357 = vunpack.c.l.b16 %v581
        %v1358 = vunpack.c.h.b16 %v581
        %v1359 = vunpack.c.l.b16 %v582
        %v1360 = vunpack.c.h.b16 %v582
        %v1361 = vunpack.c.l.b16 %v583
        %v1362 = vunpack.c.h.b16 %v583
        %v1363 = vunpack.c.l.b16 %v584
        %v1364 = vunpack.c.h.b16 %v584
        %v1365 = vunpack.c.l.b16 %v585
        %v1366 = vunpack.c.h.b16 %v585
        %v1367 = vunpack.c.l.b16 %v586
        %v1368 = vunpack.c.h.b16 %v586
        %v1369 = vunpack.c.l.b16 %v587
        %v1370 = vunpack.c.h.b16 %v587
        %v1371 = vunpack.c.l.b16 %v588
        %v1372 = vunpack.c.h.b16 %v588
        %v1373 = vunpack.c.l.b16 %v589
        %v1374 = vunpack.c.h.b16 %v589
        %v1375 = vunpack.c.l.b16 %v590
        %v1376 = vunpack.c.h.b16 %v590
        %v1377 = vunpack.c.l.b16 %v591
        %v1378 = vunpack.c.h.b16 %v591
        %v1379 = vunpack.c.l.b16 %v592
        %v1380 = vunpack.c.h.b16 %v592
        %v1381 = vunpack.c.l.b16 %v593
        %v1382 = vunpack.c.h.b16 %v593
        %v1383 = vunpack.c.l.b16 %v594
        %v1384 = vunpack.c.h.b16 %v594
        %v1385 = vunpack.c.l.b16 %v595
        %v1386 = vunpack.c.h.b16 %v595
        %v1387 = vunpack.c.l.b16 %v596
        %v1388 = vunpack.c.h.b16 %v596
        %v1389 = vunpack.c.l.b16 %v597
        %v1390 = vunpack.c.h.b16 %v597
        %v1391 = vunpack.c.l.b16 %v598
        %v1392 = vunpack.c.h.b16 %v598
        %v1393 = vunpack.c.l.b16 %v599
        %v1394 = vunpack.c.h.b16 %v599
        %v1395 = vunpack.c.l.b16 %v600
        %v1396 = vunpack.c.h.b16 %v600
        %v1397 = vunpack.c.l.b16 %v601
        %v1398 = vunpack.c.h.b16 %v601
        %v1399 = vunpack.c.l.b16 %v602
        %v1400 = vunpack.c.h.b16 %v602
        %v1401 = vunpack.c.l.b16 %v603
        %v1402 = vunpack.c.h.b16 %v603
        %v1403 = vunpack.c.l.b16 %v604
        %v1404 = vunpack.c.h.b16 %v604
        %v1405 = vunpack.c.l.b16 %v605
        %v1406 = vunpack.c.h.b16 %v605
        %v1407 = vunpack.c.l.b16 %v606
        %v1408 = vunpack.c.h.b16 %v606
        %v1409 = vunpack.c.l.b16 %v607
        %v1410 = vunpack.c.h.b16 %v607
        %v1411 = vunpack.c.l.b16 %v608
        %v1412 = vunpack.c.h.b16 %v608
        %v1413 = vunpack.c.l.b16 %v609
        %v1414 = vunpack.c.h.b16 %v609
        %v1415 = vunpack.c.l.b16 %v610
        %v1416 = vunpack.c.h.b16 %v610
        %v1417 = vunpack.c.l.b16 %v611
        %v1418 = vunpack.c.h.b16 %v611
        %v1419 = vunpack.c.l.b16 %v612
        %v1420 = vunpack.c.h.b16 %v612
        %v1421 = vunpack.c.l.b16 %v613
        %v1422 = vunpack.c.h.b16 %v613
        %v1423 = vunpack.c.l.b16 %v614
        %v1424 = vunpack.c.h.b16 %v614
        %v1425 = vunpack.c.l.b16 %v615
        %v1426 = vunpack.c.h.b16 %v615
        %v1427 = vunpack.c.l.b16 %v616
        %v1428 = vunpack.c.h.b16 %v616
        %v1429 = vunpack.c.l.b16 %v617
        %v1430 = vunpack.c.h.b16 %v617
        %v1431 = vunpack.c.l.b16 %v618
        %v1432 = vunpack.c.h.b16 %v618
        %v1433 = vunpack.c.l.b16 %v619
        %v1434 = vunpack.c.h.b16 %v619
        %v1435 = vunpack.c.l.b16 %v620
        %v1436 = vunpack.c.h.b16 %v620
        %v1437 = vunpack.c.l.b16 %v621
        %v1438 = vunpack.c.h.b16 %v621
        %v1439 = vunpack.c.l.b16 %v622
        %v1440 = vunpack.c.h.b16 %v622
        %v1441 = vunpack.c.l.b16 %v623
        %v1442 = vunpack.c.h.b16 %v623
        %v1443 = vunpack.c.l.b16 %v624
        %v1444 = vunpack.c.h.b16 %v624
        %v1445 = vunpack.c.l.b16 %v625
        %v1446 = vunpack.c.h.b16 %v625
        %v1447 = vunpack.c.l.b16 %v626
        %v1448 = vunpack.c.h.b16 %v626
        %v1449 = vunpack.c.l.b16 %v627
        %v1450 = vunpack.c.h.b16 %v627
        %v1451 = vunpack.c.l.b16 %v628
        %v1452 = vunpack.c.h.b16 %v628
        %v1453 = vunpack.c.l.b16 %v629
        %v1454 = vunpack.c.h.b16 %v629
        %v1455 = vunpack.c.l.b16 %v630
        %v1456 = vunpack.c.h.b16 %v630
        %v1457 = vunpack.c.l.b16 %v631
        %v1458 = vunpack.c.h.b16 %v631
        %v1459 = vunpack.c.l.b16 %v632
        %v1460 = vunpack.c.h.b16 %v632
        %v1461 = vunpack.c.l.b16 %v633
        %v1462 = vunpack.c.h.b16 %v633
        %v1463 = vunpack.c.l.b16 %v634
        %v1464 = vunpack.c.h.b16 %v634
        %v1465 = vunpack.c.l.b16 %v635
        %v1466 = vunpack.c.h.b16 %v635
        %v1467 = vunpack.c.l.b16 %v636
        %v1468 = vunpack.c.h.b16 %v636
        %v1469 = vunpack.c.l.b16 %v637
        %v1470 = vunpack.c.h.b16 %v637
        %v1471 = vunpack.c.l.b16 %v638
        %v1472 = vunpack.c.h.b16 %v638
        %v1473 = vunpack.c.l.b16 %v639
        %v1474 = vunpack.c.h.b16 %v639
        %v1475 = vunpack.c.l.b16 %v640
        %v1476 = vunpack.c.h.b16 %v640
        %v1477 = vunpack.c.l.b16 %v641
        %v1478 = vunpack.c.h.b16 %v641
        %v1479 = vunpack.c.l.b16 %v642
        %v1480 = vunpack.c.h.b16 %v642
        %v1481 = vunpack.c.l.b16 %v643
        %v1482 = vunpack.c.h.b16 %v643
        %v1483 = vunpack.c.l.b16 %v644
        %v1484 = vunpack.c.h.b16 %v644
        %v1485 = vunpack.c.l.b16 %v645
        %v1486 = vunpack.c.h.b16 %v645
        %v1487 = vunpack.c.l.b16 %v646
        %v1488 = vunpack.c.h.b16 %v646
        %v1489 = vunpack.c.l.b16 %v647
        %v1490 = vunpack.c.h.b16 %v647
        %v1491 = vunpack.c.l.b16 %v648
        %v1492 = vunpack.c.h.b16 %v648
        %v1493 = vunpack.c.l.b16 %v649
        %v1494 = vunpack.c.h.b16 %v649
        %v1495 = vunpack.c.l.b16 %v650
        %v1496 = vunpack.c.h.b16 %v650
        %v1497 = vunpack.c.l.b16 %v651
        %v1498 = vunpack.c.h.b16 %v651
        %v1499 = vunpack.c.l.b16 %v652
        %v1500 = vunpack.c.h.b16 %v652
        %v1501 = vunpack.c.l.b16 %v653
        %v1502 = vunpack.c.h.b16 %v653
        %v1503 = vunpack.c.l.b16 %v654
        %v1504 = vunpack.c.h.b16 %v654
        %v1505 = vunpack.c.l.b16 %v655
        %v1506 = vunpack.c.h.b16 %v655
        %v1507 = vunpack.c.l.b16 %v656
        %v1508 = vunpack.c.h.b16 %v656
        %v1509 = vunpack.c.l.b16 %v657
        %v1510 = vunpack.c.h.b16 %v657
        %v1511 = vunpack.c.l.b16 %v658
        %v1512 = vunpack.c.h.b16 %v658
        %v1513 = vunpack.c.l.b16 %v659
        %v1514 = vunpack.c.h.b16 %v659
        %v1515 = vunpack.c.l.b16 %v660
        %v1516 = vunpack.c.h.b16 %v660
        %v1517 = vunpack.c.l.b16 %v661
        %v1518 = vunpack.c.h.b16 %v661
        %v1519 = vunpack.c.l.b16 %v662
        %v1520 = vunpack.c.h.b16 %v662
        %v1521 = vunpack.c.l.b16 %v663
        %v1522 = vunpack.c.h.b16 %v663
        %v1523 = vunpack.c.l.b16 %v664
        %v1524 = vunpack.c.h.b16 %v664
        %v1525 = vunpack.c.l.b16 %v665
        %v1526 = vunpack.c.h.b16 %v665
        %v1527 = vunpack.c.l.b16 %v666
        %v1528 = vunpack.c.h.b16 %v666
        %v1529 = vunpack.c.l.b16 %v667
        %v1530 = vunpack.c.h.b16 %v667
        %v1531 = vunpack.c.l.b16 %v668
        %v1532 = vunpack.c.h.b16 %v668
        %v1533 = vunpack.c.l.b16 %v669
        %v1534 = vunpack.c.h.b16 %v669
        %v1535 = vunpack.c.l.b16 %v670
        %v1536 = vunpack.c.h.b16 %v670
        %v1537 = vunpack.c.l.b16 %v671
        %v1538 = vunpack.c.h.b16 %v671
        %v1539 = vunpack.c.l.b16 %v672
        %v1540 = vunpack.c.h.b16 %v672
        %v1541 = vunpack.c.l.b16 %v673
        %v1542 = vunpack.c.h.b16 %v673
        %v1543 = vunpack.c.l.b16 %v674
        %v1544 = vunpack.c.h.b16 %v674
        %v1545 = vunpack.c.l.b16 %v675
        %v1546 = vunpack.c.h.b16 %v675
        %v1547 = vunpack.c.l.b16 %v676
        %v1548 = vunpack.c.h.b16 %v676
        %v1549 = vunpack.c.l.b16 %v677
        %v1550 = vunpack.c.h.b16 %v677
        %v1551 = vunpack.c.l.b16 %v678
        %v1552 = vunpack.c.h.b16 %v678
        %v1553 = vunpack.c.l.b16 %v679
        %v1554 = vunpack.c.h.b16 %v679
        %v1555 = vunpack.c.l.b16 %v680
        %v1556 = vunpack.c.h.b16 %v680
        %v1557 = vunpack.c.l.b16 %v681
        %v1558 = vunpack.c.h.b16 %v681
        %v1559 = vunpack.c.l.b16 %v682
        %v1560 = vunpack.c.h.b16 %v682
        %v1561 = vunpack.c.l.b16 %v683
        %v1562 = vunpack.c.h.b16 %v683
        %v1563 = vunpack.c.l.b16 %v684
        %v1564 = vunpack.c.h.b16 %v684
        %v1565 = vunpack.c.l.b16 %v685
        %v1566 = vunpack.c.h.b16 %v685
        %v1567 = vunpack.c.l.b16 %v686
        %v1568 = vunpack.c.h.b16 %v686
        %v1569 = vunpack.c.l.b16 %v687
        %v1570 = vunpack.c.h.b16 %v687
        %v1571 = vunpack.c.l.b16 %v688
        %v1572 = vunpack.c.h.b16 %v688
        %v1573 = vunpack.c.l.b16 %v689
        %v1574 = vunpack.c.h.b16 %v689
        %v1575 = vunpack.c.l.b16 %v690
        %v1576 = vunpack.c.h.b16 %v690
        %v1577 = vunpack.c.l.b16 %v691
        %v1578 = vunpack.c.h.b16 %v691
        %v1579 = vunpack.c.l.b16 %v692
        %v1580 = vunpack.c.h.b16 %v692
        %v1581 = vunpack.c.l.b16 %v693
        %v1582 = vunpack.c.h.b16 %v693
        %v1583 = vunpack.c.l.b16 %v694
        %v1584 = vunpack.c.h.b16 %v694
        %v1585 = vunpack.c.l.b16 %v695
        %v1586 = vunpack.c.h.b16 %v695
        %v1587 = vunpack.c.l.b16 %v696
        %v1588 = vunpack.c.h.b16 %v696
        %v1589 = vunpack.c.l.b16 %v697
        %v1590 = vunpack.c.h.b16 %v697
        %v1591 = vunpack.c.l.b16 %v698
        %v1592 = vunpack.c.h.b16 %v698
        %v1593 = vunpack.c.l.b16 %v699
        %v1594 = vunpack.c.h.b16 %v699
        %v1595 = vunpack.c.l.b16 %v700
        %v1596 = vunpack.c.h.b16 %v700
        %v1597 = vunpack.c.l.b16 %v701
        %v1598 = vunpack.c.h.b16 %v701
        %v1599 = vunpack.c.l.b16 %v702
        %v1600 = vunpack.c.h.b16 %v702
        %v1601 = vunpack.c.l.b16 %v703
        %v1602 = vunpack.c.h.b16 %v703
        %v1603 = vunpack.c.l.b16 %v704
        %v1604 = vunpack.c.h.b16 %v704
        %v1605 = vunpack.c.l.b16 %v705
        %v1606 = vunpack.c.h.b16 %v705
        %v1607 = vunpack.c.l.b16 %v706
        %v1608 = vunpack.c.h.b16 %v706
        %v1609 = vunpack.c.l.b16 %v707
        %v1610 = vunpack.c.h.b16 %v707
        %v1611 = vunpack.c.l.b16 %v708
        %v1612 = vunpack.c.h.b16 %v708
        %v1613 = vunpack.c.l.b16 %v709
        %v1614 = vunpack.c.h.b16 %v709
        %v1615 = vunpack.c.l.b16 %v710
        %v1616 = vunpack.c.h.b16 %v710
        %v1617 = vunpack.c.l.b16 %v711
        %v1618 = vunpack.c.h.b16 %v711
        %v1619 = vunpack.c.l.b16 %v712
        %v1620 = vunpack.c.h.b16 %v712
        %v1621 = vunpack.c.l.b16 %v713
        %v1622 = vunpack.c.h.b16 %v713
        %v1623 = vunpack.c.l.b16 %v714
        %v1624 = vunpack.c.h.b16 %v714
        %v1625 = vunpack.c.l.b16 %v715
        %v1626 = vunpack.c.h.b16 %v715
        %v1627 = vunpack.c.l.b16 %v716
        %v1628 = vunpack.c.h.b16 %v716
        %v1629 = vunpack.c.l.b16 %v717
        %v1630 = vunpack.c.h.b16 %v717
        %v1631 = vunpack.c.l.b16 %v718
        %v1632 = vunpack.c.h.b16 %v718
        %v1633 = vunpack.c.l.b16 %v719
        %v1634 = vunpack.c.h.b16 %v719
        %v1635 = vunpack.c.l.b16 %v720
        %v1636 = vunpack.c.h.b16 %v720
        %v1637 = vunpack.c.l.b16 %v721
        %v1638 = vunpack.c.h.b16 %v721
        %v1639 = vunpack.c.l.b16 %v722
        %v1640 = vunpack.c.h.b16 %v722
        %v1641 = vunpack.c.l.b16 %v723
        %v1642 = vunpack.c.h.b16 %v723
        %v1643 = vunpack.c.l.b16 %v724
        %v1644 = vunpack.c.h.b16 %v724
        %v1645 = vunpack.c.l.b16 %v725
        %v1646 = vunpack.c.h.b16 %v725
        %v1647 = vunpack.c.l.b16 %v726
        %v1648 = vunpack.c.h.b16 %v726
        %v1649 = vunpack.c.l.b16 %v727
        %v1650 = vunpack.c.h.b16 %v727
        %v1651 = vunpack.c.l.b16 %v728
        %v1652 = vunpack.c.h.b16 %v728
        %v1653 = vunpack.c.l.b16 %v729
        %v1654 = vunpack.c.h.b16 %v729
        %v1655 = vunpack.c.l.b16 %v730
        %v1656 = vunpack.c.h.b16 %v730
        %v1657 = vunpack.c.l.b16 %v731
        %v1658 = vunpack.c.h.b16 %v731
        %v1659 = vunpack.c.l.b16 %v732
        %v1660 = vunpack.c.h.b16 %v732
        %v1661 = vpack.c.b16 %v1097, %v1085
        %v1662 = vpack.c.b16 %v1098, %v1086
        %v1663 = vpack.c.b16 %v1099, %v1087
        %v1664 = vpack.c.b16 %v1100, %v1088
        %v1665 = vpack.c.b16 %v1101, %v1089
        %v1666 = vpack.c.b16 %v1102, %v1090
        %v1667 = vpack.c.b16 %v1103, %v1091
        %v1668 = vpack.c.b16 %v1104, %v1092
        %v1669 = vpack.c.b16 %v1105, %v1093
        %v1670 = vpack.c.b16 %v1106, %v1094
        %v1671 = vpack.c.b16 %v1107, %v1095
        %v1672 = vpack.c.b16 %v1108, %v1096
        %v1673 = vpack.c.b16 %v1121, %v1109
        %v1674 = vpack.c.b16 %v1122, %v1110
        %v1675 = vpack.c.b16 %v1123, %v1111
        %v1676 = vpack.c.b16 %v1124, %v1112
        %v1677 = vpack.c.b16 %v1125, %v1113
        %v1678 = vpack.c.b16 %v1126, %v1114
        %v1679 = vpack.c.b16 %v1127, %v1115
        %v1680 = vpack.c.b16 %v1128, %v1116
        %v1681 = vpack.c.b16 %v1129, %v1117
        %v1682 = vpack.c.b16 %v1130, %v1118
        %v1683 = vpack.c.b16 %v1131, %v1119
        %v1684 = vpack.c.b16 %v1132, %v1120
        %v1685 = vpack.c.b16 %v1145, %v1133
        %v1686 = vpack.c.b16 %v1146, %v1134
        %v1687 = vpack.c.b16 %v1147, %v1135
        %v1688 = vpack.c.b16 %v1148, %v1136
        %v1689 = vpack.c.b16 %v1149, %v1137
        %v1690 = vpack.c.b16 %v1150, %v1138
        %v1691 = vpack.c.b16 %v1151, %v1139
        %v1692 = vpack.c.b16 %v1152, %v1140
        %v1693 = vpack.c.b16 %v1153, %v1141
        %v1694 = vpack.c.b16 %v1154, %v1142
        %v1695 = vpack.c.b16 %v1155, %v1143
        %v1696 = vpack.c.b16 %v1156, %v1144
        %v1697 = vpack.c.b16 %v1169, %v1157
        %v1698 = vpack.c.b16 %v1170, %v1158
        %v1699 = vpack.c.b16 %v1171, %v1159
        %v1700 = vpack.c.b16 %v1172, %v1160
        %v1701 = vpack.c.b16 %v1173, %v1161
        %v1702 = vpack.c.b16 %v1174, %v1162
        %v1703 = vpack.c.b16 %v1175, %v1163
        %v1704 = vpack.c.b16 %v1176, %v1164
        %v1705 = vpack.c.b16 %v1177, %v1165
        %v1706 = vpack.c.b16 %v1178, %v1166
        %v1707 = vpack.c.b16 %v1179, %v1167
        %v1708 = vpack.c.b16 %v1180, %v1168
        %v1709 = vpack.c.b16 %v1193, %v1181
        %v1710 = vpack.c.b16 %v1194, %v1182
        %v1711 = vpack.c.b16 %v1195, %v1183
        %v1712 = vpack.c.b16 %v1196, %v1184
        %v1713 = vpack.c.b16 %v1197, %v1185
        %v1714 = vpack.c.b16 %v1198, %v1186
        %v1715 = vpack.c.b16 %v1199, %v1187
        %v1716 = vpack.c.b16 %v1200, %v1188
        %v1717 = vpack.c.b16 %v1201, %v1189
        %v1718 = vpack.c.b16 %v1202, %v1190
        %v1719 = vpack.c.b16 %v1203, %v1191
        %v1720 = vpack.c.b16 %v1204, %v1192
        %v1721 = vpack.c.b16 %v1217, %v1205
        %v1722 = vpack.c.b16 %v1218, %v1206
        %v1723 = vpack.c.b16 %v1219, %v1207
        %v1724 = vpack.c.b16 %v1220, %v1208
        %v1725 = vpack.c.b16 %v1221, %v1209
        %v1726 = vpack.c.b16 %v1222, %v1210
        %v1727 = vpack.c.b16 %v1223, %v1211
        %v1728 = vpack.c.b16 %v1224, %v1212
        %v1729 = vpack.c.b16 %v1225, %v1213
        %v1730 = vpack.c.b16 %v1226, %v1214
        %v1731 = vpack.c.b16 %v1227, %v1215
        %v1732 = vpack.c.b16 %v1228, %v1216
        %v1733 = vpack.c.b16 %v1241, %v1229
        %v1734 = vpack.c.b16 %v1242, %v1230
        %v1735 = vpack.c.b16 %v1243, %v1231
        %v1736 = vpack.c.b16 %v1244, %v1232
        %v1737 = vpack.c.b16 %v1245, %v1233
        %v1738 = vpack.c.b16 %v1246, %v1234
        %v1739 = vpack.c.b16 %v1247, %v1235
        %v1740 = vpack.c.b16 %v1248, %v1236
        %v1741 = vpack.c.b16 %v1249, %v1237
        %v1742 = vpack.c.b16 %v1250, %v1238
        %v1743 = vpack.c.b16 %v1251, %v1239
        %v1744 = vpack.c.b16 %v1252, %v1240
        %v1745 = vpack.c.b16 %v1265, %v1253
        %v1746 = vpack.c.b16 %v1266, %v1254
        %v1747 = vpack.c.b16 %v1267, %v1255
        %v1748 = vpack.c.b16 %v1268, %v1256
        %v1749 = vpack.c.b16 %v1269, %v1257
        %v1750 = vpack.c.b16 %v1270, %v1258
        %v1751 = vpack.c.b16 %v1271, %v1259
        %v1752 = vpack.c.b16 %v1272, %v1260
        %v1753 = vpack.c.b16 %v1273, %v1261
        %v1754 = vpack.c.b16 %v1274, %v1262
        %v1755 = vpack.c.b16 %v1275, %v1263
        %v1756 = vpack.c.b16 %v1276, %v1264
        %v1757 = vpack.c.b16 %v1289, %v1277
        %v1758 = vpack.c.b16 %v1290, %v1278
        %v1759 = vpack.c.b16 %v1291, %v1279
        %v1760 = vpack.c.b16 %v1292, %v1280
        %v1761 = vpack.c.b16 %v1293, %v1281
        %v1762 = vpack.c.b16 %v1294, %v1282
        %v1763 = vpack.c.b16 %v1295, %v1283
        %v1764 = vpack.c.b16 %v1296, %v1284
        %v1765 = vpack.c.b16 %v1297, %v1285
        %v1766 = vpack.c.b16 %v1298, %v1286
        %v1767 = vpack.c.b16 %v1299, %v1287
        %v1768 = vpack.c.b16 %v1300, %v1288
        %v1769 = vpack.c.b16 %v1313, %v1301
        %v1770 = vpack.c.b16 %v1314, %v1302
        %v1771 = vpack.c.b16 %v1315, %v1303
        %v1772 = vpack.c.b16 %v1316, %v1304
        %v1773 = vpack.c.b16 %v1317, %v1305
        %v1774 = vpack.c.b16 %v1318, %v1306
        %v1775 = vpack.c.b16 %v1319, %v1307
        %v1776 = vpack.c.b16 %v1320, %v1308
        %v1777 = vpack.c.b16 %v1321, %v1309
        %v1778 = vpack.c.b16 %v1322, %v1310
        %v1779 = vpack.c.b16 %v1323, %v1311
        %v1780 = vpack.c.b16 %v1324, %v1312
        %v1781 = vpack.c.b16 %v1337, %v1325
        %v1782 = vpack.c.b16 %v1338, %v1326
        %v1783 = vpack.c.b16 %v1339, %v1327
        %v1784 = vpack.c.b16 %v1340, %v1328
        %v1785 = vpack.c.b16 %v1341, %v1329
        %v1786 = vpack.c.b16 %v1342, %v1330
        %v1787 = vpack.c.b16 %v1343, %v1331
        %v1788 = vpack.c.b16 %v1344, %v1332
        %v1789 = vpack.c.b16 %v1345, %v1333
        %v1790 = vpack.c.b16 %v1346, %v1334
        %v1791 = vpack.c.b16 %v1347, %v1335
        %v1792 = vpack.c.b16 %v1348, %v1336
        %v1793 = vpack.c.b16 %v1361, %v1349
        %v1794 = vpack.c.b16 %v1362, %v1350
        %v1795 = vpack.c.b16 %v1363, %v1351
        %v1796 = vpack.c.b16 %v1364, %v1352
        %v1797 = vpack.c.b16 %v1365, %v1353
        %v1798 = vpack.c.b16 %v1366, %v1354
        %v1799 = vpack.c.b16 %v1367, %v1355
        %v1800 = vpack.c.b16 %v1368, %v1356
        %v1801 = vpack.c.b16 %v1369, %v1357
        %v1802 = vpack.c.b16 %v1370, %v1358
        %v1803 = vpack.c.b16 %v1371, %v1359
        %v1804 = vpack.c.b16 %v1372, %v1360
        %v1805 = vpack.c.b16 %v1385, %v1373
        %v1806 = vpack.c.b16 %v1386, %v1374
        %v1807 = vpack.c.b16 %v1387, %v1375
        %v1808 = vpack.c.b16 %v1388, %v1376
        %v1809 = vpack.c.b16 %v1389, %v1377
        %v1810 = vpack.c.b16 %v1390, %v1378
        %v1811 = vpack.c.b16 %v1391, %v1379
        %v1812 = vpack.c.b16 %v1392, %v1380
        %v1813 = vpack.c.b16 %v1393, %v1381
        %v1814 = vpack.c.b16 %v1394, %v1382
        %v1815 = vpack.c.b16 %v1395, %v1383
        %v1816 = vpack.c.b16 %v1396, %v1384
        %v1817 = vpack.c.b16 %v1409, %v1397
        %v1818 = vpack.c.b16 %v1410, %v1398
        %v1819 = vpack.c.b16 %v1411, %v1399
        %v1820 = vpack.c.b16 %v1412, %v1400
        %v1821 = vpack.c.b16 %v1413, %v1401
        %v1822 = vpack.c.b16 %v1414, %v1402
        %v1823 = vpack.c.b16 %v1415, %v1403
        %v1824 = vpack.c.b16 %v1416, %v1404
        %v1825 = vpack.c.b16 %v1417, %v1405
        %v1826 = vpack.c.b16 %v1418, %v1406
        %v1827 = vpack.c.b16 %v1419, %v1407
        %v1828 = vpack.c.b16 %v1420, %v1408
        %v1829 = vpack.c.b16 %v1433, %v1421
        %v1830 = vpack.c.b16 %v1434, %v1422
        %v1831 = vpack.c.b16 %v1435, %v1423
        %v1832 = vpack.c.b16 %v1436, %v1424
        %v1833 = vpack.c.b16 %v1437, %v1425
        %v1834 = vpack.c.b16 %v1438, %v1426
        %v1835 = vpack.c.b16 %v1439, %v1427
        %v1836 = vpack.c.b16 %v1440, %v1428
        %v1837 = vpack.c.b16 %v1441, %v1429
        %v1838 = vpack.c.b16 %v1442, %v1430
        %v1839 = vpack.c.b16 %v1443, %v1431
        %v1840 = vpack.c.b16 %v1444, %v1432
        %v1841 = vpack.c.b16 %v1457, %v1445
        %v1842 = vpack.c.b16 %v1458, %v1446
        %v1843 = vpack.c.b16 %v1459, %v1447
        %v1844 = vpack.c.b16 %v1460, %v1448
        %v1845 = vpack.c.b16 %v1461, %v1449
        %v1846 = vpack.c.b16 %v1462, %v1450
        %v1847 = vpack.c.b16 %v1463, %v1451
        %v1848 = vpack.c.b16 %v1464, %v1452
        %v1849 = vpack.c.b16 %v1465, %v1453
        %v1850 = vpack.c.b16 %v1466, %v1454
        %v1851 = vpack.c.b16 %v1467, %v1455
        %v1852 = vpack.c.b16 %v1468, %v1456
        %v1853 = vpack.c.b16 %v1481, %v1469
        %v1854 = vpack.c.b16 %v1482, %v1470
        %v1855 = vpack.c.b16 %v1483, %v1471
        %v1856 = vpack.c.b16 %v1484, %v1472
        %v1857 = vpack.c.b16 %v1485, %v1473
        %v1858 = vpack.c.b16 %v1486, %v1474
        %v1859 = vpack.c.b16 %v1487, %v1475
        %v1860 = vpack.c.b16 %v1488, %v1476
        %v1861 = vpack.c.b16 %v1489, %v1477
        %v1862 = vpack.c.b16 %v1490, %v1478
        %v1863 = vpack.c.b16 %v1491, %v1479
        %v1864 = vpack.c.b16 %v1492, %v1480
        %v1865 = vpack.c.b16 %v1505, %v1493
        %v1866 = vpack.c.b16 %v1506, %v1494
        %v1867 = vpack.c.b16 %v1507, %v1495
        %v1868 = vpack.c.b16 %v1508, %v1496
        %v1869 = vpack.c.b16 %v1509, %v1497
        %v1870 = vpack.c.b16 %v1510, %v1498
        %v1871 = vpack.c.b16 %v1511, %v1499
        %v1872 = vpack.c.b16 %v1512, %v1500
        %v1873 = vpack.c.b16 %v1513, %v1501
        %v1874 = vpack.c.b16 %v1514, %v1502
        %v1875 = vpack.c.b16 %v1515, %v1503
        %v1876 = vpack.c.b16 %v1516, %v1504
        %v1877 = vpack.c.b16 %v1529, %v1517
        %v1878 = vpack.c.b16 %v1530, %v1518
        %v1879 = vpack.c.b16 %v1531, %v1519
        %v1880 = vpack.c.b16 %v1532, %v1520
        %v1881 = vpack.c.b16 %v1533, %v1521
        %v1882 = vpack.c.b16 %v1534, %v1522
        %v1883 = vpack.c.b16 %v1535, %v1523
        %v1884 = vpack.c.b16 %v1536, %v1524
        %v1885 = vpack.c.b16 %v1537, %v1525
        %v1886 = vpack.c.b16 %v1538, %v1526
        %v1887 = vpack.c.b16 %v1539, %v1527
        %v1888 = vpack.c.b16 %v1540, %v1528
        %v1889 = vpack.c.b16 %v1553, %v1541
        %v1890 = vpack.c.b16 %v1554, %v1542
        %v1891 = vpack.c.b16 %v1555, %v1543
        %v1892 = vpack.c.b16 %v1556, %v1544
        %v1893 = vpack.c.b16 %v1557, %v1545
        %v1894 = vpack.c.b16 %v1558, %v1546
        %v1895 = vpack.c.b16 %v1559, %v1547
        %v1896 = vpack.c.b16 %v1560, %v1548
        %v1897 = vpack.c.b16 %v1561, %v1549
        %v1898 = vpack.c.b16 %v1562, %v1550
        %v1899 = vpack.c.b16 %v1563, %v1551
        %v1900 = vpack.c.b16 %v1564, %v1552
        %v1901 = vpack.c.b16 %v1577, %v1565
        %v1902 = vpack.c.b16 %v1578, %v1566
        %v1903 = vpack.c.b16 %v1579, %v1567
        %v1904 = vpack.c.b16 %v1580, %v1568
        %v1905 = vpack.c.b16 %v1581, %v1569
        %v1906 = vpack.c.b16 %v1582, %v1570
        %v1907 = vpack.c.b16 %v1583, %v1571
        %v1908 = vpack.c.b16 %v1584, %v1572
        %v1909 = vpack.c.b16 %v1585, %v1573
        %v1910 = vpack.c.b16 %v1586, %v1574
        %v1911 = vpack.c.b16 %v1587, %v1575
        %v1912 = vpack.c.b16 %v1588, %v1576
        %v1913 = vpack.c.b16 %v1601, %v1589
        %v1914 = vpack.c.b16 %v1602, %v1590
        %v1915 = vpack.c.b16 %v1603, %v1591
        %v1916 = vpack.c.b16 %v1604, %v1592
        %v1917 = vpack.c.b16 %v1605, %v1593
        %v1918 = vpack.c.b16 %v1606, %v1594
        %v1919 = vpack.c.b16 %v1607, %v1595
        %v1920 = vpack.c.b16 %v1608, %v1596
        %v1921 = vpack.c.b16 %v1609, %v1597
        %v1922 = vpack.c.b16 %v1610, %v1598
        %v1923 = vpack.c.b16 %v1611, %v1599
        %v1924 = vpack.c.b16 %v1612, %v1600
        %v1925 = vpack.c.b16 %v1625, %v1613
        %v1926 = vpack.c.b16 %v1626, %v1614
        %v1927 = vpack.c.b16 %v1627, %v1615
        %v1928 = vpack.c.b16 %v1628, %v1616
        %v1929 = vpack.c.b16 %v1629, %v1617
        %v1930 = vpack.c.b16 %v1630, %v1618
        %v1931 = vpack.c.b16 %v1631, %v1619
        %v1932 = vpack.c.b16 %v1632, %v1620
        %v1933 = vpack.c.b16 %v1633, %v1621
        %v1934 = vpack.c.b16 %v1634, %v1622
        %v1935 = vpack.c.b16 %v1635, %v1623
        %v1936 = vpack.c.b16 %v1636, %v1624
        %v1937 = vpack.c.b16 %v1649, %v1637
        %v1938 = vpack.c.b16 %v1650, %v1638
        %v1939 = vpack.c.b16 %v1651, %v1639
        %v1940 = vpack.c.b16 %v1652, %v1640
        %v1941 = vpack.c.b16 %v1653, %v1641
        %v1942 = vpack.c.b16 %v1654, %v1642
        %v1943 = vpack.c.b16 %v1655, %v1643
        %v1944 = vpack.c.b16 %v1656, %v1644
        %v1945 = vpack.c.b16 %v1657, %v1645
        %v1946 = vpack.c.b16 %v1658, %v1646
        %v1947 = vpack.c.b16 %v1659, %v1647
        %v1948 = vpack.c.b16 %v1660, %v1648
        %2237 = vmatprep.subr.bf16.mxu0 %v1662
        %2238 = vmatpush1.bf16.msra.mxu0 %v1661
        %2239 = vmatprep.subr.bf16.mxu0 %v1674
        %2240 = vmatpush1.bf16.msra.mxu0 %v1673
        %2241 = vmatprep.subr.bf16.mxu0 %v1686
        %2242 = vmatpush1.bf16.msra.mxu0 %v1685
        %2243 = vmatprep.subr.bf16.mxu0 %v1698
        %2244 = vmatpush1.bf16.msra.mxu0 %v1697
        %2245 = vmatprep.subr.bf16.mxu0 %v1710
        %2246 = vmatpush1.bf16.msra.mxu0 %v1709
        %2247 = vmatprep.subr.bf16.mxu0 %v1722
        %2248 = vmatpush1.bf16.msra.mxu0 %v1721
        %2249 = vmatprep.subr.bf16.mxu0 %v1734
        %2250 = vmatpush1.bf16.msra.mxu0 %v1733
        %2251 = vmatprep.subr.bf16.mxu0 %v1746
        %2252 = vmatpush1.bf16.msra.mxu0 %v1745
        %2253 = vmatprep.subr.bf16.mxu0 %v1758
        %2254 = vmatpush1.bf16.msra.mxu0 %v1757
        %2255 = vmatprep.subr.bf16.mxu0 %v1770
        %2256 = vmatpush1.bf16.msra.mxu0 %v1769
        %2257 = vmatprep.subr.bf16.mxu0 %v1782
        %2258 = vmatpush1.bf16.msra.mxu0 %v1781
        %2259 = vmatprep.subr.bf16.mxu0 %v1794
        %2260 = vmatpush1.bf16.msra.mxu0 %v1793
        %2261 = vmatprep.subr.bf16.mxu0 %v1806
        %2262 = vmatpush1.bf16.msra.mxu0 %v1805
        %2263 = vmatprep.subr.bf16.mxu0 %v1818
        %2264 = vmatpush1.bf16.msra.mxu0 %v1817
        %2265 = vmatprep.subr.bf16.mxu0 %v1830
        %2266 = vmatpush1.bf16.msra.mxu0 %v1829
        %2267 = vmatprep.subr.bf16.mxu0 %v1842
        %2268 = vmatpush1.bf16.msra.mxu0 %v1841
        %2269 = vmatprep.mubr.bf16.mxu0 %v398
        %2270 = vmatmul.mubr.bf16.gmra.mrb[0].mxu0 %v397
        %v2271 = vpop.f32.mrb[0].mxu0
        %v2272 = vadd.f32 %v740, %v2271
        %v2273 = vpop.f32.mrb[0].mxu0
        %v2274 = vadd.f32 %v744, %v2273
        %v2275 = vpop.f32.mrb[0].mxu0
        %v2276 = vadd.f32 %v740, %v2275
        %v2277 = vpop.f32.mrb[0].mxu0
        %v2278 = vadd.f32 %v744, %v2277
        %2279 = vmatprep.mubr.bf16.mxu0 %v401
        %2280 = vmatmul.mubr.bf16.gmra.mrb[0].mxu0 %v400
        %v2281 = vpop.f32.mrb[0].mxu0
        %v2282 = vadd.f32 %v740, %v2281
        %v2283 = vpop.f32.mrb[0].mxu0
        %v2284 = vadd.f32 %v744, %v2283
        %v2285 = vpop.f32.mrb[0].mxu0
        %v2286 = vadd.f32 %v740, %v2285
        %v2287 = vpop.f32.mrb[0].mxu0
        %v2288 = vadd.f32 %v744, %v2287
        %2289 = vmatprep.mubr.bf16.mxu0 %v404
        %2290 = vmatmul.mubr.bf16.gmra.mrb[0].mxu0 %v403
        %v2291 = vpop.f32.mrb[0].mxu0
        %v2292 = vadd.f32 %v740, %v2291
        %v2293 = vpop.f32.mrb[0].mxu0
        %v2294 = vadd.f32 %v744, %v2293
        %v2295 = vpop.f32.mrb[0].mxu0
        %v2296 = vadd.f32 %v740, %v2295
        %v2297 = vpop.f32.mrb[0].mxu0
        %v2298 = vadd.f32 %v744, %v2297
        %2299 = vmatprep.mubr.bf16.mxu0 %v407
        %2300 = vmatmul.mubr.bf16.gmra.mrb[0].mxu0 %v406
        %v2301 = vpop.f32.mrb[0].mxu0
        %v2302 = vadd.f32 %v740, %v2301
        %v2303 = vpop.f32.mrb[0].mxu0
        %v2304 = vadd.f32 %v744, %v2303
        %v2305 = vpop.f32.mrb[0].mxu0
        %v2306 = vadd.f32 %v740, %v2305
        %v2307 = vpop.f32.mrb[0].mxu0
        %v2308 = vadd.f32 %v744, %v2307
        %2309 = vmatprep.mubr.bf16.mxu0 %v410
        %2310 = vmatmul.mubr.bf16.gmra.mrb[0].mxu0 %v409
        %v2311 = vpop.f32.mrb[0].mxu0
        %v2312 = vadd.f32 %v740, %v2311
        %v2313 = vpop.f32.mrb[0].mxu0
        %v2314 = vadd.f32 %v744, %v2313
        %v2315 = vpop.f32.mrb[0].mxu0
        %v2316 = vadd.f32 %v740, %v2315
        %v2317 = vpop.f32.mrb[0].mxu0
        %v2318 = vadd.f32 %v744, %v2317
        %2319 = vmatprep.mubr.bf16.mxu0 %v413
        %2320 = vmatmul.mubr.bf16.gmra.mrb[0].mxu0 %v412
        %v2321 = vpop.f32.mrb[0].mxu0
        %v2322 = vadd.f32 %v740, %v2321
        %v2323 = vpop.f32.mrb[0].mxu0
        %v2324 = vadd.f32 %v744, %v2323
        %v2325 = vpop.f32.mrb[0].mxu0
        %v2326 = vadd.f32 %v740, %v2325
        %v2327 = vpop.f32.mrb[0].mxu0
        %v2328 = vadd.f32 %v744, %v2327
        %2329 = vmatprep.mubr.bf16.mxu0 %v416
        %2330 = vmatmul.mubr.bf16.gmra.mrb[0].mxu0 %v415
        %v2331 = vpop.f32.mrb[0].mxu0
        %v2332 = vadd.f32 %v740, %v2331
        %v2333 = vpop.f32.mrb[0].mxu0
        %v2334 = vadd.f32 %v744, %v2333
        %v2335 = vpop.f32.mrb[0].mxu0
        %v2336 = vadd.f32 %v740, %v2335
        %v2337 = vpop.f32.mrb[0].mxu0
        %v2338 = vadd.f32 %v744, %v2337
        %2339 = vmatprep.mubr.bf16.mxu0 %v419
        %2340 = vmatmul.mubr.bf16.gmra.mrb[0].mxu0 %v418
        %v2341 = vpop.f32.mrb[0].mxu0
        %v2342 = vadd.f32 %v740, %v2341
        %v2343 = vpop.f32.mrb[0].mxu0
        %v2344 = vadd.f32 %v744, %v2343
        %v2345 = vpop.f32.mrb[0].mxu0
        %v2346 = vadd.f32 %v740, %v2345
        %v2347 = vpop.f32.mrb[0].mxu0
        %v2348 = vadd.f32 %v744, %v2347
        %2349 = vmatprep.mubr.bf16.mxu0 %v422
        %2350 = vmatmul.mubr.bf16.gmra.mrb[0].mxu0 %v421
        %v2351 = vpop.f32.mrb[0].mxu0
        %v2352 = vadd.f32 %v740, %v2351
        %v2353 = vpop.f32.mrb[0].mxu0
        %v2354 = vadd.f32 %v744, %v2353
        %v2355 = vpop.f32.mrb[0].mxu0
        %v2356 = vadd.f32 %v740, %v2355
        %v2357 = vpop.f32.mrb[0].mxu0
        %v2358 = vadd.f32 %v744, %v2357
        %2359 = vmatprep.mubr.bf16.mxu0 %v425
        %2360 = vmatmul.mubr.bf16.gmra.mrb[0].mxu0 %v424
        %v2361 = vpop.f32.mrb[0].mxu0
        %v2362 = vadd.f32 %v740, %v2361
        %v2363 = vpop.f32.mrb[0].mxu0
        %v2364 = vadd.f32 %v744, %v2363
        %v2365 = vpop.f32.mrb[0].mxu0
        %v2366 = vadd.f32 %v740, %v2365
        %v2367 = vpop.f32.mrb[0].mxu0
        %v2368 = vadd.f32 %v744, %v2367
        %2369 = vmatprep.mubr.bf16.mxu0 %v428
        %2370 = vmatmul.mubr.bf16.gmra.mrb[0].mxu0 %v427
        %v2371 = vpop.f32.mrb[0].mxu0
        %v2372 = vadd.f32 %v740, %v2371
        %v2373 = vpop.f32.mrb[0].mxu0
        %v2374 = vadd.f32 %v744, %v2373
        %v2375 = vpop.f32.mrb[0].mxu0
        %v2376 = vadd.f32 %v740, %v2375
        %v2377 = vpop.f32.mrb[0].mxu0
        %v2378 = vadd.f32 %v744, %v2377
        %2379 = vmatprep.mubr.bf16.mxu0 %v431
        %2380 = vmatmul.mubr.bf16.gmra.mrb[0].mxu0 %v430
        %v2381 = vpop.f32.mrb[0].mxu0
        %v2382 = vadd.f32 %v740, %v2381
        %v2383 = vpop.f32.mrb[0].mxu0
        %v2384 = vadd.f32 %v744, %v2383
        %v2385 = vpop.f32.mrb[0].mxu0
        %v2386 = vadd.f32 %v740, %v2385
        %v2387 = vpop.f32.mrb[0].mxu0
        %v2388 = vadd.f32 %v744, %v2387
        %2389 = vmatprep.mubr.bf16.mxu0 %v434
        %2390 = vmatmul.mubr.bf16.gmra.mrb[0].mxu0 %v433
        %v2391 = vpop.f32.mrb[0].mxu0
        %v2392 = vadd.f32 %v740, %v2391
        %v2393 = vpop.f32.mrb[0].mxu0
        %v2394 = vadd.f32 %v744, %v2393
        %v2395 = vpop.f32.mrb[0].mxu0
        %v2396 = vadd.f32 %v740, %v2395
        %v2397 = vpop.f32.mrb[0].mxu0
        %v2398 = vadd.f32 %v744, %v2397
        %2399 = vmatprep.mubr.bf16.mxu0 %v437
        %2400 = vmatmul.mubr.bf16.gmra.mrb[0].mxu0 %v436
        %v2401 = vpop.f32.mrb[0].mxu0
        %v2402 = vadd.f32 %v740, %v2401
        %v2403 = vpop.f32.mrb[0].mxu0
        %v2404 = vadd.f32 %v744, %v2403
        %v2405 = vpop.f32.mrb[0].mxu0
        %v2406 = vadd.f32 %v740, %v2405
        %v2407 = vpop.f32.mrb[0].mxu0
        %v2408 = vadd.f32 %v744, %v2407
        %2409 = vmatprep.mubr.bf16.mxu0 %v440
        %2410 = vmatmul.mubr.bf16.gmra.mrb[0].mxu0 %v439
        %v2411 = vpop.f32.mrb[0].mxu0
        %v2412 = vadd.f32 %v740, %v2411
        %v2413 = vpop.f32.mrb[0].mxu0
        %v2414 = vadd.f32 %v744, %v2413
        %v2415 = vpop.f32.mrb[0].mxu0
        %v2416 = vadd.f32 %v740, %v2415
        %v2417 = vpop.f32.mrb[0].mxu0
        %v2418 = vadd.f32 %v744, %v2417
        %2419 = vmatprep.mubr.bf16.mxu0 %v443
        %2420 = vmatmul.mubr.bf16.gmra.mrb[0].mxu0 %v442
        %v2421 = vpop.f32.mrb[0].mxu0
        %v2422 = vadd.f32 %v740, %v2421
        %v2423 = vpop.f32.mrb[0].mxu0
        %v2424 = vadd.f32 %v744, %v2423
        %v2425 = vpop.f32.mrb[0].mxu0
        %v2426 = vadd.f32 %v740, %v2425
        %v2427 = vpop.f32.mrb[0].mxu0
        %v2428 = vadd.f32 %v744, %v2427
        %2429 = vdwg.mxu0
        %2430 = vmatprep.subr.bf16.mxu0 %v1854
        %2431 = vmatpush1.bf16.msra.mxu0 %v1853
        %2432 = vmatprep.subr.bf16.mxu0 %v1866
        %2433 = vmatpush1.bf16.msra.mxu0 %v1865
        %2434 = vmatprep.subr.bf16.mxu0 %v1878
        %2435 = vmatpush1.bf16.msra.mxu0 %v1877
        %2436 = vmatprep.subr.bf16.mxu0 %v1890
        %2437 = vmatpush1.bf16.msra.mxu0 %v1889
        %2438 = vmatprep.subr.bf16.mxu0 %v1902
        %2439 = vmatpush1.bf16.msra.mxu0 %v1901
        %2440 = vmatprep.subr.bf16.mxu0 %v1914
        %2441 = vmatpush1.bf16.msra.mxu0 %v1913
        %2442 = vmatprep.subr.bf16.mxu0 %v1926
        %2443 = vmatpush1.bf16.msra.mxu0 %v1925
        %2444 = vmatprep.subr.bf16.mxu0 %v1938
        %2445 = vmatpush1.bf16.msra.mxu0 %v1937
        %2446 = vmatprep.subr.bf16.mxu0 0
        %2447 = vmatpush1.bf16.msra.mxu0 0
        %2448 = vmatprep.subr.bf16.mxu0 0
        %2449 = vmatpush1.bf16.msra.mxu0 0
        %2450 = vmatprep.subr.bf16.mxu0 0
        %2451 = vmatpush1.bf16.msra.mxu0 0
        %2452 = vmatprep.subr.bf16.mxu0 0
        %2453 = vmatpush1.bf16.msra.mxu0 0
        %2454 = vmatprep.subr.bf16.mxu0 0
        %2455 = vmatpush1.bf16.msra.mxu0 0
        %2456 = vmatprep.subr.bf16.mxu0 0
        %2457 = vmatpush1.bf16.msra.mxu0 0
        %2458 = vmatprep.subr.bf16.mxu0 0
        %2459 = vmatpush1.bf16.msra.mxu0 0
        %2460 = vmatprep.subr.bf16.mxu0 0
        %2461 = vmatpush1.bf16.msra.mxu0 0
        %2462 = vmatprep.mubr.bf16.mxu0 0
        %2463 = vmatmul.mubr.bf16.gmra.mrb[0].mxu0 %v399
        %v2464 = vpop.f32.mrb[0].mxu0
        %v2465 = vadd.f32 %v2272, %v2464
        %v2466 = vpop.f32.mrb[0].mxu0
        %v2467 = vadd.f32 %v2274, %v2466
        %v2468 = vpop.f32.mrb[0].mxu0
        %v2469 = vadd.f32 %v2276, %v2468
        %v2470 = vpop.f32.mrb[0].mxu0
        %v2471 = vadd.f32 %v2278, %v2470
        %2472 = vmatprep.mubr.bf16.mxu0 0
        %2473 = vmatmul.mubr.bf16.gmra.mrb[0].mxu0 %v402
        %v2474 = vpop.f32.mrb[0].mxu0
        %v2475 = vadd.f32 %v2282, %v2474
        %v2476 = vpop.f32.mrb[0].mxu0
        %v2477 = vadd.f32 %v2284, %v2476
        %v2478 = vpop.f32.mrb[0].mxu0
        %v2479 = vadd.f32 %v2286, %v2478
        %v2480 = vpop.f32.mrb[0].mxu0
        %v2481 = vadd.f32 %v2288, %v2480
        %2482 = vmatprep.mubr.bf16.mxu0 0
        %2483 = vmatmul.mubr.bf16.gmra.mrb[0].mxu0 %v405
        %v2484 = vpop.f32.mrb[0].mxu0
        %v2485 = vadd.f32 %v2292, %v2484
        %v2486 = vpop.f32.mrb[0].mxu0
        %v2487 = vadd.f32 %v2294, %v2486
        %v2488 = vpop.f32.mrb[0].mxu0
        %v2489 = vadd.f32 %v2296, %v2488
        %v2490 = vpop.f32.mrb[0].mxu0
        %v2491 = vadd.f32 %v2298, %v2490
        %2492 = vmatprep.mubr.bf16.mxu0 0
        %2493 = vmatmul.mubr.bf16.gmra.mrb[0].mxu0 %v408
        %v2494 = vpop.f32.mrb[0].mxu0
        %v2495 = vadd.f32 %v2302, %v2494
        %v2496 = vpop.f32.mrb[0].mxu0
        %v2497 = vadd.f32 %v2304, %v2496
        %v2498 = vpop.f32.mrb[0].mxu0
        %v2499 = vadd.f32 %v2306, %v2498
        %v2500 = vpop.f32.mrb[0].mxu0
        %v2501 = vadd.f32 %v2308, %v2500
        %2502 = vmatprep.mubr.bf16.mxu0 0
        %2503 = vmatmul.mubr.bf16.gmra.mrb[0].mxu0 %v411
        %v2504 = vpop.f32.mrb[0].mxu0
        %v2505 = vadd.f32 %v2312, %v2504
        %v2506 = vpop.f32.mrb[0].mxu0
        %v2507 = vadd.f32 %v2314, %v2506
        %v2508 = vpop.f32.mrb[0].mxu0
        %v2509 = vadd.f32 %v2316, %v2508
        %v2510 = vpop.f32.mrb[0].mxu0
        %v2511 = vadd.f32 %v2318, %v2510
        %2512 = vmatprep.mubr.bf16.mxu0 0
        %2513 = vmatmul.mubr.bf16.gmra.mrb[0].mxu0 %v414
        %v2514 = vpop.f32.mrb[0].mxu0
        %v2515 = vadd.f32 %v2322, %v2514
        %v2516 = vpop.f32.mrb[0].mxu0
        %v2517 = vadd.f32 %v2324, %v2516
        %v2518 = vpop.f32.mrb[0].mxu0
        %v2519 = vadd.f32 %v2326, %v2518
        %v2520 = vpop.f32.mrb[0].mxu0
        %v2521 = vadd.f32 %v2328, %v2520
        %2522 = vmatprep.mubr.bf16.mxu0 0
        %2523 = vmatmul.mubr.bf16.gmra.mrb[0].mxu0 %v417
        %v2524 = vpop.f32.mrb[0].mxu0
        %v2525 = vadd.f32 %v2332, %v2524
        %v2526 = vpop.f32.mrb[0].mxu0
        %v2527 = vadd.f32 %v2334, %v2526
        %v2528 = vpop.f32.mrb[0].mxu0
        %v2529 = vadd.f32 %v2336, %v2528
        %v2530 = vpop.f32.mrb[0].mxu0
        %v2531 = vadd.f32 %v2338, %v2530
        %2532 = vmatprep.mubr.bf16.mxu0 0
        %2533 = vmatmul.mubr.bf16.gmra.mrb[0].mxu0 %v420
        %v2534 = vpop.f32.mrb[0].mxu0
        %v2535 = vadd.f32 %v2342, %v2534
        %v2536 = vpop.f32.mrb[0].mxu0
        %v2537 = vadd.f32 %v2344, %v2536
        %v2538 = vpop.f32.mrb[0].mxu0
        %v2539 = vadd.f32 %v2346, %v2538
        %v2540 = vpop.f32.mrb[0].mxu0
        %v2541 = vadd.f32 %v2348, %v2540
        %2542 = vmatprep.mubr.bf16.mxu0 0
        %2543 = vmatmul.mubr.bf16.gmra.mrb[0].mxu0 %v423
        %v2544 = vpop.f32.mrb[0].mxu0
        %v2545 = vadd.f32 %v2352, %v2544
        %v2546 = vpop.f32.mrb[0].mxu0
        %v2547 = vadd.f32 %v2354, %v2546
        %v2548 = vpop.f32.mrb[0].mxu0
        %v2549 = vadd.f32 %v2356, %v2548
        %v2550 = vpop.f32.mrb[0].mxu0
        %v2551 = vadd.f32 %v2358, %v2550
        %2552 = vmatprep.mubr.bf16.mxu0 0
        %2553 = vmatmul.mubr.bf16.gmra.mrb[0].mxu0 %v426
        %v2554 = vpop.f32.mrb[0].mxu0
        %v2555 = vadd.f32 %v2362, %v2554
        %v2556 = vpop.f32.mrb[0].mxu0
        %v2557 = vadd.f32 %v2364, %v2556
        %v2558 = vpop.f32.mrb[0].mxu0
        %v2559 = vadd.f32 %v2366, %v2558
        %v2560 = vpop.f32.mrb[0].mxu0
        %v2561 = vadd.f32 %v2368, %v2560
        %2562 = vmatprep.mubr.bf16.mxu0 0
        %2563 = vmatmul.mubr.bf16.gmra.mrb[0].mxu0 %v429
        %v2564 = vpop.f32.mrb[0].mxu0
        %v2565 = vadd.f32 %v2372, %v2564
        %v2566 = vpop.f32.mrb[0].mxu0
        %v2567 = vadd.f32 %v2374, %v2566
        %v2568 = vpop.f32.mrb[0].mxu0
        %v2569 = vadd.f32 %v2376, %v2568
        %v2570 = vpop.f32.mrb[0].mxu0
        %v2571 = vadd.f32 %v2378, %v2570
        %2572 = vmatprep.mubr.bf16.mxu0 0
        %2573 = vmatmul.mubr.bf16.gmra.mrb[0].mxu0 %v432
        %v2574 = vpop.f32.mrb[0].mxu0
        %v2575 = vadd.f32 %v2382, %v2574
        %v2576 = vpop.f32.mrb[0].mxu0
        %v2577 = vadd.f32 %v2384, %v2576
        %v2578 = vpop.f32.mrb[0].mxu0
        %v2579 = vadd.f32 %v2386, %v2578
        %v2580 = vpop.f32.mrb[0].mxu0
        %v2581 = vadd.f32 %v2388, %v2580
        %2582 = vmatprep.mubr.bf16.mxu0 0
        %2583 = vmatmul.mubr.bf16.gmra.mrb[0].mxu0 %v435
        %v2584 = vpop.f32.mrb[0].mxu0
        %v2585 = vadd.f32 %v2392, %v2584
        %v2586 = vpop.f32.mrb[0].mxu0
        %v2587 = vadd.f32 %v2394, %v2586
        %v2588 = vpop.f32.mrb[0].mxu0
        %v2589 = vadd.f32 %v2396, %v2588
        %v2590 = vpop.f32.mrb[0].mxu0
        %v2591 = vadd.f32 %v2398, %v2590
        %2592 = vmatprep.mubr.bf16.mxu0 0
        %2593 = vmatmul.mubr.bf16.gmra.mrb[0].mxu0 %v438
        %v2594 = vpop.f32.mrb[0].mxu0
        %v2595 = vadd.f32 %v2402, %v2594
        %v2596 = vpop.f32.mrb[0].mxu0
        %v2597 = vadd.f32 %v2404, %v2596
        %v2598 = vpop.f32.mrb[0].mxu0
        %v2599 = vadd.f32 %v2406, %v2598
        %v2600 = vpop.f32.mrb[0].mxu0
        %v2601 = vadd.f32 %v2408, %v2600
        %2602 = vmatprep.mubr.bf16.mxu0 0
        %2603 = vmatmul.mubr.bf16.gmra.mrb[0].mxu0 %v441
        %v2604 = vpop.f32.mrb[0].mxu0
        %v2605 = vadd.f32 %v2412, %v2604
        %v2606 = vpop.f32.mrb[0].mxu0
        %v2607 = vadd.f32 %v2414, %v2606
        %v2608 = vpop.f32.mrb[0].mxu0
        %v2609 = vadd.f32 %v2416, %v2608
        %v2610 = vpop.f32.mrb[0].mxu0
        %v2611 = vadd.f32 %v2418, %v2610
        %2612 = vmatprep.mubr.bf16.mxu0 0
        %2613 = vmatmul.mubr.bf16.gmra.mrb[0].mxu0 %v444
        %v2614 = vpop.f32.mrb[0].mxu0
        %v2615 = vadd.f32 %v2422, %v2614
        %v2616 = vpop.f32.mrb[0].mxu0
        %v2617 = vadd.f32 %v2424, %v2616
        %v2618 = vpop.f32.mrb[0].mxu0
        %v2619 = vadd.f32 %v2426, %v2618
        %v2620 = vpop.f32.mrb[0].mxu0
        %v2621 = vadd.f32 %v2428, %v2620
        %2622 = vdwg.mxu0
        %2623 = vmatprep.subr.bf16.mxu0 %v1664
        %2624 = vmatpush1.bf16.msra.mxu0 %v1663
        %2625 = vmatprep.subr.bf16.mxu0 %v1676
        %2626 = vmatpush1.bf16.msra.mxu0 %v1675
        %2627 = vmatprep.subr.bf16.mxu0 %v1688
        %2628 = vmatpush1.bf16.msra.mxu0 %v1687
        %2629 = vmatprep.subr.bf16.mxu0 %v1700
        %2630 = vmatpush1.bf16.msra.mxu0 %v1699
        %2631 = vmatprep.subr.bf16.mxu0 %v1712
        %2632 = vmatpush1.bf16.msra.mxu0 %v1711
        %2633 = vmatprep.subr.bf16.mxu0 %v1724
        %2634 = vmatpush1.bf16.msra.mxu0 %v1723
        %2635 = vmatprep.subr.bf16.mxu0 %v1736
        %2636 = vmatpush1.bf16.msra.mxu0 %v1735
        %2637 = vmatprep.subr.bf16.mxu0 %v1748
        %2638 = vmatpush1.bf16.msra.mxu0 %v1747
        %2639 = vmatprep.subr.bf16.mxu0 %v1760
        %2640 = vmatpush1.bf16.msra.mxu0 %v1759
        %2641 = vmatprep.subr.bf16.mxu0 %v1772
        %2642 = vmatpush1.bf16.msra.mxu0 %v1771
        %2643 = vmatprep.subr.bf16.mxu0 %v1784
        %2644 = vmatpush1.bf16.msra.mxu0 %v1783
        %2645 = vmatprep.subr.bf16.mxu0 %v1796
        %2646 = vmatpush1.bf16.msra.mxu0 %v1795
        %2647 = vmatprep.subr.bf16.mxu0 %v1808
        %2648 = vmatpush1.bf16.msra.mxu0 %v1807
        %2649 = vmatprep.subr.bf16.mxu0 %v1820
        %2650 = vmatpush1.bf16.msra.mxu0 %v1819
        %2651 = vmatprep.subr.bf16.mxu0 %v1832
        %2652 = vmatpush1.bf16.msra.mxu0 %v1831
        %2653 = vmatprep.subr.bf16.mxu0 %v1844
        %2654 = vmatpush1.bf16.msra.mxu0 %v1843
        %2655 = vmatprep.mubr.bf16.mxu0 %v398
        %2656 = vmatmul.mubr.bf16.gmra.mrb[0].mxu0 %v397
        %v2657 = vpop.f32.mrb[0].mxu0
        %v2658 = vadd.f32 %v748, %v2657
        %v2659 = vpop.f32.mrb[0].mxu0
        %v2660 = vadd.f32 %v752, %v2659
        %v2661 = vpop.f32.mrb[0].mxu0
        %v2662 = vadd.f32 %v748, %v2661
        %v2663 = vpop.f32.mrb[0].mxu0
        %v2664 = vadd.f32 %v752, %v2663
        %2665 = vmatprep.mubr.bf16.mxu0 %v401
        %2666 = vmatmul.mubr.bf16.gmra.mrb[0].mxu0 %v400
        %v2667 = vpop.f32.mrb[0].mxu0
        %v2668 = vadd.f32 %v748, %v2667
        %v2669 = vpop.f32.mrb[0].mxu0
        %v2670 = vadd.f32 %v752, %v2669
        %v2671 = vpop.f32.mrb[0].mxu0
        %v2672 = vadd.f32 %v748, %v2671
        %v2673 = vpop.f32.mrb[0].mxu0
        %v2674 = vadd.f32 %v752, %v2673
        %2675 = vmatprep.mubr.bf16.mxu0 %v404
        %2676 = vmatmul.mubr.bf16.gmra.mrb[0].mxu0 %v403
        %v2677 = vpop.f32.mrb[0].mxu0
        %v2678 = vadd.f32 %v748, %v2677
        %v2679 = vpop.f32.mrb[0].mxu0
        %v2680 = vadd.f32 %v752, %v2679
        %v2681 = vpop.f32.mrb[0].mxu0
        %v2682 = vadd.f32 %v748, %v2681
        %v2683 = vpop.f32.mrb[0].mxu0
        %v2684 = vadd.f32 %v752, %v2683
        %2685 = vmatprep.mubr.bf16.mxu0 %v407
        %2686 = vmatmul.mubr.bf16.gmra.mrb[0].mxu0 %v406
        %v2687 = vpop.f32.mrb[0].mxu0
        %v2688 = vadd.f32 %v748, %v2687
        %v2689 = vpop.f32.mrb[0].mxu0
        %v2690 = vadd.f32 %v752, %v2689
        %v2691 = vpop.f32.mrb[0].mxu0
        %v2692 = vadd.f32 %v748, %v2691
        %v2693 = vpop.f32.mrb[0].mxu0
        %v2694 = vadd.f32 %v752, %v2693
        %2695 = vmatprep.mubr.bf16.mxu0 %v410
        %2696 = vmatmul.mubr.bf16.gmra.mrb[0].mxu0 %v409
        %v2697 = vpop.f32.mrb[0].mxu0
        %v2698 = vadd.f32 %v748, %v2697
        %v2699 = vpop.f32.mrb[0].mxu0
        %v2700 = vadd.f32 %v752, %v2699
        %v2701 = vpop.f32.mrb[0].mxu0
        %v2702 = vadd.f32 %v748, %v2701
        %v2703 = vpop.f32.mrb[0].mxu0
        %v2704 = vadd.f32 %v752, %v2703
        %2705 = vmatprep.mubr.bf16.mxu0 %v413
        %2706 = vmatmul.mubr.bf16.gmra.mrb[0].mxu0 %v412
        %v2707 = vpop.f32.mrb[0].mxu0
        %v2708 = vadd.f32 %v748, %v2707
        %v2709 = vpop.f32.mrb[0].mxu0
        %v2710 = vadd.f32 %v752, %v2709
        %v2711 = vpop.f32.mrb[0].mxu0
        %v2712 = vadd.f32 %v748, %v2711
        %v2713 = vpop.f32.mrb[0].mxu0
        %v2714 = vadd.f32 %v752, %v2713
        %2715 = vmatprep.mubr.bf16.mxu0 %v416
        %2716 = vmatmul.mubr.bf16.gmra.mrb[0].mxu0 %v415
        %v2717 = vpop.f32.mrb[0].mxu0
        %v2718 = vadd.f32 %v748, %v2717
        %v2719 = vpop.f32.mrb[0].mxu0
        %v2720 = vadd.f32 %v752, %v2719
        %v2721 = vpop.f32.mrb[0].mxu0
        %v2722 = vadd.f32 %v748, %v2721
        %v2723 = vpop.f32.mrb[0].mxu0
        %v2724 = vadd.f32 %v752, %v2723
        %2725 = vmatprep.mubr.bf16.mxu0 %v419
        %2726 = vmatmul.mubr.bf16.gmra.mrb[0].mxu0 %v418
        %v2727 = vpop.f32.mrb[0].mxu0
        %v2728 = vadd.f32 %v748, %v2727
        %v2729 = vpop.f32.mrb[0].mxu0
        %v2730 = vadd.f32 %v752, %v2729
        %v2731 = vpop.f32.mrb[0].mxu0
        %v2732 = vadd.f32 %v748, %v2731
        %v2733 = vpop.f32.mrb[0].mxu0
        %v2734 = vadd.f32 %v752, %v2733
        %2735 = vmatprep.mubr.bf16.mxu0 %v422
        %2736 = vmatmul.mubr.bf16.gmra.mrb[0].mxu0 %v421
        %v2737 = vpop.f32.mrb[0].mxu0
        %v2738 = vadd.f32 %v748, %v2737
        %v2739 = vpop.f32.mrb[0].mxu0
        %v2740 = vadd.f32 %v752, %v2739
        %v2741 = vpop.f32.mrb[0].mxu0
        %v2742 = vadd.f32 %v748, %v2741
        %v2743 = vpop.f32.mrb[0].mxu0
        %v2744 = vadd.f32 %v752, %v2743
        %2745 = vmatprep.mubr.bf16.mxu0 %v425
        %2746 = vmatmul.mubr.bf16.gmra.mrb[0].mxu0 %v424
        %v2747 = vpop.f32.mrb[0].mxu0
        %v2748 = vadd.f32 %v748, %v2747
        %v2749 = vpop.f32.mrb[0].mxu0
        %v2750 = vadd.f32 %v752, %v2749
        %v2751 = vpop.f32.mrb[0].mxu0
        %v2752 = vadd.f32 %v748, %v2751
        %v2753 = vpop.f32.mrb[0].mxu0
        %v2754 = vadd.f32 %v752, %v2753
        %2755 = vmatprep.mubr.bf16.mxu0 %v428
        %2756 = vmatmul.mubr.bf16.gmra.mrb[0].mxu0 %v427
        %v2757 = vpop.f32.mrb[0].mxu0
        %v2758 = vadd.f32 %v748, %v2757
        %v2759 = vpop.f32.mrb[0].mxu0
        %v2760 = vadd.f32 %v752, %v2759
        %v2761 = vpop.f32.mrb[0].mxu0
        %v2762 = vadd.f32 %v748, %v2761
        %v2763 = vpop.f32.mrb[0].mxu0
        %v2764 = vadd.f32 %v752, %v2763
        %2765 = vmatprep.mubr.bf16.mxu0 %v431
        %2766 = vmatmul.mubr.bf16.gmra.mrb[0].mxu0 %v430
        %v2767 = vpop.f32.mrb[0].mxu0
        %v2768 = vadd.f32 %v748, %v2767
        %v2769 = vpop.f32.mrb[0].mxu0
        %v2770 = vadd.f32 %v752, %v2769
        %v2771 = vpop.f32.mrb[0].mxu0
        %v2772 = vadd.f32 %v748, %v2771
        %v2773 = vpop.f32.mrb[0].mxu0
        %v2774 = vadd.f32 %v752, %v2773
        %2775 = vmatprep.mubr.bf16.mxu0 %v434
        %2776 = vmatmul.mubr.bf16.gmra.mrb[0].mxu0 %v433
        %v2777 = vpop.f32.mrb[0].mxu0
        %v2778 = vadd.f32 %v748, %v2777
        %v2779 = vpop.f32.mrb[0].mxu0
        %v2780 = vadd.f32 %v752, %v2779
        %v2781 = vpop.f32.mrb[0].mxu0
        %v2782 = vadd.f32 %v748, %v2781
        %v2783 = vpop.f32.mrb[0].mxu0
        %v2784 = vadd.f32 %v752, %v2783
        %2785 = vmatprep.mubr.bf16.mxu0 %v437
        %2786 = vmatmul.mubr.bf16.gmra.mrb[0].mxu0 %v436
        %v2787 = vpop.f32.mrb[0].mxu0
        %v2788 = vadd.f32 %v748, %v2787
        %v2789 = vpop.f32.mrb[0].mxu0
        %v2790 = vadd.f32 %v752, %v2789
        %v2791 = vpop.f32.mrb[0].mxu0
        %v2792 = vadd.f32 %v748, %v2791
        %v2793 = vpop.f32.mrb[0].mxu0
        %v2794 = vadd.f32 %v752, %v2793
        %2795 = vmatprep.mubr.bf16.mxu0 %v440
        %2796 = vmatmul.mubr.bf16.gmra.mrb[0].mxu0 %v439
        %v2797 = vpop.f32.mrb[0].mxu0
        %v2798 = vadd.f32 %v748, %v2797
        %v2799 = vpop.f32.mrb[0].mxu0
        %v2800 = vadd.f32 %v752, %v2799
        %v2801 = vpop.f32.mrb[0].mxu0
        %v2802 = vadd.f32 %v748, %v2801
        %v2803 = vpop.f32.mrb[0].mxu0
        %v2804 = vadd.f32 %v752, %v2803
        %2805 = vmatprep.mubr.bf16.mxu0 %v443
        %2806 = vmatmul.mubr.bf16.gmra.mrb[0].mxu0 %v442
        %v2807 = vpop.f32.mrb[0].mxu0
        %v2808 = vadd.f32 %v748, %v2807
        %v2809 = vpop.f32.mrb[0].mxu0
        %v2810 = vadd.f32 %v752, %v2809
        %v2811 = vpop.f32.mrb[0].mxu0
        %v2812 = vadd.f32 %v748, %v2811
        %v2813 = vpop.f32.mrb[0].mxu0
        %v2814 = vadd.f32 %v752, %v2813
        %2815 = vdwg.mxu0
        %2816 = vmatprep.subr.bf16.mxu0 %v1856
        %2817 = vmatpush1.bf16.msra.mxu0 %v1855
        %2818 = vmatprep.subr.bf16.mxu0 %v1868
        %2819 = vmatpush1.bf16.msra.mxu0 %v1867
        %2820 = vmatprep.subr.bf16.mxu0 %v1880
        %2821 = vmatpush1.bf16.msra.mxu0 %v1879
        %2822 = vmatprep.subr.bf16.mxu0 %v1892
        %2823 = vmatpush1.bf16.msra.mxu0 %v1891
        %2824 = vmatprep.subr.bf16.mxu0 %v1904
        %2825 = vmatpush1.bf16.msra.mxu0 %v1903
        %2826 = vmatprep.subr.bf16.mxu0 %v1916
        %2827 = vmatpush1.bf16.msra.mxu0 %v1915
        %2828 = vmatprep.subr.bf16.mxu0 %v1928
        %2829 = vmatpush1.bf16.msra.mxu0 %v1927
        %2830 = vmatprep.subr.bf16.mxu0 %v1940
        %2831 = vmatpush1.bf16.msra.mxu0 %v1939
        %2832 = vmatprep.subr.bf16.mxu0 0
        %2833 = vmatpush1.bf16.msra.mxu0 0
        %2834 = vmatprep.subr.bf16.mxu0 0
        %2835 = vmatpush1.bf16.msra.mxu0 0
        %2836 = vmatprep.subr.bf16.mxu0 0
        %2837 = vmatpush1.bf16.msra.mxu0 0
        %2838 = vmatprep.subr.bf16.mxu0 0
        %2839 = vmatpush1.bf16.msra.mxu0 0
        %2840 = vmatprep.subr.bf16.mxu0 0
        %2841 = vmatpush1.bf16.msra.mxu0 0
        %2842 = vmatprep.subr.bf16.mxu0 0
        %2843 = vmatpush1.bf16.msra.mxu0 0
        %2844 = vmatprep.subr.bf16.mxu0 0
        %2845 = vmatpush1.bf16.msra.mxu0 0
        %2846 = vmatprep.subr.bf16.mxu0 0
        %2847 = vmatpush1.bf16.msra.mxu0 0
        %2848 = vmatprep.mubr.bf16.mxu0 0
        %2849 = vmatmul.mubr.bf16.gmra.mrb[0].mxu0 %v399
        %v2850 = vpop.f32.mrb[0].mxu0
        %v2851 = vadd.f32 %v2658, %v2850
        %v2852 = vpop.f32.mrb[0].mxu0
        %v2853 = vadd.f32 %v2660, %v2852
        %v2854 = vpop.f32.mrb[0].mxu0
        %v2855 = vadd.f32 %v2662, %v2854
        %v2856 = vpop.f32.mrb[0].mxu0
        %v2857 = vadd.f32 %v2664, %v2856
        %2858 = vmatprep.mubr.bf16.mxu0 0
        %2859 = vmatmul.mubr.bf16.gmra.mrb[0].mxu0 %v402
        %v2860 = vpop.f32.mrb[0].mxu0
        %v2861 = vadd.f32 %v2668, %v2860
        %v2862 = vpop.f32.mrb[0].mxu0
        %v2863 = vadd.f32 %v2670, %v2862
        %v2864 = vpop.f32.mrb[0].mxu0
        %v2865 = vadd.f32 %v2672, %v2864
        %v2866 = vpop.f32.mrb[0].mxu0
        %v2867 = vadd.f32 %v2674, %v2866
        %2868 = vmatprep.mubr.bf16.mxu0 0
        %2869 = vmatmul.mubr.bf16.gmra.mrb[0].mxu0 %v405
        %v2870 = vpop.f32.mrb[0].mxu0
        %v2871 = vadd.f32 %v2678, %v2870
        %v2872 = vpop.f32.mrb[0].mxu0
        %v2873 = vadd.f32 %v2680, %v2872
        %v2874 = vpop.f32.mrb[0].mxu0
        %v2875 = vadd.f32 %v2682, %v2874
        %v2876 = vpop.f32.mrb[0].mxu0
        %v2877 = vadd.f32 %v2684, %v2876
        %2878 = vmatprep.mubr.bf16.mxu0 0
        %2879 = vmatmul.mubr.bf16.gmra.mrb[0].mxu0 %v408
        %v2880 = vpop.f32.mrb[0].mxu0
        %v2881 = vadd.f32 %v2688, %v2880
        %v2882 = vpop.f32.mrb[0].mxu0
        %v2883 = vadd.f32 %v2690, %v2882
        %v2884 = vpop.f32.mrb[0].mxu0
        %v2885 = vadd.f32 %v2692, %v2884
        %v2886 = vpop.f32.mrb[0].mxu0
        %v2887 = vadd.f32 %v2694, %v2886
        %2888 = vmatprep.mubr.bf16.mxu0 0
        %2889 = vmatmul.mubr.bf16.gmra.mrb[0].mxu0 %v411
        %v2890 = vpop.f32.mrb[0].mxu0
        %v2891 = vadd.f32 %v2698, %v2890
        %v2892 = vpop.f32.mrb[0].mxu0
        %v2893 = vadd.f32 %v2700, %v2892
        %v2894 = vpop.f32.mrb[0].mxu0
        %v2895 = vadd.f32 %v2702, %v2894
        %v2896 = vpop.f32.mrb[0].mxu0
        %v2897 = vadd.f32 %v2704, %v2896
        %2898 = vmatprep.mubr.bf16.mxu0 0
        %2899 = vmatmul.mubr.bf16.gmra.mrb[0].mxu0 %v414
        %v2900 = vpop.f32.mrb[0].mxu0
        %v2901 = vadd.f32 %v2708, %v2900
        %v2902 = vpop.f32.mrb[0].mxu0
        %v2903 = vadd.f32 %v2710, %v2902
        %v2904 = vpop.f32.mrb[0].mxu0
        %v2905 = vadd.f32 %v2712, %v2904
        %v2906 = vpop.f32.mrb[0].mxu0
        %v2907 = vadd.f32 %v2714, %v2906
        %2908 = vmatprep.mubr.bf16.mxu0 0
        %2909 = vmatmul.mubr.bf16.gmra.mrb[0].mxu0 %v417
        %v2910 = vpop.f32.mrb[0].mxu0
        %v2911 = vadd.f32 %v2718, %v2910
        %v2912 = vpop.f32.mrb[0].mxu0
        %v2913 = vadd.f32 %v2720, %v2912
        %v2914 = vpop.f32.mrb[0].mxu0
        %v2915 = vadd.f32 %v2722, %v2914
        %v2916 = vpop.f32.mrb[0].mxu0
        %v2917 = vadd.f32 %v2724, %v2916
        %2918 = vmatprep.mubr.bf16.mxu0 0
        %2919 = vmatmul.mubr.bf16.gmra.mrb[0].mxu0 %v420
        %v2920 = vpop.f32.mrb[0].mxu0
        %v2921 = vadd.f32 %v2728, %v2920
        %v2922 = vpop.f32.mrb[0].mxu0
        %v2923 = vadd.f32 %v2730, %v2922
        %v2924 = vpop.f32.mrb[0].mxu0
        %v2925 = vadd.f32 %v2732, %v2924
        %v2926 = vpop.f32.mrb[0].mxu0
        %v2927 = vadd.f32 %v2734, %v2926
        %2928 = vmatprep.mubr.bf16.mxu0 0
        %2929 = vmatmul.mubr.bf16.gmra.mrb[0].mxu0 %v423
        %v2930 = vpop.f32.mrb[0].mxu0
        %v2931 = vadd.f32 %v2738, %v2930
        %v2932 = vpop.f32.mrb[0].mxu0
        %v2933 = vadd.f32 %v2740, %v2932
        %v2934 = vpop.f32.mrb[0].mxu0
        %v2935 = vadd.f32 %v2742, %v2934
        %v2936 = vpop.f32.mrb[0].mxu0
        %v2937 = vadd.f32 %v2744, %v2936
        %2938 = vmatprep.mubr.bf16.mxu0 0
        %2939 = vmatmul.mubr.bf16.gmra.mrb[0].mxu0 %v426
        %v2940 = vpop.f32.mrb[0].mxu0
        %v2941 = vadd.f32 %v2748, %v2940
        %v2942 = vpop.f32.mrb[0].mxu0
        %v2943 = vadd.f32 %v2750, %v2942
        %v2944 = vpop.f32.mrb[0].mxu0
        %v2945 = vadd.f32 %v2752, %v2944
        %v2946 = vpop.f32.mrb[0].mxu0
        %v2947 = vadd.f32 %v2754, %v2946
        %2948 = vmatprep.mubr.bf16.mxu0 0
        %2949 = vmatmul.mubr.bf16.gmra.mrb[0].mxu0 %v429
        %v2950 = vpop.f32.mrb[0].mxu0
        %v2951 = vadd.f32 %v2758, %v2950
        %v2952 = vpop.f32.mrb[0].mxu0
        %v2953 = vadd.f32 %v2760, %v2952
        %v2954 = vpop.f32.mrb[0].mxu0
        %v2955 = vadd.f32 %v2762, %v2954
        %v2956 = vpop.f32.mrb[0].mxu0
        %v2957 = vadd.f32 %v2764, %v2956
        %2958 = vmatprep.mubr.bf16.mxu0 0
        %2959 = vmatmul.mubr.bf16.gmra.mrb[0].mxu0 %v432
        %v2960 = vpop.f32.mrb[0].mxu0
        %v2961 = vadd.f32 %v2768, %v2960
        %v2962 = vpop.f32.mrb[0].mxu0
        %v2963 = vadd.f32 %v2770, %v2962
        %v2964 = vpop.f32.mrb[0].mxu0
        %v2965 = vadd.f32 %v2772, %v2964
        %v2966 = vpop.f32.mrb[0].mxu0
        %v2967 = vadd.f32 %v2774, %v2966
        %2968 = vmatprep.mubr.bf16.mxu0 0
        %2969 = vmatmul.mubr.bf16.gmra.mrb[0].mxu0 %v435
        %v2970 = vpop.f32.mrb[0].mxu0
        %v2971 = vadd.f32 %v2778, %v2970
        %v2972 = vpop.f32.mrb[0].mxu0
        %v2973 = vadd.f32 %v2780, %v2972
        %v2974 = vpop.f32.mrb[0].mxu0
        %v2975 = vadd.f32 %v2782, %v2974
        %v2976 = vpop.f32.mrb[0].mxu0
        %v2977 = vadd.f32 %v2784, %v2976
        %2978 = vmatprep.mubr.bf16.mxu0 0
        %2979 = vmatmul.mubr.bf16.gmra.mrb[0].mxu0 %v438
        %v2980 = vpop.f32.mrb[0].mxu0
        %v2981 = vadd.f32 %v2788, %v2980
        %v2982 = vpop.f32.mrb[0].mxu0
        %v2983 = vadd.f32 %v2790, %v2982
        %v2984 = vpop.f32.mrb[0].mxu0
        %v2985 = vadd.f32 %v2792, %v2984
        %v2986 = vpop.f32.mrb[0].mxu0
        %v2987 = vadd.f32 %v2794, %v2986
        %2988 = vmatprep.mubr.bf16.mxu0 0
        %2989 = vmatmul.mubr.bf16.gmra.mrb[0].mxu0 %v441
        %v2990 = vpop.f32.mrb[0].mxu0
        %v2991 = vadd.f32 %v2798, %v2990
        %v2992 = vpop.f32.mrb[0].mxu0
        %v2993 = vadd.f32 %v2800, %v2992
        %v2994 = vpop.f32.mrb[0].mxu0
        %v2995 = vadd.f32 %v2802, %v2994
        %v2996 = vpop.f32.mrb[0].mxu0
        %v2997 = vadd.f32 %v2804, %v2996
        %2998 = vmatprep.mubr.bf16.mxu0 0
        %2999 = vmatmul.mubr.bf16.gmra.mrb[0].mxu0 %v444
        %v3000 = vpop.f32.mrb[0].mxu0
        %v3001 = vadd.f32 %v2808, %v3000
        %v3002 = vpop.f32.mrb[0].mxu0
        %v3003 = vadd.f32 %v2810, %v3002
        %v3004 = vpop.f32.mrb[0].mxu0
        %v3005 = vadd.f32 %v2812, %v3004
        %v3006 = vpop.f32.mrb[0].mxu0
        %v3007 = vadd.f32 %v2814, %v3006
        %3008 = vdwg.mxu0
        %3009 = vmatprep.subr.bf16.mxu0 %v1666
        %3010 = vmatpush1.bf16.msra.mxu0 %v1665
        %3011 = vmatprep.subr.bf16.mxu0 %v1678
        %3012 = vmatpush1.bf16.msra.mxu0 %v1677
        %3013 = vmatprep.subr.bf16.mxu0 %v1690
        %3014 = vmatpush1.bf16.msra.mxu0 %v1689
        %3015 = vmatprep.subr.bf16.mxu0 %v1702
        %3016 = vmatpush1.bf16.msra.mxu0 %v1701
        %3017 = vmatprep.subr.bf16.mxu0 %v1714
        %3018 = vmatpush1.bf16.msra.mxu0 %v1713
        %3019 = vmatprep.subr.bf16.mxu0 %v1726
        %3020 = vmatpush1.bf16.msra.mxu0 %v1725
        %3021 = vmatprep.subr.bf16.mxu0 %v1738
        %3022 = vmatpush1.bf16.msra.mxu0 %v1737
        %3023 = vmatprep.subr.bf16.mxu0 %v1750
        %3024 = vmatpush1.bf16.msra.mxu0 %v1749
        %3025 = vmatprep.subr.bf16.mxu0 %v1762
        %3026 = vmatpush1.bf16.msra.mxu0 %v1761
        %3027 = vmatprep.subr.bf16.mxu0 %v1774
        %3028 = vmatpush1.bf16.msra.mxu0 %v1773
        %3029 = vmatprep.subr.bf16.mxu0 %v1786
        %3030 = vmatpush1.bf16.msra.mxu0 %v1785
        %3031 = vmatprep.subr.bf16.mxu0 %v1798
        %3032 = vmatpush1.bf16.msra.mxu0 %v1797
        %3033 = vmatprep.subr.bf16.mxu0 %v1810
        %3034 = vmatpush1.bf16.msra.mxu0 %v1809
        %3035 = vmatprep.subr.bf16.mxu0 %v1822
        %3036 = vmatpush1.bf16.msra.mxu0 %v1821
        %3037 = vmatprep.subr.bf16.mxu0 %v1834
        %3038 = vmatpush1.bf16.msra.mxu0 %v1833
        %3039 = vmatprep.subr.bf16.mxu0 %v1846
        %3040 = vmatpush1.bf16.msra.mxu0 %v1845
        %3041 = vmatprep.mubr.bf16.mxu0 %v398
        %3042 = vmatmul.mubr.bf16.gmra.mrb[0].mxu0 %v397
        %v3043 = vpop.f32.mrb[0].mxu0
        %v3044 = vadd.f32 %v756, %v3043
        %v3045 = vpop.f32.mrb[0].mxu0
        %v3046 = vadd.f32 %v760, %v3045
        %v3047 = vpop.f32.mrb[0].mxu0
        %v3048 = vadd.f32 %v756, %v3047
        %v3049 = vpop.f32.mrb[0].mxu0
        %v3050 = vadd.f32 %v760, %v3049
        %3051 = vmatprep.mubr.bf16.mxu0 %v401
        %3052 = vmatmul.mubr.bf16.gmra.mrb[0].mxu0 %v400
        %v3053 = vpop.f32.mrb[0].mxu0
        %v3054 = vadd.f32 %v756, %v3053
        %v3055 = vpop.f32.mrb[0].mxu0
        %v3056 = vadd.f32 %v760, %v3055
        %v3057 = vpop.f32.mrb[0].mxu0
        %v3058 = vadd.f32 %v756, %v3057
        %v3059 = vpop.f32.mrb[0].mxu0
        %v3060 = vadd.f32 %v760, %v3059
        %3061 = vmatprep.mubr.bf16.mxu0 %v404
        %3062 = vmatmul.mubr.bf16.gmra.mrb[0].mxu0 %v403
        %v3063 = vpop.f32.mrb[0].mxu0
        %v3064 = vadd.f32 %v756, %v3063
        %v3065 = vpop.f32.mrb[0].mxu0
        %v3066 = vadd.f32 %v760, %v3065
        %v3067 = vpop.f32.mrb[0].mxu0
        %v3068 = vadd.f32 %v756, %v3067
        %v3069 = vpop.f32.mrb[0].mxu0
        %v3070 = vadd.f32 %v760, %v3069
        %3071 = vmatprep.mubr.bf16.mxu0 %v407
        %3072 = vmatmul.mubr.bf16.gmra.mrb[0].mxu0 %v406
        %v3073 = vpop.f32.mrb[0].mxu0
        %v3074 = vadd.f32 %v756, %v3073
        %v3075 = vpop.f32.mrb[0].mxu0
        %v3076 = vadd.f32 %v760, %v3075
        %v3077 = vpop.f32.mrb[0].mxu0
        %v3078 = vadd.f32 %v756, %v3077
        %v3079 = vpop.f32.mrb[0].mxu0
        %v3080 = vadd.f32 %v760, %v3079
        %3081 = vmatprep.mubr.bf16.mxu0 %v410
        %3082 = vmatmul.mubr.bf16.gmra.mrb[0].mxu0 %v409
        %v3083 = vpop.f32.mrb[0].mxu0
        %v3084 = vadd.f32 %v756, %v3083
        %v3085 = vpop.f32.mrb[0].mxu0
        %v3086 = vadd.f32 %v760, %v3085
        %v3087 = vpop.f32.mrb[0].mxu0
        %v3088 = vadd.f32 %v756, %v3087
        %v3089 = vpop.f32.mrb[0].mxu0
        %v3090 = vadd.f32 %v760, %v3089
        %3091 = vmatprep.mubr.bf16.mxu0 %v413
        %3092 = vmatmul.mubr.bf16.gmra.mrb[0].mxu0 %v412
        %v3093 = vpop.f32.mrb[0].mxu0
        %v3094 = vadd.f32 %v756, %v3093
        %v3095 = vpop.f32.mrb[0].mxu0
        %v3096 = vadd.f32 %v760, %v3095
        %v3097 = vpop.f32.mrb[0].mxu0
        %v3098 = vadd.f32 %v756, %v3097
        %v3099 = vpop.f32.mrb[0].mxu0
        %v3100 = vadd.f32 %v760, %v3099
        %3101 = vmatprep.mubr.bf16.mxu0 %v416
        %3102 = vmatmul.mubr.bf16.gmra.mrb[0].mxu0 %v415
        %v3103 = vpop.f32.mrb[0].mxu0
        %v3104 = vadd.f32 %v756, %v3103
        %v3105 = vpop.f32.mrb[0].mxu0
        %v3106 = vadd.f32 %v760, %v3105
        %v3107 = vpop.f32.mrb[0].mxu0
        %v3108 = vadd.f32 %v756, %v3107
        %v3109 = vpop.f32.mrb[0].mxu0
        %v3110 = vadd.f32 %v760, %v3109
        %3111 = vmatprep.mubr.bf16.mxu0 %v419
        %3112 = vmatmul.mubr.bf16.gmra.mrb[0].mxu0 %v418
        %v3113 = vpop.f32.mrb[0].mxu0
        %v3114 = vadd.f32 %v756, %v3113
        %v3115 = vpop.f32.mrb[0].mxu0
        %v3116 = vadd.f32 %v760, %v3115
        %v3117 = vpop.f32.mrb[0].mxu0
        %v3118 = vadd.f32 %v756, %v3117
        %v3119 = vpop.f32.mrb[0].mxu0
        %v3120 = vadd.f32 %v760, %v3119
        %3121 = vmatprep.mubr.bf16.mxu0 %v422
        %3122 = vmatmul.mubr.bf16.gmra.mrb[0].mxu0 %v421
        %v3123 = vpop.f32.mrb[0].mxu0
        %v3124 = vadd.f32 %v756, %v3123
        %v3125 = vpop.f32.mrb[0].mxu0
        %v3126 = vadd.f32 %v760, %v3125
        %v3127 = vpop.f32.mrb[0].mxu0
        %v3128 = vadd.f32 %v756, %v3127
        %v3129 = vpop.f32.mrb[0].mxu0
        %v3130 = vadd.f32 %v760, %v3129
        %3131 = vmatprep.mubr.bf16.mxu0 %v425
        %3132 = vmatmul.mubr.bf16.gmra.mrb[0].mxu0 %v424
        %v3133 = vpop.f32.mrb[0].mxu0
        %v3134 = vadd.f32 %v756, %v3133
        %v3135 = vpop.f32.mrb[0].mxu0
        %v3136 = vadd.f32 %v760, %v3135
        %v3137 = vpop.f32.mrb[0].mxu0
        %v3138 = vadd.f32 %v756, %v3137
        %v3139 = vpop.f32.mrb[0].mxu0
        %v3140 = vadd.f32 %v760, %v3139
        %3141 = vmatprep.mubr.bf16.mxu0 %v428
        %3142 = vmatmul.mubr.bf16.gmra.mrb[0].mxu0 %v427
        %v3143 = vpop.f32.mrb[0].mxu0
        %v3144 = vadd.f32 %v756, %v3143
        %v3145 = vpop.f32.mrb[0].mxu0
        %v3146 = vadd.f32 %v760, %v3145
        %v3147 = vpop.f32.mrb[0].mxu0
        %v3148 = vadd.f32 %v756, %v3147
        %v3149 = vpop.f32.mrb[0].mxu0
        %v3150 = vadd.f32 %v760, %v3149
        %3151 = vmatprep.mubr.bf16.mxu0 %v431
        %3152 = vmatmul.mubr.bf16.gmra.mrb[0].mxu0 %v430
        %v3153 = vpop.f32.mrb[0].mxu0
        %v3154 = vadd.f32 %v756, %v3153
        %v3155 = vpop.f32.mrb[0].mxu0
        %v3156 = vadd.f32 %v760, %v3155
        %v3157 = vpop.f32.mrb[0].mxu0
        %v3158 = vadd.f32 %v756, %v3157
        %v3159 = vpop.f32.mrb[0].mxu0
        %v3160 = vadd.f32 %v760, %v3159
        %3161 = vmatprep.mubr.bf16.mxu0 %v434
        %3162 = vmatmul.mubr.bf16.gmra.mrb[0].mxu0 %v433
        %v3163 = vpop.f32.mrb[0].mxu0
        %v3164 = vadd.f32 %v756, %v3163
        %v3165 = vpop.f32.mrb[0].mxu0
        %v3166 = vadd.f32 %v760, %v3165
        %v3167 = vpop.f32.mrb[0].mxu0
        %v3168 = vadd.f32 %v756, %v3167
        %v3169 = vpop.f32.mrb[0].mxu0
        %v3170 = vadd.f32 %v760, %v3169
        %3171 = vmatprep.mubr.bf16.mxu0 %v437
        %3172 = vmatmul.mubr.bf16.gmra.mrb[0].mxu0 %v436
        %v3173 = vpop.f32.mrb[0].mxu0
        %v3174 = vadd.f32 %v756, %v3173
        %v3175 = vpop.f32.mrb[0].mxu0
        %v3176 = vadd.f32 %v760, %v3175
        %v3177 = vpop.f32.mrb[0].mxu0
        %v3178 = vadd.f32 %v756, %v3177
        %v3179 = vpop.f32.mrb[0].mxu0
        %v3180 = vadd.f32 %v760, %v3179
        %3181 = vmatprep.mubr.bf16.mxu0 %v440
        %3182 = vmatmul.mubr.bf16.gmra.mrb[0].mxu0 %v439
        %v3183 = vpop.f32.mrb[0].mxu0
        %v3184 = vadd.f32 %v756, %v3183
        %v3185 = vpop.f32.mrb[0].mxu0
        %v3186 = vadd.f32 %v760, %v3185
        %v3187 = vpop.f32.mrb[0].mxu0
        %v3188 = vadd.f32 %v756, %v3187
        %v3189 = vpop.f32.mrb[0].mxu0
        %v3190 = vadd.f32 %v760, %v3189
        %3191 = vmatprep.mubr.bf16.mxu0 %v443
        %3192 = vmatmul.mubr.bf16.gmra.mrb[0].mxu0 %v442
        %v3193 = vpop.f32.mrb[0].mxu0
        %v3194 = vadd.f32 %v756, %v3193
        %v3195 = vpop.f32.mrb[0].mxu0
        %v3196 = vadd.f32 %v760, %v3195
        %v3197 = vpop.f32.mrb[0].mxu0
        %v3198 = vadd.f32 %v756, %v3197
        %v3199 = vpop.f32.mrb[0].mxu0
        %v3200 = vadd.f32 %v760, %v3199
        %3201 = vdwg.mxu0
        %3202 = vmatprep.subr.bf16.mxu0 %v1858
        %3203 = vmatpush1.bf16.msra.mxu0 %v1857
        %3204 = vmatprep.subr.bf16.mxu0 %v1870
        %3205 = vmatpush1.bf16.msra.mxu0 %v1869
        %3206 = vmatprep.subr.bf16.mxu0 %v1882
        %3207 = vmatpush1.bf16.msra.mxu0 %v1881
        %3208 = vmatprep.subr.bf16.mxu0 %v1894
        %3209 = vmatpush1.bf16.msra.mxu0 %v1893
        %3210 = vmatprep.subr.bf16.mxu0 %v1906
        %3211 = vmatpush1.bf16.msra.mxu0 %v1905
        %3212 = vmatprep.subr.bf16.mxu0 %v1918
        %3213 = vmatpush1.bf16.msra.mxu0 %v1917
        %3214 = vmatprep.subr.bf16.mxu0 %v1930
        %3215 = vmatpush1.bf16.msra.mxu0 %v1929
        %3216 = vmatprep.subr.bf16.mxu0 %v1942
        %3217 = vmatpush1.bf16.msra.mxu0 %v1941
        %3218 = vmatprep.subr.bf16.mxu0 0
        %3219 = vmatpush1.bf16.msra.mxu0 0
        %3220 = vmatprep.subr.bf16.mxu0 0
        %3221 = vmatpush1.bf16.msra.mxu0 0
        %3222 = vmatprep.subr.bf16.mxu0 0
        %3223 = vmatpush1.bf16.msra.mxu0 0
        %3224 = vmatprep.subr.bf16.mxu0 0
        %3225 = vmatpush1.bf16.msra.mxu0 0
        %3226 = vmatprep.subr.bf16.mxu0 0
        %3227 = vmatpush1.bf16.msra.mxu0 0
        %3228 = vmatprep.subr.bf16.mxu0 0
        %3229 = vmatpush1.bf16.msra.mxu0 0
        %3230 = vmatprep.subr.bf16.mxu0 0
        %3231 = vmatpush1.bf16.msra.mxu0 0
        %3232 = vmatprep.subr.bf16.mxu0 0
        %3233 = vmatpush1.bf16.msra.mxu0 0
        %3234 = vmatprep.mubr.bf16.mxu0 0
        %3235 = vmatmul.mubr.bf16.gmra.mrb[0].mxu0 %v399
        %v3236 = vpop.f32.mrb[0].mxu0
        %v3237 = vadd.f32 %v3044, %v3236
        %v3238 = vpop.f32.mrb[0].mxu0
        %v3239 = vadd.f32 %v3046, %v3238
        %v3240 = vpop.f32.mrb[0].mxu0
        %v3241 = vadd.f32 %v3048, %v3240
        %v3242 = vpop.f32.mrb[0].mxu0
        %v3243 = vadd.f32 %v3050, %v3242
        %3244 = vmatprep.mubr.bf16.mxu0 0
        %3245 = vmatmul.mubr.bf16.gmra.mrb[0].mxu0 %v402
        %v3246 = vpop.f32.mrb[0].mxu0
        %v3247 = vadd.f32 %v3054, %v3246
        %v3248 = vpop.f32.mrb[0].mxu0
        %v3249 = vadd.f32 %v3056, %v3248
        %v3250 = vpop.f32.mrb[0].mxu0
        %v3251 = vadd.f32 %v3058, %v3250
        %v3252 = vpop.f32.mrb[0].mxu0
        %v3253 = vadd.f32 %v3060, %v3252
        %3254 = vmatprep.mubr.bf16.mxu0 0
        %3255 = vmatmul.mubr.bf16.gmra.mrb[0].mxu0 %v405
        %v3256 = vpop.f32.mrb[0].mxu0
        %v3257 = vadd.f32 %v3064, %v3256
        %v3258 = vpop.f32.mrb[0].mxu0
        %v3259 = vadd.f32 %v3066, %v3258
        %v3260 = vpop.f32.mrb[0].mxu0
        %v3261 = vadd.f32 %v3068, %v3260
        %v3262 = vpop.f32.mrb[0].mxu0
        %v3263 = vadd.f32 %v3070, %v3262
        %3264 = vmatprep.mubr.bf16.mxu0 0
        %3265 = vmatmul.mubr.bf16.gmra.mrb[0].mxu0 %v408
        %v3266 = vpop.f32.mrb[0].mxu0
        %v3267 = vadd.f32 %v3074, %v3266
        %v3268 = vpop.f32.mrb[0].mxu0
        %v3269 = vadd.f32 %v3076, %v3268
        %v3270 = vpop.f32.mrb[0].mxu0
        %v3271 = vadd.f32 %v3078, %v3270
        %v3272 = vpop.f32.mrb[0].mxu0
        %v3273 = vadd.f32 %v3080, %v3272
        %3274 = vmatprep.mubr.bf16.mxu0 0
        %3275 = vmatmul.mubr.bf16.gmra.mrb[0].mxu0 %v411
        %v3276 = vpop.f32.mrb[0].mxu0
        %v3277 = vadd.f32 %v3084, %v3276
        %v3278 = vpop.f32.mrb[0].mxu0
        %v3279 = vadd.f32 %v3086, %v3278
        %v3280 = vpop.f32.mrb[0].mxu0
        %v3281 = vadd.f32 %v3088, %v3280
        %v3282 = vpop.f32.mrb[0].mxu0
        %v3283 = vadd.f32 %v3090, %v3282
        %3284 = vmatprep.mubr.bf16.mxu0 0
        %3285 = vmatmul.mubr.bf16.gmra.mrb[0].mxu0 %v414
        %v3286 = vpop.f32.mrb[0].mxu0
        %v3287 = vadd.f32 %v3094, %v3286
        %v3288 = vpop.f32.mrb[0].mxu0
        %v3289 = vadd.f32 %v3096, %v3288
        %v3290 = vpop.f32.mrb[0].mxu0
        %v3291 = vadd.f32 %v3098, %v3290
        %v3292 = vpop.f32.mrb[0].mxu0
        %v3293 = vadd.f32 %v3100, %v3292
        %3294 = vmatprep.mubr.bf16.mxu0 0
        %3295 = vmatmul.mubr.bf16.gmra.mrb[0].mxu0 %v417
        %v3296 = vpop.f32.mrb[0].mxu0
        %v3297 = vadd.f32 %v3104, %v3296
        %v3298 = vpop.f32.mrb[0].mxu0
        %v3299 = vadd.f32 %v3106, %v3298
        %v3300 = vpop.f32.mrb[0].mxu0
        %v3301 = vadd.f32 %v3108, %v3300
        %v3302 = vpop.f32.mrb[0].mxu0
        %v3303 = vadd.f32 %v3110, %v3302
        %3304 = vmatprep.mubr.bf16.mxu0 0
        %3305 = vmatmul.mubr.bf16.gmra.mrb[0].mxu0 %v420
        %v3306 = vpop.f32.mrb[0].mxu0
        %v3307 = vadd.f32 %v3114, %v3306
        %v3308 = vpop.f32.mrb[0].mxu0
        %v3309 = vadd.f32 %v3116, %v3308
        %v3310 = vpop.f32.mrb[0].mxu0
        %v3311 = vadd.f32 %v3118, %v3310
        %v3312 = vpop.f32.mrb[0].mxu0
        %v3313 = vadd.f32 %v3120, %v3312
        %3314 = vmatprep.mubr.bf16.mxu0 0
        %3315 = vmatmul.mubr.bf16.gmra.mrb[0].mxu0 %v423
        %v3316 = vpop.f32.mrb[0].mxu0
        %v3317 = vadd.f32 %v3124, %v3316
        %v3318 = vpop.f32.mrb[0].mxu0
        %v3319 = vadd.f32 %v3126, %v3318
        %v3320 = vpop.f32.mrb[0].mxu0
        %v3321 = vadd.f32 %v3128, %v3320
        %v3322 = vpop.f32.mrb[0].mxu0
        %v3323 = vadd.f32 %v3130, %v3322
        %3324 = vmatprep.mubr.bf16.mxu0 0
        %3325 = vmatmul.mubr.bf16.gmra.mrb[0].mxu0 %v426
        %v3326 = vpop.f32.mrb[0].mxu0
        %v3327 = vadd.f32 %v3134, %v3326
        %v3328 = vpop.f32.mrb[0].mxu0
        %v3329 = vadd.f32 %v3136, %v3328
        %v3330 = vpop.f32.mrb[0].mxu0
        %v3331 = vadd.f32 %v3138, %v3330
        %v3332 = vpop.f32.mrb[0].mxu0
        %v3333 = vadd.f32 %v3140, %v3332
        %3334 = vmatprep.mubr.bf16.mxu0 0
        %3335 = vmatmul.mubr.bf16.gmra.mrb[0].mxu0 %v429
        %v3336 = vpop.f32.mrb[0].mxu0
        %v3337 = vadd.f32 %v3144, %v3336
        %v3338 = vpop.f32.mrb[0].mxu0
        %v3339 = vadd.f32 %v3146, %v3338
        %v3340 = vpop.f32.mrb[0].mxu0
        %v3341 = vadd.f32 %v3148, %v3340
        %v3342 = vpop.f32.mrb[0].mxu0
        %v3343 = vadd.f32 %v3150, %v3342
        %3344 = vmatprep.mubr.bf16.mxu0 0
        %3345 = vmatmul.mubr.bf16.gmra.mrb[0].mxu0 %v432
        %v3346 = vpop.f32.mrb[0].mxu0
        %v3347 = vadd.f32 %v3154, %v3346
        %v3348 = vpop.f32.mrb[0].mxu0
        %v3349 = vadd.f32 %v3156, %v3348
        %v3350 = vpop.f32.mrb[0].mxu0
        %v3351 = vadd.f32 %v3158, %v3350
        %v3352 = vpop.f32.mrb[0].mxu0
        %v3353 = vadd.f32 %v3160, %v3352
        %3354 = vmatprep.mubr.bf16.mxu0 0
        %3355 = vmatmul.mubr.bf16.gmra.mrb[0].mxu0 %v435
        %v3356 = vpop.f32.mrb[0].mxu0
        %v3357 = vadd.f32 %v3164, %v3356
        %v3358 = vpop.f32.mrb[0].mxu0
        %v3359 = vadd.f32 %v3166, %v3358
        %v3360 = vpop.f32.mrb[0].mxu0
        %v3361 = vadd.f32 %v3168, %v3360
        %v3362 = vpop.f32.mrb[0].mxu0
        %v3363 = vadd.f32 %v3170, %v3362
        %3364 = vmatprep.mubr.bf16.mxu0 0
        %3365 = vmatmul.mubr.bf16.gmra.mrb[0].mxu0 %v438
        %v3366 = vpop.f32.mrb[0].mxu0
        %v3367 = vadd.f32 %v3174, %v3366
        %v3368 = vpop.f32.mrb[0].mxu0
        %v3369 = vadd.f32 %v3176, %v3368
        %v3370 = vpop.f32.mrb[0].mxu0
        %v3371 = vadd.f32 %v3178, %v3370
        %v3372 = vpop.f32.mrb[0].mxu0
        %v3373 = vadd.f32 %v3180, %v3372
        %3374 = vmatprep.mubr.bf16.mxu0 0
        %3375 = vmatmul.mubr.bf16.gmra.mrb[0].mxu0 %v441
        %v3376 = vpop.f32.mrb[0].mxu0
        %v3377 = vadd.f32 %v3184, %v3376
        %v3378 = vpop.f32.mrb[0].mxu0
        %v3379 = vadd.f32 %v3186, %v3378
        %v3380 = vpop.f32.mrb[0].mxu0
        %v3381 = vadd.f32 %v3188, %v3380
        %v3382 = vpop.f32.mrb[0].mxu0
        %v3383 = vadd.f32 %v3190, %v3382
        %3384 = vmatprep.mubr.bf16.mxu0 0
        %3385 = vmatmul.mubr.bf16.gmra.mrb[0].mxu0 %v444
        %v3386 = vpop.f32.mrb[0].mxu0
        %v3387 = vadd.f32 %v3194, %v3386
        %v3388 = vpop.f32.mrb[0].mxu0
        %v3389 = vadd.f32 %v3196, %v3388
        %v3390 = vpop.f32.mrb[0].mxu0
        %v3391 = vadd.f32 %v3198, %v3390
        %v3392 = vpop.f32.mrb[0].mxu0
        %v3393 = vadd.f32 %v3200, %v3392
        %3394 = vdwg.mxu0
        %3395 = vmatprep.subr.bf16.mxu0 %v1668
        %3396 = vmatpush1.bf16.msra.mxu0 %v1667
        %3397 = vmatprep.subr.bf16.mxu0 %v1680
        %3398 = vmatpush1.bf16.msra.mxu0 %v1679
        %3399 = vmatprep.subr.bf16.mxu0 %v1692
        %3400 = vmatpush1.bf16.msra.mxu0 %v1691
        %3401 = vmatprep.subr.bf16.mxu0 %v1704
        %3402 = vmatpush1.bf16.msra.mxu0 %v1703
        %3403 = vmatprep.subr.bf16.mxu0 %v1716
        %3404 = vmatpush1.bf16.msra.mxu0 %v1715
        %3405 = vmatprep.subr.bf16.mxu0 %v1728
        %3406 = vmatpush1.bf16.msra.mxu0 %v1727
        %3407 = vmatprep.subr.bf16.mxu0 %v1740
        %3408 = vmatpush1.bf16.msra.mxu0 %v1739
        %3409 = vmatprep.subr.bf16.mxu0 %v1752
        %3410 = vmatpush1.bf16.msra.mxu0 %v1751
        %3411 = vmatprep.subr.bf16.mxu0 %v1764
        %3412 = vmatpush1.bf16.msra.mxu0 %v1763
        %3413 = vmatprep.subr.bf16.mxu0 %v1776
        %3414 = vmatpush1.bf16.msra.mxu0 %v1775
        %3415 = vmatprep.subr.bf16.mxu0 %v1788
        %3416 = vmatpush1.bf16.msra.mxu0 %v1787
        %3417 = vmatprep.subr.bf16.mxu0 %v1800
        %3418 = vmatpush1.bf16.msra.mxu0 %v1799
        %3419 = vmatprep.subr.bf16.mxu0 %v1812
        %3420 = vmatpush1.bf16.msra.mxu0 %v1811
        %3421 = vmatprep.subr.bf16.mxu0 %v1824
        %3422 = vmatpush1.bf16.msra.mxu0 %v1823
        %3423 = vmatprep.subr.bf16.mxu0 %v1836
        %3424 = vmatpush1.bf16.msra.mxu0 %v1835
        %3425 = vmatprep.subr.bf16.mxu0 %v1848
        %3426 = vmatpush1.bf16.msra.mxu0 %v1847
        %3427 = vmatprep.mubr.bf16.mxu0 %v398
        %3428 = vmatmul.mubr.bf16.gmra.mrb[0].mxu0 %v397
        %v3429 = vpop.f32.mrb[0].mxu0
        %v3430 = vadd.f32 %v764, %v3429
        %v3431 = vpop.f32.mrb[0].mxu0
        %v3432 = vadd.f32 %v768, %v3431
        %v3433 = vpop.f32.mrb[0].mxu0
        %v3434 = vadd.f32 %v764, %v3433
        %v3435 = vpop.f32.mrb[0].mxu0
        %v3436 = vadd.f32 %v768, %v3435
        %3437 = vmatprep.mubr.bf16.mxu0 %v401
        %3438 = vmatmul.mubr.bf16.gmra.mrb[0].mxu0 %v400
        %v3439 = vpop.f32.mrb[0].mxu0
        %v3440 = vadd.f32 %v764, %v3439
        %v3441 = vpop.f32.mrb[0].mxu0
        %v3442 = vadd.f32 %v768, %v3441
        %v3443 = vpop.f32.mrb[0].mxu0
        %v3444 = vadd.f32 %v764, %v3443
        %v3445 = vpop.f32.mrb[0].mxu0
        %v3446 = vadd.f32 %v768, %v3445
        %3447 = vmatprep.mubr.bf16.mxu0 %v404
        %3448 = vmatmul.mubr.bf16.gmra.mrb[0].mxu0 %v403
        %v3449 = vpop.f32.mrb[0].mxu0
        %v3450 = vadd.f32 %v764, %v3449
        %v3451 = vpop.f32.mrb[0].mxu0
        %v3452 = vadd.f32 %v768, %v3451
        %v3453 = vpop.f32.mrb[0].mxu0
        %v3454 = vadd.f32 %v764, %v3453
        %v3455 = vpop.f32.mrb[0].mxu0
        %v3456 = vadd.f32 %v768, %v3455
        %3457 = vmatprep.mubr.bf16.mxu0 %v407
        %3458 = vmatmul.mubr.bf16.gmra.mrb[0].mxu0 %v406
        %v3459 = vpop.f32.mrb[0].mxu0
        %v3460 = vadd.f32 %v764, %v3459
        %v3461 = vpop.f32.mrb[0].mxu0
        %v3462 = vadd.f32 %v768, %v3461
        %v3463 = vpop.f32.mrb[0].mxu0
        %v3464 = vadd.f32 %v764, %v3463
        %v3465 = vpop.f32.mrb[0].mxu0
        %v3466 = vadd.f32 %v768, %v3465
        %3467 = vmatprep.mubr.bf16.mxu0 %v410
        %3468 = vmatmul.mubr.bf16.gmra.mrb[0].mxu0 %v409
        %v3469 = vpop.f32.mrb[0].mxu0
        %v3470 = vadd.f32 %v764, %v3469
        %v3471 = vpop.f32.mrb[0].mxu0
        %v3472 = vadd.f32 %v768, %v3471
        %v3473 = vpop.f32.mrb[0].mxu0
        %v3474 = vadd.f32 %v764, %v3473
        %v3475 = vpop.f32.mrb[0].mxu0
        %v3476 = vadd.f32 %v768, %v3475
        %3477 = vmatprep.mubr.bf16.mxu0 %v413
        %3478 = vmatmul.mubr.bf16.gmra.mrb[0].mxu0 %v412
        %v3479 = vpop.f32.mrb[0].mxu0
        %v3480 = vadd.f32 %v764, %v3479
        %v3481 = vpop.f32.mrb[0].mxu0
        %v3482 = vadd.f32 %v768, %v3481
        %v3483 = vpop.f32.mrb[0].mxu0
        %v3484 = vadd.f32 %v764, %v3483
        %v3485 = vpop.f32.mrb[0].mxu0
        %v3486 = vadd.f32 %v768, %v3485
        %3487 = vmatprep.mubr.bf16.mxu0 %v416
        %3488 = vmatmul.mubr.bf16.gmra.mrb[0].mxu0 %v415
        %v3489 = vpop.f32.mrb[0].mxu0
        %v3490 = vadd.f32 %v764, %v3489
        %v3491 = vpop.f32.mrb[0].mxu0
        %v3492 = vadd.f32 %v768, %v3491
        %v3493 = vpop.f32.mrb[0].mxu0
        %v3494 = vadd.f32 %v764, %v3493
        %v3495 = vpop.f32.mrb[0].mxu0
        %v3496 = vadd.f32 %v768, %v3495
        %3497 = vmatprep.mubr.bf16.mxu0 %v419
        %3498 = vmatmul.mubr.bf16.gmra.mrb[0].mxu0 %v418
        %v3499 = vpop.f32.mrb[0].mxu0
        %v3500 = vadd.f32 %v764, %v3499
        %v3501 = vpop.f32.mrb[0].mxu0
        %v3502 = vadd.f32 %v768, %v3501
        %v3503 = vpop.f32.mrb[0].mxu0
        %v3504 = vadd.f32 %v764, %v3503
        %v3505 = vpop.f32.mrb[0].mxu0
        %v3506 = vadd.f32 %v768, %v3505
        %3507 = vmatprep.mubr.bf16.mxu0 %v422
        %3508 = vmatmul.mubr.bf16.gmra.mrb[0].mxu0 %v421
        %v3509 = vpop.f32.mrb[0].mxu0
        %v3510 = vadd.f32 %v764, %v3509
        %v3511 = vpop.f32.mrb[0].mxu0
        %v3512 = vadd.f32 %v768, %v3511
        %v3513 = vpop.f32.mrb[0].mxu0
        %v3514 = vadd.f32 %v764, %v3513
        %v3515 = vpop.f32.mrb[0].mxu0
        %v3516 = vadd.f32 %v768, %v3515
        %3517 = vmatprep.mubr.bf16.mxu0 %v425
        %3518 = vmatmul.mubr.bf16.gmra.mrb[0].mxu0 %v424
        %v3519 = vpop.f32.mrb[0].mxu0
        %v3520 = vadd.f32 %v764, %v3519
        %v3521 = vpop.f32.mrb[0].mxu0
        %v3522 = vadd.f32 %v768, %v3521
        %v3523 = vpop.f32.mrb[0].mxu0
        %v3524 = vadd.f32 %v764, %v3523
        %v3525 = vpop.f32.mrb[0].mxu0
        %v3526 = vadd.f32 %v768, %v3525
        %3527 = vmatprep.mubr.bf16.mxu0 %v428
        %3528 = vmatmul.mubr.bf16.gmra.mrb[0].mxu0 %v427
        %v3529 = vpop.f32.mrb[0].mxu0
        %v3530 = vadd.f32 %v764, %v3529
        %v3531 = vpop.f32.mrb[0].mxu0
        %v3532 = vadd.f32 %v768, %v3531
        %v3533 = vpop.f32.mrb[0].mxu0
        %v3534 = vadd.f32 %v764, %v3533
        %v3535 = vpop.f32.mrb[0].mxu0
        %v3536 = vadd.f32 %v768, %v3535
        %3537 = vmatprep.mubr.bf16.mxu0 %v431
        %3538 = vmatmul.mubr.bf16.gmra.mrb[0].mxu0 %v430
        %v3539 = vpop.f32.mrb[0].mxu0
        %v3540 = vadd.f32 %v764, %v3539
        %v3541 = vpop.f32.mrb[0].mxu0
        %v3542 = vadd.f32 %v768, %v3541
        %v3543 = vpop.f32.mrb[0].mxu0
        %v3544 = vadd.f32 %v764, %v3543
        %v3545 = vpop.f32.mrb[0].mxu0
        %v3546 = vadd.f32 %v768, %v3545
        %3547 = vmatprep.mubr.bf16.mxu0 %v434
        %3548 = vmatmul.mubr.bf16.gmra.mrb[0].mxu0 %v433
        %v3549 = vpop.f32.mrb[0].mxu0
        %v3550 = vadd.f32 %v764, %v3549
        %v3551 = vpop.f32.mrb[0].mxu0
        %v3552 = vadd.f32 %v768, %v3551
        %v3553 = vpop.f32.mrb[0].mxu0
        %v3554 = vadd.f32 %v764, %v3553
        %v3555 = vpop.f32.mrb[0].mxu0
        %v3556 = vadd.f32 %v768, %v3555
        %3557 = vmatprep.mubr.bf16.mxu0 %v437
        %3558 = vmatmul.mubr.bf16.gmra.mrb[0].mxu0 %v436
        %v3559 = vpop.f32.mrb[0].mxu0
        %v3560 = vadd.f32 %v764, %v3559
        %v3561 = vpop.f32.mrb[0].mxu0
        %v3562 = vadd.f32 %v768, %v3561
        %v3563 = vpop.f32.mrb[0].mxu0
        %v3564 = vadd.f32 %v764, %v3563
        %v3565 = vpop.f32.mrb[0].mxu0
        %v3566 = vadd.f32 %v768, %v3565
        %3567 = vmatprep.mubr.bf16.mxu0 %v440
        %3568 = vmatmul.mubr.bf16.gmra.mrb[0].mxu0 %v439
        %v3569 = vpop.f32.mrb[0].mxu0
        %v3570 = vadd.f32 %v764, %v3569
        %v3571 = vpop.f32.mrb[0].mxu0
        %v3572 = vadd.f32 %v768, %v3571
        %v3573 = vpop.f32.mrb[0].mxu0
        %v3574 = vadd.f32 %v764, %v3573
        %v3575 = vpop.f32.mrb[0].mxu0
        %v3576 = vadd.f32 %v768, %v3575
        %3577 = vmatprep.mubr.bf16.mxu0 %v443
        %3578 = vmatmul.mubr.bf16.gmra.mrb[0].mxu0 %v442
        %v3579 = vpop.f32.mrb[0].mxu0
        %v3580 = vadd.f32 %v764, %v3579
        %v3581 = vpop.f32.mrb[0].mxu0
        %v3582 = vadd.f32 %v768, %v3581
        %v3583 = vpop.f32.mrb[0].mxu0
        %v3584 = vadd.f32 %v764, %v3583
        %v3585 = vpop.f32.mrb[0].mxu0
        %v3586 = vadd.f32 %v768, %v3585
        %3587 = vdwg.mxu0
        %3588 = vmatprep.subr.bf16.mxu0 %v1860
        %3589 = vmatpush1.bf16.msra.mxu0 %v1859
        %3590 = vmatprep.subr.bf16.mxu0 %v1872
        %3591 = vmatpush1.bf16.msra.mxu0 %v1871
        %3592 = vmatprep.subr.bf16.mxu0 %v1884
        %3593 = vmatpush1.bf16.msra.mxu0 %v1883
        %3594 = vmatprep.subr.bf16.mxu0 %v1896
        %3595 = vmatpush1.bf16.msra.mxu0 %v1895
        %3596 = vmatprep.subr.bf16.mxu0 %v1908
        %3597 = vmatpush1.bf16.msra.mxu0 %v1907
        %3598 = vmatprep.subr.bf16.mxu0 %v1920
        %3599 = vmatpush1.bf16.msra.mxu0 %v1919
        %3600 = vmatprep.subr.bf16.mxu0 %v1932
        %3601 = vmatpush1.bf16.msra.mxu0 %v1931
        %3602 = vmatprep.subr.bf16.mxu0 %v1944
        %3603 = vmatpush1.bf16.msra.mxu0 %v1943
        %3604 = vmatprep.subr.bf16.mxu0 0
        %3605 = vmatpush1.bf16.msra.mxu0 0
        %3606 = vmatprep.subr.bf16.mxu0 0
        %3607 = vmatpush1.bf16.msra.mxu0 0
        %3608 = vmatprep.subr.bf16.mxu0 0
        %3609 = vmatpush1.bf16.msra.mxu0 0
        %3610 = vmatprep.subr.bf16.mxu0 0
        %3611 = vmatpush1.bf16.msra.mxu0 0
        %3612 = vmatprep.subr.bf16.mxu0 0
        %3613 = vmatpush1.bf16.msra.mxu0 0
        %3614 = vmatprep.subr.bf16.mxu0 0
        %3615 = vmatpush1.bf16.msra.mxu0 0
        %3616 = vmatprep.subr.bf16.mxu0 0
        %3617 = vmatpush1.bf16.msra.mxu0 0
        %3618 = vmatprep.subr.bf16.mxu0 0
        %3619 = vmatpush1.bf16.msra.mxu0 0
        %3620 = vmatprep.mubr.bf16.mxu0 0
        %3621 = vmatmul.mubr.bf16.gmra.mrb[0].mxu0 %v399
        %v3622 = vpop.f32.mrb[0].mxu0
        %v3623 = vadd.f32 %v3430, %v3622
        %v3624 = vpop.f32.mrb[0].mxu0
        %v3625 = vadd.f32 %v3432, %v3624
        %v3626 = vpop.f32.mrb[0].mxu0
        %v3627 = vadd.f32 %v3434, %v3626
        %v3628 = vpop.f32.mrb[0].mxu0
        %v3629 = vadd.f32 %v3436, %v3628
        %3630 = vmatprep.mubr.bf16.mxu0 0
        %3631 = vmatmul.mubr.bf16.gmra.mrb[0].mxu0 %v402
        %v3632 = vpop.f32.mrb[0].mxu0
        %v3633 = vadd.f32 %v3440, %v3632
        %v3634 = vpop.f32.mrb[0].mxu0
        %v3635 = vadd.f32 %v3442, %v3634
        %v3636 = vpop.f32.mrb[0].mxu0
        %v3637 = vadd.f32 %v3444, %v3636
        %v3638 = vpop.f32.mrb[0].mxu0
        %v3639 = vadd.f32 %v3446, %v3638
        %3640 = vmatprep.mubr.bf16.mxu0 0
        %3641 = vmatmul.mubr.bf16.gmra.mrb[0].mxu0 %v405
        %v3642 = vpop.f32.mrb[0].mxu0
        %v3643 = vadd.f32 %v3450, %v3642
        %v3644 = vpop.f32.mrb[0].mxu0
        %v3645 = vadd.f32 %v3452, %v3644
        %v3646 = vpop.f32.mrb[0].mxu0
        %v3647 = vadd.f32 %v3454, %v3646
        %v3648 = vpop.f32.mrb[0].mxu0
        %v3649 = vadd.f32 %v3456, %v3648
        %3650 = vmatprep.mubr.bf16.mxu0 0
        %3651 = vmatmul.mubr.bf16.gmra.mrb[0].mxu0 %v408
        %v3652 = vpop.f32.mrb[0].mxu0
        %v3653 = vadd.f32 %v3460, %v3652
        %v3654 = vpop.f32.mrb[0].mxu0
        %v3655 = vadd.f32 %v3462, %v3654
        %v3656 = vpop.f32.mrb[0].mxu0
        %v3657 = vadd.f32 %v3464, %v3656
        %v3658 = vpop.f32.mrb[0].mxu0
        %v3659 = vadd.f32 %v3466, %v3658
        %3660 = vmatprep.mubr.bf16.mxu0 0
        %3661 = vmatmul.mubr.bf16.gmra.mrb[0].mxu0 %v411
        %v3662 = vpop.f32.mrb[0].mxu0
        %v3663 = vadd.f32 %v3470, %v3662
        %v3664 = vpop.f32.mrb[0].mxu0
        %v3665 = vadd.f32 %v3472, %v3664
        %v3666 = vpop.f32.mrb[0].mxu0
        %v3667 = vadd.f32 %v3474, %v3666
        %v3668 = vpop.f32.mrb[0].mxu0
        %v3669 = vadd.f32 %v3476, %v3668
        %3670 = vmatprep.mubr.bf16.mxu0 0
        %3671 = vmatmul.mubr.bf16.gmra.mrb[0].mxu0 %v414
        %v3672 = vpop.f32.mrb[0].mxu0
        %v3673 = vadd.f32 %v3480, %v3672
        %v3674 = vpop.f32.mrb[0].mxu0
        %v3675 = vadd.f32 %v3482, %v3674
        %v3676 = vpop.f32.mrb[0].mxu0
        %v3677 = vadd.f32 %v3484, %v3676
        %v3678 = vpop.f32.mrb[0].mxu0
        %v3679 = vadd.f32 %v3486, %v3678
        %3680 = vmatprep.mubr.bf16.mxu0 0
        %3681 = vmatmul.mubr.bf16.gmra.mrb[0].mxu0 %v417
        %v3682 = vpop.f32.mrb[0].mxu0
        %v3683 = vadd.f32 %v3490, %v3682
        %v3684 = vpop.f32.mrb[0].mxu0
        %v3685 = vadd.f32 %v3492, %v3684
        %v3686 = vpop.f32.mrb[0].mxu0
        %v3687 = vadd.f32 %v3494, %v3686
        %v3688 = vpop.f32.mrb[0].mxu0
        %v3689 = vadd.f32 %v3496, %v3688
        %3690 = vmatprep.mubr.bf16.mxu0 0
        %3691 = vmatmul.mubr.bf16.gmra.mrb[0].mxu0 %v420
        %v3692 = vpop.f32.mrb[0].mxu0
        %v3693 = vadd.f32 %v3500, %v3692
        %v3694 = vpop.f32.mrb[0].mxu0
        %v3695 = vadd.f32 %v3502, %v3694
        %v3696 = vpop.f32.mrb[0].mxu0
        %v3697 = vadd.f32 %v3504, %v3696
        %v3698 = vpop.f32.mrb[0].mxu0
        %v3699 = vadd.f32 %v3506, %v3698
        %3700 = vmatprep.mubr.bf16.mxu0 0
        %3701 = vmatmul.mubr.bf16.gmra.mrb[0].mxu0 %v423
        %v3702 = vpop.f32.mrb[0].mxu0
        %v3703 = vadd.f32 %v3510, %v3702
        %v3704 = vpop.f32.mrb[0].mxu0
        %v3705 = vadd.f32 %v3512, %v3704
        %v3706 = vpop.f32.mrb[0].mxu0
        %v3707 = vadd.f32 %v3514, %v3706
        %v3708 = vpop.f32.mrb[0].mxu0
        %v3709 = vadd.f32 %v3516, %v3708
        %3710 = vmatprep.mubr.bf16.mxu0 0
        %3711 = vmatmul.mubr.bf16.gmra.mrb[0].mxu0 %v426
        %v3712 = vpop.f32.mrb[0].mxu0
        %v3713 = vadd.f32 %v3520, %v3712
        %v3714 = vpop.f32.mrb[0].mxu0
        %v3715 = vadd.f32 %v3522, %v3714
        %v3716 = vpop.f32.mrb[0].mxu0
        %v3717 = vadd.f32 %v3524, %v3716
        %v3718 = vpop.f32.mrb[0].mxu0
        %v3719 = vadd.f32 %v3526, %v3718
        %3720 = vmatprep.mubr.bf16.mxu0 0
        %3721 = vmatmul.mubr.bf16.gmra.mrb[0].mxu0 %v429
        %v3722 = vpop.f32.mrb[0].mxu0
        %v3723 = vadd.f32 %v3530, %v3722
        %v3724 = vpop.f32.mrb[0].mxu0
        %v3725 = vadd.f32 %v3532, %v3724
        %v3726 = vpop.f32.mrb[0].mxu0
        %v3727 = vadd.f32 %v3534, %v3726
        %v3728 = vpop.f32.mrb[0].mxu0
        %v3729 = vadd.f32 %v3536, %v3728
        %3730 = vmatprep.mubr.bf16.mxu0 0
        %3731 = vmatmul.mubr.bf16.gmra.mrb[0].mxu0 %v432
        %v3732 = vpop.f32.mrb[0].mxu0
        %v3733 = vadd.f32 %v3540, %v3732
        %v3734 = vpop.f32.mrb[0].mxu0
        %v3735 = vadd.f32 %v3542, %v3734
        %v3736 = vpop.f32.mrb[0].mxu0
        %v3737 = vadd.f32 %v3544, %v3736
        %v3738 = vpop.f32.mrb[0].mxu0
        %v3739 = vadd.f32 %v3546, %v3738
        %3740 = vmatprep.mubr.bf16.mxu0 0
        %3741 = vmatmul.mubr.bf16.gmra.mrb[0].mxu0 %v435
        %v3742 = vpop.f32.mrb[0].mxu0
        %v3743 = vadd.f32 %v3550, %v3742
        %v3744 = vpop.f32.mrb[0].mxu0
        %v3745 = vadd.f32 %v3552, %v3744
        %v3746 = vpop.f32.mrb[0].mxu0
        %v3747 = vadd.f32 %v3554, %v3746
        %v3748 = vpop.f32.mrb[0].mxu0
        %v3749 = vadd.f32 %v3556, %v3748
        %3750 = vmatprep.mubr.bf16.mxu0 0
        %3751 = vmatmul.mubr.bf16.gmra.mrb[0].mxu0 %v438
        %v3752 = vpop.f32.mrb[0].mxu0
        %v3753 = vadd.f32 %v3560, %v3752
        %v3754 = vpop.f32.mrb[0].mxu0
        %v3755 = vadd.f32 %v3562, %v3754
        %v3756 = vpop.f32.mrb[0].mxu0
        %v3757 = vadd.f32 %v3564, %v3756
        %v3758 = vpop.f32.mrb[0].mxu0
        %v3759 = vadd.f32 %v3566, %v3758
        %3760 = vmatprep.mubr.bf16.mxu0 0
        %3761 = vmatmul.mubr.bf16.gmra.mrb[0].mxu0 %v441
        %v3762 = vpop.f32.mrb[0].mxu0
        %v3763 = vadd.f32 %v3570, %v3762
        %v3764 = vpop.f32.mrb[0].mxu0
        %v3765 = vadd.f32 %v3572, %v3764
        %v3766 = vpop.f32.mrb[0].mxu0
        %v3767 = vadd.f32 %v3574, %v3766
        %v3768 = vpop.f32.mrb[0].mxu0
        %v3769 = vadd.f32 %v3576, %v3768
        %3770 = vmatprep.mubr.bf16.mxu0 0
        %3771 = vmatmul.mubr.bf16.gmra.mrb[0].mxu0 %v444
        %v3772 = vpop.f32.mrb[0].mxu0
        %v3773 = vadd.f32 %v3580, %v3772
        %v3774 = vpop.f32.mrb[0].mxu0
        %v3775 = vadd.f32 %v3582, %v3774
        %v3776 = vpop.f32.mrb[0].mxu0
        %v3777 = vadd.f32 %v3584, %v3776
        %v3778 = vpop.f32.mrb[0].mxu0
        %v3779 = vadd.f32 %v3586, %v3778
        %3780 = vdwg.mxu0
        %3781 = vmatprep.subr.bf16.mxu0 %v1670
        %3782 = vmatpush1.bf16.msra.mxu0 %v1669
        %3783 = vmatprep.subr.bf16.mxu0 %v1682
        %3784 = vmatpush1.bf16.msra.mxu0 %v1681
        %3785 = vmatprep.subr.bf16.mxu0 %v1694
        %3786 = vmatpush1.bf16.msra.mxu0 %v1693
        %3787 = vmatprep.subr.bf16.mxu0 %v1706
        %3788 = vmatpush1.bf16.msra.mxu0 %v1705
        %3789 = vmatprep.subr.bf16.mxu0 %v1718
        %3790 = vmatpush1.bf16.msra.mxu0 %v1717
        %3791 = vmatprep.subr.bf16.mxu0 %v1730
        %3792 = vmatpush1.bf16.msra.mxu0 %v1729
        %3793 = vmatprep.subr.bf16.mxu0 %v1742
        %3794 = vmatpush1.bf16.msra.mxu0 %v1741
        %3795 = vmatprep.subr.bf16.mxu0 %v1754
        %3796 = vmatpush1.bf16.msra.mxu0 %v1753
        %3797 = vmatprep.subr.bf16.mxu0 %v1766
        %3798 = vmatpush1.bf16.msra.mxu0 %v1765
        %3799 = vmatprep.subr.bf16.mxu0 %v1778
        %3800 = vmatpush1.bf16.msra.mxu0 %v1777
        %3801 = vmatprep.subr.bf16.mxu0 %v1790
        %3802 = vmatpush1.bf16.msra.mxu0 %v1789
        %3803 = vmatprep.subr.bf16.mxu0 %v1802
        %3804 = vmatpush1.bf16.msra.mxu0 %v1801
        %3805 = vmatprep.subr.bf16.mxu0 %v1814
        %3806 = vmatpush1.bf16.msra.mxu0 %v1813
        %3807 = vmatprep.subr.bf16.mxu0 %v1826
        %3808 = vmatpush1.bf16.msra.mxu0 %v1825
        %3809 = vmatprep.subr.bf16.mxu0 %v1838
        %3810 = vmatpush1.bf16.msra.mxu0 %v1837
        %3811 = vmatprep.subr.bf16.mxu0 %v1850
        %3812 = vmatpush1.bf16.msra.mxu0 %v1849
        %3813 = vmatprep.mubr.bf16.mxu0 %v398
        %3814 = vmatmul.mubr.bf16.gmra.mrb[0].mxu0 %v397
        %v3815 = vpop.f32.mrb[0].mxu0
        %v3816 = vadd.f32 %v772, %v3815
        %v3817 = vpop.f32.mrb[0].mxu0
        %v3818 = vadd.f32 %v776, %v3817
        %v3819 = vpop.f32.mrb[0].mxu0
        %v3820 = vadd.f32 %v772, %v3819
        %v3821 = vpop.f32.mrb[0].mxu0
        %v3822 = vadd.f32 %v776, %v3821
        %3823 = vmatprep.mubr.bf16.mxu0 %v401
        %3824 = vmatmul.mubr.bf16.gmra.mrb[0].mxu0 %v400
        %v3825 = vpop.f32.mrb[0].mxu0
        %v3826 = vadd.f32 %v772, %v3825
        %v3827 = vpop.f32.mrb[0].mxu0
        %v3828 = vadd.f32 %v776, %v3827
        %v3829 = vpop.f32.mrb[0].mxu0
        %v3830 = vadd.f32 %v772, %v3829
        %v3831 = vpop.f32.mrb[0].mxu0
        %v3832 = vadd.f32 %v776, %v3831
        %3833 = vmatprep.mubr.bf16.mxu0 %v404
        %3834 = vmatmul.mubr.bf16.gmra.mrb[0].mxu0 %v403
        %v3835 = vpop.f32.mrb[0].mxu0
        %v3836 = vadd.f32 %v772, %v3835
        %v3837 = vpop.f32.mrb[0].mxu0
        %v3838 = vadd.f32 %v776, %v3837
        %v3839 = vpop.f32.mrb[0].mxu0
        %v3840 = vadd.f32 %v772, %v3839
        %v3841 = vpop.f32.mrb[0].mxu0
        %v3842 = vadd.f32 %v776, %v3841
        %3843 = vmatprep.mubr.bf16.mxu0 %v407
        %3844 = vmatmul.mubr.bf16.gmra.mrb[0].mxu0 %v406
        %v3845 = vpop.f32.mrb[0].mxu0
        %v3846 = vadd.f32 %v772, %v3845
        %v3847 = vpop.f32.mrb[0].mxu0
        %v3848 = vadd.f32 %v776, %v3847
        %v3849 = vpop.f32.mrb[0].mxu0
        %v3850 = vadd.f32 %v772, %v3849
        %v3851 = vpop.f32.mrb[0].mxu0
        %v3852 = vadd.f32 %v776, %v3851
        %3853 = vmatprep.mubr.bf16.mxu0 %v410
        %3854 = vmatmul.mubr.bf16.gmra.mrb[0].mxu0 %v409
        %v3855 = vpop.f32.mrb[0].mxu0
        %v3856 = vadd.f32 %v772, %v3855
        %v3857 = vpop.f32.mrb[0].mxu0
        %v3858 = vadd.f32 %v776, %v3857
        %v3859 = vpop.f32.mrb[0].mxu0
        %v3860 = vadd.f32 %v772, %v3859
        %v3861 = vpop.f32.mrb[0].mxu0
        %v3862 = vadd.f32 %v776, %v3861
        %3863 = vmatprep.mubr.bf16.mxu0 %v413
        %3864 = vmatmul.mubr.bf16.gmra.mrb[0].mxu0 %v412
        %v3865 = vpop.f32.mrb[0].mxu0
        %v3866 = vadd.f32 %v772, %v3865
        %v3867 = vpop.f32.mrb[0].mxu0
        %v3868 = vadd.f32 %v776, %v3867
        %v3869 = vpop.f32.mrb[0].mxu0
        %v3870 = vadd.f32 %v772, %v3869
        %v3871 = vpop.f32.mrb[0].mxu0
        %v3872 = vadd.f32 %v776, %v3871
        %3873 = vmatprep.mubr.bf16.mxu0 %v416
        %3874 = vmatmul.mubr.bf16.gmra.mrb[0].mxu0 %v415
        %v3875 = vpop.f32.mrb[0].mxu0
        %v3876 = vadd.f32 %v772, %v3875
        %v3877 = vpop.f32.mrb[0].mxu0
        %v3878 = vadd.f32 %v776, %v3877
        %v3879 = vpop.f32.mrb[0].mxu0
        %v3880 = vadd.f32 %v772, %v3879
        %v3881 = vpop.f32.mrb[0].mxu0
        %v3882 = vadd.f32 %v776, %v3881
        %3883 = vmatprep.mubr.bf16.mxu0 %v419
        %3884 = vmatmul.mubr.bf16.gmra.mrb[0].mxu0 %v418
        %v3885 = vpop.f32.mrb[0].mxu0
        %v3886 = vadd.f32 %v772, %v3885
        %v3887 = vpop.f32.mrb[0].mxu0
        %v3888 = vadd.f32 %v776, %v3887
        %v3889 = vpop.f32.mrb[0].mxu0
        %v3890 = vadd.f32 %v772, %v3889
        %v3891 = vpop.f32.mrb[0].mxu0
        %v3892 = vadd.f32 %v776, %v3891
        %3893 = vmatprep.mubr.bf16.mxu0 %v422
        %3894 = vmatmul.mubr.bf16.gmra.mrb[0].mxu0 %v421
        %v3895 = vpop.f32.mrb[0].mxu0
        %v3896 = vadd.f32 %v772, %v3895
        %v3897 = vpop.f32.mrb[0].mxu0
        %v3898 = vadd.f32 %v776, %v3897
        %v3899 = vpop.f32.mrb[0].mxu0
        %v3900 = vadd.f32 %v772, %v3899
        %v3901 = vpop.f32.mrb[0].mxu0
        %v3902 = vadd.f32 %v776, %v3901
        %3903 = vmatprep.mubr.bf16.mxu0 %v425
        %3904 = vmatmul.mubr.bf16.gmra.mrb[0].mxu0 %v424
        %v3905 = vpop.f32.mrb[0].mxu0
        %v3906 = vadd.f32 %v772, %v3905
        %v3907 = vpop.f32.mrb[0].mxu0
        %v3908 = vadd.f32 %v776, %v3907
        %v3909 = vpop.f32.mrb[0].mxu0
        %v3910 = vadd.f32 %v772, %v3909
        %v3911 = vpop.f32.mrb[0].mxu0
        %v3912 = vadd.f32 %v776, %v3911
        %3913 = vmatprep.mubr.bf16.mxu0 %v428
        %3914 = vmatmul.mubr.bf16.gmra.mrb[0].mxu0 %v427
        %v3915 = vpop.f32.mrb[0].mxu0
        %v3916 = vadd.f32 %v772, %v3915
        %v3917 = vpop.f32.mrb[0].mxu0
        %v3918 = vadd.f32 %v776, %v3917
        %v3919 = vpop.f32.mrb[0].mxu0
        %v3920 = vadd.f32 %v772, %v3919
        %v3921 = vpop.f32.mrb[0].mxu0
        %v3922 = vadd.f32 %v776, %v3921
        %3923 = vmatprep.mubr.bf16.mxu0 %v431
        %3924 = vmatmul.mubr.bf16.gmra.mrb[0].mxu0 %v430
        %v3925 = vpop.f32.mrb[0].mxu0
        %v3926 = vadd.f32 %v772, %v3925
        %v3927 = vpop.f32.mrb[0].mxu0
        %v3928 = vadd.f32 %v776, %v3927
        %v3929 = vpop.f32.mrb[0].mxu0
        %v3930 = vadd.f32 %v772, %v3929
        %v3931 = vpop.f32.mrb[0].mxu0
        %v3932 = vadd.f32 %v776, %v3931
        %3933 = vmatprep.mubr.bf16.mxu0 %v434
        %3934 = vmatmul.mubr.bf16.gmra.mrb[0].mxu0 %v433
        %v3935 = vpop.f32.mrb[0].mxu0
        %v3936 = vadd.f32 %v772, %v3935
        %v3937 = vpop.f32.mrb[0].mxu0
        %v3938 = vadd.f32 %v776, %v3937
        %v3939 = vpop.f32.mrb[0].mxu0
        %v3940 = vadd.f32 %v772, %v3939
        %v3941 = vpop.f32.mrb[0].mxu0
        %v3942 = vadd.f32 %v776, %v3941
        %3943 = vmatprep.mubr.bf16.mxu0 %v437
        %3944 = vmatmul.mubr.bf16.gmra.mrb[0].mxu0 %v436
        %v3945 = vpop.f32.mrb[0].mxu0
        %v3946 = vadd.f32 %v772, %v3945
        %v3947 = vpop.f32.mrb[0].mxu0
        %v3948 = vadd.f32 %v776, %v3947
        %v3949 = vpop.f32.mrb[0].mxu0
        %v3950 = vadd.f32 %v772, %v3949
        %v3951 = vpop.f32.mrb[0].mxu0
        %v3952 = vadd.f32 %v776, %v3951
        %3953 = vmatprep.mubr.bf16.mxu0 %v440
        %3954 = vmatmul.mubr.bf16.gmra.mrb[0].mxu0 %v439
        %v3955 = vpop.f32.mrb[0].mxu0
        %v3956 = vadd.f32 %v772, %v3955
        %v3957 = vpop.f32.mrb[0].mxu0
        %v3958 = vadd.f32 %v776, %v3957
        %v3959 = vpop.f32.mrb[0].mxu0
        %v3960 = vadd.f32 %v772, %v3959
        %v3961 = vpop.f32.mrb[0].mxu0
        %v3962 = vadd.f32 %v776, %v3961
        %3963 = vmatprep.mubr.bf16.mxu0 %v443
        %3964 = vmatmul.mubr.bf16.gmra.mrb[0].mxu0 %v442
        %v3965 = vpop.f32.mrb[0].mxu0
        %v3966 = vadd.f32 %v772, %v3965
        %v3967 = vpop.f32.mrb[0].mxu0
        %v3968 = vadd.f32 %v776, %v3967
        %v3969 = vpop.f32.mrb[0].mxu0
        %v3970 = vadd.f32 %v772, %v3969
        %v3971 = vpop.f32.mrb[0].mxu0
        %v3972 = vadd.f32 %v776, %v3971
        %3973 = vdwg.mxu0
        %3974 = vmatprep.subr.bf16.mxu0 %v1862
        %3975 = vmatpush1.bf16.msra.mxu0 %v1861
        %3976 = vmatprep.subr.bf16.mxu0 %v1874
        %3977 = vmatpush1.bf16.msra.mxu0 %v1873
        %3978 = vmatprep.subr.bf16.mxu0 %v1886
        %3979 = vmatpush1.bf16.msra.mxu0 %v1885
        %3980 = vmatprep.subr.bf16.mxu0 %v1898
        %3981 = vmatpush1.bf16.msra.mxu0 %v1897
        %3982 = vmatprep.subr.bf16.mxu0 %v1910
        %3983 = vmatpush1.bf16.msra.mxu0 %v1909
        %3984 = vmatprep.subr.bf16.mxu0 %v1922
        %3985 = vmatpush1.bf16.msra.mxu0 %v1921
        %3986 = vmatprep.subr.bf16.mxu0 %v1934
        %3987 = vmatpush1.bf16.msra.mxu0 %v1933
        %3988 = vmatprep.subr.bf16.mxu0 %v1946
        %3989 = vmatpush1.bf16.msra.mxu0 %v1945
        %3990 = vmatprep.subr.bf16.mxu0 0
        %3991 = vmatpush1.bf16.msra.mxu0 0
        %3992 = vmatprep.subr.bf16.mxu0 0
        %3993 = vmatpush1.bf16.msra.mxu0 0
        %3994 = vmatprep.subr.bf16.mxu0 0
        %3995 = vmatpush1.bf16.msra.mxu0 0
        %3996 = vmatprep.subr.bf16.mxu0 0
        %3997 = vmatpush1.bf16.msra.mxu0 0
        %3998 = vmatprep.subr.bf16.mxu0 0
        %3999 = vmatpush1.bf16.msra.mxu0 0
        %4000 = vmatprep.subr.bf16.mxu0 0
        %4001 = vmatpush1.bf16.msra.mxu0 0
        %4002 = vmatprep.subr.bf16.mxu0 0
        %4003 = vmatpush1.bf16.msra.mxu0 0
        %4004 = vmatprep.subr.bf16.mxu0 0
        %4005 = vmatpush1.bf16.msra.mxu0 0
        %4006 = vmatprep.mubr.bf16.mxu0 0
        %4007 = vmatmul.mubr.bf16.gmra.mrb[0].mxu0 %v399
        %v4008 = vpop.f32.mrb[0].mxu0
        %v4009 = vadd.f32 %v3816, %v4008
        %v4010 = vpop.f32.mrb[0].mxu0
        %v4011 = vadd.f32 %v3818, %v4010
        %v4012 = vpop.f32.mrb[0].mxu0
        %v4013 = vadd.f32 %v3820, %v4012
        %v4014 = vpop.f32.mrb[0].mxu0
        %v4015 = vadd.f32 %v3822, %v4014
        %4016 = vmatprep.mubr.bf16.mxu0 0
        %4017 = vmatmul.mubr.bf16.gmra.mrb[0].mxu0 %v402
        %v4018 = vpop.f32.mrb[0].mxu0
        %v4019 = vadd.f32 %v3826, %v4018
        %v4020 = vpop.f32.mrb[0].mxu0
        %v4021 = vadd.f32 %v3828, %v4020
        %v4022 = vpop.f32.mrb[0].mxu0
        %v4023 = vadd.f32 %v3830, %v4022
        %v4024 = vpop.f32.mrb[0].mxu0
        %v4025 = vadd.f32 %v3832, %v4024
        %4026 = vmatprep.mubr.bf16.mxu0 0
        %4027 = vmatmul.mubr.bf16.gmra.mrb[0].mxu0 %v405
        %v4028 = vpop.f32.mrb[0].mxu0
        %v4029 = vadd.f32 %v3836, %v4028
        %v4030 = vpop.f32.mrb[0].mxu0
        %v4031 = vadd.f32 %v3838, %v4030
        %v4032 = vpop.f32.mrb[0].mxu0
        %v4033 = vadd.f32 %v3840, %v4032
        %v4034 = vpop.f32.mrb[0].mxu0
        %v4035 = vadd.f32 %v3842, %v4034
        %4036 = vmatprep.mubr.bf16.mxu0 0
        %4037 = vmatmul.mubr.bf16.gmra.mrb[0].mxu0 %v408
        %v4038 = vpop.f32.mrb[0].mxu0
        %v4039 = vadd.f32 %v3846, %v4038
        %v4040 = vpop.f32.mrb[0].mxu0
        %v4041 = vadd.f32 %v3848, %v4040
        %v4042 = vpop.f32.mrb[0].mxu0
        %v4043 = vadd.f32 %v3850, %v4042
        %v4044 = vpop.f32.mrb[0].mxu0
        %v4045 = vadd.f32 %v3852, %v4044
        %4046 = vmatprep.mubr.bf16.mxu0 0
        %4047 = vmatmul.mubr.bf16.gmra.mrb[0].mxu0 %v411
        %v4048 = vpop.f32.mrb[0].mxu0
        %v4049 = vadd.f32 %v3856, %v4048
        %v4050 = vpop.f32.mrb[0].mxu0
        %v4051 = vadd.f32 %v3858, %v4050
        %v4052 = vpop.f32.mrb[0].mxu0
        %v4053 = vadd.f32 %v3860, %v4052
        %v4054 = vpop.f32.mrb[0].mxu0
        %v4055 = vadd.f32 %v3862, %v4054
        %4056 = vmatprep.mubr.bf16.mxu0 0
        %4057 = vmatmul.mubr.bf16.gmra.mrb[0].mxu0 %v414
        %v4058 = vpop.f32.mrb[0].mxu0
        %v4059 = vadd.f32 %v3866, %v4058
        %v4060 = vpop.f32.mrb[0].mxu0
        %v4061 = vadd.f32 %v3868, %v4060
        %v4062 = vpop.f32.mrb[0].mxu0
        %v4063 = vadd.f32 %v3870, %v4062
        %v4064 = vpop.f32.mrb[0].mxu0
        %v4065 = vadd.f32 %v3872, %v4064
        %4066 = vmatprep.mubr.bf16.mxu0 0
        %4067 = vmatmul.mubr.bf16.gmra.mrb[0].mxu0 %v417
        %v4068 = vpop.f32.mrb[0].mxu0
        %v4069 = vadd.f32 %v3876, %v4068
        %v4070 = vpop.f32.mrb[0].mxu0
        %v4071 = vadd.f32 %v3878, %v4070
        %v4072 = vpop.f32.mrb[0].mxu0
        %v4073 = vadd.f32 %v3880, %v4072
        %v4074 = vpop.f32.mrb[0].mxu0
        %v4075 = vadd.f32 %v3882, %v4074
        %4076 = vmatprep.mubr.bf16.mxu0 0
        %4077 = vmatmul.mubr.bf16.gmra.mrb[0].mxu0 %v420
        %v4078 = vpop.f32.mrb[0].mxu0
        %v4079 = vadd.f32 %v3886, %v4078
        %v4080 = vpop.f32.mrb[0].mxu0
        %v4081 = vadd.f32 %v3888, %v4080
        %v4082 = vpop.f32.mrb[0].mxu0
        %v4083 = vadd.f32 %v3890, %v4082
        %v4084 = vpop.f32.mrb[0].mxu0
        %v4085 = vadd.f32 %v3892, %v4084
        %4086 = vmatprep.mubr.bf16.mxu0 0
        %4087 = vmatmul.mubr.bf16.gmra.mrb[0].mxu0 %v423
        %v4088 = vpop.f32.mrb[0].mxu0
        %v4089 = vadd.f32 %v3896, %v4088
        %v4090 = vpop.f32.mrb[0].mxu0
        %v4091 = vadd.f32 %v3898, %v4090
        %v4092 = vpop.f32.mrb[0].mxu0
        %v4093 = vadd.f32 %v3900, %v4092
        %v4094 = vpop.f32.mrb[0].mxu0
        %v4095 = vadd.f32 %v3902, %v4094
        %4096 = vmatprep.mubr.bf16.mxu0 0
        %4097 = vmatmul.mubr.bf16.gmra.mrb[0].mxu0 %v426
        %v4098 = vpop.f32.mrb[0].mxu0
        %v4099 = vadd.f32 %v3906, %v4098
        %v4100 = vpop.f32.mrb[0].mxu0
        %v4101 = vadd.f32 %v3908, %v4100
        %v4102 = vpop.f32.mrb[0].mxu0
        %v4103 = vadd.f32 %v3910, %v4102
        %v4104 = vpop.f32.mrb[0].mxu0
        %v4105 = vadd.f32 %v3912, %v4104
        %4106 = vmatprep.mubr.bf16.mxu0 0
        %4107 = vmatmul.mubr.bf16.gmra.mrb[0].mxu0 %v429
        %v4108 = vpop.f32.mrb[0].mxu0
        %v4109 = vadd.f32 %v3916, %v4108
        %v4110 = vpop.f32.mrb[0].mxu0
        %v4111 = vadd.f32 %v3918, %v4110
        %v4112 = vpop.f32.mrb[0].mxu0
        %v4113 = vadd.f32 %v3920, %v4112
        %v4114 = vpop.f32.mrb[0].mxu0
        %v4115 = vadd.f32 %v3922, %v4114
        %4116 = vmatprep.mubr.bf16.mxu0 0
        %4117 = vmatmul.mubr.bf16.gmra.mrb[0].mxu0 %v432
        %v4118 = vpop.f32.mrb[0].mxu0
        %v4119 = vadd.f32 %v3926, %v4118
        %v4120 = vpop.f32.mrb[0].mxu0
        %v4121 = vadd.f32 %v3928, %v4120
        %v4122 = vpop.f32.mrb[0].mxu0
        %v4123 = vadd.f32 %v3930, %v4122
        %v4124 = vpop.f32.mrb[0].mxu0
        %v4125 = vadd.f32 %v3932, %v4124
        %4126 = vmatprep.mubr.bf16.mxu0 0
        %4127 = vmatmul.mubr.bf16.gmra.mrb[0].mxu0 %v435
        %v4128 = vpop.f32.mrb[0].mxu0
        %v4129 = vadd.f32 %v3936, %v4128
        %v4130 = vpop.f32.mrb[0].mxu0
        %v4131 = vadd.f32 %v3938, %v4130
        %v4132 = vpop.f32.mrb[0].mxu0
        %v4133 = vadd.f32 %v3940, %v4132
        %v4134 = vpop.f32.mrb[0].mxu0
        %v4135 = vadd.f32 %v3942, %v4134
        %4136 = vmatprep.mubr.bf16.mxu0 0
        %4137 = vmatmul.mubr.bf16.gmra.mrb[0].mxu0 %v438
        %v4138 = vpop.f32.mrb[0].mxu0
        %v4139 = vadd.f32 %v3946, %v4138
        %v4140 = vpop.f32.mrb[0].mxu0
        %v4141 = vadd.f32 %v3948, %v4140
        %v4142 = vpop.f32.mrb[0].mxu0
        %v4143 = vadd.f32 %v3950, %v4142
        %v4144 = vpop.f32.mrb[0].mxu0
        %v4145 = vadd.f32 %v3952, %v4144
        %4146 = vmatprep.mubr.bf16.mxu0 0
        %4147 = vmatmul.mubr.bf16.gmra.mrb[0].mxu0 %v441
        %v4148 = vpop.f32.mrb[0].mxu0
        %v4149 = vadd.f32 %v3956, %v4148
        %v4150 = vpop.f32.mrb[0].mxu0
        %v4151 = vadd.f32 %v3958, %v4150
        %v4152 = vpop.f32.mrb[0].mxu0
        %v4153 = vadd.f32 %v3960, %v4152
        %v4154 = vpop.f32.mrb[0].mxu0
        %v4155 = vadd.f32 %v3962, %v4154
        %4156 = vmatprep.mubr.bf16.mxu0 0
        %4157 = vmatmul.mubr.bf16.gmra.mrb[0].mxu0 %v444
        %v4158 = vpop.f32.mrb[0].mxu0
        %v4159 = vadd.f32 %v3966, %v4158
        %v4160 = vpop.f32.mrb[0].mxu0
        %v4161 = vadd.f32 %v3968, %v4160
        %v4162 = vpop.f32.mrb[0].mxu0
        %v4163 = vadd.f32 %v3970, %v4162
        %v4164 = vpop.f32.mrb[0].mxu0
        %v4165 = vadd.f32 %v3972, %v4164
        %4166 = vdwg.mxu0
        %4167 = vmatprep.subr.bf16.mxu0 %v1672
        %4168 = vmatpush1.bf16.msra.mxu0 %v1671
        %4169 = vmatprep.subr.bf16.mxu0 %v1684
        %4170 = vmatpush1.bf16.msra.mxu0 %v1683
        %4171 = vmatprep.subr.bf16.mxu0 %v1696
        %4172 = vmatpush1.bf16.msra.mxu0 %v1695
        %4173 = vmatprep.subr.bf16.mxu0 %v1708
        %4174 = vmatpush1.bf16.msra.mxu0 %v1707
        %4175 = vmatprep.subr.bf16.mxu0 %v1720
        %4176 = vmatpush1.bf16.msra.mxu0 %v1719
        %4177 = vmatprep.subr.bf16.mxu0 %v1732
        %4178 = vmatpush1.bf16.msra.mxu0 %v1731
        %4179 = vmatprep.subr.bf16.mxu0 %v1744
        %4180 = vmatpush1.bf16.msra.mxu0 %v1743
        %4181 = vmatprep.subr.bf16.mxu0 %v1756
        %4182 = vmatpush1.bf16.msra.mxu0 %v1755
        %4183 = vmatprep.subr.bf16.mxu0 %v1768
        %4184 = vmatpush1.bf16.msra.mxu0 %v1767
        %4185 = vmatprep.subr.bf16.mxu0 %v1780
        %4186 = vmatpush1.bf16.msra.mxu0 %v1779
        %4187 = vmatprep.subr.bf16.mxu0 %v1792
        %4188 = vmatpush1.bf16.msra.mxu0 %v1791
        %4189 = vmatprep.subr.bf16.mxu0 %v1804
        %4190 = vmatpush1.bf16.msra.mxu0 %v1803
        %4191 = vmatprep.subr.bf16.mxu0 %v1816
        %4192 = vmatpush1.bf16.msra.mxu0 %v1815
        %4193 = vmatprep.subr.bf16.mxu0 %v1828
        %4194 = vmatpush1.bf16.msra.mxu0 %v1827
        %4195 = vmatprep.subr.bf16.mxu0 %v1840
        %4196 = vmatpush1.bf16.msra.mxu0 %v1839
        %4197 = vmatprep.subr.bf16.mxu0 %v1852
        %4198 = vmatpush1.bf16.msra.mxu0 %v1851
        %4199 = vmatprep.mubr.bf16.mxu0 %v398
        %4200 = vmatmul.mubr.bf16.gmra.mrb[0].mxu0 %v397
        %v4201 = vpop.f32.mrb[0].mxu0
        %v4202 = vadd.f32 %v780, %v4201
        %v4203 = vpop.f32.mrb[0].mxu0
        %v4204 = vadd.f32 %v784, %v4203
        %v4205 = vpop.f32.mrb[0].mxu0
        %v4206 = vadd.f32 %v780, %v4205
        %v4207 = vpop.f32.mrb[0].mxu0
        %v4208 = vadd.f32 %v784, %v4207
        %4209 = vmatprep.mubr.bf16.mxu0 %v401
        %4210 = vmatmul.mubr.bf16.gmra.mrb[0].mxu0 %v400
        %v4211 = vpop.f32.mrb[0].mxu0
        %v4212 = vadd.f32 %v780, %v4211
        %v4213 = vpop.f32.mrb[0].mxu0
        %v4214 = vadd.f32 %v784, %v4213
        %v4215 = vpop.f32.mrb[0].mxu0
        %v4216 = vadd.f32 %v780, %v4215
        %v4217 = vpop.f32.mrb[0].mxu0
        %v4218 = vadd.f32 %v784, %v4217
        %4219 = vmatprep.mubr.bf16.mxu0 %v404
        %4220 = vmatmul.mubr.bf16.gmra.mrb[0].mxu0 %v403
        %v4221 = vpop.f32.mrb[0].mxu0
        %v4222 = vadd.f32 %v780, %v4221
        %v4223 = vpop.f32.mrb[0].mxu0
        %v4224 = vadd.f32 %v784, %v4223
        %v4225 = vpop.f32.mrb[0].mxu0
        %v4226 = vadd.f32 %v780, %v4225
        %v4227 = vpop.f32.mrb[0].mxu0
        %v4228 = vadd.f32 %v784, %v4227
        %4229 = vmatprep.mubr.bf16.mxu0 %v407
        %4230 = vmatmul.mubr.bf16.gmra.mrb[0].mxu0 %v406
        %v4231 = vpop.f32.mrb[0].mxu0
        %v4232 = vadd.f32 %v780, %v4231
        %v4233 = vpop.f32.mrb[0].mxu0
        %v4234 = vadd.f32 %v784, %v4233
        %v4235 = vpop.f32.mrb[0].mxu0
        %v4236 = vadd.f32 %v780, %v4235
        %v4237 = vpop.f32.mrb[0].mxu0
        %v4238 = vadd.f32 %v784, %v4237
        %4239 = vmatprep.mubr.bf16.mxu0 %v410
        %4240 = vmatmul.mubr.bf16.gmra.mrb[0].mxu0 %v409
        %v4241 = vpop.f32.mrb[0].mxu0
        %v4242 = vadd.f32 %v780, %v4241
        %v4243 = vpop.f32.mrb[0].mxu0
        %v4244 = vadd.f32 %v784, %v4243
        %v4245 = vpop.f32.mrb[0].mxu0
        %v4246 = vadd.f32 %v780, %v4245
        %v4247 = vpop.f32.mrb[0].mxu0
        %v4248 = vadd.f32 %v784, %v4247
        %4249 = vmatprep.mubr.bf16.mxu0 %v413
        %4250 = vmatmul.mubr.bf16.gmra.mrb[0].mxu0 %v412
        %v4251 = vpop.f32.mrb[0].mxu0
        %v4252 = vadd.f32 %v780, %v4251
        %v4253 = vpop.f32.mrb[0].mxu0
        %v4254 = vadd.f32 %v784, %v4253
        %v4255 = vpop.f32.mrb[0].mxu0
        %v4256 = vadd.f32 %v780, %v4255
        %v4257 = vpop.f32.mrb[0].mxu0
        %v4258 = vadd.f32 %v784, %v4257
        %4259 = vmatprep.mubr.bf16.mxu0 %v416
        %4260 = vmatmul.mubr.bf16.gmra.mrb[0].mxu0 %v415
        %v4261 = vpop.f32.mrb[0].mxu0
        %v4262 = vadd.f32 %v780, %v4261
        %v4263 = vpop.f32.mrb[0].mxu0
        %v4264 = vadd.f32 %v784, %v4263
        %v4265 = vpop.f32.mrb[0].mxu0
        %v4266 = vadd.f32 %v780, %v4265
        %v4267 = vpop.f32.mrb[0].mxu0
        %v4268 = vadd.f32 %v784, %v4267
        %4269 = vmatprep.mubr.bf16.mxu0 %v419
        %4270 = vmatmul.mubr.bf16.gmra.mrb[0].mxu0 %v418
        %v4271 = vpop.f32.mrb[0].mxu0
        %v4272 = vadd.f32 %v780, %v4271
        %v4273 = vpop.f32.mrb[0].mxu0
        %v4274 = vadd.f32 %v784, %v4273
        %v4275 = vpop.f32.mrb[0].mxu0
        %v4276 = vadd.f32 %v780, %v4275
        %v4277 = vpop.f32.mrb[0].mxu0
        %v4278 = vadd.f32 %v784, %v4277
        %4279 = vmatprep.mubr.bf16.mxu0 %v422
        %4280 = vmatmul.mubr.bf16.gmra.mrb[0].mxu0 %v421
        %v4281 = vpop.f32.mrb[0].mxu0
        %v4282 = vadd.f32 %v780, %v4281
        %v4283 = vpop.f32.mrb[0].mxu0
        %v4284 = vadd.f32 %v784, %v4283
        %v4285 = vpop.f32.mrb[0].mxu0
        %v4286 = vadd.f32 %v780, %v4285
        %v4287 = vpop.f32.mrb[0].mxu0
        %v4288 = vadd.f32 %v784, %v4287
        %4289 = vmatprep.mubr.bf16.mxu0 %v425
        %4290 = vmatmul.mubr.bf16.gmra.mrb[0].mxu0 %v424
        %v4291 = vpop.f32.mrb[0].mxu0
        %v4292 = vadd.f32 %v780, %v4291
        %v4293 = vpop.f32.mrb[0].mxu0
        %v4294 = vadd.f32 %v784, %v4293
        %v4295 = vpop.f32.mrb[0].mxu0
        %v4296 = vadd.f32 %v780, %v4295
        %v4297 = vpop.f32.mrb[0].mxu0
        %v4298 = vadd.f32 %v784, %v4297
        %4299 = vmatprep.mubr.bf16.mxu0 %v428
        %4300 = vmatmul.mubr.bf16.gmra.mrb[0].mxu0 %v427
        %v4301 = vpop.f32.mrb[0].mxu0
        %v4302 = vadd.f32 %v780, %v4301
        %v4303 = vpop.f32.mrb[0].mxu0
        %v4304 = vadd.f32 %v784, %v4303
        %v4305 = vpop.f32.mrb[0].mxu0
        %v4306 = vadd.f32 %v780, %v4305
        %v4307 = vpop.f32.mrb[0].mxu0
        %v4308 = vadd.f32 %v784, %v4307
        %4309 = vmatprep.mubr.bf16.mxu0 %v431
        %4310 = vmatmul.mubr.bf16.gmra.mrb[0].mxu0 %v430
        %v4311 = vpop.f32.mrb[0].mxu0
        %v4312 = vadd.f32 %v780, %v4311
        %v4313 = vpop.f32.mrb[0].mxu0
        %v4314 = vadd.f32 %v784, %v4313
        %v4315 = vpop.f32.mrb[0].mxu0
        %v4316 = vadd.f32 %v780, %v4315
        %v4317 = vpop.f32.mrb[0].mxu0
        %v4318 = vadd.f32 %v784, %v4317
        %4319 = vmatprep.mubr.bf16.mxu0 %v434
        %4320 = vmatmul.mubr.bf16.gmra.mrb[0].mxu0 %v433
        %v4321 = vpop.f32.mrb[0].mxu0
        %v4322 = vadd.f32 %v780, %v4321
        %v4323 = vpop.f32.mrb[0].mxu0
        %v4324 = vadd.f32 %v784, %v4323
        %v4325 = vpop.f32.mrb[0].mxu0
        %v4326 = vadd.f32 %v780, %v4325
        %v4327 = vpop.f32.mrb[0].mxu0
        %v4328 = vadd.f32 %v784, %v4327
        %4329 = vmatprep.mubr.bf16.mxu0 %v437
        %4330 = vmatmul.mubr.bf16.gmra.mrb[0].mxu0 %v436
        %v4331 = vpop.f32.mrb[0].mxu0
        %v4332 = vadd.f32 %v780, %v4331
        %v4333 = vpop.f32.mrb[0].mxu0
        %v4334 = vadd.f32 %v784, %v4333
        %v4335 = vpop.f32.mrb[0].mxu0
        %v4336 = vadd.f32 %v780, %v4335
        %v4337 = vpop.f32.mrb[0].mxu0
        %v4338 = vadd.f32 %v784, %v4337
        %4339 = vmatprep.mubr.bf16.mxu0 %v440
        %4340 = vmatmul.mubr.bf16.gmra.mrb[0].mxu0 %v439
        %v4341 = vpop.f32.mrb[0].mxu0
        %v4342 = vadd.f32 %v780, %v4341
        %v4343 = vpop.f32.mrb[0].mxu0
        %v4344 = vadd.f32 %v784, %v4343
        %v4345 = vpop.f32.mrb[0].mxu0
        %v4346 = vadd.f32 %v780, %v4345
        %v4347 = vpop.f32.mrb[0].mxu0
        %v4348 = vadd.f32 %v784, %v4347
        %4349 = vmatprep.mubr.bf16.mxu0 %v443
        %4350 = vmatmul.mubr.bf16.gmra.mrb[0].mxu0 %v442
        %v4351 = vpop.f32.mrb[0].mxu0
        %v4352 = vadd.f32 %v780, %v4351
        %v4353 = vpop.f32.mrb[0].mxu0
        %v4354 = vadd.f32 %v784, %v4353
        %v4355 = vpop.f32.mrb[0].mxu0
        %v4356 = vadd.f32 %v780, %v4355
        %v4357 = vpop.f32.mrb[0].mxu0
        %v4358 = vadd.f32 %v784, %v4357
        %4359 = vdwg.mxu0
        %4360 = vmatprep.subr.bf16.mxu0 %v1864
        %4361 = vmatpush1.bf16.msra.mxu0 %v1863
        %4362 = vmatprep.subr.bf16.mxu0 %v1876
        %4363 = vmatpush1.bf16.msra.mxu0 %v1875
        %4364 = vmatprep.subr.bf16.mxu0 %v1888
        %4365 = vmatpush1.bf16.msra.mxu0 %v1887
        %4366 = vmatprep.subr.bf16.mxu0 %v1900
        %4367 = vmatpush1.bf16.msra.mxu0 %v1899
        %4368 = vmatprep.subr.bf16.mxu0 %v1912
        %4369 = vmatpush1.bf16.msra.mxu0 %v1911
        %4370 = vmatprep.subr.bf16.mxu0 %v1924
        %4371 = vmatpush1.bf16.msra.mxu0 %v1923
        %4372 = vmatprep.subr.bf16.mxu0 %v1936
        %4373 = vmatpush1.bf16.msra.mxu0 %v1935
        %4374 = vmatprep.subr.bf16.mxu0 %v1948
        %4375 = vmatpush1.bf16.msra.mxu0 %v1947
        %4376 = vmatprep.subr.bf16.mxu0 0
        %4377 = vmatpush1.bf16.msra.mxu0 0
        %4378 = vmatprep.subr.bf16.mxu0 0
        %4379 = vmatpush1.bf16.msra.mxu0 0
        %4380 = vmatprep.subr.bf16.mxu0 0
        %4381 = vmatpush1.bf16.msra.mxu0 0
        %4382 = vmatprep.subr.bf16.mxu0 0
        %4383 = vmatpush1.bf16.msra.mxu0 0
        %4384 = vmatprep.subr.bf16.mxu0 0
        %4385 = vmatpush1.bf16.msra.mxu0 0
        %4386 = vmatprep.subr.bf16.mxu0 0
        %4387 = vmatpush1.bf16.msra.mxu0 0
        %4388 = vmatprep.subr.bf16.mxu0 0
        %4389 = vmatpush1.bf16.msra.mxu0 0
        %4390 = vmatprep.subr.bf16.mxu0 0
        %4391 = vmatpush1.bf16.msra.mxu0 0
        %4392 = vmatprep.mubr.bf16.mxu0 0
        %4393 = vmatmul.mubr.bf16.gmra.mrb[0].mxu0 %v399
        %v4394 = vpop.f32.mrb[0].mxu0
        %v4395 = vadd.f32 %v4202, %v4394
        %v4396 = vpop.f32.mrb[0].mxu0
        %v4397 = vadd.f32 %v4204, %v4396
        %v4398 = vpop.f32.mrb[0].mxu0
        %v4399 = vadd.f32 %v4206, %v4398
        %v4400 = vpop.f32.mrb[0].mxu0
        %v4401 = vadd.f32 %v4208, %v4400
        %4402 = vmatprep.mubr.bf16.mxu0 0
        %4403 = vmatmul.mubr.bf16.gmra.mrb[0].mxu0 %v402
        %v4404 = vpop.f32.mrb[0].mxu0
        %v4405 = vadd.f32 %v4212, %v4404
        %v4406 = vpop.f32.mrb[0].mxu0
        %v4407 = vadd.f32 %v4214, %v4406
        %v4408 = vpop.f32.mrb[0].mxu0
        %v4409 = vadd.f32 %v4216, %v4408
        %v4410 = vpop.f32.mrb[0].mxu0
        %v4411 = vadd.f32 %v4218, %v4410
        %4412 = vmatprep.mubr.bf16.mxu0 0
        %4413 = vmatmul.mubr.bf16.gmra.mrb[0].mxu0 %v405
        %v4414 = vpop.f32.mrb[0].mxu0
        %v4415 = vadd.f32 %v4222, %v4414
        %v4416 = vpop.f32.mrb[0].mxu0
        %v4417 = vadd.f32 %v4224, %v4416
        %v4418 = vpop.f32.mrb[0].mxu0
        %v4419 = vadd.f32 %v4226, %v4418
        %v4420 = vpop.f32.mrb[0].mxu0
        %v4421 = vadd.f32 %v4228, %v4420
        %4422 = vmatprep.mubr.bf16.mxu0 0
        %4423 = vmatmul.mubr.bf16.gmra.mrb[0].mxu0 %v408
        %v4424 = vpop.f32.mrb[0].mxu0
        %v4425 = vadd.f32 %v4232, %v4424
        %v4426 = vpop.f32.mrb[0].mxu0
        %v4427 = vadd.f32 %v4234, %v4426
        %v4428 = vpop.f32.mrb[0].mxu0
        %v4429 = vadd.f32 %v4236, %v4428
        %v4430 = vpop.f32.mrb[0].mxu0
        %v4431 = vadd.f32 %v4238, %v4430
        %4432 = vmatprep.mubr.bf16.mxu0 0
        %4433 = vmatmul.mubr.bf16.gmra.mrb[0].mxu0 %v411
        %v4434 = vpop.f32.mrb[0].mxu0
        %v4435 = vadd.f32 %v4242, %v4434
        %v4436 = vpop.f32.mrb[0].mxu0
        %v4437 = vadd.f32 %v4244, %v4436
        %v4438 = vpop.f32.mrb[0].mxu0
        %v4439 = vadd.f32 %v4246, %v4438
        %v4440 = vpop.f32.mrb[0].mxu0
        %v4441 = vadd.f32 %v4248, %v4440
        %4442 = vmatprep.mubr.bf16.mxu0 0
        %4443 = vmatmul.mubr.bf16.gmra.mrb[0].mxu0 %v414
        %v4444 = vpop.f32.mrb[0].mxu0
        %v4445 = vadd.f32 %v4252, %v4444
        %v4446 = vpop.f32.mrb[0].mxu0
        %v4447 = vadd.f32 %v4254, %v4446
        %v4448 = vpop.f32.mrb[0].mxu0
        %v4449 = vadd.f32 %v4256, %v4448
        %v4450 = vpop.f32.mrb[0].mxu0
        %v4451 = vadd.f32 %v4258, %v4450
        %4452 = vmatprep.mubr.bf16.mxu0 0
        %4453 = vmatmul.mubr.bf16.gmra.mrb[0].mxu0 %v417
        %v4454 = vpop.f32.mrb[0].mxu0
        %v4455 = vadd.f32 %v4262, %v4454
        %v4456 = vpop.f32.mrb[0].mxu0
        %v4457 = vadd.f32 %v4264, %v4456
        %v4458 = vpop.f32.mrb[0].mxu0
        %v4459 = vadd.f32 %v4266, %v4458
        %v4460 = vpop.f32.mrb[0].mxu0
        %v4461 = vadd.f32 %v4268, %v4460
        %4462 = vmatprep.mubr.bf16.mxu0 0
        %4463 = vmatmul.mubr.bf16.gmra.mrb[0].mxu0 %v420
        %v4464 = vpop.f32.mrb[0].mxu0
        %v4465 = vadd.f32 %v4272, %v4464
        %v4466 = vpop.f32.mrb[0].mxu0
        %v4467 = vadd.f32 %v4274, %v4466
        %v4468 = vpop.f32.mrb[0].mxu0
        %v4469 = vadd.f32 %v4276, %v4468
        %v4470 = vpop.f32.mrb[0].mxu0
        %v4471 = vadd.f32 %v4278, %v4470
        %4472 = vmatprep.mubr.bf16.mxu0 0
        %4473 = vmatmul.mubr.bf16.gmra.mrb[0].mxu0 %v423
        %v4474 = vpop.f32.mrb[0].mxu0
        %v4475 = vadd.f32 %v4282, %v4474
        %v4476 = vpop.f32.mrb[0].mxu0
        %v4477 = vadd.f32 %v4284, %v4476
        %v4478 = vpop.f32.mrb[0].mxu0
        %v4479 = vadd.f32 %v4286, %v4478
        %v4480 = vpop.f32.mrb[0].mxu0
        %v4481 = vadd.f32 %v4288, %v4480
        %4482 = vmatprep.mubr.bf16.mxu0 0
        %4483 = vmatmul.mubr.bf16.gmra.mrb[0].mxu0 %v426
        %v4484 = vpop.f32.mrb[0].mxu0
        %v4485 = vadd.f32 %v4292, %v4484
        %v4486 = vpop.f32.mrb[0].mxu0
        %v4487 = vadd.f32 %v4294, %v4486
        %v4488 = vpop.f32.mrb[0].mxu0
        %v4489 = vadd.f32 %v4296, %v4488
        %v4490 = vpop.f32.mrb[0].mxu0
        %v4491 = vadd.f32 %v4298, %v4490
        %4492 = vmatprep.mubr.bf16.mxu0 0
        %4493 = vmatmul.mubr.bf16.gmra.mrb[0].mxu0 %v429
        %v4494 = vpop.f32.mrb[0].mxu0
        %v4495 = vadd.f32 %v4302, %v4494
        %v4496 = vpop.f32.mrb[0].mxu0
        %v4497 = vadd.f32 %v4304, %v4496
        %v4498 = vpop.f32.mrb[0].mxu0
        %v4499 = vadd.f32 %v4306, %v4498
        %v4500 = vpop.f32.mrb[0].mxu0
        %v4501 = vadd.f32 %v4308, %v4500
        %4502 = vmatprep.mubr.bf16.mxu0 0
        %4503 = vmatmul.mubr.bf16.gmra.mrb[0].mxu0 %v432
        %v4504 = vpop.f32.mrb[0].mxu0
        %v4505 = vadd.f32 %v4312, %v4504
        %v4506 = vpop.f32.mrb[0].mxu0
        %v4507 = vadd.f32 %v4314, %v4506
        %v4508 = vpop.f32.mrb[0].mxu0
        %v4509 = vadd.f32 %v4316, %v4508
        %v4510 = vpop.f32.mrb[0].mxu0
        %v4511 = vadd.f32 %v4318, %v4510
        %4512 = vmatprep.mubr.bf16.mxu0 0
        %4513 = vmatmul.mubr.bf16.gmra.mrb[0].mxu0 %v435
        %v4514 = vpop.f32.mrb[0].mxu0
        %v4515 = vadd.f32 %v4322, %v4514
        %v4516 = vpop.f32.mrb[0].mxu0
        %v4517 = vadd.f32 %v4324, %v4516
        %v4518 = vpop.f32.mrb[0].mxu0
        %v4519 = vadd.f32 %v4326, %v4518
        %v4520 = vpop.f32.mrb[0].mxu0
        %v4521 = vadd.f32 %v4328, %v4520
        %4522 = vmatprep.mubr.bf16.mxu0 0
        %4523 = vmatmul.mubr.bf16.gmra.mrb[0].mxu0 %v438
        %v4524 = vpop.f32.mrb[0].mxu0
        %v4525 = vadd.f32 %v4332, %v4524
        %v4526 = vpop.f32.mrb[0].mxu0
        %v4527 = vadd.f32 %v4334, %v4526
        %v4528 = vpop.f32.mrb[0].mxu0
        %v4529 = vadd.f32 %v4336, %v4528
        %v4530 = vpop.f32.mrb[0].mxu0
        %v4531 = vadd.f32 %v4338, %v4530
        %4532 = vmatprep.mubr.bf16.mxu0 0
        %4533 = vmatmul.mubr.bf16.gmra.mrb[0].mxu0 %v441
        %v4534 = vpop.f32.mrb[0].mxu0
        %v4535 = vadd.f32 %v4342, %v4534
        %v4536 = vpop.f32.mrb[0].mxu0
        %v4537 = vadd.f32 %v4344, %v4536
        %v4538 = vpop.f32.mrb[0].mxu0
        %v4539 = vadd.f32 %v4346, %v4538
        %v4540 = vpop.f32.mrb[0].mxu0
        %v4541 = vadd.f32 %v4348, %v4540
        %4542 = vmatprep.mubr.bf16.mxu0 0
        %4543 = vmatmul.mubr.bf16.gmra.mrb[0].mxu0 %v444
        %v4544 = vpop.f32.mrb[0].mxu0
        %v4545 = vadd.f32 %v4352, %v4544
        %v4546 = vpop.f32.mrb[0].mxu0
        %v4547 = vadd.f32 %v4354, %v4546
        %v4548 = vpop.f32.mrb[0].mxu0
        %v4549 = vadd.f32 %v4356, %v4548
        %v4550 = vpop.f32.mrb[0].mxu0
        %v4551 = vadd.f32 %v4358, %v4550
        %4552 = vdwg.mxu0
        %v4553 = vmax.f32 %v2465, 0.0
        %v4554 = vmax.f32 %v2467, 0.0
        %v4555 = vmax.f32 %v2851, 0.0
        %v4556 = vmax.f32 %v2853, 0.0
        %v4557 = vmax.f32 %v3237, 0.0
        %v4558 = vmax.f32 %v3239, 0.0
        %v4559 = vmax.f32 %v3623, 0.0
        %v4560 = vmax.f32 %v3625, 0.0
        %v4561 = vmax.f32 %v4009, 0.0
        %v4562 = vmax.f32 %v4011, 0.0
        %v4563 = vmax.f32 %v4395, 0.0
        %v4564 = vmax.f32 %v4397, 0.0
        %v4565 = vmax.f32 %v2469, 0.0
        %v4566 = vmax.f32 %v2471, 0.0
        %v4567 = vmax.f32 %v2855, 0.0
        %v4568 = vmax.f32 %v2857, 0.0
        %v4569 = vmax.f32 %v3241, 0.0
        %v4570 = vmax.f32 %v3243, 0.0
        %v4571 = vmax.f32 %v3627, 0.0
        %v4572 = vmax.f32 %v3629, 0.0
        %v4573 = vmax.f32 %v4013, 0.0
        %v4574 = vmax.f32 %v4015, 0.0
        %v4575 = vmax.f32 %v4399, 0.0
        %v4576 = vmax.f32 %v4401, 0.0
        %v4577 = vmax.f32 %v2475, 0.0
        %v4578 = vmax.f32 %v2477, 0.0
        %v4579 = vmax.f32 %v2861, 0.0
        %v4580 = vmax.f32 %v2863, 0.0
        %v4581 = vmax.f32 %v3247, 0.0
        %v4582 = vmax.f32 %v3249, 0.0
        %v4583 = vmax.f32 %v3633, 0.0
        %v4584 = vmax.f32 %v3635, 0.0
        %v4585 = vmax.f32 %v4019, 0.0
        %v4586 = vmax.f32 %v4021, 0.0
        %v4587 = vmax.f32 %v4405, 0.0
        %v4588 = vmax.f32 %v4407, 0.0
        %v4589 = vmax.f32 %v2479, 0.0
        %v4590 = vmax.f32 %v2481, 0.0
        %v4591 = vmax.f32 %v2865, 0.0
        %v4592 = vmax.f32 %v2867, 0.0
        %v4593 = vmax.f32 %v3251, 0.0
        %v4594 = vmax.f32 %v3253, 0.0
        %v4595 = vmax.f32 %v3637, 0.0
        %v4596 = vmax.f32 %v3639, 0.0
        %v4597 = vmax.f32 %v4023, 0.0
        %v4598 = vmax.f32 %v4025, 0.0
        %v4599 = vmax.f32 %v4409, 0.0
        %v4600 = vmax.f32 %v4411, 0.0
        %v4601 = vmax.f32 %v2485, 0.0
        %v4602 = vmax.f32 %v2487, 0.0
        %v4603 = vmax.f32 %v2871, 0.0
        %v4604 = vmax.f32 %v2873, 0.0
        %v4605 = vmax.f32 %v3257, 0.0
        %v4606 = vmax.f32 %v3259, 0.0
        %v4607 = vmax.f32 %v3643, 0.0
        %v4608 = vmax.f32 %v3645, 0.0
        %v4609 = vmax.f32 %v4029, 0.0
        %v4610 = vmax.f32 %v4031, 0.0
        %v4611 = vmax.f32 %v4415, 0.0
        %v4612 = vmax.f32 %v4417, 0.0
        %v4613 = vmax.f32 %v2489, 0.0
        %v4614 = vmax.f32 %v2491, 0.0
        %v4615 = vmax.f32 %v2875, 0.0
        %v4616 = vmax.f32 %v2877, 0.0
        %v4617 = vmax.f32 %v3261, 0.0
        %v4618 = vmax.f32 %v3263, 0.0
        %v4619 = vmax.f32 %v3647, 0.0
        %v4620 = vmax.f32 %v3649, 0.0
        %v4621 = vmax.f32 %v4033, 0.0
        %v4622 = vmax.f32 %v4035, 0.0
        %v4623 = vmax.f32 %v4419, 0.0
        %v4624 = vmax.f32 %v4421, 0.0
        %v4625 = vmax.f32 %v2495, 0.0
        %v4626 = vmax.f32 %v2497, 0.0
        %v4627 = vmax.f32 %v2881, 0.0
        %v4628 = vmax.f32 %v2883, 0.0
        %v4629 = vmax.f32 %v3267, 0.0
        %v4630 = vmax.f32 %v3269, 0.0
        %v4631 = vmax.f32 %v3653, 0.0
        %v4632 = vmax.f32 %v3655, 0.0
        %v4633 = vmax.f32 %v4039, 0.0
        %v4634 = vmax.f32 %v4041, 0.0
        %v4635 = vmax.f32 %v4425, 0.0
        %v4636 = vmax.f32 %v4427, 0.0
        %v4637 = vmax.f32 %v2499, 0.0
        %v4638 = vmax.f32 %v2501, 0.0
        %v4639 = vmax.f32 %v2885, 0.0
        %v4640 = vmax.f32 %v2887, 0.0
        %v4641 = vmax.f32 %v3271, 0.0
        %v4642 = vmax.f32 %v3273, 0.0
        %v4643 = vmax.f32 %v3657, 0.0
        %v4644 = vmax.f32 %v3659, 0.0
        %v4645 = vmax.f32 %v4043, 0.0
        %v4646 = vmax.f32 %v4045, 0.0
        %v4647 = vmax.f32 %v4429, 0.0
        %v4648 = vmax.f32 %v4431, 0.0
        %v4649 = vmax.f32 %v2505, 0.0
        %v4650 = vmax.f32 %v2507, 0.0
        %v4651 = vmax.f32 %v2891, 0.0
        %v4652 = vmax.f32 %v2893, 0.0
        %v4653 = vmax.f32 %v3277, 0.0
        %v4654 = vmax.f32 %v3279, 0.0
        %v4655 = vmax.f32 %v3663, 0.0
        %v4656 = vmax.f32 %v3665, 0.0
        %v4657 = vmax.f32 %v4049, 0.0
        %v4658 = vmax.f32 %v4051, 0.0
        %v4659 = vmax.f32 %v4435, 0.0
        %v4660 = vmax.f32 %v4437, 0.0
        %v4661 = vmax.f32 %v2509, 0.0
        %v4662 = vmax.f32 %v2511, 0.0
        %v4663 = vmax.f32 %v2895, 0.0
        %v4664 = vmax.f32 %v2897, 0.0
        %v4665 = vmax.f32 %v3281, 0.0
        %v4666 = vmax.f32 %v3283, 0.0
        %v4667 = vmax.f32 %v3667, 0.0
        %v4668 = vmax.f32 %v3669, 0.0
        %v4669 = vmax.f32 %v4053, 0.0
        %v4670 = vmax.f32 %v4055, 0.0
        %v4671 = vmax.f32 %v4439, 0.0
        %v4672 = vmax.f32 %v4441, 0.0
        %v4673 = vmax.f32 %v2515, 0.0
        %v4674 = vmax.f32 %v2517, 0.0
        %v4675 = vmax.f32 %v2901, 0.0
        %v4676 = vmax.f32 %v2903, 0.0
        %v4677 = vmax.f32 %v3287, 0.0
        %v4678 = vmax.f32 %v3289, 0.0
        %v4679 = vmax.f32 %v3673, 0.0
        %v4680 = vmax.f32 %v3675, 0.0
        %v4681 = vmax.f32 %v4059, 0.0
        %v4682 = vmax.f32 %v4061, 0.0
        %v4683 = vmax.f32 %v4445, 0.0
        %v4684 = vmax.f32 %v4447, 0.0
        %v4685 = vmax.f32 %v2519, 0.0
        %v4686 = vmax.f32 %v2521, 0.0
        %v4687 = vmax.f32 %v2905, 0.0
        %v4688 = vmax.f32 %v2907, 0.0
        %v4689 = vmax.f32 %v3291, 0.0
        %v4690 = vmax.f32 %v3293, 0.0
        %v4691 = vmax.f32 %v3677, 0.0
        %v4692 = vmax.f32 %v3679, 0.0
        %v4693 = vmax.f32 %v4063, 0.0
        %v4694 = vmax.f32 %v4065, 0.0
        %v4695 = vmax.f32 %v4449, 0.0
        %v4696 = vmax.f32 %v4451, 0.0
        %v4697 = vmax.f32 %v2525, 0.0
        %v4698 = vmax.f32 %v2527, 0.0
        %v4699 = vmax.f32 %v2911, 0.0
        %v4700 = vmax.f32 %v2913, 0.0
        %v4701 = vmax.f32 %v3297, 0.0
        %v4702 = vmax.f32 %v3299, 0.0
        %v4703 = vmax.f32 %v3683, 0.0
        %v4704 = vmax.f32 %v3685, 0.0
        %v4705 = vmax.f32 %v4069, 0.0
        %v4706 = vmax.f32 %v4071, 0.0
        %v4707 = vmax.f32 %v4455, 0.0
        %v4708 = vmax.f32 %v4457, 0.0
        %v4709 = vmax.f32 %v2529, 0.0
        %v4710 = vmax.f32 %v2531, 0.0
        %v4711 = vmax.f32 %v2915, 0.0
        %v4712 = vmax.f32 %v2917, 0.0
        %v4713 = vmax.f32 %v3301, 0.0
        %v4714 = vmax.f32 %v3303, 0.0
        %v4715 = vmax.f32 %v3687, 0.0
        %v4716 = vmax.f32 %v3689, 0.0
        %v4717 = vmax.f32 %v4073, 0.0
        %v4718 = vmax.f32 %v4075, 0.0
        %v4719 = vmax.f32 %v4459, 0.0
        %v4720 = vmax.f32 %v4461, 0.0
        %v4721 = vmax.f32 %v2535, 0.0
        %v4722 = vmax.f32 %v2537, 0.0
        %v4723 = vmax.f32 %v2921, 0.0
        %v4724 = vmax.f32 %v2923, 0.0
        %v4725 = vmax.f32 %v3307, 0.0
        %v4726 = vmax.f32 %v3309, 0.0
        %v4727 = vmax.f32 %v3693, 0.0
        %v4728 = vmax.f32 %v3695, 0.0
        %v4729 = vmax.f32 %v4079, 0.0
        %v4730 = vmax.f32 %v4081, 0.0
        %v4731 = vmax.f32 %v4465, 0.0
        %v4732 = vmax.f32 %v4467, 0.0
        %v4733 = vmax.f32 %v2539, 0.0
        %v4734 = vmax.f32 %v2541, 0.0
        %v4735 = vmax.f32 %v2925, 0.0
        %v4736 = vmax.f32 %v2927, 0.0
        %v4737 = vmax.f32 %v3311, 0.0
        %v4738 = vmax.f32 %v3313, 0.0
        %v4739 = vmax.f32 %v3697, 0.0
        %v4740 = vmax.f32 %v3699, 0.0
        %v4741 = vmax.f32 %v4083, 0.0
        %v4742 = vmax.f32 %v4085, 0.0
        %v4743 = vmax.f32 %v4469, 0.0
        %v4744 = vmax.f32 %v4471, 0.0
        %v4745 = vmax.f32 %v2545, 0.0
        %v4746 = vmax.f32 %v2547, 0.0
        %v4747 = vmax.f32 %v2931, 0.0
        %v4748 = vmax.f32 %v2933, 0.0
        %v4749 = vmax.f32 %v3317, 0.0
        %v4750 = vmax.f32 %v3319, 0.0
        %v4751 = vmax.f32 %v3703, 0.0
        %v4752 = vmax.f32 %v3705, 0.0
        %v4753 = vmax.f32 %v4089, 0.0
        %v4754 = vmax.f32 %v4091, 0.0
        %v4755 = vmax.f32 %v4475, 0.0
        %v4756 = vmax.f32 %v4477, 0.0
        %v4757 = vmax.f32 %v2549, 0.0
        %v4758 = vmax.f32 %v2551, 0.0
        %v4759 = vmax.f32 %v2935, 0.0
        %v4760 = vmax.f32 %v2937, 0.0
        %v4761 = vmax.f32 %v3321, 0.0
        %v4762 = vmax.f32 %v3323, 0.0
        %v4763 = vmax.f32 %v3707, 0.0
        %v4764 = vmax.f32 %v3709, 0.0
        %v4765 = vmax.f32 %v4093, 0.0
        %v4766 = vmax.f32 %v4095, 0.0
        %v4767 = vmax.f32 %v4479, 0.0
        %v4768 = vmax.f32 %v4481, 0.0
        %v4769 = vmax.f32 %v2555, 0.0
        %v4770 = vmax.f32 %v2557, 0.0
        %v4771 = vmax.f32 %v2941, 0.0
        %v4772 = vmax.f32 %v2943, 0.0
        %v4773 = vmax.f32 %v3327, 0.0
        %v4774 = vmax.f32 %v3329, 0.0
        %v4775 = vmax.f32 %v3713, 0.0
        %v4776 = vmax.f32 %v3715, 0.0
        %v4777 = vmax.f32 %v4099, 0.0
        %v4778 = vmax.f32 %v4101, 0.0
        %v4779 = vmax.f32 %v4485, 0.0
        %v4780 = vmax.f32 %v4487, 0.0
        %v4781 = vmax.f32 %v2559, 0.0
        %v4782 = vmax.f32 %v2561, 0.0
        %v4783 = vmax.f32 %v2945, 0.0
        %v4784 = vmax.f32 %v2947, 0.0
        %v4785 = vmax.f32 %v3331, 0.0
        %v4786 = vmax.f32 %v3333, 0.0
        %v4787 = vmax.f32 %v3717, 0.0
        %v4788 = vmax.f32 %v3719, 0.0
        %v4789 = vmax.f32 %v4103, 0.0
        %v4790 = vmax.f32 %v4105, 0.0
        %v4791 = vmax.f32 %v4489, 0.0
        %v4792 = vmax.f32 %v4491, 0.0
        %v4793 = vmax.f32 %v2565, 0.0
        %v4794 = vmax.f32 %v2567, 0.0
        %v4795 = vmax.f32 %v2951, 0.0
        %v4796 = vmax.f32 %v2953, 0.0
        %v4797 = vmax.f32 %v3337, 0.0
        %v4798 = vmax.f32 %v3339, 0.0
        %v4799 = vmax.f32 %v3723, 0.0
        %v4800 = vmax.f32 %v3725, 0.0
        %v4801 = vmax.f32 %v4109, 0.0
        %v4802 = vmax.f32 %v4111, 0.0
        %v4803 = vmax.f32 %v4495, 0.0
        %v4804 = vmax.f32 %v4497, 0.0
        %v4805 = vmax.f32 %v2569, 0.0
        %v4806 = vmax.f32 %v2571, 0.0
        %v4807 = vmax.f32 %v2955, 0.0
        %v4808 = vmax.f32 %v2957, 0.0
        %v4809 = vmax.f32 %v3341, 0.0
        %v4810 = vmax.f32 %v3343, 0.0
        %v4811 = vmax.f32 %v3727, 0.0
        %v4812 = vmax.f32 %v3729, 0.0
        %v4813 = vmax.f32 %v4113, 0.0
        %v4814 = vmax.f32 %v4115, 0.0
        %v4815 = vmax.f32 %v4499, 0.0
        %v4816 = vmax.f32 %v4501, 0.0
        %v4817 = vmax.f32 %v2575, 0.0
        %v4818 = vmax.f32 %v2577, 0.0
        %v4819 = vmax.f32 %v2961, 0.0
        %v4820 = vmax.f32 %v2963, 0.0
        %v4821 = vmax.f32 %v3347, 0.0
        %v4822 = vmax.f32 %v3349, 0.0
        %v4823 = vmax.f32 %v3733, 0.0
        %v4824 = vmax.f32 %v3735, 0.0
        %v4825 = vmax.f32 %v4119, 0.0
        %v4826 = vmax.f32 %v4121, 0.0
        %v4827 = vmax.f32 %v4505, 0.0
        %v4828 = vmax.f32 %v4507, 0.0
        %v4829 = vmax.f32 %v2579, 0.0
        %v4830 = vmax.f32 %v2581, 0.0
        %v4831 = vmax.f32 %v2965, 0.0
        %v4832 = vmax.f32 %v2967, 0.0
        %v4833 = vmax.f32 %v3351, 0.0
        %v4834 = vmax.f32 %v3353, 0.0
        %v4835 = vmax.f32 %v3737, 0.0
        %v4836 = vmax.f32 %v3739, 0.0
        %v4837 = vmax.f32 %v4123, 0.0
        %v4838 = vmax.f32 %v4125, 0.0
        %v4839 = vmax.f32 %v4509, 0.0
        %v4840 = vmax.f32 %v4511, 0.0
        %v4841 = vmax.f32 %v2585, 0.0
        %v4842 = vmax.f32 %v2587, 0.0
        %v4843 = vmax.f32 %v2971, 0.0
        %v4844 = vmax.f32 %v2973, 0.0
        %v4845 = vmax.f32 %v3357, 0.0
        %v4846 = vmax.f32 %v3359, 0.0
        %v4847 = vmax.f32 %v3743, 0.0
        %v4848 = vmax.f32 %v3745, 0.0
        %v4849 = vmax.f32 %v4129, 0.0
        %v4850 = vmax.f32 %v4131, 0.0
        %v4851 = vmax.f32 %v4515, 0.0
        %v4852 = vmax.f32 %v4517, 0.0
        %v4853 = vmax.f32 %v2589, 0.0
        %v4854 = vmax.f32 %v2591, 0.0
        %v4855 = vmax.f32 %v2975, 0.0
        %v4856 = vmax.f32 %v2977, 0.0
        %v4857 = vmax.f32 %v3361, 0.0
        %v4858 = vmax.f32 %v3363, 0.0
        %v4859 = vmax.f32 %v3747, 0.0
        %v4860 = vmax.f32 %v3749, 0.0
        %v4861 = vmax.f32 %v4133, 0.0
        %v4862 = vmax.f32 %v4135, 0.0
        %v4863 = vmax.f32 %v4519, 0.0
        %v4864 = vmax.f32 %v4521, 0.0
        %v4865 = vmax.f32 %v2595, 0.0
        %v4866 = vmax.f32 %v2597, 0.0
        %v4867 = vmax.f32 %v2981, 0.0
        %v4868 = vmax.f32 %v2983, 0.0
        %v4869 = vmax.f32 %v3367, 0.0
        %v4870 = vmax.f32 %v3369, 0.0
        %v4871 = vmax.f32 %v3753, 0.0
        %v4872 = vmax.f32 %v3755, 0.0
        %v4873 = vmax.f32 %v4139, 0.0
        %v4874 = vmax.f32 %v4141, 0.0
        %v4875 = vmax.f32 %v4525, 0.0
        %v4876 = vmax.f32 %v4527, 0.0
        %v4877 = vmax.f32 %v2599, 0.0
        %v4878 = vmax.f32 %v2601, 0.0
        %v4879 = vmax.f32 %v2985, 0.0
        %v4880 = vmax.f32 %v2987, 0.0
        %v4881 = vmax.f32 %v3371, 0.0
        %v4882 = vmax.f32 %v3373, 0.0
        %v4883 = vmax.f32 %v3757, 0.0
        %v4884 = vmax.f32 %v3759, 0.0
        %v4885 = vmax.f32 %v4143, 0.0
        %v4886 = vmax.f32 %v4145, 0.0
        %v4887 = vmax.f32 %v4529, 0.0
        %v4888 = vmax.f32 %v4531, 0.0
        %v4889 = vmax.f32 %v2605, 0.0
        %v4890 = vmax.f32 %v2607, 0.0
        %v4891 = vmax.f32 %v2991, 0.0
        %v4892 = vmax.f32 %v2993, 0.0
        %v4893 = vmax.f32 %v3377, 0.0
        %v4894 = vmax.f32 %v3379, 0.0
        %v4895 = vmax.f32 %v3763, 0.0
        %v4896 = vmax.f32 %v3765, 0.0
        %v4897 = vmax.f32 %v4149, 0.0
        %v4898 = vmax.f32 %v4151, 0.0
        %v4899 = vmax.f32 %v4535, 0.0
        %v4900 = vmax.f32 %v4537, 0.0
        %v4901 = vmax.f32 %v2609, 0.0
        %v4902 = vmax.f32 %v2611, 0.0
        %v4903 = vmax.f32 %v2995, 0.0
        %v4904 = vmax.f32 %v2997, 0.0
        %v4905 = vmax.f32 %v3381, 0.0
        %v4906 = vmax.f32 %v3383, 0.0
        %v4907 = vmax.f32 %v3767, 0.0
        %v4908 = vmax.f32 %v3769, 0.0
        %v4909 = vmax.f32 %v4153, 0.0
        %v4910 = vmax.f32 %v4155, 0.0
        %v4911 = vmax.f32 %v4539, 0.0
        %v4912 = vmax.f32 %v4541, 0.0
        %v4913 = vmax.f32 %v2615, 0.0
        %v4914 = vmax.f32 %v2617, 0.0
        %v4915 = vmax.f32 %v3001, 0.0
        %v4916 = vmax.f32 %v3003, 0.0
        %v4917 = vmax.f32 %v3387, 0.0
        %v4918 = vmax.f32 %v3389, 0.0
        %v4919 = vmax.f32 %v3773, 0.0
        %v4920 = vmax.f32 %v3775, 0.0
        %v4921 = vmax.f32 %v4159, 0.0
        %v4922 = vmax.f32 %v4161, 0.0
        %v4923 = vmax.f32 %v4545, 0.0
        %v4924 = vmax.f32 %v4547, 0.0
        %v4925 = vmax.f32 %v2619, 0.0
        %v4926 = vmax.f32 %v2621, 0.0
        %v4927 = vmax.f32 %v3005, 0.0
        %v4928 = vmax.f32 %v3007, 0.0
        %v4929 = vmax.f32 %v3391, 0.0
        %v4930 = vmax.f32 %v3393, 0.0
        %v4931 = vmax.f32 %v3777, 0.0
        %v4932 = vmax.f32 %v3779, 0.0
        %v4933 = vmax.f32 %v4163, 0.0
        %v4934 = vmax.f32 %v4165, 0.0
        %v4935 = vmax.f32 %v4549, 0.0
        %v4936 = vmax.f32 %v4551, 0.0
        %v4937 = vpack.c.bf16 %v4565, %v4553
        %v4938 = vpack.c.bf16 %v4566, %v4554
        %v4939 = vpack.c.bf16 %v4567, %v4555
        %v4940 = vpack.c.bf16 %v4568, %v4556
        %v4941 = vpack.c.bf16 %v4569, %v4557
        %v4942 = vpack.c.bf16 %v4570, %v4558
        %v4943 = vpack.c.bf16 %v4571, %v4559
        %v4944 = vpack.c.bf16 %v4572, %v4560
        %v4945 = vpack.c.bf16 %v4573, %v4561
        %v4946 = vpack.c.bf16 %v4574, %v4562
        %v4947 = vpack.c.bf16 %v4575, %v4563
        %v4948 = vpack.c.bf16 %v4576, %v4564
        %v4949 = vpack.c.bf16 %v4589, %v4577
        %v4950 = vpack.c.bf16 %v4590, %v4578
        %v4951 = vpack.c.bf16 %v4591, %v4579
        %v4952 = vpack.c.bf16 %v4592, %v4580
        %v4953 = vpack.c.bf16 %v4593, %v4581
        %v4954 = vpack.c.bf16 %v4594, %v4582
        %v4955 = vpack.c.bf16 %v4595, %v4583
        %v4956 = vpack.c.bf16 %v4596, %v4584
        %v4957 = vpack.c.bf16 %v4597, %v4585
        %v4958 = vpack.c.bf16 %v4598, %v4586
        %v4959 = vpack.c.bf16 %v4599, %v4587
        %v4960 = vpack.c.bf16 %v4600, %v4588
        %v4961 = vpack.c.bf16 %v4613, %v4601
        %v4962 = vpack.c.bf16 %v4614, %v4602
        %v4963 = vpack.c.bf16 %v4615, %v4603
        %v4964 = vpack.c.bf16 %v4616, %v4604
        %v4965 = vpack.c.bf16 %v4617, %v4605
        %v4966 = vpack.c.bf16 %v4618, %v4606
        %v4967 = vpack.c.bf16 %v4619, %v4607
        %v4968 = vpack.c.bf16 %v4620, %v4608
        %v4969 = vpack.c.bf16 %v4621, %v4609
        %v4970 = vpack.c.bf16 %v4622, %v4610
        %v4971 = vpack.c.bf16 %v4623, %v4611
        %v4972 = vpack.c.bf16 %v4624, %v4612
        %v4973 = vpack.c.bf16 %v4637, %v4625
        %v4974 = vpack.c.bf16 %v4638, %v4626
        %v4975 = vpack.c.bf16 %v4639, %v4627
        %v4976 = vpack.c.bf16 %v4640, %v4628
        %v4977 = vpack.c.bf16 %v4641, %v4629
        %v4978 = vpack.c.bf16 %v4642, %v4630
        %v4979 = vpack.c.bf16 %v4643, %v4631
        %v4980 = vpack.c.bf16 %v4644, %v4632
        %v4981 = vpack.c.bf16 %v4645, %v4633
        %v4982 = vpack.c.bf16 %v4646, %v4634
        %v4983 = vpack.c.bf16 %v4647, %v4635
        %v4984 = vpack.c.bf16 %v4648, %v4636
        %v4985 = vpack.c.bf16 %v4661, %v4649
        %v4986 = vpack.c.bf16 %v4662, %v4650
        %v4987 = vpack.c.bf16 %v4663, %v4651
        %v4988 = vpack.c.bf16 %v4664, %v4652
        %v4989 = vpack.c.bf16 %v4665, %v4653
        %v4990 = vpack.c.bf16 %v4666, %v4654
        %v4991 = vpack.c.bf16 %v4667, %v4655
        %v4992 = vpack.c.bf16 %v4668, %v4656
        %v4993 = vpack.c.bf16 %v4669, %v4657
        %v4994 = vpack.c.bf16 %v4670, %v4658
        %v4995 = vpack.c.bf16 %v4671, %v4659
        %v4996 = vpack.c.bf16 %v4672, %v4660
        %v4997 = vpack.c.bf16 %v4685, %v4673
        %v4998 = vpack.c.bf16 %v4686, %v4674
        %v4999 = vpack.c.bf16 %v4687, %v4675
        %v5000 = vpack.c.bf16 %v4688, %v4676
        %v5001 = vpack.c.bf16 %v4689, %v4677
        %v5002 = vpack.c.bf16 %v4690, %v4678
        %v5003 = vpack.c.bf16 %v4691, %v4679
        %v5004 = vpack.c.bf16 %v4692, %v4680
        %v5005 = vpack.c.bf16 %v4693, %v4681
        %v5006 = vpack.c.bf16 %v4694, %v4682
        %v5007 = vpack.c.bf16 %v4695, %v4683
        %v5008 = vpack.c.bf16 %v4696, %v4684
        %v5009 = vpack.c.bf16 %v4709, %v4697
        %v5010 = vpack.c.bf16 %v4710, %v4698
        %v5011 = vpack.c.bf16 %v4711, %v4699
        %v5012 = vpack.c.bf16 %v4712, %v4700
        %v5013 = vpack.c.bf16 %v4713, %v4701
        %v5014 = vpack.c.bf16 %v4714, %v4702
        %v5015 = vpack.c.bf16 %v4715, %v4703
        %v5016 = vpack.c.bf16 %v4716, %v4704
        %v5017 = vpack.c.bf16 %v4717, %v4705
        %v5018 = vpack.c.bf16 %v4718, %v4706
        %v5019 = vpack.c.bf16 %v4719, %v4707
        %v5020 = vpack.c.bf16 %v4720, %v4708
        %v5021 = vpack.c.bf16 %v4733, %v4721
        %v5022 = vpack.c.bf16 %v4734, %v4722
        %v5023 = vpack.c.bf16 %v4735, %v4723
        %v5024 = vpack.c.bf16 %v4736, %v4724
        %v5025 = vpack.c.bf16 %v4737, %v4725
        %v5026 = vpack.c.bf16 %v4738, %v4726
        %v5027 = vpack.c.bf16 %v4739, %v4727
        %v5028 = vpack.c.bf16 %v4740, %v4728
        %v5029 = vpack.c.bf16 %v4741, %v4729
        %v5030 = vpack.c.bf16 %v4742, %v4730
        %v5031 = vpack.c.bf16 %v4743, %v4731
        %v5032 = vpack.c.bf16 %v4744, %v4732
        %v5033 = vpack.c.bf16 %v4757, %v4745
        %v5034 = vpack.c.bf16 %v4758, %v4746
        %v5035 = vpack.c.bf16 %v4759, %v4747
        %v5036 = vpack.c.bf16 %v4760, %v4748
        %v5037 = vpack.c.bf16 %v4761, %v4749
        %v5038 = vpack.c.bf16 %v4762, %v4750
        %v5039 = vpack.c.bf16 %v4763, %v4751
        %v5040 = vpack.c.bf16 %v4764, %v4752
        %v5041 = vpack.c.bf16 %v4765, %v4753
        %v5042 = vpack.c.bf16 %v4766, %v4754
        %v5043 = vpack.c.bf16 %v4767, %v4755
        %v5044 = vpack.c.bf16 %v4768, %v4756
        %v5045 = vpack.c.bf16 %v4781, %v4769
        %v5046 = vpack.c.bf16 %v4782, %v4770
        %v5047 = vpack.c.bf16 %v4783, %v4771
        %v5048 = vpack.c.bf16 %v4784, %v4772
        %v5049 = vpack.c.bf16 %v4785, %v4773
        %v5050 = vpack.c.bf16 %v4786, %v4774
        %v5051 = vpack.c.bf16 %v4787, %v4775
        %v5052 = vpack.c.bf16 %v4788, %v4776
        %v5053 = vpack.c.bf16 %v4789, %v4777
        %v5054 = vpack.c.bf16 %v4790, %v4778
        %v5055 = vpack.c.bf16 %v4791, %v4779
        %v5056 = vpack.c.bf16 %v4792, %v4780
        %v5057 = vpack.c.bf16 %v4805, %v4793
        %v5058 = vpack.c.bf16 %v4806, %v4794
        %v5059 = vpack.c.bf16 %v4807, %v4795
        %v5060 = vpack.c.bf16 %v4808, %v4796
        %v5061 = vpack.c.bf16 %v4809, %v4797
        %v5062 = vpack.c.bf16 %v4810, %v4798
        %v5063 = vpack.c.bf16 %v4811, %v4799
        %v5064 = vpack.c.bf16 %v4812, %v4800
        %v5065 = vpack.c.bf16 %v4813, %v4801
        %v5066 = vpack.c.bf16 %v4814, %v4802
        %v5067 = vpack.c.bf16 %v4815, %v4803
        %v5068 = vpack.c.bf16 %v4816, %v4804
        %v5069 = vpack.c.bf16 %v4829, %v4817
        %v5070 = vpack.c.bf16 %v4830, %v4818
        %v5071 = vpack.c.bf16 %v4831, %v4819
        %v5072 = vpack.c.bf16 %v4832, %v4820
        %v5073 = vpack.c.bf16 %v4833, %v4821
        %v5074 = vpack.c.bf16 %v4834, %v4822
        %v5075 = vpack.c.bf16 %v4835, %v4823
        %v5076 = vpack.c.bf16 %v4836, %v4824
        %v5077 = vpack.c.bf16 %v4837, %v4825
        %v5078 = vpack.c.bf16 %v4838, %v4826
        %v5079 = vpack.c.bf16 %v4839, %v4827
        %v5080 = vpack.c.bf16 %v4840, %v4828
        %v5081 = vpack.c.bf16 %v4853, %v4841
        %v5082 = vpack.c.bf16 %v4854, %v4842
        %v5083 = vpack.c.bf16 %v4855, %v4843
        %v5084 = vpack.c.bf16 %v4856, %v4844
        %v5085 = vpack.c.bf16 %v4857, %v4845
        %v5086 = vpack.c.bf16 %v4858, %v4846
        %v5087 = vpack.c.bf16 %v4859, %v4847
        %v5088 = vpack.c.bf16 %v4860, %v4848
        %v5089 = vpack.c.bf16 %v4861, %v4849
        %v5090 = vpack.c.bf16 %v4862, %v4850
        %v5091 = vpack.c.bf16 %v4863, %v4851
        %v5092 = vpack.c.bf16 %v4864, %v4852
        %v5093 = vpack.c.bf16 %v4877, %v4865
        %v5094 = vpack.c.bf16 %v4878, %v4866
        %v5095 = vpack.c.bf16 %v4879, %v4867
        %v5096 = vpack.c.bf16 %v4880, %v4868
        %v5097 = vpack.c.bf16 %v4881, %v4869
        %v5098 = vpack.c.bf16 %v4882, %v4870
        %v5099 = vpack.c.bf16 %v4883, %v4871
        %v5100 = vpack.c.bf16 %v4884, %v4872
        %v5101 = vpack.c.bf16 %v4885, %v4873
        %v5102 = vpack.c.bf16 %v4886, %v4874
        %v5103 = vpack.c.bf16 %v4887, %v4875
        %v5104 = vpack.c.bf16 %v4888, %v4876
        %v5105 = vpack.c.bf16 %v4901, %v4889
        %v5106 = vpack.c.bf16 %v4902, %v4890
        %v5107 = vpack.c.bf16 %v4903, %v4891
        %v5108 = vpack.c.bf16 %v4904, %v4892
        %v5109 = vpack.c.bf16 %v4905, %v4893
        %v5110 = vpack.c.bf16 %v4906, %v4894
        %v5111 = vpack.c.bf16 %v4907, %v4895
        %v5112 = vpack.c.bf16 %v4908, %v4896
        %v5113 = vpack.c.bf16 %v4909, %v4897
        %v5114 = vpack.c.bf16 %v4910, %v4898
        %v5115 = vpack.c.bf16 %v4911, %v4899
        %v5116 = vpack.c.bf16 %v4912, %v4900
        %v5117 = vpack.c.bf16 %v4925, %v4913
        %v5118 = vpack.c.bf16 %v4926, %v4914
        %v5119 = vpack.c.bf16 %v4927, %v4915
        %v5120 = vpack.c.bf16 %v4928, %v4916
        %v5121 = vpack.c.bf16 %v4929, %v4917
        %v5122 = vpack.c.bf16 %v4930, %v4918
        %v5123 = vpack.c.bf16 %v4931, %v4919
        %v5124 = vpack.c.bf16 %v4932, %v4920
        %v5125 = vpack.c.bf16 %v4933, %v4921
        %v5126 = vpack.c.bf16 %v4934, %v4922
        %v5127 = vpack.c.bf16 %v4935, %v4923
        %v5128 = vpack.c.bf16 %v4936, %v4924
        %v5129 = vld [vmem:[#allocation8] sm:$0xff]
        %v5130 = vld [vmem:[#allocation8 + $0x8] sm:$0xf]
        %v5131 = vld [vmem:[#allocation8 + $0xc] sm:$0xff]
        %v5132 = vld [vmem:[#allocation8 + $0x14] sm:$0xf]
        %v5133 = vld [vmem:[#allocation8 + $0x18] sm:$0xff]
        %v5134 = vld [vmem:[#allocation8 + $0x20] sm:$0xf]
        %v5135 = vld [vmem:[#allocation8 + $0x24] sm:$0xff]
        %v5136 = vld [vmem:[#allocation8 + $0x2c] sm:$0xf]
        %v5137 = vld [vmem:[#allocation8 + $0x30] sm:$0xff]
        %v5138 = vld [vmem:[#allocation8 + $0x38] sm:$0xf]
        %v5139 = vld [vmem:[#allocation8 + $0x3c] sm:$0xff]
        %v5140 = vld [vmem:[#allocation8 + $0x44] sm:$0xf]
        %v5141 = vld [vmem:[#allocation8 + $0x48] sm:$0xff]
        %v5142 = vld [vmem:[#allocation8 + $0x50] sm:$0xf]
        %v5143 = vld [vmem:[#allocation8 + $0x54] sm:$0xff]
        %v5144 = vld [vmem:[#allocation8 + $0x5c] sm:$0xf]
        %v5145 = vld [vmem:[#allocation8 + $0x60] sm:$0xff]
        %v5146 = vld [vmem:[#allocation8 + $0x68] sm:$0xf]
        %v5147 = vld [vmem:[#allocation8 + $0x6c] sm:$0xff]
        %v5148 = vld [vmem:[#allocation8 + $0x74] sm:$0xf]
        %v5149 = vld [vmem:[#allocation8 + $0x78] sm:$0xff]
        %v5150 = vld [vmem:[#allocation8 + $0x80] sm:$0xf]
        %v5151 = vld [vmem:[#allocation8 + $0x84] sm:$0xff]
        %v5152 = vld [vmem:[#allocation8 + $0x8c] sm:$0xf]
        %v5153 = vld [vmem:[#allocation8 + $0x90] sm:$0xff]
        %v5154 = vld [vmem:[#allocation8 + $0x98] sm:$0xf]
        %v5155 = vld [vmem:[#allocation8 + $0x9c] sm:$0xff]
        %v5156 = vld [vmem:[#allocation8 + $0xa4] sm:$0xf]
        %v5157 = vld [vmem:[#allocation8 + $0xa8] sm:$0xff]
        %v5158 = vld [vmem:[#allocation8 + $0xb0] sm:$0xf]
        %v5159 = vld [vmem:[#allocation8 + $0xb4] sm:$0xff]
        %v5160 = vld [vmem:[#allocation8 + $0xbc] sm:$0xf]
        %v5161 = vld [vmem:[#allocation8 + $0xc0] sm:$0xff]
        %v5162 = vld [vmem:[#allocation8 + $0xc8] sm:$0xf]
        %v5163 = vld [vmem:[#allocation8 + $0xcc] sm:$0xff]
        %v5164 = vld [vmem:[#allocation8 + $0xd4] sm:$0xf]
        %v5165 = vld [vmem:[#allocation8 + $0xd8] sm:$0xff]
        %v5166 = vld [vmem:[#allocation8 + $0xe0] sm:$0xf]
        %v5167 = vld [vmem:[#allocation8 + $0xe4] sm:$0xff]
        %v5168 = vld [vmem:[#allocation8 + $0xec] sm:$0xf]
        %v5169 = vld [vmem:[#allocation8 + $0xf0] sm:$0xff]
        %v5170 = vld [vmem:[#allocation8 + $0xf8] sm:$0xf]
        %v5171 = vld [vmem:[#allocation8 + $0xfc] sm:$0xff]
        %v5172 = vld [vmem:[#allocation8 + $0x104] sm:$0xf]
        %v5173 = vld [vmem:[#allocation8 + $0x108] sm:$0xff]
        %v5174 = vld [vmem:[#allocation8 + $0x110] sm:$0xf]
        %v5175 = vld [vmem:[#allocation8 + $0x114] sm:$0xff]
        %v5176 = vld [vmem:[#allocation8 + $0x11c] sm:$0xf]
        %v5177 = vld [vmem:[#allocation8 + $0x120] sm:$0xff]
        %v5178 = vld [vmem:[#allocation8 + $0x128] sm:$0xf]
        %v5179 = vld [vmem:[#allocation8 + $0x12c] sm:$0xff]
        %v5180 = vld [vmem:[#allocation8 + $0x134] sm:$0xf]
        %v5181 = vld [vmem:[#allocation8 + $0x138] sm:$0xff]
        %v5182 = vld [vmem:[#allocation8 + $0x140] sm:$0xf]
        %v5183 = vld [vmem:[#allocation8 + $0x144] sm:$0xff]
        %v5184 = vld [vmem:[#allocation8 + $0x14c] sm:$0xf]
        %v5185 = vld [vmem:[#allocation8 + $0x150] sm:$0xff]
        %v5186 = vld [vmem:[#allocation8 + $0x158] sm:$0xf]
        %v5187 = vld [vmem:[#allocation8 + $0x15c] sm:$0xff]
        %v5188 = vld [vmem:[#allocation8 + $0x164] sm:$0xf]
        %v5189 = vld [vmem:[#allocation8 + $0x168] sm:$0xff]
        %v5190 = vld [vmem:[#allocation8 + $0x170] sm:$0xf]
        %v5191 = vld [vmem:[#allocation8 + $0x174] sm:$0xff]
        %v5192 = vld [vmem:[#allocation8 + $0x17c] sm:$0xf]
        %v5193 = vld [vmem:[#allocation8 + $0x180] sm:$0xff]
        %v5194 = vld [vmem:[#allocation8 + $0x188] sm:$0xf]
        %v5195 = vld [vmem:[#allocation8 + $0x18c] sm:$0xff]
        %v5196 = vld [vmem:[#allocation8 + $0x194] sm:$0xf]
        %v5197 = vld [vmem:[#allocation8 + $0x198] sm:$0xff]
        %v5198 = vld [vmem:[#allocation8 + $0x1a0] sm:$0xf]
        %v5199 = vld [vmem:[#allocation8 + $0x1a4] sm:$0xff]
        %v5200 = vld [vmem:[#allocation8 + $0x1ac] sm:$0xf]
        %v5201 = vld [vmem:[#allocation8 + $0x1b0] sm:$0xff]
        %v5202 = vld [vmem:[#allocation8 + $0x1b8] sm:$0xf]
        %v5203 = vld [vmem:[#allocation8 + $0x1bc] sm:$0xff]
        %v5204 = vld [vmem:[#allocation8 + $0x1c4] sm:$0xf]
        %v5205 = vld [vmem:[#allocation8 + $0x1c8] sm:$0xff]
        %v5206 = vld [vmem:[#allocation8 + $0x1d0] sm:$0xf]
        %v5207 = vld [vmem:[#allocation8 + $0x1d4] sm:$0xff]
        %v5208 = vld [vmem:[#allocation8 + $0x1dc] sm:$0xf]
        %v5209 = vld [vmem:[#allocation8 + $0x1e0] sm:$0xff]
        %v5210 = vld [vmem:[#allocation8 + $0x1e8] sm:$0xf]
        %v5211 = vld [vmem:[#allocation8 + $0x1ec] sm:$0xff]
        %v5212 = vld [vmem:[#allocation8 + $0x1f4] sm:$0xf]
        %v5213 = vld [vmem:[#allocation8 + $0x1f8] sm:$0xff]
        %v5214 = vld [vmem:[#allocation8 + $0x200] sm:$0xf]
        %v5215 = vld [vmem:[#allocation8 + $0x204] sm:$0xff]
        %v5216 = vld [vmem:[#allocation8 + $0x20c] sm:$0xf]
        %v5217 = vld [vmem:[#allocation8 + $0x210] sm:$0xff]
        %v5218 = vld [vmem:[#allocation8 + $0x218] sm:$0xf]
        %v5219 = vld [vmem:[#allocation8 + $0x21c] sm:$0xff]
        %v5220 = vld [vmem:[#allocation8 + $0x224] sm:$0xf]
        %v5221 = vld [vmem:[#allocation8 + $0x228] sm:$0xff]
        %v5222 = vld [vmem:[#allocation8 + $0x230] sm:$0xf]
        %v5223 = vld [vmem:[#allocation8 + $0x234] sm:$0xff]
        %v5224 = vld [vmem:[#allocation8 + $0x23c] sm:$0xf]
        %v5225 = vld [vmem:[#allocation8 + $0x240] sm:$0xff]
        %v5226 = vld [vmem:[#allocation8 + $0x248] sm:$0xf]
        %v5227 = vld [vmem:[#allocation8 + $0x24c] sm:$0xff]
        %v5228 = vld [vmem:[#allocation8 + $0x254] sm:$0xf]
        %v5229 = vld [vmem:[#allocation8 + $0x258] sm:$0xff]
        %v5230 = vld [vmem:[#allocation8 + $0x260] sm:$0xf]
        %v5231 = vld [vmem:[#allocation8 + $0x264] sm:$0xff]
        %v5232 = vld [vmem:[#allocation8 + $0x26c] sm:$0xf]
        %v5233 = vld [vmem:[#allocation8 + $0x270] sm:$0xff]
        %v5234 = vld [vmem:[#allocation8 + $0x278] sm:$0xf]
        %v5235 = vld [vmem:[#allocation8 + $0x27c] sm:$0xff]
        %v5236 = vld [vmem:[#allocation8 + $0x284] sm:$0xf]
        %v5237 = vld [vmem:[#allocation8 + $0x288] sm:$0xff]
        %v5238 = vld [vmem:[#allocation8 + $0x290] sm:$0xf]
        %v5239 = vld [vmem:[#allocation8 + $0x294] sm:$0xff]
        %v5240 = vld [vmem:[#allocation8 + $0x29c] sm:$0xf]
        %v5241 = vld [vmem:[#allocation8 + $0x2a0] sm:$0xff]
        %v5242 = vld [vmem:[#allocation8 + $0x2a8] sm:$0xf]
        %v5243 = vld [vmem:[#allocation8 + $0x2ac] sm:$0xff]
        %v5244 = vld [vmem:[#allocation8 + $0x2b4] sm:$0xf]
        %v5245 = vld [vmem:[#allocation8 + $0x2b8] sm:$0xff]
        %v5246 = vld [vmem:[#allocation8 + $0x2c0] sm:$0xf]
        %v5247 = vld [vmem:[#allocation8 + $0x2c4] sm:$0xff]
        %v5248 = vld [vmem:[#allocation8 + $0x2cc] sm:$0xf]
        %v5249 = vld [vmem:[#allocation8 + $0x2d0] sm:$0xff]
        %v5250 = vld [vmem:[#allocation8 + $0x2d8] sm:$0xf]
        %v5251 = vld [vmem:[#allocation8 + $0x2dc] sm:$0xff]
        %v5252 = vld [vmem:[#allocation8 + $0x2e4] sm:$0xf]
        %v5253 = vld [vmem:[#allocation8 + $0x2e8] sm:$0xff]
        %v5254 = vld [vmem:[#allocation8 + $0x2f0] sm:$0xf]
        %v5255 = vld [vmem:[#allocation8 + $0x2f4] sm:$0xff]
        %v5256 = vld [vmem:[#allocation8 + $0x2fc] sm:$0xf]
        %v5257 = vld [vmem:[#allocation8 + $0x300] sm:$0xff]
        %v5258 = vld [vmem:[#allocation8 + $0x308] sm:$0xf]
        %v5259 = vld [vmem:[#allocation8 + $0x30c] sm:$0xff]
        %v5260 = vld [vmem:[#allocation8 + $0x314] sm:$0xf]
        %v5261 = vld [vmem:[#allocation8 + $0x318] sm:$0xff]
        %v5262 = vld [vmem:[#allocation8 + $0x320] sm:$0xf]
        %v5263 = vld [vmem:[#allocation8 + $0x324] sm:$0xff]
        %v5264 = vld [vmem:[#allocation8 + $0x32c] sm:$0xf]
        %v5265 = vld [vmem:[#allocation8 + $0x330] sm:$0xff]
        %v5266 = vld [vmem:[#allocation8 + $0x338] sm:$0xf]
        %v5267 = vld [vmem:[#allocation8 + $0x33c] sm:$0xff]
        %v5268 = vld [vmem:[#allocation8 + $0x344] sm:$0xf]
        %v5269 = vld [vmem:[#allocation8 + $0x348] sm:$0xff]
        %v5270 = vld [vmem:[#allocation8 + $0x350] sm:$0xf]
        %v5271 = vld [vmem:[#allocation8 + $0x354] sm:$0xff]
        %v5272 = vld [vmem:[#allocation8 + $0x35c] sm:$0xf]
        %v5273 = vld [vmem:[#allocation8 + $0x360] sm:$0xff]
        %v5274 = vld [vmem:[#allocation8 + $0x368] sm:$0xf]
        %v5275 = vld [vmem:[#allocation8 + $0x36c] sm:$0xff]
        %v5276 = vld [vmem:[#allocation8 + $0x374] sm:$0xf]
        %v5277 = vld [vmem:[#allocation8 + $0x378] sm:$0xff]
        %v5278 = vld [vmem:[#allocation8 + $0x380] sm:$0xf]
        %v5279 = vld [vmem:[#allocation8 + $0x384] sm:$0xff]
        %v5280 = vld [vmem:[#allocation8 + $0x38c] sm:$0xf]
        %v5281 = vld [vmem:[#allocation8 + $0x390] sm:$0xff]
        %v5282 = vld [vmem:[#allocation8 + $0x398] sm:$0xf]
        %v5283 = vld [vmem:[#allocation8 + $0x39c] sm:$0xff]
        %v5284 = vld [vmem:[#allocation8 + $0x3a4] sm:$0xf]
        %v5285 = vld [vmem:[#allocation8 + $0x3a8] sm:$0xff]
        %v5286 = vld [vmem:[#allocation8 + $0x3b0] sm:$0xf]
        %v5287 = vld [vmem:[#allocation8 + $0x3b4] sm:$0xff]
        %v5288 = vld [vmem:[#allocation8 + $0x3bc] sm:$0xf]
        %v5289 = vld [vmem:[#allocation8 + $0x3c0] sm:$0xff]
        %v5290 = vld [vmem:[#allocation8 + $0x3c8] sm:$0xf]
        %v5291 = vld [vmem:[#allocation8 + $0x3cc] sm:$0xff]
        %v5292 = vld [vmem:[#allocation8 + $0x3d4] sm:$0xf]
        %v5293 = vld [vmem:[#allocation8 + $0x3d8] sm:$0xff]
        %v5294 = vld [vmem:[#allocation8 + $0x3e0] sm:$0xf]
        %v5295 = vld [vmem:[#allocation8 + $0x3e4] sm:$0xff]
        %v5296 = vld [vmem:[#allocation8 + $0x3ec] sm:$0xf]
        %v5297 = vld [vmem:[#allocation8 + $0x3f0] sm:$0xff]
        %v5298 = vld [vmem:[#allocation8 + $0x3f8] sm:$0xf]
        %v5299 = vld [vmem:[#allocation8 + $0x3fc] sm:$0xff]
        %v5300 = vld [vmem:[#allocation8 + $0x404] sm:$0xf]
        %v5301 = vld [vmem:[#allocation8 + $0x408] sm:$0xff]
        %v5302 = vld [vmem:[#allocation8 + $0x410] sm:$0xf]
        %v5303 = vld [vmem:[#allocation8 + $0x414] sm:$0xff]
        %v5304 = vld [vmem:[#allocation8 + $0x41c] sm:$0xf]
        %v5305 = vld [vmem:[#allocation8 + $0x420] sm:$0xff]
        %v5306 = vld [vmem:[#allocation8 + $0x428] sm:$0xf]
        %v5307 = vld [vmem:[#allocation8 + $0x42c] sm:$0xff]
        %v5308 = vld [vmem:[#allocation8 + $0x434] sm:$0xf]
        %v5309 = vld [vmem:[#allocation8 + $0x438] sm:$0xff]
        %v5310 = vld [vmem:[#allocation8 + $0x440] sm:$0xf]
        %v5311 = vld [vmem:[#allocation8 + $0x444] sm:$0xff]
        %v5312 = vld [vmem:[#allocation8 + $0x44c] sm:$0xf]
        %v5313 = vld [vmem:[#allocation8 + $0x450] sm:$0xff]
        %v5314 = vld [vmem:[#allocation8 + $0x458] sm:$0xf]
        %v5315 = vld [vmem:[#allocation8 + $0x45c] sm:$0xff]
        %v5316 = vld [vmem:[#allocation8 + $0x464] sm:$0xf]
        %v5317 = vld [vmem:[#allocation8 + $0x468] sm:$0xff]
        %v5318 = vld [vmem:[#allocation8 + $0x470] sm:$0xf]
        %v5319 = vld [vmem:[#allocation8 + $0x474] sm:$0xff]
        %v5320 = vld [vmem:[#allocation8 + $0x47c] sm:$0xf]
        %v5321 = vld [vmem:[#allocation8 + $0x480] sm:$0xff]
        %v5322 = vld [vmem:[#allocation8 + $0x488] sm:$0xf]
        %v5323 = vld [vmem:[#allocation8 + $0x48c] sm:$0xff]
        %v5324 = vld [vmem:[#allocation8 + $0x494] sm:$0xf]
        %v5325 = vld [vmem:[#allocation8 + $0x498] sm:$0xff]
        %v5326 = vld [vmem:[#allocation8 + $0x4a0] sm:$0xf]
        %v5327 = vld [vmem:[#allocation8 + $0x4a4] sm:$0xff]
        %v5328 = vld [vmem:[#allocation8 + $0x4ac] sm:$0xf]
        %v5329 = vld [vmem:[#allocation8 + $0x4b0] sm:$0xff]
        %v5330 = vld [vmem:[#allocation8 + $0x4b8] sm:$0xf]
        %v5331 = vld [vmem:[#allocation8 + $0x4bc] sm:$0xff]
        %v5332 = vld [vmem:[#allocation8 + $0x4c4] sm:$0xf]
        %v5333 = vld [vmem:[#allocation8 + $0x4c8] sm:$0xff]
        %v5334 = vld [vmem:[#allocation8 + $0x4d0] sm:$0xf]
        %v5335 = vld [vmem:[#allocation8 + $0x4d4] sm:$0xff]
        %v5336 = vld [vmem:[#allocation8 + $0x4dc] sm:$0xf]
        %v5337 = vld [vmem:[#allocation8 + $0x4e0] sm:$0xff]
        %v5338 = vld [vmem:[#allocation8 + $0x4e8] sm:$0xf]
        %v5339 = vld [vmem:[#allocation8 + $0x4ec] sm:$0xff]
        %v5340 = vld [vmem:[#allocation8 + $0x4f4] sm:$0xf]
        %v5341 = vld [vmem:[#allocation8 + $0x4f8] sm:$0xff]
        %v5342 = vld [vmem:[#allocation8 + $0x500] sm:$0xf]
        %v5343 = vld [vmem:[#allocation8 + $0x504] sm:$0xff]
        %v5344 = vld [vmem:[#allocation8 + $0x50c] sm:$0xf]
        %v5345 = vld [vmem:[#allocation8 + $0x510] sm:$0xff]
        %v5346 = vld [vmem:[#allocation8 + $0x518] sm:$0xf]
        %v5347 = vld [vmem:[#allocation8 + $0x51c] sm:$0xff]
        %v5348 = vld [vmem:[#allocation8 + $0x524] sm:$0xf]
        %v5349 = vld [vmem:[#allocation8 + $0x528] sm:$0xff]
        %v5350 = vld [vmem:[#allocation8 + $0x530] sm:$0xf]
        %v5351 = vld [vmem:[#allocation8 + $0x534] sm:$0xff]
        %v5352 = vld [vmem:[#allocation8 + $0x53c] sm:$0xf]
        %v5353 = vld [vmem:[#allocation8 + $0x540] sm:$0xff]
        %v5354 = vld [vmem:[#allocation8 + $0x548] sm:$0xf]
        %v5355 = vld [vmem:[#allocation8 + $0x54c] sm:$0xff]
        %v5356 = vld [vmem:[#allocation8 + $0x554] sm:$0xf]
        %v5357 = vld [vmem:[#allocation8 + $0x558] sm:$0xff]
        %v5358 = vld [vmem:[#allocation8 + $0x560] sm:$0xf]
        %v5359 = vld [vmem:[#allocation8 + $0x564] sm:$0xff]
        %v5360 = vld [vmem:[#allocation8 + $0x56c] sm:$0xf]
        %v5361 = vld [vmem:[#allocation8 + $0x570] sm:$0xff]
        %v5362 = vld [vmem:[#allocation8 + $0x578] sm:$0xf]
        %v5363 = vld [vmem:[#allocation8 + $0x57c] sm:$0xff]
        %v5364 = vld [vmem:[#allocation8 + $0x584] sm:$0xf]
        %v5365 = vld [vmem:[#allocation8 + $0x588] sm:$0xff]
        %v5366 = vld [vmem:[#allocation8 + $0x590] sm:$0xf]
        %v5367 = vld [vmem:[#allocation8 + $0x594] sm:$0xff]
        %v5368 = vld [vmem:[#allocation8 + $0x59c] sm:$0xf]
        %v5369 = vld [vmem:[#allocation8 + $0x5a0] sm:$0xff]
        %v5370 = vld [vmem:[#allocation8 + $0x5a8] sm:$0xf]
        %v5371 = vld [vmem:[#allocation8 + $0x5ac] sm:$0xff]
        %v5372 = vld [vmem:[#allocation8 + $0x5b4] sm:$0xf]
        %v5373 = vld [vmem:[#allocation8 + $0x5b8] sm:$0xff]
        %v5374 = vld [vmem:[#allocation8 + $0x5c0] sm:$0xf]
        %v5375 = vld [vmem:[#allocation8 + $0x5c4] sm:$0xff]
        %v5376 = vld [vmem:[#allocation8 + $0x5cc] sm:$0xf]
        %v5377 = vld [vmem:[#allocation8 + $0x5d0] sm:$0xff]
        %v5378 = vld [vmem:[#allocation8 + $0x5d8] sm:$0xf]
        %v5379 = vld [vmem:[#allocation8 + $0x5dc] sm:$0xff]
        %v5380 = vld [vmem:[#allocation8 + $0x5e4] sm:$0xf]
        %v5381 = vld [vmem:[#allocation8 + $0x5e8] sm:$0xff]
        %v5382 = vld [vmem:[#allocation8 + $0x5f0] sm:$0xf]
        %v5383 = vld [vmem:[#allocation8 + $0x5f4] sm:$0xff]
        %v5384 = vld [vmem:[#allocation8 + $0x5fc] sm:$0xf]
        %v5385 = vld [vmem:[#allocation8 + $0x600] sm:$0xff]
        %v5386 = vld [vmem:[#allocation8 + $0x608] sm:$0xf]
        %v5387 = vld [vmem:[#allocation8 + $0x60c] sm:$0xff]
        %v5388 = vld [vmem:[#allocation8 + $0x614] sm:$0xf]
        %v5389 = vld [vmem:[#allocation8 + $0x618] sm:$0xff]
        %v5390 = vld [vmem:[#allocation8 + $0x620] sm:$0xf]
        %v5391 = vld [vmem:[#allocation8 + $0x624] sm:$0xff]
        %v5392 = vld [vmem:[#allocation8 + $0x62c] sm:$0xf]
        %v5393 = vld [vmem:[#allocation8 + $0x630] sm:$0xff]
        %v5394 = vld [vmem:[#allocation8 + $0x638] sm:$0xf]
        %v5395 = vld [vmem:[#allocation8 + $0x63c] sm:$0xff]
        %v5396 = vld [vmem:[#allocation8 + $0x644] sm:$0xf]
        %v5397 = vld [vmem:[#allocation8 + $0x648] sm:$0xff]
        %v5398 = vld [vmem:[#allocation8 + $0x650] sm:$0xf]
        %v5399 = vld [vmem:[#allocation8 + $0x654] sm:$0xff]
        %v5400 = vld [vmem:[#allocation8 + $0x65c] sm:$0xf]
        %v5401 = vld [vmem:[#allocation8 + $0x660] sm:$0xff]
        %v5402 = vld [vmem:[#allocation8 + $0x668] sm:$0xf]
        %v5403 = vld [vmem:[#allocation8 + $0x66c] sm:$0xff]
        %v5404 = vld [vmem:[#allocation8 + $0x674] sm:$0xf]
        %v5405 = vld [vmem:[#allocation8 + $0x678] sm:$0xff]
        %v5406 = vld [vmem:[#allocation8 + $0x680] sm:$0xf]
        %v5407 = vld [vmem:[#allocation8 + $0x684] sm:$0xff]
        %v5408 = vld [vmem:[#allocation8 + $0x68c] sm:$0xf]
        %v5409 = vld [vmem:[#allocation8 + $0x690] sm:$0xff]
        %v5410 = vld [vmem:[#allocation8 + $0x698] sm:$0xf]
        %v5411 = vld [vmem:[#allocation8 + $0x69c] sm:$0xff]
        %v5412 = vld [vmem:[#allocation8 + $0x6a4] sm:$0xf]
        %v5413 = vld [vmem:[#allocation8 + $0x6a8] sm:$0xff]
        %v5414 = vld [vmem:[#allocation8 + $0x6b0] sm:$0xf]
        %v5415 = vld [vmem:[#allocation8 + $0x6b4] sm:$0xff]
        %v5416 = vld [vmem:[#allocation8 + $0x6bc] sm:$0xf]
        %v5417 = vld [vmem:[#allocation8 + $0x6c0] sm:$0xff]
        %v5418 = vld [vmem:[#allocation8 + $0x6c8] sm:$0xf]
        %v5419 = vld [vmem:[#allocation8 + $0x6cc] sm:$0xff]
        %v5420 = vld [vmem:[#allocation8 + $0x6d4] sm:$0xf]
        %v5421 = vld [vmem:[#allocation8 + $0x6d8] sm:$0xff]
        %v5422 = vld [vmem:[#allocation8 + $0x6e0] sm:$0xf]
        %v5423 = vld [vmem:[#allocation8 + $0x6e4] sm:$0xff]
        %v5424 = vld [vmem:[#allocation8 + $0x6ec] sm:$0xf]
        %v5425 = vld [vmem:[#allocation8 + $0x6f0] sm:$0xff]
        %v5426 = vld [vmem:[#allocation8 + $0x6f8] sm:$0xf]
        %v5427 = vld [vmem:[#allocation8 + $0x6fc] sm:$0xff]
        %v5428 = vld [vmem:[#allocation8 + $0x704] sm:$0xf]
        %v5429 = vld [vmem:[#allocation8 + $0x708] sm:$0xff]
        %v5430 = vld [vmem:[#allocation8 + $0x710] sm:$0xf]
        %v5431 = vld [vmem:[#allocation8 + $0x714] sm:$0xff]
        %v5432 = vld [vmem:[#allocation8 + $0x71c] sm:$0xf]
        %v5433 = vld [vmem:[#allocation8 + $0x720] sm:$0xff]
        %v5434 = vld [vmem:[#allocation8 + $0x728] sm:$0xf]
        %v5435 = vld [vmem:[#allocation8 + $0x72c] sm:$0xff]
        %v5436 = vld [vmem:[#allocation8 + $0x734] sm:$0xf]
        %v5437 = vld [vmem:[#allocation8 + $0x738] sm:$0xff]
        %v5438 = vld [vmem:[#allocation8 + $0x740] sm:$0xf]
        %v5439 = vld [vmem:[#allocation8 + $0x744] sm:$0xff]
        %v5440 = vld [vmem:[#allocation8 + $0x74c] sm:$0xf]
        %v5441 = vld [vmem:[#allocation8 + $0x750] sm:$0xff]
        %v5442 = vld [vmem:[#allocation8 + $0x758] sm:$0xf]
        %v5443 = vld [vmem:[#allocation8 + $0x75c] sm:$0xff]
        %v5444 = vld [vmem:[#allocation8 + $0x764] sm:$0xf]
        %v5445 = vld [vmem:[#allocation8 + $0x768] sm:$0xff]
        %v5446 = vld [vmem:[#allocation8 + $0x770] sm:$0xf]
        %v5447 = vld [vmem:[#allocation8 + $0x774] sm:$0xff]
        %v5448 = vld [vmem:[#allocation8 + $0x77c] sm:$0xf]
        %v5449 = vld [vmem:[#allocation8 + $0x780] sm:$0xff]
        %v5450 = vld [vmem:[#allocation8 + $0x788] sm:$0xf]
        %v5451 = vld [vmem:[#allocation8 + $0x78c] sm:$0xff]
        %v5452 = vld [vmem:[#allocation8 + $0x794] sm:$0xf]
        %v5453 = vld [vmem:[#allocation8 + $0x798] sm:$0xff]
        %v5454 = vld [vmem:[#allocation8 + $0x7a0] sm:$0xf]
        %v5455 = vld [vmem:[#allocation8 + $0x7a4] sm:$0xff]
        %v5456 = vld [vmem:[#allocation8 + $0x7ac] sm:$0xf]
        %v5457 = vld [vmem:[#allocation8 + $0x7b0] sm:$0xff]
        %v5458 = vld [vmem:[#allocation8 + $0x7b8] sm:$0xf]
        %v5459 = vld [vmem:[#allocation8 + $0x7bc] sm:$0xff]
        %v5460 = vld [vmem:[#allocation8 + $0x7c4] sm:$0xf]
        %v5461 = vld [vmem:[#allocation8 + $0x7c8] sm:$0xff]
        %v5462 = vld [vmem:[#allocation8 + $0x7d0] sm:$0xf]
        %v5463 = vld [vmem:[#allocation8 + $0x7d4] sm:$0xff]
        %v5464 = vld [vmem:[#allocation8 + $0x7dc] sm:$0xf]
        %v5465 = vld [vmem:[#allocation8 + $0x7e0] sm:$0xff]
        %v5466 = vld [vmem:[#allocation8 + $0x7e8] sm:$0xf]
        %v5467 = vld [vmem:[#allocation8 + $0x7ec] sm:$0xff]
        %v5468 = vld [vmem:[#allocation8 + $0x7f4] sm:$0xf]
        %v5469 = vld [vmem:[#allocation8 + $0x7f8] sm:$0xff]
        %v5470 = vld [vmem:[#allocation8 + $0x800] sm:$0xf]
        %v5471 = vld [vmem:[#allocation8 + $0x804] sm:$0xff]
        %v5472 = vld [vmem:[#allocation8 + $0x80c] sm:$0xf]
        %v5473 = vld [vmem:[#allocation8 + $0x810] sm:$0xff]
        %v5474 = vld [vmem:[#allocation8 + $0x818] sm:$0xf]
        %v5475 = vld [vmem:[#allocation8 + $0x81c] sm:$0xff]
        %v5476 = vld [vmem:[#allocation8 + $0x824] sm:$0xf]
        %v5477 = vld [vmem:[#allocation8 + $0x828] sm:$0xff]
        %v5478 = vld [vmem:[#allocation8 + $0x830] sm:$0xf]
        %v5479 = vld [vmem:[#allocation8 + $0x834] sm:$0xff]
        %v5480 = vld [vmem:[#allocation8 + $0x83c] sm:$0xf]
        %v5481 = vld [vmem:[#allocation8 + $0x840] sm:$0xff]
        %v5482 = vld [vmem:[#allocation8 + $0x848] sm:$0xf]
        %v5483 = vld [vmem:[#allocation8 + $0x84c] sm:$0xff]
        %v5484 = vld [vmem:[#allocation8 + $0x854] sm:$0xf]
        %v5485 = vld [vmem:[#allocation8 + $0x858] sm:$0xff]
        %v5486 = vld [vmem:[#allocation8 + $0x860] sm:$0xf]
        %v5487 = vld [vmem:[#allocation8 + $0x864] sm:$0xff]
        %v5488 = vld [vmem:[#allocation8 + $0x86c] sm:$0xf]
        %v5489 = vld [vmem:[#allocation8 + $0x870] sm:$0xff]
        %v5490 = vld [vmem:[#allocation8 + $0x878] sm:$0xf]
        %v5491 = vld [vmem:[#allocation8 + $0x87c] sm:$0xff]
        %v5492 = vld [vmem:[#allocation8 + $0x884] sm:$0xf]
        %v5493 = vld [vmem:[#allocation8 + $0x888] sm:$0xff]
        %v5494 = vld [vmem:[#allocation8 + $0x890] sm:$0xf]
        %v5495 = vld [vmem:[#allocation8 + $0x894] sm:$0xff]
        %v5496 = vld [vmem:[#allocation8 + $0x89c] sm:$0xf]
        %v5497 = vld [vmem:[#allocation8 + $0x8a0] sm:$0xff]
        %v5498 = vld [vmem:[#allocation8 + $0x8a8] sm:$0xf]
        %v5499 = vld [vmem:[#allocation8 + $0x8ac] sm:$0xff]
        %v5500 = vld [vmem:[#allocation8 + $0x8b4] sm:$0xf]
        %v5501 = vld [vmem:[#allocation8 + $0x8b8] sm:$0xff]
        %v5502 = vld [vmem:[#allocation8 + $0x8c0] sm:$0xf]
        %v5503 = vld [vmem:[#allocation8 + $0x8c4] sm:$0xff]
        %v5504 = vld [vmem:[#allocation8 + $0x8cc] sm:$0xf]
        %v5505 = vld [vmem:[#allocation8 + $0x8d0] sm:$0xff]
        %v5506 = vld [vmem:[#allocation8 + $0x8d8] sm:$0xf]
        %v5507 = vld [vmem:[#allocation8 + $0x8dc] sm:$0xff]
        %v5508 = vld [vmem:[#allocation8 + $0x8e4] sm:$0xf]
        %v5509 = vld [vmem:[#allocation8 + $0x8e8] sm:$0xff]
        %v5510 = vld [vmem:[#allocation8 + $0x8f0] sm:$0xf]
        %v5511 = vld [vmem:[#allocation8 + $0x8f4] sm:$0xff]
        %v5512 = vld [vmem:[#allocation8 + $0x8fc] sm:$0xf]
        %v5513 = vld [vmem:[#allocation10] sm:$0x7]
        %v5515 = vlaneseq
        %v5516 = vshrl.u32 %v5515, 7
        %v5517 = vsub.s32 0, %v5516
        %v5518 = vrot.slane %v5513, %v5517
        %v5519 = vlaneseq
        %v5520 = vshrl.u32 %v5519, 7
        %v5521 = vsub.s32 1, %v5520
        %v5522 = vrot.slane %v5513, %v5521
        %v5523 = vlaneseq
        %v5524 = vshrl.u32 %v5523, 7
        %v5525 = vsub.s32 2, %v5524
        %v5526 = vrot.slane %v5513, %v5525
        %v5914 = vunpack.c.l.b16 %v5129
        %v5915 = vunpack.c.h.b16 %v5129
        %v5916 = vunpack.c.l.b16 %v5130
        %v5917 = vunpack.c.l.b16 %v5131
        %v5918 = vunpack.c.h.b16 %v5131
        %v5919 = vunpack.c.l.b16 %v5132
        %v5920 = vunpack.c.l.b16 %v5133
        %v5921 = vunpack.c.h.b16 %v5133
        %v5922 = vunpack.c.l.b16 %v5134
        %v5923 = vunpack.c.l.b16 %v5135
        %v5924 = vunpack.c.h.b16 %v5135
        %v5925 = vunpack.c.l.b16 %v5136
        %v5926 = vunpack.c.l.b16 %v5137
        %v5927 = vunpack.c.h.b16 %v5137
        %v5928 = vunpack.c.l.b16 %v5138
        %v5929 = vunpack.c.l.b16 %v5139
        %v5930 = vunpack.c.h.b16 %v5139
        %v5931 = vunpack.c.l.b16 %v5140
        %v5932 = vunpack.c.l.b16 %v5141
        %v5933 = vunpack.c.h.b16 %v5141
        %v5934 = vunpack.c.l.b16 %v5142
        %v5935 = vunpack.c.l.b16 %v5143
        %v5936 = vunpack.c.h.b16 %v5143
        %v5937 = vunpack.c.l.b16 %v5144
        %v5938 = vunpack.c.l.b16 %v5145
        %v5939 = vunpack.c.h.b16 %v5145
        %v5940 = vunpack.c.l.b16 %v5146
        %v5941 = vunpack.c.l.b16 %v5147
        %v5942 = vunpack.c.h.b16 %v5147
        %v5943 = vunpack.c.l.b16 %v5148
        %v5944 = vunpack.c.l.b16 %v5149
        %v5945 = vunpack.c.h.b16 %v5149
        %v5946 = vunpack.c.l.b16 %v5150
        %v5947 = vunpack.c.l.b16 %v5151
        %v5948 = vunpack.c.h.b16 %v5151
        %v5949 = vunpack.c.l.b16 %v5152
        %v5950 = vunpack.c.l.b16 %v5153
        %v5951 = vunpack.c.h.b16 %v5153
        %v5952 = vunpack.c.l.b16 %v5154
        %v5953 = vunpack.c.l.b16 %v5155
        %v5954 = vunpack.c.h.b16 %v5155
        %v5955 = vunpack.c.l.b16 %v5156
        %v5956 = vunpack.c.l.b16 %v5157
        %v5957 = vunpack.c.h.b16 %v5157
        %v5958 = vunpack.c.l.b16 %v5158
        %v5959 = vunpack.c.l.b16 %v5159
        %v5960 = vunpack.c.h.b16 %v5159
        %v5961 = vunpack.c.l.b16 %v5160
        %v5962 = vunpack.c.l.b16 %v5161
        %v5963 = vunpack.c.h.b16 %v5161
        %v5964 = vunpack.c.l.b16 %v5162
        %v5965 = vunpack.c.l.b16 %v5163
        %v5966 = vunpack.c.h.b16 %v5163
        %v5967 = vunpack.c.l.b16 %v5164
        %v5968 = vunpack.c.l.b16 %v5165
        %v5969 = vunpack.c.h.b16 %v5165
        %v5970 = vunpack.c.l.b16 %v5166
        %v5971 = vunpack.c.l.b16 %v5167
        %v5972 = vunpack.c.h.b16 %v5167
        %v5973 = vunpack.c.l.b16 %v5168
        %v5974 = vunpack.c.l.b16 %v5169
        %v5975 = vunpack.c.h.b16 %v5169
        %v5976 = vunpack.c.l.b16 %v5170
        %v5977 = vunpack.c.l.b16 %v5171
        %v5978 = vunpack.c.h.b16 %v5171
        %v5979 = vunpack.c.l.b16 %v5172
        %v5980 = vunpack.c.l.b16 %v5173
        %v5981 = vunpack.c.h.b16 %v5173
        %v5982 = vunpack.c.l.b16 %v5174
        %v5983 = vunpack.c.l.b16 %v5175
        %v5984 = vunpack.c.h.b16 %v5175
        %v5985 = vunpack.c.l.b16 %v5176
        %v5986 = vunpack.c.l.b16 %v5177
        %v5987 = vunpack.c.h.b16 %v5177
        %v5988 = vunpack.c.l.b16 %v5178
        %v5989 = vunpack.c.l.b16 %v5179
        %v5990 = vunpack.c.h.b16 %v5179
        %v5991 = vunpack.c.l.b16 %v5180
        %v5992 = vunpack.c.l.b16 %v5181
        %v5993 = vunpack.c.h.b16 %v5181
        %v5994 = vunpack.c.l.b16 %v5182
        %v5995 = vunpack.c.l.b16 %v5183
        %v5996 = vunpack.c.h.b16 %v5183
        %v5997 = vunpack.c.l.b16 %v5184
        %v5998 = vunpack.c.l.b16 %v5185
        %v5999 = vunpack.c.h.b16 %v5185
        %v6000 = vunpack.c.l.b16 %v5186
        %v6001 = vunpack.c.l.b16 %v5187
        %v6002 = vunpack.c.h.b16 %v5187
        %v6003 = vunpack.c.l.b16 %v5188
        %v6004 = vunpack.c.l.b16 %v5189
        %v6005 = vunpack.c.h.b16 %v5189
        %v6006 = vunpack.c.l.b16 %v5190
        %v6007 = vunpack.c.l.b16 %v5191
        %v6008 = vunpack.c.h.b16 %v5191
        %v6009 = vunpack.c.l.b16 %v5192
        %v6010 = vunpack.c.l.b16 %v5193
        %v6011 = vunpack.c.h.b16 %v5193
        %v6012 = vunpack.c.l.b16 %v5194
        %v6013 = vunpack.c.l.b16 %v5195
        %v6014 = vunpack.c.h.b16 %v5195
        %v6015 = vunpack.c.l.b16 %v5196
        %v6016 = vunpack.c.l.b16 %v5197
        %v6017 = vunpack.c.h.b16 %v5197
        %v6018 = vunpack.c.l.b16 %v5198
        %v6019 = vunpack.c.l.b16 %v5199
        %v6020 = vunpack.c.h.b16 %v5199
        %v6021 = vunpack.c.l.b16 %v5200
        %v6022 = vunpack.c.l.b16 %v5201
        %v6023 = vunpack.c.h.b16 %v5201
        %v6024 = vunpack.c.l.b16 %v5202
        %v6025 = vunpack.c.l.b16 %v5203
        %v6026 = vunpack.c.h.b16 %v5203
        %v6027 = vunpack.c.l.b16 %v5204
        %v6028 = vunpack.c.l.b16 %v5205
        %v6029 = vunpack.c.h.b16 %v5205
        %v6030 = vunpack.c.l.b16 %v5206
        %v6031 = vunpack.c.l.b16 %v5207
        %v6032 = vunpack.c.h.b16 %v5207
        %v6033 = vunpack.c.l.b16 %v5208
        %v6034 = vunpack.c.l.b16 %v5209
        %v6035 = vunpack.c.h.b16 %v5209
        %v6036 = vunpack.c.l.b16 %v5210
        %v6037 = vunpack.c.l.b16 %v5211
        %v6038 = vunpack.c.h.b16 %v5211
        %v6039 = vunpack.c.l.b16 %v5212
        %v6040 = vunpack.c.l.b16 %v5213
        %v6041 = vunpack.c.h.b16 %v5213
        %v6042 = vunpack.c.l.b16 %v5214
        %v6043 = vunpack.c.l.b16 %v5215
        %v6044 = vunpack.c.h.b16 %v5215
        %v6045 = vunpack.c.l.b16 %v5216
        %v6046 = vunpack.c.l.b16 %v5217
        %v6047 = vunpack.c.h.b16 %v5217
        %v6048 = vunpack.c.l.b16 %v5218
        %v6049 = vunpack.c.l.b16 %v5219
        %v6050 = vunpack.c.h.b16 %v5219
        %v6051 = vunpack.c.l.b16 %v5220
        %v6052 = vunpack.c.l.b16 %v5221
        %v6053 = vunpack.c.h.b16 %v5221
        %v6054 = vunpack.c.l.b16 %v5222
        %v6055 = vunpack.c.l.b16 %v5223
        %v6056 = vunpack.c.h.b16 %v5223
        %v6057 = vunpack.c.l.b16 %v5224
        %v6058 = vunpack.c.l.b16 %v5225
        %v6059 = vunpack.c.h.b16 %v5225
        %v6060 = vunpack.c.l.b16 %v5226
        %v6061 = vunpack.c.l.b16 %v5227
        %v6062 = vunpack.c.h.b16 %v5227
        %v6063 = vunpack.c.l.b16 %v5228
        %v6064 = vunpack.c.l.b16 %v5229
        %v6065 = vunpack.c.h.b16 %v5229
        %v6066 = vunpack.c.l.b16 %v5230
        %v6067 = vunpack.c.l.b16 %v5231
        %v6068 = vunpack.c.h.b16 %v5231
        %v6069 = vunpack.c.l.b16 %v5232
        %v6070 = vunpack.c.l.b16 %v5233
        %v6071 = vunpack.c.h.b16 %v5233
        %v6072 = vunpack.c.l.b16 %v5234
        %v6073 = vunpack.c.l.b16 %v5235
        %v6074 = vunpack.c.h.b16 %v5235
        %v6075 = vunpack.c.l.b16 %v5236
        %v6076 = vunpack.c.l.b16 %v5237
        %v6077 = vunpack.c.h.b16 %v5237
        %v6078 = vunpack.c.l.b16 %v5238
        %v6079 = vunpack.c.l.b16 %v5239
        %v6080 = vunpack.c.h.b16 %v5239
        %v6081 = vunpack.c.l.b16 %v5240
        %v6082 = vunpack.c.l.b16 %v5241
        %v6083 = vunpack.c.h.b16 %v5241
        %v6084 = vunpack.c.l.b16 %v5242
        %v6085 = vunpack.c.l.b16 %v5243
        %v6086 = vunpack.c.h.b16 %v5243
        %v6087 = vunpack.c.l.b16 %v5244
        %v6088 = vunpack.c.l.b16 %v5245
        %v6089 = vunpack.c.h.b16 %v5245
        %v6090 = vunpack.c.l.b16 %v5246
        %v6091 = vunpack.c.l.b16 %v5247
        %v6092 = vunpack.c.h.b16 %v5247
        %v6093 = vunpack.c.l.b16 %v5248
        %v6094 = vunpack.c.l.b16 %v5249
        %v6095 = vunpack.c.h.b16 %v5249
        %v6096 = vunpack.c.l.b16 %v5250
        %v6097 = vunpack.c.l.b16 %v5251
        %v6098 = vunpack.c.h.b16 %v5251
        %v6099 = vunpack.c.l.b16 %v5252
        %v6100 = vunpack.c.l.b16 %v5253
        %v6101 = vunpack.c.h.b16 %v5253
        %v6102 = vunpack.c.l.b16 %v5254
        %v6103 = vunpack.c.l.b16 %v5255
        %v6104 = vunpack.c.h.b16 %v5255
        %v6105 = vunpack.c.l.b16 %v5256
        %v6106 = vunpack.c.l.b16 %v5257
        %v6107 = vunpack.c.h.b16 %v5257
        %v6108 = vunpack.c.l.b16 %v5258
        %v6109 = vunpack.c.l.b16 %v5259
        %v6110 = vunpack.c.h.b16 %v5259
        %v6111 = vunpack.c.l.b16 %v5260
        %v6112 = vunpack.c.l.b16 %v5261
        %v6113 = vunpack.c.h.b16 %v5261
        %v6114 = vunpack.c.l.b16 %v5262
        %v6115 = vunpack.c.l.b16 %v5263
        %v6116 = vunpack.c.h.b16 %v5263
        %v6117 = vunpack.c.l.b16 %v5264
        %v6118 = vunpack.c.l.b16 %v5265
        %v6119 = vunpack.c.h.b16 %v5265
        %v6120 = vunpack.c.l.b16 %v5266
        %v6121 = vunpack.c.l.b16 %v5267
        %v6122 = vunpack.c.h.b16 %v5267
        %v6123 = vunpack.c.l.b16 %v5268
        %v6124 = vunpack.c.l.b16 %v5269
        %v6125 = vunpack.c.h.b16 %v5269
        %v6126 = vunpack.c.l.b16 %v5270
        %v6127 = vunpack.c.l.b16 %v5271
        %v6128 = vunpack.c.h.b16 %v5271
        %v6129 = vunpack.c.l.b16 %v5272
        %v6130 = vunpack.c.l.b16 %v5273
        %v6131 = vunpack.c.h.b16 %v5273
        %v6132 = vunpack.c.l.b16 %v5274
        %v6133 = vunpack.c.l.b16 %v5275
        %v6134 = vunpack.c.h.b16 %v5275
        %v6135 = vunpack.c.l.b16 %v5276
        %v6136 = vunpack.c.l.b16 %v5277
        %v6137 = vunpack.c.h.b16 %v5277
        %v6138 = vunpack.c.l.b16 %v5278
        %v6139 = vunpack.c.l.b16 %v5279
        %v6140 = vunpack.c.h.b16 %v5279
        %v6141 = vunpack.c.l.b16 %v5280
        %v6142 = vunpack.c.l.b16 %v5281
        %v6143 = vunpack.c.h.b16 %v5281
        %v6144 = vunpack.c.l.b16 %v5282
        %v6145 = vunpack.c.l.b16 %v5283
        %v6146 = vunpack.c.h.b16 %v5283
        %v6147 = vunpack.c.l.b16 %v5284
        %v6148 = vunpack.c.l.b16 %v5285
        %v6149 = vunpack.c.h.b16 %v5285
        %v6150 = vunpack.c.l.b16 %v5286
        %v6151 = vunpack.c.l.b16 %v5287
        %v6152 = vunpack.c.h.b16 %v5287
        %v6153 = vunpack.c.l.b16 %v5288
        %v6154 = vunpack.c.l.b16 %v5289
        %v6155 = vunpack.c.h.b16 %v5289
        %v6156 = vunpack.c.l.b16 %v5290
        %v6157 = vunpack.c.l.b16 %v5291
        %v6158 = vunpack.c.h.b16 %v5291
        %v6159 = vunpack.c.l.b16 %v5292
        %v6160 = vunpack.c.l.b16 %v5293
        %v6161 = vunpack.c.h.b16 %v5293
        %v6162 = vunpack.c.l.b16 %v5294
        %v6163 = vunpack.c.l.b16 %v5295
        %v6164 = vunpack.c.h.b16 %v5295
        %v6165 = vunpack.c.l.b16 %v5296
        %v6166 = vunpack.c.l.b16 %v5297
        %v6167 = vunpack.c.h.b16 %v5297
        %v6168 = vunpack.c.l.b16 %v5298
        %v6169 = vunpack.c.l.b16 %v5299
        %v6170 = vunpack.c.h.b16 %v5299
        %v6171 = vunpack.c.l.b16 %v5300
        %v6172 = vunpack.c.l.b16 %v5301
        %v6173 = vunpack.c.h.b16 %v5301
        %v6174 = vunpack.c.l.b16 %v5302
        %v6175 = vunpack.c.l.b16 %v5303
        %v6176 = vunpack.c.h.b16 %v5303
        %v6177 = vunpack.c.l.b16 %v5304
        %v6178 = vunpack.c.l.b16 %v5305
        %v6179 = vunpack.c.h.b16 %v5305
        %v6180 = vunpack.c.l.b16 %v5306
        %v6181 = vunpack.c.l.b16 %v5307
        %v6182 = vunpack.c.h.b16 %v5307
        %v6183 = vunpack.c.l.b16 %v5308
        %v6184 = vunpack.c.l.b16 %v5309
        %v6185 = vunpack.c.h.b16 %v5309
        %v6186 = vunpack.c.l.b16 %v5310
        %v6187 = vunpack.c.l.b16 %v5311
        %v6188 = vunpack.c.h.b16 %v5311
        %v6189 = vunpack.c.l.b16 %v5312
        %v6190 = vunpack.c.l.b16 %v5313
        %v6191 = vunpack.c.h.b16 %v5313
        %v6192 = vunpack.c.l.b16 %v5314
        %v6193 = vunpack.c.l.b16 %v5315
        %v6194 = vunpack.c.h.b16 %v5315
        %v6195 = vunpack.c.l.b16 %v5316
        %v6196 = vunpack.c.l.b16 %v5317
        %v6197 = vunpack.c.h.b16 %v5317
        %v6198 = vunpack.c.l.b16 %v5318
        %v6199 = vunpack.c.l.b16 %v5319
        %v6200 = vunpack.c.h.b16 %v5319
        %v6201 = vunpack.c.l.b16 %v5320
        %v6202 = vunpack.c.l.b16 %v5321
        %v6203 = vunpack.c.h.b16 %v5321
        %v6204 = vunpack.c.l.b16 %v5322
        %v6205 = vunpack.c.l.b16 %v5323
        %v6206 = vunpack.c.h.b16 %v5323
        %v6207 = vunpack.c.l.b16 %v5324
        %v6208 = vunpack.c.l.b16 %v5325
        %v6209 = vunpack.c.h.b16 %v5325
        %v6210 = vunpack.c.l.b16 %v5326
        %v6211 = vunpack.c.l.b16 %v5327
        %v6212 = vunpack.c.h.b16 %v5327
        %v6213 = vunpack.c.l.b16 %v5328
        %v6214 = vunpack.c.l.b16 %v5329
        %v6215 = vunpack.c.h.b16 %v5329
        %v6216 = vunpack.c.l.b16 %v5330
        %v6217 = vunpack.c.l.b16 %v5331
        %v6218 = vunpack.c.h.b16 %v5331
        %v6219 = vunpack.c.l.b16 %v5332
        %v6220 = vunpack.c.l.b16 %v5333
        %v6221 = vunpack.c.h.b16 %v5333
        %v6222 = vunpack.c.l.b16 %v5334
        %v6223 = vunpack.c.l.b16 %v5335
        %v6224 = vunpack.c.h.b16 %v5335
        %v6225 = vunpack.c.l.b16 %v5336
        %v6226 = vunpack.c.l.b16 %v5337
        %v6227 = vunpack.c.h.b16 %v5337
        %v6228 = vunpack.c.l.b16 %v5338
        %v6229 = vunpack.c.l.b16 %v5339
        %v6230 = vunpack.c.h.b16 %v5339
        %v6231 = vunpack.c.l.b16 %v5340
        %v6232 = vunpack.c.l.b16 %v5341
        %v6233 = vunpack.c.h.b16 %v5341
        %v6234 = vunpack.c.l.b16 %v5342
        %v6235 = vunpack.c.l.b16 %v5343
        %v6236 = vunpack.c.h.b16 %v5343
        %v6237 = vunpack.c.l.b16 %v5344
        %v6238 = vunpack.c.l.b16 %v5345
        %v6239 = vunpack.c.h.b16 %v5345
        %v6240 = vunpack.c.l.b16 %v5346
        %v6241 = vunpack.c.l.b16 %v5347
        %v6242 = vunpack.c.h.b16 %v5347
        %v6243 = vunpack.c.l.b16 %v5348
        %v6244 = vunpack.c.l.b16 %v5349
        %v6245 = vunpack.c.h.b16 %v5349
        %v6246 = vunpack.c.l.b16 %v5350
        %v6247 = vunpack.c.l.b16 %v5351
        %v6248 = vunpack.c.h.b16 %v5351
        %v6249 = vunpack.c.l.b16 %v5352
        %v6250 = vunpack.c.l.b16 %v5353
        %v6251 = vunpack.c.h.b16 %v5353
        %v6252 = vunpack.c.l.b16 %v5354
        %v6253 = vunpack.c.l.b16 %v5355
        %v6254 = vunpack.c.h.b16 %v5355
        %v6255 = vunpack.c.l.b16 %v5356
        %v6256 = vunpack.c.l.b16 %v5357
        %v6257 = vunpack.c.h.b16 %v5357
        %v6258 = vunpack.c.l.b16 %v5358
        %v6259 = vunpack.c.l.b16 %v5359
        %v6260 = vunpack.c.h.b16 %v5359
        %v6261 = vunpack.c.l.b16 %v5360
        %v6262 = vunpack.c.l.b16 %v5361
        %v6263 = vunpack.c.h.b16 %v5361
        %v6264 = vunpack.c.l.b16 %v5362
        %v6265 = vunpack.c.l.b16 %v5363
        %v6266 = vunpack.c.h.b16 %v5363
        %v6267 = vunpack.c.l.b16 %v5364
        %v6268 = vunpack.c.l.b16 %v5365
        %v6269 = vunpack.c.h.b16 %v5365
        %v6270 = vunpack.c.l.b16 %v5366
        %v6271 = vunpack.c.l.b16 %v5367
        %v6272 = vunpack.c.h.b16 %v5367
        %v6273 = vunpack.c.l.b16 %v5368
        %v6274 = vunpack.c.l.b16 %v5369
        %v6275 = vunpack.c.h.b16 %v5369
        %v6276 = vunpack.c.l.b16 %v5370
        %v6277 = vunpack.c.l.b16 %v5371
        %v6278 = vunpack.c.h.b16 %v5371
        %v6279 = vunpack.c.l.b16 %v5372
        %v6280 = vunpack.c.l.b16 %v5373
        %v6281 = vunpack.c.h.b16 %v5373
        %v6282 = vunpack.c.l.b16 %v5374
        %v6283 = vunpack.c.l.b16 %v5375
        %v6284 = vunpack.c.h.b16 %v5375
        %v6285 = vunpack.c.l.b16 %v5376
        %v6286 = vunpack.c.l.b16 %v5377
        %v6287 = vunpack.c.h.b16 %v5377
        %v6288 = vunpack.c.l.b16 %v5378
        %v6289 = vunpack.c.l.b16 %v5379
        %v6290 = vunpack.c.h.b16 %v5379
        %v6291 = vunpack.c.l.b16 %v5380
        %v6292 = vunpack.c.l.b16 %v5381
        %v6293 = vunpack.c.h.b16 %v5381
        %v6294 = vunpack.c.l.b16 %v5382
        %v6295 = vunpack.c.l.b16 %v5383
        %v6296 = vunpack.c.h.b16 %v5383
        %v6297 = vunpack.c.l.b16 %v5384
        %v6298 = vunpack.c.l.b16 %v5385
        %v6299 = vunpack.c.h.b16 %v5385
        %v6300 = vunpack.c.l.b16 %v5386
        %v6301 = vunpack.c.l.b16 %v5387
        %v6302 = vunpack.c.h.b16 %v5387
        %v6303 = vunpack.c.l.b16 %v5388
        %v6304 = vunpack.c.l.b16 %v5389
        %v6305 = vunpack.c.h.b16 %v5389
        %v6306 = vunpack.c.l.b16 %v5390
        %v6307 = vunpack.c.l.b16 %v5391
        %v6308 = vunpack.c.h.b16 %v5391
        %v6309 = vunpack.c.l.b16 %v5392
        %v6310 = vunpack.c.l.b16 %v5393
        %v6311 = vunpack.c.h.b16 %v5393
        %v6312 = vunpack.c.l.b16 %v5394
        %v6313 = vunpack.c.l.b16 %v5395
        %v6314 = vunpack.c.h.b16 %v5395
        %v6315 = vunpack.c.l.b16 %v5396
        %v6316 = vunpack.c.l.b16 %v5397
        %v6317 = vunpack.c.h.b16 %v5397
        %v6318 = vunpack.c.l.b16 %v5398
        %v6319 = vunpack.c.l.b16 %v5399
        %v6320 = vunpack.c.h.b16 %v5399
        %v6321 = vunpack.c.l.b16 %v5400
        %v6322 = vunpack.c.l.b16 %v5401
        %v6323 = vunpack.c.h.b16 %v5401
        %v6324 = vunpack.c.l.b16 %v5402
        %v6325 = vunpack.c.l.b16 %v5403
        %v6326 = vunpack.c.h.b16 %v5403
        %v6327 = vunpack.c.l.b16 %v5404
        %v6328 = vunpack.c.l.b16 %v5405
        %v6329 = vunpack.c.h.b16 %v5405
        %v6330 = vunpack.c.l.b16 %v5406
        %v6331 = vunpack.c.l.b16 %v5407
        %v6332 = vunpack.c.h.b16 %v5407
        %v6333 = vunpack.c.l.b16 %v5408
        %v6334 = vunpack.c.l.b16 %v5409
        %v6335 = vunpack.c.h.b16 %v5409
        %v6336 = vunpack.c.l.b16 %v5410
        %v6337 = vunpack.c.l.b16 %v5411
        %v6338 = vunpack.c.h.b16 %v5411
        %v6339 = vunpack.c.l.b16 %v5412
        %v6340 = vunpack.c.l.b16 %v5413
        %v6341 = vunpack.c.h.b16 %v5413
        %v6342 = vunpack.c.l.b16 %v5414
        %v6343 = vunpack.c.l.b16 %v5415
        %v6344 = vunpack.c.h.b16 %v5415
        %v6345 = vunpack.c.l.b16 %v5416
        %v6346 = vunpack.c.l.b16 %v5417
        %v6347 = vunpack.c.h.b16 %v5417
        %v6348 = vunpack.c.l.b16 %v5418
        %v6349 = vunpack.c.l.b16 %v5419
        %v6350 = vunpack.c.h.b16 %v5419
        %v6351 = vunpack.c.l.b16 %v5420
        %v6352 = vunpack.c.l.b16 %v5421
        %v6353 = vunpack.c.h.b16 %v5421
        %v6354 = vunpack.c.l.b16 %v5422
        %v6355 = vunpack.c.l.b16 %v5423
        %v6356 = vunpack.c.h.b16 %v5423
        %v6357 = vunpack.c.l.b16 %v5424
        %v6358 = vunpack.c.l.b16 %v5425
        %v6359 = vunpack.c.h.b16 %v5425
        %v6360 = vunpack.c.l.b16 %v5426
        %v6361 = vunpack.c.l.b16 %v5427
        %v6362 = vunpack.c.h.b16 %v5427
        %v6363 = vunpack.c.l.b16 %v5428
        %v6364 = vunpack.c.l.b16 %v5429
        %v6365 = vunpack.c.h.b16 %v5429
        %v6366 = vunpack.c.l.b16 %v5430
        %v6367 = vunpack.c.l.b16 %v5431
        %v6368 = vunpack.c.h.b16 %v5431
        %v6369 = vunpack.c.l.b16 %v5432
        %v6370 = vunpack.c.l.b16 %v5433
        %v6371 = vunpack.c.h.b16 %v5433
        %v6372 = vunpack.c.l.b16 %v5434
        %v6373 = vunpack.c.l.b16 %v5435
        %v6374 = vunpack.c.h.b16 %v5435
        %v6375 = vunpack.c.l.b16 %v5436
        %v6376 = vunpack.c.l.b16 %v5437
        %v6377 = vunpack.c.h.b16 %v5437
        %v6378 = vunpack.c.l.b16 %v5438
        %v6379 = vunpack.c.l.b16 %v5439
        %v6380 = vunpack.c.h.b16 %v5439
        %v6381 = vunpack.c.l.b16 %v5440
        %v6382 = vunpack.c.l.b16 %v5441
        %v6383 = vunpack.c.h.b16 %v5441
        %v6384 = vunpack.c.l.b16 %v5442
        %v6385 = vunpack.c.l.b16 %v5443
        %v6386 = vunpack.c.h.b16 %v5443
        %v6387 = vunpack.c.l.b16 %v5444
        %v6388 = vunpack.c.l.b16 %v5445
        %v6389 = vunpack.c.h.b16 %v5445
        %v6390 = vunpack.c.l.b16 %v5446
        %v6391 = vunpack.c.l.b16 %v5447
        %v6392 = vunpack.c.h.b16 %v5447
        %v6393 = vunpack.c.l.b16 %v5448
        %v6394 = vunpack.c.l.b16 %v5449
        %v6395 = vunpack.c.h.b16 %v5449
        %v6396 = vunpack.c.l.b16 %v5450
        %v6397 = vunpack.c.l.b16 %v5451
        %v6398 = vunpack.c.h.b16 %v5451
        %v6399 = vunpack.c.l.b16 %v5452
        %v6400 = vunpack.c.l.b16 %v5453
        %v6401 = vunpack.c.h.b16 %v5453
        %v6402 = vunpack.c.l.b16 %v5454
        %v6403 = vunpack.c.l.b16 %v5455
        %v6404 = vunpack.c.h.b16 %v5455
        %v6405 = vunpack.c.l.b16 %v5456
        %v6406 = vunpack.c.l.b16 %v5457
        %v6407 = vunpack.c.h.b16 %v5457
        %v6408 = vunpack.c.l.b16 %v5458
        %v6409 = vunpack.c.l.b16 %v5459
        %v6410 = vunpack.c.h.b16 %v5459
        %v6411 = vunpack.c.l.b16 %v5460
        %v6412 = vunpack.c.l.b16 %v5461
        %v6413 = vunpack.c.h.b16 %v5461
        %v6414 = vunpack.c.l.b16 %v5462
        %v6415 = vunpack.c.l.b16 %v5463
        %v6416 = vunpack.c.h.b16 %v5463
        %v6417 = vunpack.c.l.b16 %v5464
        %v6418 = vunpack.c.l.b16 %v5465
        %v6419 = vunpack.c.h.b16 %v5465
        %v6420 = vunpack.c.l.b16 %v5466
        %v6421 = vunpack.c.l.b16 %v5467
        %v6422 = vunpack.c.h.b16 %v5467
        %v6423 = vunpack.c.l.b16 %v5468
        %v6424 = vunpack.c.l.b16 %v5469
        %v6425 = vunpack.c.h.b16 %v5469
        %v6426 = vunpack.c.l.b16 %v5470
        %v6427 = vunpack.c.l.b16 %v5471
        %v6428 = vunpack.c.h.b16 %v5471
        %v6429 = vunpack.c.l.b16 %v5472
        %v6430 = vunpack.c.l.b16 %v5473
        %v6431 = vunpack.c.h.b16 %v5473
        %v6432 = vunpack.c.l.b16 %v5474
        %v6433 = vunpack.c.l.b16 %v5475
        %v6434 = vunpack.c.h.b16 %v5475
        %v6435 = vunpack.c.l.b16 %v5476
        %v6436 = vunpack.c.l.b16 %v5477
        %v6437 = vunpack.c.h.b16 %v5477
        %v6438 = vunpack.c.l.b16 %v5478
        %v6439 = vunpack.c.l.b16 %v5479
        %v6440 = vunpack.c.h.b16 %v5479
        %v6441 = vunpack.c.l.b16 %v5480
        %v6442 = vunpack.c.l.b16 %v5481
        %v6443 = vunpack.c.h.b16 %v5481
        %v6444 = vunpack.c.l.b16 %v5482
        %v6445 = vunpack.c.l.b16 %v5483
        %v6446 = vunpack.c.h.b16 %v5483
        %v6447 = vunpack.c.l.b16 %v5484
        %v6448 = vunpack.c.l.b16 %v5485
        %v6449 = vunpack.c.h.b16 %v5485
        %v6450 = vunpack.c.l.b16 %v5486
        %v6451 = vunpack.c.l.b16 %v5487
        %v6452 = vunpack.c.h.b16 %v5487
        %v6453 = vunpack.c.l.b16 %v5488
        %v6454 = vunpack.c.l.b16 %v5489
        %v6455 = vunpack.c.h.b16 %v5489
        %v6456 = vunpack.c.l.b16 %v5490
        %v6457 = vunpack.c.l.b16 %v5491
        %v6458 = vunpack.c.h.b16 %v5491
        %v6459 = vunpack.c.l.b16 %v5492
        %v6460 = vunpack.c.l.b16 %v5493
        %v6461 = vunpack.c.h.b16 %v5493
        %v6462 = vunpack.c.l.b16 %v5494
        %v6463 = vunpack.c.l.b16 %v5495
        %v6464 = vunpack.c.h.b16 %v5495
        %v6465 = vunpack.c.l.b16 %v5496
        %v6466 = vunpack.c.l.b16 %v5497
        %v6467 = vunpack.c.h.b16 %v5497
        %v6468 = vunpack.c.l.b16 %v5498
        %v6469 = vunpack.c.l.b16 %v5499
        %v6470 = vunpack.c.h.b16 %v5499
        %v6471 = vunpack.c.l.b16 %v5500
        %v6472 = vunpack.c.l.b16 %v5501
        %v6473 = vunpack.c.h.b16 %v5501
        %v6474 = vunpack.c.l.b16 %v5502
        %v6475 = vunpack.c.l.b16 %v5503
        %v6476 = vunpack.c.h.b16 %v5503
        %v6477 = vunpack.c.l.b16 %v5504
        %v6478 = vunpack.c.l.b16 %v5505
        %v6479 = vunpack.c.h.b16 %v5505
        %v6480 = vunpack.c.l.b16 %v5506
        %v6481 = vunpack.c.l.b16 %v5507
        %v6482 = vunpack.c.h.b16 %v5507
        %v6483 = vunpack.c.l.b16 %v5508
        %v6484 = vunpack.c.l.b16 %v5509
        %v6485 = vunpack.c.h.b16 %v5509
        %v6486 = vunpack.c.l.b16 %v5510
        %v6487 = vunpack.c.l.b16 %v5511
        %v6488 = vunpack.c.h.b16 %v5511
        %v6489 = vunpack.c.l.b16 %v5512
        %v6490 = vpack.c.b16 %v5917, %v5914
        %v6491 = vpack.c.b16 %v5918, %v5915
        %v6492 = vpack.c.b16 %v5919, %v5916
        %v6493 = vpack.c.b16 %v5923, %v5920
        %v6494 = vpack.c.b16 %v5924, %v5921
        %v6495 = vpack.c.b16 %v5925, %v5922
        %v6496 = vpack.c.b16 %v5929, %v5926
        %v6497 = vpack.c.b16 %v5930, %v5927
        %v6498 = vpack.c.b16 %v5931, %v5928
        %v6499 = vpack.c.b16 %v5935, %v5932
        %v6500 = vpack.c.b16 %v5936, %v5933
        %v6501 = vpack.c.b16 %v5937, %v5934
        %v6502 = vpack.c.b16 %v5941, %v5938
        %v6503 = vpack.c.b16 %v5942, %v5939
        %v6504 = vpack.c.b16 %v5943, %v5940
        %v6505 = vpack.c.b16 %v5947, %v5944
        %v6506 = vpack.c.b16 %v5948, %v5945
        %v6507 = vpack.c.b16 %v5949, %v5946
        %v6508 = vpack.c.b16 %v5953, %v5950
        %v6509 = vpack.c.b16 %v5954, %v5951
        %v6510 = vpack.c.b16 %v5955, %v5952
        %v6511 = vpack.c.b16 %v5959, %v5956
        %v6512 = vpack.c.b16 %v5960, %v5957
        %v6513 = vpack.c.b16 %v5961, %v5958
        %v6514 = vpack.c.b16 %v5965, %v5962
        %v6515 = vpack.c.b16 %v5966, %v5963
        %v6516 = vpack.c.b16 %v5967, %v5964
        %v6517 = vpack.c.b16 %v5971, %v5968
        %v6518 = vpack.c.b16 %v5972, %v5969
        %v6519 = vpack.c.b16 %v5973, %v5970
        %v6520 = vpack.c.b16 %v5977, %v5974
        %v6521 = vpack.c.b16 %v5978, %v5975
        %v6522 = vpack.c.b16 %v5979, %v5976
        %v6523 = vpack.c.b16 %v5983, %v5980
        %v6524 = vpack.c.b16 %v5984, %v5981
        %v6525 = vpack.c.b16 %v5985, %v5982
        %v6526 = vpack.c.b16 %v5989, %v5986
        %v6527 = vpack.c.b16 %v5990, %v5987
        %v6528 = vpack.c.b16 %v5991, %v5988
        %v6529 = vpack.c.b16 %v5995, %v5992
        %v6530 = vpack.c.b16 %v5996, %v5993
        %v6531 = vpack.c.b16 %v5997, %v5994
        %v6532 = vpack.c.b16 %v6001, %v5998
        %v6533 = vpack.c.b16 %v6002, %v5999
        %v6534 = vpack.c.b16 %v6003, %v6000
        %v6535 = vpack.c.b16 %v6007, %v6004
        %v6536 = vpack.c.b16 %v6008, %v6005
        %v6537 = vpack.c.b16 %v6009, %v6006
        %v6538 = vpack.c.b16 %v6013, %v6010
        %v6539 = vpack.c.b16 %v6014, %v6011
        %v6540 = vpack.c.b16 %v6015, %v6012
        %v6541 = vpack.c.b16 %v6019, %v6016
        %v6542 = vpack.c.b16 %v6020, %v6017
        %v6543 = vpack.c.b16 %v6021, %v6018
        %v6544 = vpack.c.b16 %v6025, %v6022
        %v6545 = vpack.c.b16 %v6026, %v6023
        %v6546 = vpack.c.b16 %v6027, %v6024
        %v6547 = vpack.c.b16 %v6031, %v6028
        %v6548 = vpack.c.b16 %v6032, %v6029
        %v6549 = vpack.c.b16 %v6033, %v6030
        %v6550 = vpack.c.b16 %v6037, %v6034
        %v6551 = vpack.c.b16 %v6038, %v6035
        %v6552 = vpack.c.b16 %v6039, %v6036
        %v6553 = vpack.c.b16 %v6043, %v6040
        %v6554 = vpack.c.b16 %v6044, %v6041
        %v6555 = vpack.c.b16 %v6045, %v6042
        %v6556 = vpack.c.b16 %v6049, %v6046
        %v6557 = vpack.c.b16 %v6050, %v6047
        %v6558 = vpack.c.b16 %v6051, %v6048
        %v6559 = vpack.c.b16 %v6055, %v6052
        %v6560 = vpack.c.b16 %v6056, %v6053
        %v6561 = vpack.c.b16 %v6057, %v6054
        %v6562 = vpack.c.b16 %v6061, %v6058
        %v6563 = vpack.c.b16 %v6062, %v6059
        %v6564 = vpack.c.b16 %v6063, %v6060
        %v6565 = vpack.c.b16 %v6067, %v6064
        %v6566 = vpack.c.b16 %v6068, %v6065
        %v6567 = vpack.c.b16 %v6069, %v6066
        %v6568 = vpack.c.b16 %v6073, %v6070
        %v6569 = vpack.c.b16 %v6074, %v6071
        %v6570 = vpack.c.b16 %v6075, %v6072
        %v6571 = vpack.c.b16 %v6079, %v6076
        %v6572 = vpack.c.b16 %v6080, %v6077
        %v6573 = vpack.c.b16 %v6081, %v6078
        %v6574 = vpack.c.b16 %v6085, %v6082
        %v6575 = vpack.c.b16 %v6086, %v6083
        %v6576 = vpack.c.b16 %v6087, %v6084
        %v6577 = vpack.c.b16 %v6091, %v6088
        %v6578 = vpack.c.b16 %v6092, %v6089
        %v6579 = vpack.c.b16 %v6093, %v6090
        %v6580 = vpack.c.b16 %v6097, %v6094
        %v6581 = vpack.c.b16 %v6098, %v6095
        %v6582 = vpack.c.b16 %v6099, %v6096
        %v6583 = vpack.c.b16 %v6103, %v6100
        %v6584 = vpack.c.b16 %v6104, %v6101
        %v6585 = vpack.c.b16 %v6105, %v6102
        %v6586 = vpack.c.b16 %v6109, %v6106
        %v6587 = vpack.c.b16 %v6110, %v6107
        %v6588 = vpack.c.b16 %v6111, %v6108
        %v6589 = vpack.c.b16 %v6115, %v6112
        %v6590 = vpack.c.b16 %v6116, %v6113
        %v6591 = vpack.c.b16 %v6117, %v6114
        %v6592 = vpack.c.b16 %v6121, %v6118
        %v6593 = vpack.c.b16 %v6122, %v6119
        %v6594 = vpack.c.b16 %v6123, %v6120
        %v6595 = vpack.c.b16 %v6127, %v6124
        %v6596 = vpack.c.b16 %v6128, %v6125
        %v6597 = vpack.c.b16 %v6129, %v6126
        %v6598 = vpack.c.b16 %v6133, %v6130
        %v6599 = vpack.c.b16 %v6134, %v6131
        %v6600 = vpack.c.b16 %v6135, %v6132
        %v6601 = vpack.c.b16 %v6139, %v6136
        %v6602 = vpack.c.b16 %v6140, %v6137
        %v6603 = vpack.c.b16 %v6141, %v6138
        %v6604 = vpack.c.b16 %v6145, %v6142
        %v6605 = vpack.c.b16 %v6146, %v6143
        %v6606 = vpack.c.b16 %v6147, %v6144
        %v6607 = vpack.c.b16 %v6151, %v6148
        %v6608 = vpack.c.b16 %v6152, %v6149
        %v6609 = vpack.c.b16 %v6153, %v6150
        %v6610 = vpack.c.b16 %v6157, %v6154
        %v6611 = vpack.c.b16 %v6158, %v6155
        %v6612 = vpack.c.b16 %v6159, %v6156
        %v6613 = vpack.c.b16 %v6163, %v6160
        %v6614 = vpack.c.b16 %v6164, %v6161
        %v6615 = vpack.c.b16 %v6165, %v6162
        %v6616 = vpack.c.b16 %v6169, %v6166
        %v6617 = vpack.c.b16 %v6170, %v6167
        %v6618 = vpack.c.b16 %v6171, %v6168
        %v6619 = vpack.c.b16 %v6175, %v6172
        %v6620 = vpack.c.b16 %v6176, %v6173
        %v6621 = vpack.c.b16 %v6177, %v6174
        %v6622 = vpack.c.b16 %v6181, %v6178
        %v6623 = vpack.c.b16 %v6182, %v6179
        %v6624 = vpack.c.b16 %v6183, %v6180
        %v6625 = vpack.c.b16 %v6187, %v6184
        %v6626 = vpack.c.b16 %v6188, %v6185
        %v6627 = vpack.c.b16 %v6189, %v6186
        %v6628 = vpack.c.b16 %v6193, %v6190
        %v6629 = vpack.c.b16 %v6194, %v6191
        %v6630 = vpack.c.b16 %v6195, %v6192
        %v6631 = vpack.c.b16 %v6199, %v6196
        %v6632 = vpack.c.b16 %v6200, %v6197
        %v6633 = vpack.c.b16 %v6201, %v6198
        %v6634 = vpack.c.b16 %v6205, %v6202
        %v6635 = vpack.c.b16 %v6206, %v6203
        %v6636 = vpack.c.b16 %v6207, %v6204
        %v6637 = vpack.c.b16 %v6211, %v6208
        %v6638 = vpack.c.b16 %v6212, %v6209
        %v6639 = vpack.c.b16 %v6213, %v6210
        %v6640 = vpack.c.b16 %v6217, %v6214
        %v6641 = vpack.c.b16 %v6218, %v6215
        %v6642 = vpack.c.b16 %v6219, %v6216
        %v6643 = vpack.c.b16 %v6223, %v6220
        %v6644 = vpack.c.b16 %v6224, %v6221
        %v6645 = vpack.c.b16 %v6225, %v6222
        %v6646 = vpack.c.b16 %v6229, %v6226
        %v6647 = vpack.c.b16 %v6230, %v6227
        %v6648 = vpack.c.b16 %v6231, %v6228
        %v6649 = vpack.c.b16 %v6235, %v6232
        %v6650 = vpack.c.b16 %v6236, %v6233
        %v6651 = vpack.c.b16 %v6237, %v6234
        %v6652 = vpack.c.b16 %v6241, %v6238
        %v6653 = vpack.c.b16 %v6242, %v6239
        %v6654 = vpack.c.b16 %v6243, %v6240
        %v6655 = vpack.c.b16 %v6247, %v6244
        %v6656 = vpack.c.b16 %v6248, %v6245
        %v6657 = vpack.c.b16 %v6249, %v6246
        %v6658 = vpack.c.b16 %v6253, %v6250
        %v6659 = vpack.c.b16 %v6254, %v6251
        %v6660 = vpack.c.b16 %v6255, %v6252
        %v6661 = vpack.c.b16 %v6259, %v6256
        %v6662 = vpack.c.b16 %v6260, %v6257
        %v6663 = vpack.c.b16 %v6261, %v6258
        %v6664 = vpack.c.b16 %v6265, %v6262
        %v6665 = vpack.c.b16 %v6266, %v6263
        %v6666 = vpack.c.b16 %v6267, %v6264
        %v6667 = vpack.c.b16 %v6271, %v6268
        %v6668 = vpack.c.b16 %v6272, %v6269
        %v6669 = vpack.c.b16 %v6273, %v6270
        %v6670 = vpack.c.b16 %v6277, %v6274
        %v6671 = vpack.c.b16 %v6278, %v6275
        %v6672 = vpack.c.b16 %v6279, %v6276
        %v6673 = vpack.c.b16 %v6283, %v6280
        %v6674 = vpack.c.b16 %v6284, %v6281
        %v6675 = vpack.c.b16 %v6285, %v6282
        %v6676 = vpack.c.b16 %v6289, %v6286
        %v6677 = vpack.c.b16 %v6290, %v6287
        %v6678 = vpack.c.b16 %v6291, %v6288
        %v6679 = vpack.c.b16 %v6295, %v6292
        %v6680 = vpack.c.b16 %v6296, %v6293
        %v6681 = vpack.c.b16 %v6297, %v6294
        %v6682 = vpack.c.b16 %v6301, %v6298
        %v6683 = vpack.c.b16 %v6302, %v6299
        %v6684 = vpack.c.b16 %v6303, %v6300
        %v6685 = vpack.c.b16 %v6307, %v6304
        %v6686 = vpack.c.b16 %v6308, %v6305
        %v6687 = vpack.c.b16 %v6309, %v6306
        %v6688 = vpack.c.b16 %v6313, %v6310
        %v6689 = vpack.c.b16 %v6314, %v6311
        %v6690 = vpack.c.b16 %v6315, %v6312
        %v6691 = vpack.c.b16 %v6319, %v6316
        %v6692 = vpack.c.b16 %v6320, %v6317
        %v6693 = vpack.c.b16 %v6321, %v6318
        %v6694 = vpack.c.b16 %v6325, %v6322
        %v6695 = vpack.c.b16 %v6326, %v6323
        %v6696 = vpack.c.b16 %v6327, %v6324
        %v6697 = vpack.c.b16 %v6331, %v6328
        %v6698 = vpack.c.b16 %v6332, %v6329
        %v6699 = vpack.c.b16 %v6333, %v6330
        %v6700 = vpack.c.b16 %v6337, %v6334
        %v6701 = vpack.c.b16 %v6338, %v6335
        %v6702 = vpack.c.b16 %v6339, %v6336
        %v6703 = vpack.c.b16 %v6343, %v6340
        %v6704 = vpack.c.b16 %v6344, %v6341
        %v6705 = vpack.c.b16 %v6345, %v6342
        %v6706 = vpack.c.b16 %v6349, %v6346
        %v6707 = vpack.c.b16 %v6350, %v6347
        %v6708 = vpack.c.b16 %v6351, %v6348
        %v6709 = vpack.c.b16 %v6355, %v6352
        %v6710 = vpack.c.b16 %v6356, %v6353
        %v6711 = vpack.c.b16 %v6357, %v6354
        %v6712 = vpack.c.b16 %v6361, %v6358
        %v6713 = vpack.c.b16 %v6362, %v6359
        %v6714 = vpack.c.b16 %v6363, %v6360
        %v6715 = vpack.c.b16 %v6367, %v6364
        %v6716 = vpack.c.b16 %v6368, %v6365
        %v6717 = vpack.c.b16 %v6369, %v6366
        %v6718 = vpack.c.b16 %v6373, %v6370
        %v6719 = vpack.c.b16 %v6374, %v6371
        %v6720 = vpack.c.b16 %v6375, %v6372
        %v6721 = vpack.c.b16 %v6379, %v6376
        %v6722 = vpack.c.b16 %v6380, %v6377
        %v6723 = vpack.c.b16 %v6381, %v6378
        %v6724 = vpack.c.b16 %v6385, %v6382
        %v6725 = vpack.c.b16 %v6386, %v6383
        %v6726 = vpack.c.b16 %v6387, %v6384
        %v6727 = vpack.c.b16 %v6391, %v6388
        %v6728 = vpack.c.b16 %v6392, %v6389
        %v6729 = vpack.c.b16 %v6393, %v6390
        %v6730 = vpack.c.b16 %v6397, %v6394
        %v6731 = vpack.c.b16 %v6398, %v6395
        %v6732 = vpack.c.b16 %v6399, %v6396
        %v6733 = vpack.c.b16 %v6403, %v6400
        %v6734 = vpack.c.b16 %v6404, %v6401
        %v6735 = vpack.c.b16 %v6405, %v6402
        %v6736 = vpack.c.b16 %v6409, %v6406
        %v6737 = vpack.c.b16 %v6410, %v6407
        %v6738 = vpack.c.b16 %v6411, %v6408
        %v6739 = vpack.c.b16 %v6415, %v6412
        %v6740 = vpack.c.b16 %v6416, %v6413
        %v6741 = vpack.c.b16 %v6417, %v6414
        %v6742 = vpack.c.b16 %v6421, %v6418
        %v6743 = vpack.c.b16 %v6422, %v6419
        %v6744 = vpack.c.b16 %v6423, %v6420
        %v6745 = vpack.c.b16 %v6427, %v6424
        %v6746 = vpack.c.b16 %v6428, %v6425
        %v6747 = vpack.c.b16 %v6429, %v6426
        %v6748 = vpack.c.b16 %v6433, %v6430
        %v6749 = vpack.c.b16 %v6434, %v6431
        %v6750 = vpack.c.b16 %v6435, %v6432
        %v6751 = vpack.c.b16 %v6439, %v6436
        %v6752 = vpack.c.b16 %v6440, %v6437
        %v6753 = vpack.c.b16 %v6441, %v6438
        %v6754 = vpack.c.b16 %v6445, %v6442
        %v6755 = vpack.c.b16 %v6446, %v6443
        %v6756 = vpack.c.b16 %v6447, %v6444
        %v6757 = vpack.c.b16 %v6451, %v6448
        %v6758 = vpack.c.b16 %v6452, %v6449
        %v6759 = vpack.c.b16 %v6453, %v6450
        %v6760 = vpack.c.b16 %v6457, %v6454
        %v6761 = vpack.c.b16 %v6458, %v6455
        %v6762 = vpack.c.b16 %v6459, %v6456
        %v6763 = vpack.c.b16 %v6463, %v6460
        %v6764 = vpack.c.b16 %v6464, %v6461
        %v6765 = vpack.c.b16 %v6465, %v6462
        %v6766 = vpack.c.b16 %v6469, %v6466
        %v6767 = vpack.c.b16 %v6470, %v6467
        %v6768 = vpack.c.b16 %v6471, %v6468
        %v6769 = vpack.c.b16 %v6475, %v6472
        %v6770 = vpack.c.b16 %v6476, %v6473
        %v6771 = vpack.c.b16 %v6477, %v6474
        %v6772 = vpack.c.b16 %v6481, %v6478
        %v6773 = vpack.c.b16 %v6482, %v6479
        %v6774 = vpack.c.b16 %v6483, %v6480
        %v6775 = vpack.c.b16 %v6487, %v6484
        %v6776 = vpack.c.b16 %v6488, %v6485
        %v6777 = vpack.c.b16 %v6489, %v6486
        %7066 = vmatprep.subr.bf16.mxu0 %v6491
        %7067 = vmatpush1.bf16.msra.mxu0 %v6490
        %7068 = vmatprep.subr.bf16.mxu0 %v6494
        %7069 = vmatpush1.bf16.msra.mxu0 %v6493
        %7070 = vmatprep.subr.bf16.mxu0 %v6497
        %7071 = vmatpush1.bf16.msra.mxu0 %v6496
        %7072 = vmatprep.subr.bf16.mxu0 %v6500
        %7073 = vmatpush1.bf16.msra.mxu0 %v6499
        %7074 = vmatprep.subr.bf16.mxu0 %v6503
        %7075 = vmatpush1.bf16.msra.mxu0 %v6502
        %7076 = vmatprep.subr.bf16.mxu0 %v6506
        %7077 = vmatpush1.bf16.msra.mxu0 %v6505
        %7078 = vmatprep.subr.bf16.mxu0 %v6509
        %7079 = vmatpush1.bf16.msra.mxu0 %v6508
        %7080 = vmatprep.subr.bf16.mxu0 %v6512
        %7081 = vmatpush1.bf16.msra.mxu0 %v6511
        %7082 = vmatprep.subr.bf16.mxu0 %v6515
        %7083 = vmatpush1.bf16.msra.mxu0 %v6514
        %7084 = vmatprep.subr.bf16.mxu0 %v6518
        %7085 = vmatpush1.bf16.msra.mxu0 %v6517
        %7086 = vmatprep.subr.bf16.mxu0 %v6521
        %7087 = vmatpush1.bf16.msra.mxu0 %v6520
        %7088 = vmatprep.subr.bf16.mxu0 %v6524
        %7089 = vmatpush1.bf16.msra.mxu0 %v6523
        %7090 = vmatprep.subr.bf16.mxu0 %v6527
        %7091 = vmatpush1.bf16.msra.mxu0 %v6526
        %7092 = vmatprep.subr.bf16.mxu0 %v6530
        %7093 = vmatpush1.bf16.msra.mxu0 %v6529
        %7094 = vmatprep.subr.bf16.mxu0 %v6533
        %7095 = vmatpush1.bf16.msra.mxu0 %v6532
        %7096 = vmatprep.subr.bf16.mxu0 %v6536
        %7097 = vmatpush1.bf16.msra.mxu0 %v6535
        %7098 = vmatprep.mubr.bf16.mxu0 %v4938
        %7099 = vmatmul.mubr.bf16.gmra.mrb[0].mxu0 %v4937
        %v7100 = vpop.f32.mrb[0].mxu0
        %v7101 = vadd.f32 %v5518, %v7100
        %v7102 = vpop.f32.mrb[0].mxu0
        %v7103 = vadd.f32 %v5522, %v7102
        %v7104 = vpop.f32.mrb[0].mxu0
        %v7105 = vadd.f32 %v5518, %v7104
        %v7106 = vpop.f32.mrb[0].mxu0
        %v7107 = vadd.f32 %v5522, %v7106
        %7108 = vmatprep.mubr.bf16.mxu0 %v4950
        %7109 = vmatmul.mubr.bf16.gmra.mrb[0].mxu0 %v4949
        %v7110 = vpop.f32.mrb[0].mxu0
        %v7111 = vadd.f32 %v5518, %v7110
        %v7112 = vpop.f32.mrb[0].mxu0
        %v7113 = vadd.f32 %v5522, %v7112
        %v7114 = vpop.f32.mrb[0].mxu0
        %v7115 = vadd.f32 %v5518, %v7114
        %v7116 = vpop.f32.mrb[0].mxu0
        %v7117 = vadd.f32 %v5522, %v7116
        %7118 = vmatprep.mubr.bf16.mxu0 %v4962
        %7119 = vmatmul.mubr.bf16.gmra.mrb[0].mxu0 %v4961
        %v7120 = vpop.f32.mrb[0].mxu0
        %v7121 = vadd.f32 %v5518, %v7120
        %v7122 = vpop.f32.mrb[0].mxu0
        %v7123 = vadd.f32 %v5522, %v7122
        %v7124 = vpop.f32.mrb[0].mxu0
        %v7125 = vadd.f32 %v5518, %v7124
        %v7126 = vpop.f32.mrb[0].mxu0
        %v7127 = vadd.f32 %v5522, %v7126
        %7128 = vmatprep.mubr.bf16.mxu0 %v4974
        %7129 = vmatmul.mubr.bf16.gmra.mrb[0].mxu0 %v4973
        %v7130 = vpop.f32.mrb[0].mxu0
        %v7131 = vadd.f32 %v5518, %v7130
        %v7132 = vpop.f32.mrb[0].mxu0
        %v7133 = vadd.f32 %v5522, %v7132
        %v7134 = vpop.f32.mrb[0].mxu0
        %v7135 = vadd.f32 %v5518, %v7134
        %v7136 = vpop.f32.mrb[0].mxu0
        %v7137 = vadd.f32 %v5522, %v7136
        %7138 = vmatprep.mubr.bf16.mxu0 %v4986
        %7139 = vmatmul.mubr.bf16.gmra.mrb[0].mxu0 %v4985
        %v7140 = vpop.f32.mrb[0].mxu0
        %v7141 = vadd.f32 %v5518, %v7140
        %v7142 = vpop.f32.mrb[0].mxu0
        %v7143 = vadd.f32 %v5522, %v7142
        %v7144 = vpop.f32.mrb[0].mxu0
        %v7145 = vadd.f32 %v5518, %v7144
        %v7146 = vpop.f32.mrb[0].mxu0
        %v7147 = vadd.f32 %v5522, %v7146
        %7148 = vmatprep.mubr.bf16.mxu0 %v4998
        %7149 = vmatmul.mubr.bf16.gmra.mrb[0].mxu0 %v4997
        %v7150 = vpop.f32.mrb[0].mxu0
        %v7151 = vadd.f32 %v5518, %v7150
        %v7152 = vpop.f32.mrb[0].mxu0
        %v7153 = vadd.f32 %v5522, %v7152
        %v7154 = vpop.f32.mrb[0].mxu0
        %v7155 = vadd.f32 %v5518, %v7154
        %v7156 = vpop.f32.mrb[0].mxu0
        %v7157 = vadd.f32 %v5522, %v7156
        %7158 = vmatprep.mubr.bf16.mxu0 %v5010
        %7159 = vmatmul.mubr.bf16.gmra.mrb[0].mxu0 %v5009
        %v7160 = vpop.f32.mrb[0].mxu0
        %v7161 = vadd.f32 %v5518, %v7160
        %v7162 = vpop.f32.mrb[0].mxu0
        %v7163 = vadd.f32 %v5522, %v7162
        %v7164 = vpop.f32.mrb[0].mxu0
        %v7165 = vadd.f32 %v5518, %v7164
        %v7166 = vpop.f32.mrb[0].mxu0
        %v7167 = vadd.f32 %v5522, %v7166
        %7168 = vmatprep.mubr.bf16.mxu0 %v5022
        %7169 = vmatmul.mubr.bf16.gmra.mrb[0].mxu0 %v5021
        %v7170 = vpop.f32.mrb[0].mxu0
        %v7171 = vadd.f32 %v5518, %v7170
        %v7172 = vpop.f32.mrb[0].mxu0
        %v7173 = vadd.f32 %v5522, %v7172
        %v7174 = vpop.f32.mrb[0].mxu0
        %v7175 = vadd.f32 %v5518, %v7174
        %v7176 = vpop.f32.mrb[0].mxu0
        %v7177 = vadd.f32 %v5522, %v7176
        %7178 = vmatprep.mubr.bf16.mxu0 %v5034
        %7179 = vmatmul.mubr.bf16.gmra.mrb[0].mxu0 %v5033
        %v7180 = vpop.f32.mrb[0].mxu0
        %v7181 = vadd.f32 %v5518, %v7180
        %v7182 = vpop.f32.mrb[0].mxu0
        %v7183 = vadd.f32 %v5522, %v7182
        %v7184 = vpop.f32.mrb[0].mxu0
        %v7185 = vadd.f32 %v5518, %v7184
        %v7186 = vpop.f32.mrb[0].mxu0
        %v7187 = vadd.f32 %v5522, %v7186
        %7188 = vmatprep.mubr.bf16.mxu0 %v5046
        %7189 = vmatmul.mubr.bf16.gmra.mrb[0].mxu0 %v5045
        %v7190 = vpop.f32.mrb[0].mxu0
        %v7191 = vadd.f32 %v5518, %v7190
        %v7192 = vpop.f32.mrb[0].mxu0
        %v7193 = vadd.f32 %v5522, %v7192
        %v7194 = vpop.f32.mrb[0].mxu0
        %v7195 = vadd.f32 %v5518, %v7194
        %v7196 = vpop.f32.mrb[0].mxu0
        %v7197 = vadd.f32 %v5522, %v7196
        %7198 = vmatprep.mubr.bf16.mxu0 %v5058
        %7199 = vmatmul.mubr.bf16.gmra.mrb[0].mxu0 %v5057
        %v7200 = vpop.f32.mrb[0].mxu0
        %v7201 = vadd.f32 %v5518, %v7200
        %v7202 = vpop.f32.mrb[0].mxu0
        %v7203 = vadd.f32 %v5522, %v7202
        %v7204 = vpop.f32.mrb[0].mxu0
        %v7205 = vadd.f32 %v5518, %v7204
        %v7206 = vpop.f32.mrb[0].mxu0
        %v7207 = vadd.f32 %v5522, %v7206
        %7208 = vmatprep.mubr.bf16.mxu0 %v5070
        %7209 = vmatmul.mubr.bf16.gmra.mrb[0].mxu0 %v5069
        %v7210 = vpop.f32.mrb[0].mxu0
        %v7211 = vadd.f32 %v5518, %v7210
        %v7212 = vpop.f32.mrb[0].mxu0
        %v7213 = vadd.f32 %v5522, %v7212
        %v7214 = vpop.f32.mrb[0].mxu0
        %v7215 = vadd.f32 %v5518, %v7214
        %v7216 = vpop.f32.mrb[0].mxu0
        %v7217 = vadd.f32 %v5522, %v7216
        %7218 = vmatprep.mubr.bf16.mxu0 %v5082
        %7219 = vmatmul.mubr.bf16.gmra.mrb[0].mxu0 %v5081
        %v7220 = vpop.f32.mrb[0].mxu0
        %v7221 = vadd.f32 %v5518, %v7220
        %v7222 = vpop.f32.mrb[0].mxu0
        %v7223 = vadd.f32 %v5522, %v7222
        %v7224 = vpop.f32.mrb[0].mxu0
        %v7225 = vadd.f32 %v5518, %v7224
        %v7226 = vpop.f32.mrb[0].mxu0
        %v7227 = vadd.f32 %v5522, %v7226
        %7228 = vmatprep.mubr.bf16.mxu0 %v5094
        %7229 = vmatmul.mubr.bf16.gmra.mrb[0].mxu0 %v5093
        %v7230 = vpop.f32.mrb[0].mxu0
        %v7231 = vadd.f32 %v5518, %v7230
        %v7232 = vpop.f32.mrb[0].mxu0
        %v7233 = vadd.f32 %v5522, %v7232
        %v7234 = vpop.f32.mrb[0].mxu0
        %v7235 = vadd.f32 %v5518, %v7234
        %v7236 = vpop.f32.mrb[0].mxu0
        %v7237 = vadd.f32 %v5522, %v7236
        %7238 = vmatprep.mubr.bf16.mxu0 %v5106
        %7239 = vmatmul.mubr.bf16.gmra.mrb[0].mxu0 %v5105
        %v7240 = vpop.f32.mrb[0].mxu0
        %v7241 = vadd.f32 %v5518, %v7240
        %v7242 = vpop.f32.mrb[0].mxu0
        %v7243 = vadd.f32 %v5522, %v7242
        %v7244 = vpop.f32.mrb[0].mxu0
        %v7245 = vadd.f32 %v5518, %v7244
        %v7246 = vpop.f32.mrb[0].mxu0
        %v7247 = vadd.f32 %v5522, %v7246
        %7248 = vmatprep.mubr.bf16.mxu0 %v5118
        %7249 = vmatmul.mubr.bf16.gmra.mrb[0].mxu0 %v5117
        %v7250 = vpop.f32.mrb[0].mxu0
        %v7251 = vadd.f32 %v5518, %v7250
        %v7252 = vpop.f32.mrb[0].mxu0
        %v7253 = vadd.f32 %v5522, %v7252
        %v7254 = vpop.f32.mrb[0].mxu0
        %v7255 = vadd.f32 %v5518, %v7254
        %v7256 = vpop.f32.mrb[0].mxu0
        %v7257 = vadd.f32 %v5522, %v7256
        %7258 = vdwg.mxu0
        %7259 = vmatprep.subr.bf16.mxu0 %v6539
        %7260 = vmatpush1.bf16.msra.mxu0 %v6538
        %7261 = vmatprep.subr.bf16.mxu0 %v6542
        %7262 = vmatpush1.bf16.msra.mxu0 %v6541
        %7263 = vmatprep.subr.bf16.mxu0 %v6545
        %7264 = vmatpush1.bf16.msra.mxu0 %v6544
        %7265 = vmatprep.subr.bf16.mxu0 %v6548
        %7266 = vmatpush1.bf16.msra.mxu0 %v6547
        %7267 = vmatprep.subr.bf16.mxu0 %v6551
        %7268 = vmatpush1.bf16.msra.mxu0 %v6550
        %7269 = vmatprep.subr.bf16.mxu0 %v6554
        %7270 = vmatpush1.bf16.msra.mxu0 %v6553
        %7271 = vmatprep.subr.bf16.mxu0 %v6557
        %7272 = vmatpush1.bf16.msra.mxu0 %v6556
        %7273 = vmatprep.subr.bf16.mxu0 %v6560
        %7274 = vmatpush1.bf16.msra.mxu0 %v6559
        %7275 = vmatprep.subr.bf16.mxu0 %v6563
        %7276 = vmatpush1.bf16.msra.mxu0 %v6562
        %7277 = vmatprep.subr.bf16.mxu0 %v6566
        %7278 = vmatpush1.bf16.msra.mxu0 %v6565
        %7279 = vmatprep.subr.bf16.mxu0 %v6569
        %7280 = vmatpush1.bf16.msra.mxu0 %v6568
        %7281 = vmatprep.subr.bf16.mxu0 %v6572
        %7282 = vmatpush1.bf16.msra.mxu0 %v6571
        %7283 = vmatprep.subr.bf16.mxu0 %v6575
        %7284 = vmatpush1.bf16.msra.mxu0 %v6574
        %7285 = vmatprep.subr.bf16.mxu0 %v6578
        %7286 = vmatpush1.bf16.msra.mxu0 %v6577
        %7287 = vmatprep.subr.bf16.mxu0 %v6581
        %7288 = vmatpush1.bf16.msra.mxu0 %v6580
        %7289 = vmatprep.subr.bf16.mxu0 %v6584
        %7290 = vmatpush1.bf16.msra.mxu0 %v6583
        %7291 = vmatprep.mubr.bf16.mxu0 %v4940
        %7292 = vmatmul.mubr.bf16.gmra.mrb[0].mxu0 %v4939
        %v7293 = vpop.f32.mrb[0].mxu0
        %v7294 = vadd.f32 %v7101, %v7293
        %v7295 = vpop.f32.mrb[0].mxu0
        %v7296 = vadd.f32 %v7103, %v7295
        %v7297 = vpop.f32.mrb[0].mxu0
        %v7298 = vadd.f32 %v7105, %v7297
        %v7299 = vpop.f32.mrb[0].mxu0
        %v7300 = vadd.f32 %v7107, %v7299
        %7301 = vmatprep.mubr.bf16.mxu0 %v4952
        %7302 = vmatmul.mubr.bf16.gmra.mrb[0].mxu0 %v4951
        %v7303 = vpop.f32.mrb[0].mxu0
        %v7304 = vadd.f32 %v7111, %v7303
        %v7305 = vpop.f32.mrb[0].mxu0
        %v7306 = vadd.f32 %v7113, %v7305
        %v7307 = vpop.f32.mrb[0].mxu0
        %v7308 = vadd.f32 %v7115, %v7307
        %v7309 = vpop.f32.mrb[0].mxu0
        %v7310 = vadd.f32 %v7117, %v7309
        %7311 = vmatprep.mubr.bf16.mxu0 %v4964
        %7312 = vmatmul.mubr.bf16.gmra.mrb[0].mxu0 %v4963
        %v7313 = vpop.f32.mrb[0].mxu0
        %v7314 = vadd.f32 %v7121, %v7313
        %v7315 = vpop.f32.mrb[0].mxu0
        %v7316 = vadd.f32 %v7123, %v7315
        %v7317 = vpop.f32.mrb[0].mxu0
        %v7318 = vadd.f32 %v7125, %v7317
        %v7319 = vpop.f32.mrb[0].mxu0
        %v7320 = vadd.f32 %v7127, %v7319
        %7321 = vmatprep.mubr.bf16.mxu0 %v4976
        %7322 = vmatmul.mubr.bf16.gmra.mrb[0].mxu0 %v4975
        %v7323 = vpop.f32.mrb[0].mxu0
        %v7324 = vadd.f32 %v7131, %v7323
        %v7325 = vpop.f32.mrb[0].mxu0
        %v7326 = vadd.f32 %v7133, %v7325
        %v7327 = vpop.f32.mrb[0].mxu0
        %v7328 = vadd.f32 %v7135, %v7327
        %v7329 = vpop.f32.mrb[0].mxu0
        %v7330 = vadd.f32 %v7137, %v7329
        %7331 = vmatprep.mubr.bf16.mxu0 %v4988
        %7332 = vmatmul.mubr.bf16.gmra.mrb[0].mxu0 %v4987
        %v7333 = vpop.f32.mrb[0].mxu0
        %v7334 = vadd.f32 %v7141, %v7333
        %v7335 = vpop.f32.mrb[0].mxu0
        %v7336 = vadd.f32 %v7143, %v7335
        %v7337 = vpop.f32.mrb[0].mxu0
        %v7338 = vadd.f32 %v7145, %v7337
        %v7339 = vpop.f32.mrb[0].mxu0
        %v7340 = vadd.f32 %v7147, %v7339
        %7341 = vmatprep.mubr.bf16.mxu0 %v5000
        %7342 = vmatmul.mubr.bf16.gmra.mrb[0].mxu0 %v4999
        %v7343 = vpop.f32.mrb[0].mxu0
        %v7344 = vadd.f32 %v7151, %v7343
        %v7345 = vpop.f32.mrb[0].mxu0
        %v7346 = vadd.f32 %v7153, %v7345
        %v7347 = vpop.f32.mrb[0].mxu0
        %v7348 = vadd.f32 %v7155, %v7347
        %v7349 = vpop.f32.mrb[0].mxu0
        %v7350 = vadd.f32 %v7157, %v7349
        %7351 = vmatprep.mubr.bf16.mxu0 %v5012
        %7352 = vmatmul.mubr.bf16.gmra.mrb[0].mxu0 %v5011
        %v7353 = vpop.f32.mrb[0].mxu0
        %v7354 = vadd.f32 %v7161, %v7353
        %v7355 = vpop.f32.mrb[0].mxu0
        %v7356 = vadd.f32 %v7163, %v7355
        %v7357 = vpop.f32.mrb[0].mxu0
        %v7358 = vadd.f32 %v7165, %v7357
        %v7359 = vpop.f32.mrb[0].mxu0
        %v7360 = vadd.f32 %v7167, %v7359
        %7361 = vmatprep.mubr.bf16.mxu0 %v5024
        %7362 = vmatmul.mubr.bf16.gmra.mrb[0].mxu0 %v5023
        %v7363 = vpop.f32.mrb[0].mxu0
        %v7364 = vadd.f32 %v7171, %v7363
        %v7365 = vpop.f32.mrb[0].mxu0
        %v7366 = vadd.f32 %v7173, %v7365
        %v7367 = vpop.f32.mrb[0].mxu0
        %v7368 = vadd.f32 %v7175, %v7367
        %v7369 = vpop.f32.mrb[0].mxu0
        %v7370 = vadd.f32 %v7177, %v7369
        %7371 = vmatprep.mubr.bf16.mxu0 %v5036
        %7372 = vmatmul.mubr.bf16.gmra.mrb[0].mxu0 %v5035
        %v7373 = vpop.f32.mrb[0].mxu0
        %v7374 = vadd.f32 %v7181, %v7373
        %v7375 = vpop.f32.mrb[0].mxu0
        %v7376 = vadd.f32 %v7183, %v7375
        %v7377 = vpop.f32.mrb[0].mxu0
        %v7378 = vadd.f32 %v7185, %v7377
        %v7379 = vpop.f32.mrb[0].mxu0
        %v7380 = vadd.f32 %v7187, %v7379
        %7381 = vmatprep.mubr.bf16.mxu0 %v5048
        %7382 = vmatmul.mubr.bf16.gmra.mrb[0].mxu0 %v5047
        %v7383 = vpop.f32.mrb[0].mxu0
        %v7384 = vadd.f32 %v7191, %v7383
        %v7385 = vpop.f32.mrb[0].mxu0
        %v7386 = vadd.f32 %v7193, %v7385
        %v7387 = vpop.f32.mrb[0].mxu0
        %v7388 = vadd.f32 %v7195, %v7387
        %v7389 = vpop.f32.mrb[0].mxu0
        %v7390 = vadd.f32 %v7197, %v7389
        %7391 = vmatprep.mubr.bf16.mxu0 %v5060
        %7392 = vmatmul.mubr.bf16.gmra.mrb[0].mxu0 %v5059
        %v7393 = vpop.f32.mrb[0].mxu0
        %v7394 = vadd.f32 %v7201, %v7393
        %v7395 = vpop.f32.mrb[0].mxu0
        %v7396 = vadd.f32 %v7203, %v7395
        %v7397 = vpop.f32.mrb[0].mxu0
        %v7398 = vadd.f32 %v7205, %v7397
        %v7399 = vpop.f32.mrb[0].mxu0
        %v7400 = vadd.f32 %v7207, %v7399
        %7401 = vmatprep.mubr.bf16.mxu0 %v5072
        %7402 = vmatmul.mubr.bf16.gmra.mrb[0].mxu0 %v5071
        %v7403 = vpop.f32.mrb[0].mxu0
        %v7404 = vadd.f32 %v7211, %v7403
        %v7405 = vpop.f32.mrb[0].mxu0
        %v7406 = vadd.f32 %v7213, %v7405
        %v7407 = vpop.f32.mrb[0].mxu0
        %v7408 = vadd.f32 %v7215, %v7407
        %v7409 = vpop.f32.mrb[0].mxu0
        %v7410 = vadd.f32 %v7217, %v7409
        %7411 = vmatprep.mubr.bf16.mxu0 %v5084
        %7412 = vmatmul.mubr.bf16.gmra.mrb[0].mxu0 %v5083
        %v7413 = vpop.f32.mrb[0].mxu0
        %v7414 = vadd.f32 %v7221, %v7413
        %v7415 = vpop.f32.mrb[0].mxu0
        %v7416 = vadd.f32 %v7223, %v7415
        %v7417 = vpop.f32.mrb[0].mxu0
        %v7418 = vadd.f32 %v7225, %v7417
        %v7419 = vpop.f32.mrb[0].mxu0
        %v7420 = vadd.f32 %v7227, %v7419
        %7421 = vmatprep.mubr.bf16.mxu0 %v5096
        %7422 = vmatmul.mubr.bf16.gmra.mrb[0].mxu0 %v5095
        %v7423 = vpop.f32.mrb[0].mxu0
        %v7424 = vadd.f32 %v7231, %v7423
        %v7425 = vpop.f32.mrb[0].mxu0
        %v7426 = vadd.f32 %v7233, %v7425
        %v7427 = vpop.f32.mrb[0].mxu0
        %v7428 = vadd.f32 %v7235, %v7427
        %v7429 = vpop.f32.mrb[0].mxu0
        %v7430 = vadd.f32 %v7237, %v7429
        %7431 = vmatprep.mubr.bf16.mxu0 %v5108
        %7432 = vmatmul.mubr.bf16.gmra.mrb[0].mxu0 %v5107
        %v7433 = vpop.f32.mrb[0].mxu0
        %v7434 = vadd.f32 %v7241, %v7433
        %v7435 = vpop.f32.mrb[0].mxu0
        %v7436 = vadd.f32 %v7243, %v7435
        %v7437 = vpop.f32.mrb[0].mxu0
        %v7438 = vadd.f32 %v7245, %v7437
        %v7439 = vpop.f32.mrb[0].mxu0
        %v7440 = vadd.f32 %v7247, %v7439
        %7441 = vmatprep.mubr.bf16.mxu0 %v5120
        %7442 = vmatmul.mubr.bf16.gmra.mrb[0].mxu0 %v5119
        %v7443 = vpop.f32.mrb[0].mxu0
        %v7444 = vadd.f32 %v7251, %v7443
        %v7445 = vpop.f32.mrb[0].mxu0
        %v7446 = vadd.f32 %v7253, %v7445
        %v7447 = vpop.f32.mrb[0].mxu0
        %v7448 = vadd.f32 %v7255, %v7447
        %v7449 = vpop.f32.mrb[0].mxu0
        %v7450 = vadd.f32 %v7257, %v7449
        %7451 = vdwg.mxu0
        %7452 = vmatprep.subr.bf16.mxu0 %v6587
        %7453 = vmatpush1.bf16.msra.mxu0 %v6586
        %7454 = vmatprep.subr.bf16.mxu0 %v6590
        %7455 = vmatpush1.bf16.msra.mxu0 %v6589
        %7456 = vmatprep.subr.bf16.mxu0 %v6593
        %7457 = vmatpush1.bf16.msra.mxu0 %v6592
        %7458 = vmatprep.subr.bf16.mxu0 %v6596
        %7459 = vmatpush1.bf16.msra.mxu0 %v6595
        %7460 = vmatprep.subr.bf16.mxu0 %v6599
        %7461 = vmatpush1.bf16.msra.mxu0 %v6598
        %7462 = vmatprep.subr.bf16.mxu0 %v6602
        %7463 = vmatpush1.bf16.msra.mxu0 %v6601
        %7464 = vmatprep.subr.bf16.mxu0 %v6605
        %7465 = vmatpush1.bf16.msra.mxu0 %v6604
        %7466 = vmatprep.subr.bf16.mxu0 %v6608
        %7467 = vmatpush1.bf16.msra.mxu0 %v6607
        %7468 = vmatprep.subr.bf16.mxu0 %v6611
        %7469 = vmatpush1.bf16.msra.mxu0 %v6610
        %7470 = vmatprep.subr.bf16.mxu0 %v6614
        %7471 = vmatpush1.bf16.msra.mxu0 %v6613
        %7472 = vmatprep.subr.bf16.mxu0 %v6617
        %7473 = vmatpush1.bf16.msra.mxu0 %v6616
        %7474 = vmatprep.subr.bf16.mxu0 %v6620
        %7475 = vmatpush1.bf16.msra.mxu0 %v6619
        %7476 = vmatprep.subr.bf16.mxu0 %v6623
        %7477 = vmatpush1.bf16.msra.mxu0 %v6622
        %7478 = vmatprep.subr.bf16.mxu0 %v6626
        %7479 = vmatpush1.bf16.msra.mxu0 %v6625
        %7480 = vmatprep.subr.bf16.mxu0 %v6629
        %7481 = vmatpush1.bf16.msra.mxu0 %v6628
        %7482 = vmatprep.subr.bf16.mxu0 %v6632
        %7483 = vmatpush1.bf16.msra.mxu0 %v6631
        %7484 = vmatprep.mubr.bf16.mxu0 %v4942
        %7485 = vmatmul.mubr.bf16.gmra.mrb[0].mxu0 %v4941
        %v7486 = vpop.f32.mrb[0].mxu0
        %v7487 = vadd.f32 %v7294, %v7486
        %v7488 = vpop.f32.mrb[0].mxu0
        %v7489 = vadd.f32 %v7296, %v7488
        %v7490 = vpop.f32.mrb[0].mxu0
        %v7491 = vadd.f32 %v7298, %v7490
        %v7492 = vpop.f32.mrb[0].mxu0
        %v7493 = vadd.f32 %v7300, %v7492
        %7494 = vmatprep.mubr.bf16.mxu0 %v4954
        %7495 = vmatmul.mubr.bf16.gmra.mrb[0].mxu0 %v4953
        %v7496 = vpop.f32.mrb[0].mxu0
        %v7497 = vadd.f32 %v7304, %v7496
        %v7498 = vpop.f32.mrb[0].mxu0
        %v7499 = vadd.f32 %v7306, %v7498
        %v7500 = vpop.f32.mrb[0].mxu0
        %v7501 = vadd.f32 %v7308, %v7500
        %v7502 = vpop.f32.mrb[0].mxu0
        %v7503 = vadd.f32 %v7310, %v7502
        %7504 = vmatprep.mubr.bf16.mxu0 %v4966
        %7505 = vmatmul.mubr.bf16.gmra.mrb[0].mxu0 %v4965
        %v7506 = vpop.f32.mrb[0].mxu0
        %v7507 = vadd.f32 %v7314, %v7506
        %v7508 = vpop.f32.mrb[0].mxu0
        %v7509 = vadd.f32 %v7316, %v7508
        %v7510 = vpop.f32.mrb[0].mxu0
        %v7511 = vadd.f32 %v7318, %v7510
        %v7512 = vpop.f32.mrb[0].mxu0
        %v7513 = vadd.f32 %v7320, %v7512
        %7514 = vmatprep.mubr.bf16.mxu0 %v4978
        %7515 = vmatmul.mubr.bf16.gmra.mrb[0].mxu0 %v4977
        %v7516 = vpop.f32.mrb[0].mxu0
        %v7517 = vadd.f32 %v7324, %v7516
        %v7518 = vpop.f32.mrb[0].mxu0
        %v7519 = vadd.f32 %v7326, %v7518
        %v7520 = vpop.f32.mrb[0].mxu0
        %v7521 = vadd.f32 %v7328, %v7520
        %v7522 = vpop.f32.mrb[0].mxu0
        %v7523 = vadd.f32 %v7330, %v7522
        %7524 = vmatprep.mubr.bf16.mxu0 %v4990
        %7525 = vmatmul.mubr.bf16.gmra.mrb[0].mxu0 %v4989
        %v7526 = vpop.f32.mrb[0].mxu0
        %v7527 = vadd.f32 %v7334, %v7526
        %v7528 = vpop.f32.mrb[0].mxu0
        %v7529 = vadd.f32 %v7336, %v7528
        %v7530 = vpop.f32.mrb[0].mxu0
        %v7531 = vadd.f32 %v7338, %v7530
        %v7532 = vpop.f32.mrb[0].mxu0
        %v7533 = vadd.f32 %v7340, %v7532
        %7534 = vmatprep.mubr.bf16.mxu0 %v5002
        %7535 = vmatmul.mubr.bf16.gmra.mrb[0].mxu0 %v5001
        %v7536 = vpop.f32.mrb[0].mxu0
        %v7537 = vadd.f32 %v7344, %v7536
        %v7538 = vpop.f32.mrb[0].mxu0
        %v7539 = vadd.f32 %v7346, %v7538
        %v7540 = vpop.f32.mrb[0].mxu0
        %v7541 = vadd.f32 %v7348, %v7540
        %v7542 = vpop.f32.mrb[0].mxu0
        %v7543 = vadd.f32 %v7350, %v7542
        %7544 = vmatprep.mubr.bf16.mxu0 %v5014
        %7545 = vmatmul.mubr.bf16.gmra.mrb[0].mxu0 %v5013
        %v7546 = vpop.f32.mrb[0].mxu0
        %v7547 = vadd.f32 %v7354, %v7546
        %v7548 = vpop.f32.mrb[0].mxu0
        %v7549 = vadd.f32 %v7356, %v7548
        %v7550 = vpop.f32.mrb[0].mxu0
        %v7551 = vadd.f32 %v7358, %v7550
        %v7552 = vpop.f32.mrb[0].mxu0
        %v7553 = vadd.f32 %v7360, %v7552
        %7554 = vmatprep.mubr.bf16.mxu0 %v5026
        %7555 = vmatmul.mubr.bf16.gmra.mrb[0].mxu0 %v5025
        %v7556 = vpop.f32.mrb[0].mxu0
        %v7557 = vadd.f32 %v7364, %v7556
        %v7558 = vpop.f32.mrb[0].mxu0
        %v7559 = vadd.f32 %v7366, %v7558
        %v7560 = vpop.f32.mrb[0].mxu0
        %v7561 = vadd.f32 %v7368, %v7560
        %v7562 = vpop.f32.mrb[0].mxu0
        %v7563 = vadd.f32 %v7370, %v7562
        %7564 = vmatprep.mubr.bf16.mxu0 %v5038
        %7565 = vmatmul.mubr.bf16.gmra.mrb[0].mxu0 %v5037
        %v7566 = vpop.f32.mrb[0].mxu0
        %v7567 = vadd.f32 %v7374, %v7566
        %v7568 = vpop.f32.mrb[0].mxu0
        %v7569 = vadd.f32 %v7376, %v7568
        %v7570 = vpop.f32.mrb[0].mxu0
        %v7571 = vadd.f32 %v7378, %v7570
        %v7572 = vpop.f32.mrb[0].mxu0
        %v7573 = vadd.f32 %v7380, %v7572
        %7574 = vmatprep.mubr.bf16.mxu0 %v5050
        %7575 = vmatmul.mubr.bf16.gmra.mrb[0].mxu0 %v5049
        %v7576 = vpop.f32.mrb[0].mxu0
        %v7577 = vadd.f32 %v7384, %v7576
        %v7578 = vpop.f32.mrb[0].mxu0
        %v7579 = vadd.f32 %v7386, %v7578
        %v7580 = vpop.f32.mrb[0].mxu0
        %v7581 = vadd.f32 %v7388, %v7580
        %v7582 = vpop.f32.mrb[0].mxu0
        %v7583 = vadd.f32 %v7390, %v7582
        %7584 = vmatprep.mubr.bf16.mxu0 %v5062
        %7585 = vmatmul.mubr.bf16.gmra.mrb[0].mxu0 %v5061
        %v7586 = vpop.f32.mrb[0].mxu0
        %v7587 = vadd.f32 %v7394, %v7586
        %v7588 = vpop.f32.mrb[0].mxu0
        %v7589 = vadd.f32 %v7396, %v7588
        %v7590 = vpop.f32.mrb[0].mxu0
        %v7591 = vadd.f32 %v7398, %v7590
        %v7592 = vpop.f32.mrb[0].mxu0
        %v7593 = vadd.f32 %v7400, %v7592
        %7594 = vmatprep.mubr.bf16.mxu0 %v5074
        %7595 = vmatmul.mubr.bf16.gmra.mrb[0].mxu0 %v5073
        %v7596 = vpop.f32.mrb[0].mxu0
        %v7597 = vadd.f32 %v7404, %v7596
        %v7598 = vpop.f32.mrb[0].mxu0
        %v7599 = vadd.f32 %v7406, %v7598
        %v7600 = vpop.f32.mrb[0].mxu0
        %v7601 = vadd.f32 %v7408, %v7600
        %v7602 = vpop.f32.mrb[0].mxu0
        %v7603 = vadd.f32 %v7410, %v7602
        %7604 = vmatprep.mubr.bf16.mxu0 %v5086
        %7605 = vmatmul.mubr.bf16.gmra.mrb[0].mxu0 %v5085
        %v7606 = vpop.f32.mrb[0].mxu0
        %v7607 = vadd.f32 %v7414, %v7606
        %v7608 = vpop.f32.mrb[0].mxu0
        %v7609 = vadd.f32 %v7416, %v7608
        %v7610 = vpop.f32.mrb[0].mxu0
        %v7611 = vadd.f32 %v7418, %v7610
        %v7612 = vpop.f32.mrb[0].mxu0
        %v7613 = vadd.f32 %v7420, %v7612
        %7614 = vmatprep.mubr.bf16.mxu0 %v5098
        %7615 = vmatmul.mubr.bf16.gmra.mrb[0].mxu0 %v5097
        %v7616 = vpop.f32.mrb[0].mxu0
        %v7617 = vadd.f32 %v7424, %v7616
        %v7618 = vpop.f32.mrb[0].mxu0
        %v7619 = vadd.f32 %v7426, %v7618
        %v7620 = vpop.f32.mrb[0].mxu0
        %v7621 = vadd.f32 %v7428, %v7620
        %v7622 = vpop.f32.mrb[0].mxu0
        %v7623 = vadd.f32 %v7430, %v7622
        %7624 = vmatprep.mubr.bf16.mxu0 %v5110
        %7625 = vmatmul.mubr.bf16.gmra.mrb[0].mxu0 %v5109
        %v7626 = vpop.f32.mrb[0].mxu0
        %v7627 = vadd.f32 %v7434, %v7626
        %v7628 = vpop.f32.mrb[0].mxu0
        %v7629 = vadd.f32 %v7436, %v7628
        %v7630 = vpop.f32.mrb[0].mxu0
        %v7631 = vadd.f32 %v7438, %v7630
        %v7632 = vpop.f32.mrb[0].mxu0
        %v7633 = vadd.f32 %v7440, %v7632
        %7634 = vmatprep.mubr.bf16.mxu0 %v5122
        %7635 = vmatmul.mubr.bf16.gmra.mrb[0].mxu0 %v5121
        %v7636 = vpop.f32.mrb[0].mxu0
        %v7637 = vadd.f32 %v7444, %v7636
        %v7638 = vpop.f32.mrb[0].mxu0
        %v7639 = vadd.f32 %v7446, %v7638
        %v7640 = vpop.f32.mrb[0].mxu0
        %v7641 = vadd.f32 %v7448, %v7640
        %v7642 = vpop.f32.mrb[0].mxu0
        %v7643 = vadd.f32 %v7450, %v7642
        %7644 = vdwg.mxu0
        %7645 = vmatprep.subr.bf16.mxu0 %v6635
        %7646 = vmatpush1.bf16.msra.mxu0 %v6634
        %7647 = vmatprep.subr.bf16.mxu0 %v6638
        %7648 = vmatpush1.bf16.msra.mxu0 %v6637
        %7649 = vmatprep.subr.bf16.mxu0 %v6641
        %7650 = vmatpush1.bf16.msra.mxu0 %v6640
        %7651 = vmatprep.subr.bf16.mxu0 %v6644
        %7652 = vmatpush1.bf16.msra.mxu0 %v6643
        %7653 = vmatprep.subr.bf16.mxu0 %v6647
        %7654 = vmatpush1.bf16.msra.mxu0 %v6646
        %7655 = vmatprep.subr.bf16.mxu0 %v6650
        %7656 = vmatpush1.bf16.msra.mxu0 %v6649
        %7657 = vmatprep.subr.bf16.mxu0 %v6653
        %7658 = vmatpush1.bf16.msra.mxu0 %v6652
        %7659 = vmatprep.subr.bf16.mxu0 %v6656
        %7660 = vmatpush1.bf16.msra.mxu0 %v6655
        %7661 = vmatprep.subr.bf16.mxu0 %v6659
        %7662 = vmatpush1.bf16.msra.mxu0 %v6658
        %7663 = vmatprep.subr.bf16.mxu0 %v6662
        %7664 = vmatpush1.bf16.msra.mxu0 %v6661
        %7665 = vmatprep.subr.bf16.mxu0 %v6665
        %7666 = vmatpush1.bf16.msra.mxu0 %v6664
        %7667 = vmatprep.subr.bf16.mxu0 %v6668
        %7668 = vmatpush1.bf16.msra.mxu0 %v6667
        %7669 = vmatprep.subr.bf16.mxu0 %v6671
        %7670 = vmatpush1.bf16.msra.mxu0 %v6670
        %7671 = vmatprep.subr.bf16.mxu0 %v6674
        %7672 = vmatpush1.bf16.msra.mxu0 %v6673
        %7673 = vmatprep.subr.bf16.mxu0 %v6677
        %7674 = vmatpush1.bf16.msra.mxu0 %v6676
        %7675 = vmatprep.subr.bf16.mxu0 %v6680
        %7676 = vmatpush1.bf16.msra.mxu0 %v6679
        %7677 = vmatprep.mubr.bf16.mxu0 %v4944
        %7678 = vmatmul.mubr.bf16.gmra.mrb[0].mxu0 %v4943
        %v7679 = vpop.f32.mrb[0].mxu0
        %v7680 = vadd.f32 %v7487, %v7679
        %v7681 = vpop.f32.mrb[0].mxu0
        %v7682 = vadd.f32 %v7489, %v7681
        %v7683 = vpop.f32.mrb[0].mxu0
        %v7684 = vadd.f32 %v7491, %v7683
        %v7685 = vpop.f32.mrb[0].mxu0
        %v7686 = vadd.f32 %v7493, %v7685
        %7687 = vmatprep.mubr.bf16.mxu0 %v4956
        %7688 = vmatmul.mubr.bf16.gmra.mrb[0].mxu0 %v4955
        %v7689 = vpop.f32.mrb[0].mxu0
        %v7690 = vadd.f32 %v7497, %v7689
        %v7691 = vpop.f32.mrb[0].mxu0
        %v7692 = vadd.f32 %v7499, %v7691
        %v7693 = vpop.f32.mrb[0].mxu0
        %v7694 = vadd.f32 %v7501, %v7693
        %v7695 = vpop.f32.mrb[0].mxu0
        %v7696 = vadd.f32 %v7503, %v7695
        %7697 = vmatprep.mubr.bf16.mxu0 %v4968
        %7698 = vmatmul.mubr.bf16.gmra.mrb[0].mxu0 %v4967
        %v7699 = vpop.f32.mrb[0].mxu0
        %v7700 = vadd.f32 %v7507, %v7699
        %v7701 = vpop.f32.mrb[0].mxu0
        %v7702 = vadd.f32 %v7509, %v7701
        %v7703 = vpop.f32.mrb[0].mxu0
        %v7704 = vadd.f32 %v7511, %v7703
        %v7705 = vpop.f32.mrb[0].mxu0
        %v7706 = vadd.f32 %v7513, %v7705
        %7707 = vmatprep.mubr.bf16.mxu0 %v4980
        %7708 = vmatmul.mubr.bf16.gmra.mrb[0].mxu0 %v4979
        %v7709 = vpop.f32.mrb[0].mxu0
        %v7710 = vadd.f32 %v7517, %v7709
        %v7711 = vpop.f32.mrb[0].mxu0
        %v7712 = vadd.f32 %v7519, %v7711
        %v7713 = vpop.f32.mrb[0].mxu0
        %v7714 = vadd.f32 %v7521, %v7713
        %v7715 = vpop.f32.mrb[0].mxu0
        %v7716 = vadd.f32 %v7523, %v7715
        %7717 = vmatprep.mubr.bf16.mxu0 %v4992
        %7718 = vmatmul.mubr.bf16.gmra.mrb[0].mxu0 %v4991
        %v7719 = vpop.f32.mrb[0].mxu0
        %v7720 = vadd.f32 %v7527, %v7719
        %v7721 = vpop.f32.mrb[0].mxu0
        %v7722 = vadd.f32 %v7529, %v7721
        %v7723 = vpop.f32.mrb[0].mxu0
        %v7724 = vadd.f32 %v7531, %v7723
        %v7725 = vpop.f32.mrb[0].mxu0
        %v7726 = vadd.f32 %v7533, %v7725
        %7727 = vmatprep.mubr.bf16.mxu0 %v5004
        %7728 = vmatmul.mubr.bf16.gmra.mrb[0].mxu0 %v5003
        %v7729 = vpop.f32.mrb[0].mxu0
        %v7730 = vadd.f32 %v7537, %v7729
        %v7731 = vpop.f32.mrb[0].mxu0
        %v7732 = vadd.f32 %v7539, %v7731
        %v7733 = vpop.f32.mrb[0].mxu0
        %v7734 = vadd.f32 %v7541, %v7733
        %v7735 = vpop.f32.mrb[0].mxu0
        %v7736 = vadd.f32 %v7543, %v7735
        %7737 = vmatprep.mubr.bf16.mxu0 %v5016
        %7738 = vmatmul.mubr.bf16.gmra.mrb[0].mxu0 %v5015
        %v7739 = vpop.f32.mrb[0].mxu0
        %v7740 = vadd.f32 %v7547, %v7739
        %v7741 = vpop.f32.mrb[0].mxu0
        %v7742 = vadd.f32 %v7549, %v7741
        %v7743 = vpop.f32.mrb[0].mxu0
        %v7744 = vadd.f32 %v7551, %v7743
        %v7745 = vpop.f32.mrb[0].mxu0
        %v7746 = vadd.f32 %v7553, %v7745
        %7747 = vmatprep.mubr.bf16.mxu0 %v5028
        %7748 = vmatmul.mubr.bf16.gmra.mrb[0].mxu0 %v5027
        %v7749 = vpop.f32.mrb[0].mxu0
        %v7750 = vadd.f32 %v7557, %v7749
        %v7751 = vpop.f32.mrb[0].mxu0
        %v7752 = vadd.f32 %v7559, %v7751
        %v7753 = vpop.f32.mrb[0].mxu0
        %v7754 = vadd.f32 %v7561, %v7753
        %v7755 = vpop.f32.mrb[0].mxu0
        %v7756 = vadd.f32 %v7563, %v7755
        %7757 = vmatprep.mubr.bf16.mxu0 %v5040
        %7758 = vmatmul.mubr.bf16.gmra.mrb[0].mxu0 %v5039
        %v7759 = vpop.f32.mrb[0].mxu0
        %v7760 = vadd.f32 %v7567, %v7759
        %v7761 = vpop.f32.mrb[0].mxu0
        %v7762 = vadd.f32 %v7569, %v7761
        %v7763 = vpop.f32.mrb[0].mxu0
        %v7764 = vadd.f32 %v7571, %v7763
        %v7765 = vpop.f32.mrb[0].mxu0
        %v7766 = vadd.f32 %v7573, %v7765
        %7767 = vmatprep.mubr.bf16.mxu0 %v5052
        %7768 = vmatmul.mubr.bf16.gmra.mrb[0].mxu0 %v5051
        %v7769 = vpop.f32.mrb[0].mxu0
        %v7770 = vadd.f32 %v7577, %v7769
        %v7771 = vpop.f32.mrb[0].mxu0
        %v7772 = vadd.f32 %v7579, %v7771
        %v7773 = vpop.f32.mrb[0].mxu0
        %v7774 = vadd.f32 %v7581, %v7773
        %v7775 = vpop.f32.mrb[0].mxu0
        %v7776 = vadd.f32 %v7583, %v7775
        %7777 = vmatprep.mubr.bf16.mxu0 %v5064
        %7778 = vmatmul.mubr.bf16.gmra.mrb[0].mxu0 %v5063
        %v7779 = vpop.f32.mrb[0].mxu0
        %v7780 = vadd.f32 %v7587, %v7779
        %v7781 = vpop.f32.mrb[0].mxu0
        %v7782 = vadd.f32 %v7589, %v7781
        %v7783 = vpop.f32.mrb[0].mxu0
        %v7784 = vadd.f32 %v7591, %v7783
        %v7785 = vpop.f32.mrb[0].mxu0
        %v7786 = vadd.f32 %v7593, %v7785
        %7787 = vmatprep.mubr.bf16.mxu0 %v5076
        %7788 = vmatmul.mubr.bf16.gmra.mrb[0].mxu0 %v5075
        %v7789 = vpop.f32.mrb[0].mxu0
        %v7790 = vadd.f32 %v7597, %v7789
        %v7791 = vpop.f32.mrb[0].mxu0
        %v7792 = vadd.f32 %v7599, %v7791
        %v7793 = vpop.f32.mrb[0].mxu0
        %v7794 = vadd.f32 %v7601, %v7793
        %v7795 = vpop.f32.mrb[0].mxu0
        %v7796 = vadd.f32 %v7603, %v7795
        %7797 = vmatprep.mubr.bf16.mxu0 %v5088
        %7798 = vmatmul.mubr.bf16.gmra.mrb[0].mxu0 %v5087
        %v7799 = vpop.f32.mrb[0].mxu0
        %v7800 = vadd.f32 %v7607, %v7799
        %v7801 = vpop.f32.mrb[0].mxu0
        %v7802 = vadd.f32 %v7609, %v7801
        %v7803 = vpop.f32.mrb[0].mxu0
        %v7804 = vadd.f32 %v7611, %v7803
        %v7805 = vpop.f32.mrb[0].mxu0
        %v7806 = vadd.f32 %v7613, %v7805
        %7807 = vmatprep.mubr.bf16.mxu0 %v5100
        %7808 = vmatmul.mubr.bf16.gmra.mrb[0].mxu0 %v5099
        %v7809 = vpop.f32.mrb[0].mxu0
        %v7810 = vadd.f32 %v7617, %v7809
        %v7811 = vpop.f32.mrb[0].mxu0
        %v7812 = vadd.f32 %v7619, %v7811
        %v7813 = vpop.f32.mrb[0].mxu0
        %v7814 = vadd.f32 %v7621, %v7813
        %v7815 = vpop.f32.mrb[0].mxu0
        %v7816 = vadd.f32 %v7623, %v7815
        %7817 = vmatprep.mubr.bf16.mxu0 %v5112
        %7818 = vmatmul.mubr.bf16.gmra.mrb[0].mxu0 %v5111
        %v7819 = vpop.f32.mrb[0].mxu0
        %v7820 = vadd.f32 %v7627, %v7819
        %v7821 = vpop.f32.mrb[0].mxu0
        %v7822 = vadd.f32 %v7629, %v7821
        %v7823 = vpop.f32.mrb[0].mxu0
        %v7824 = vadd.f32 %v7631, %v7823
        %v7825 = vpop.f32.mrb[0].mxu0
        %v7826 = vadd.f32 %v7633, %v7825
        %7827 = vmatprep.mubr.bf16.mxu0 %v5124
        %7828 = vmatmul.mubr.bf16.gmra.mrb[0].mxu0 %v5123
        %v7829 = vpop.f32.mrb[0].mxu0
        %v7830 = vadd.f32 %v7637, %v7829
        %v7831 = vpop.f32.mrb[0].mxu0
        %v7832 = vadd.f32 %v7639, %v7831
        %v7833 = vpop.f32.mrb[0].mxu0
        %v7834 = vadd.f32 %v7641, %v7833
        %v7835 = vpop.f32.mrb[0].mxu0
        %v7836 = vadd.f32 %v7643, %v7835
        %7837 = vdwg.mxu0
        %7838 = vmatprep.subr.bf16.mxu0 %v6683
        %7839 = vmatpush1.bf16.msra.mxu0 %v6682
        %7840 = vmatprep.subr.bf16.mxu0 %v6686
        %7841 = vmatpush1.bf16.msra.mxu0 %v6685
        %7842 = vmatprep.subr.bf16.mxu0 %v6689
        %7843 = vmatpush1.bf16.msra.mxu0 %v6688
        %7844 = vmatprep.subr.bf16.mxu0 %v6692
        %7845 = vmatpush1.bf16.msra.mxu0 %v6691
        %7846 = vmatprep.subr.bf16.mxu0 %v6695
        %7847 = vmatpush1.bf16.msra.mxu0 %v6694
        %7848 = vmatprep.subr.bf16.mxu0 %v6698
        %7849 = vmatpush1.bf16.msra.mxu0 %v6697
        %7850 = vmatprep.subr.bf16.mxu0 %v6701
        %7851 = vmatpush1.bf16.msra.mxu0 %v6700
        %7852 = vmatprep.subr.bf16.mxu0 %v6704
        %7853 = vmatpush1.bf16.msra.mxu0 %v6703
        %7854 = vmatprep.subr.bf16.mxu0 %v6707
        %7855 = vmatpush1.bf16.msra.mxu0 %v6706
        %7856 = vmatprep.subr.bf16.mxu0 %v6710
        %7857 = vmatpush1.bf16.msra.mxu0 %v6709
        %7858 = vmatprep.subr.bf16.mxu0 %v6713
        %7859 = vmatpush1.bf16.msra.mxu0 %v6712
        %7860 = vmatprep.subr.bf16.mxu0 %v6716
        %7861 = vmatpush1.bf16.msra.mxu0 %v6715
        %7862 = vmatprep.subr.bf16.mxu0 %v6719
        %7863 = vmatpush1.bf16.msra.mxu0 %v6718
        %7864 = vmatprep.subr.bf16.mxu0 %v6722
        %7865 = vmatpush1.bf16.msra.mxu0 %v6721
        %7866 = vmatprep.subr.bf16.mxu0 %v6725
        %7867 = vmatpush1.bf16.msra.mxu0 %v6724
        %7868 = vmatprep.subr.bf16.mxu0 %v6728
        %7869 = vmatpush1.bf16.msra.mxu0 %v6727
        %7870 = vmatprep.mubr.bf16.mxu0 %v4946
        %7871 = vmatmul.mubr.bf16.gmra.mrb[0].mxu0 %v4945
        %v7872 = vpop.f32.mrb[0].mxu0
        %v7873 = vadd.f32 %v7680, %v7872
        %v7874 = vpop.f32.mrb[0].mxu0
        %v7875 = vadd.f32 %v7682, %v7874
        %v7876 = vpop.f32.mrb[0].mxu0
        %v7877 = vadd.f32 %v7684, %v7876
        %v7878 = vpop.f32.mrb[0].mxu0
        %v7879 = vadd.f32 %v7686, %v7878
        %7880 = vmatprep.mubr.bf16.mxu0 %v4958
        %7881 = vmatmul.mubr.bf16.gmra.mrb[0].mxu0 %v4957
        %v7882 = vpop.f32.mrb[0].mxu0
        %v7883 = vadd.f32 %v7690, %v7882
        %v7884 = vpop.f32.mrb[0].mxu0
        %v7885 = vadd.f32 %v7692, %v7884
        %v7886 = vpop.f32.mrb[0].mxu0
        %v7887 = vadd.f32 %v7694, %v7886
        %v7888 = vpop.f32.mrb[0].mxu0
        %v7889 = vadd.f32 %v7696, %v7888
        %7890 = vmatprep.mubr.bf16.mxu0 %v4970
        %7891 = vmatmul.mubr.bf16.gmra.mrb[0].mxu0 %v4969
        %v7892 = vpop.f32.mrb[0].mxu0
        %v7893 = vadd.f32 %v7700, %v7892
        %v7894 = vpop.f32.mrb[0].mxu0
        %v7895 = vadd.f32 %v7702, %v7894
        %v7896 = vpop.f32.mrb[0].mxu0
        %v7897 = vadd.f32 %v7704, %v7896
        %v7898 = vpop.f32.mrb[0].mxu0
        %v7899 = vadd.f32 %v7706, %v7898
        %7900 = vmatprep.mubr.bf16.mxu0 %v4982
        %7901 = vmatmul.mubr.bf16.gmra.mrb[0].mxu0 %v4981
        %v7902 = vpop.f32.mrb[0].mxu0
        %v7903 = vadd.f32 %v7710, %v7902
        %v7904 = vpop.f32.mrb[0].mxu0
        %v7905 = vadd.f32 %v7712, %v7904
        %v7906 = vpop.f32.mrb[0].mxu0
        %v7907 = vadd.f32 %v7714, %v7906
        %v7908 = vpop.f32.mrb[0].mxu0
        %v7909 = vadd.f32 %v7716, %v7908
        %7910 = vmatprep.mubr.bf16.mxu0 %v4994
        %7911 = vmatmul.mubr.bf16.gmra.mrb[0].mxu0 %v4993
        %v7912 = vpop.f32.mrb[0].mxu0
        %v7913 = vadd.f32 %v7720, %v7912
        %v7914 = vpop.f32.mrb[0].mxu0
        %v7915 = vadd.f32 %v7722, %v7914
        %v7916 = vpop.f32.mrb[0].mxu0
        %v7917 = vadd.f32 %v7724, %v7916
        %v7918 = vpop.f32.mrb[0].mxu0
        %v7919 = vadd.f32 %v7726, %v7918
        %7920 = vmatprep.mubr.bf16.mxu0 %v5006
        %7921 = vmatmul.mubr.bf16.gmra.mrb[0].mxu0 %v5005
        %v7922 = vpop.f32.mrb[0].mxu0
        %v7923 = vadd.f32 %v7730, %v7922
        %v7924 = vpop.f32.mrb[0].mxu0
        %v7925 = vadd.f32 %v7732, %v7924
        %v7926 = vpop.f32.mrb[0].mxu0
        %v7927 = vadd.f32 %v7734, %v7926
        %v7928 = vpop.f32.mrb[0].mxu0
        %v7929 = vadd.f32 %v7736, %v7928
        %7930 = vmatprep.mubr.bf16.mxu0 %v5018
        %7931 = vmatmul.mubr.bf16.gmra.mrb[0].mxu0 %v5017
        %v7932 = vpop.f32.mrb[0].mxu0
        %v7933 = vadd.f32 %v7740, %v7932
        %v7934 = vpop.f32.mrb[0].mxu0
        %v7935 = vadd.f32 %v7742, %v7934
        %v7936 = vpop.f32.mrb[0].mxu0
        %v7937 = vadd.f32 %v7744, %v7936
        %v7938 = vpop.f32.mrb[0].mxu0
        %v7939 = vadd.f32 %v7746, %v7938
        %7940 = vmatprep.mubr.bf16.mxu0 %v5030
        %7941 = vmatmul.mubr.bf16.gmra.mrb[0].mxu0 %v5029
        %v7942 = vpop.f32.mrb[0].mxu0
        %v7943 = vadd.f32 %v7750, %v7942
        %v7944 = vpop.f32.mrb[0].mxu0
        %v7945 = vadd.f32 %v7752, %v7944
        %v7946 = vpop.f32.mrb[0].mxu0
        %v7947 = vadd.f32 %v7754, %v7946
        %v7948 = vpop.f32.mrb[0].mxu0
        %v7949 = vadd.f32 %v7756, %v7948
        %7950 = vmatprep.mubr.bf16.mxu0 %v5042
        %7951 = vmatmul.mubr.bf16.gmra.mrb[0].mxu0 %v5041
        %v7952 = vpop.f32.mrb[0].mxu0
        %v7953 = vadd.f32 %v7760, %v7952
        %v7954 = vpop.f32.mrb[0].mxu0
        %v7955 = vadd.f32 %v7762, %v7954
        %v7956 = vpop.f32.mrb[0].mxu0
        %v7957 = vadd.f32 %v7764, %v7956
        %v7958 = vpop.f32.mrb[0].mxu0
        %v7959 = vadd.f32 %v7766, %v7958
        %7960 = vmatprep.mubr.bf16.mxu0 %v5054
        %7961 = vmatmul.mubr.bf16.gmra.mrb[0].mxu0 %v5053
        %v7962 = vpop.f32.mrb[0].mxu0
        %v7963 = vadd.f32 %v7770, %v7962
        %v7964 = vpop.f32.mrb[0].mxu0
        %v7965 = vadd.f32 %v7772, %v7964
        %v7966 = vpop.f32.mrb[0].mxu0
        %v7967 = vadd.f32 %v7774, %v7966
        %v7968 = vpop.f32.mrb[0].mxu0
        %v7969 = vadd.f32 %v7776, %v7968
        %7970 = vmatprep.mubr.bf16.mxu0 %v5066
        %7971 = vmatmul.mubr.bf16.gmra.mrb[0].mxu0 %v5065
        %v7972 = vpop.f32.mrb[0].mxu0
        %v7973 = vadd.f32 %v7780, %v7972
        %v7974 = vpop.f32.mrb[0].mxu0
        %v7975 = vadd.f32 %v7782, %v7974
        %v7976 = vpop.f32.mrb[0].mxu0
        %v7977 = vadd.f32 %v7784, %v7976
        %v7978 = vpop.f32.mrb[0].mxu0
        %v7979 = vadd.f32 %v7786, %v7978
        %7980 = vmatprep.mubr.bf16.mxu0 %v5078
        %7981 = vmatmul.mubr.bf16.gmra.mrb[0].mxu0 %v5077
        %v7982 = vpop.f32.mrb[0].mxu0
        %v7983 = vadd.f32 %v7790, %v7982
        %v7984 = vpop.f32.mrb[0].mxu0
        %v7985 = vadd.f32 %v7792, %v7984
        %v7986 = vpop.f32.mrb[0].mxu0
        %v7987 = vadd.f32 %v7794, %v7986
        %v7988 = vpop.f32.mrb[0].mxu0
        %v7989 = vadd.f32 %v7796, %v7988
        %7990 = vmatprep.mubr.bf16.mxu0 %v5090
        %7991 = vmatmul.mubr.bf16.gmra.mrb[0].mxu0 %v5089
        %v7992 = vpop.f32.mrb[0].mxu0
        %v7993 = vadd.f32 %v7800, %v7992
        %v7994 = vpop.f32.mrb[0].mxu0
        %v7995 = vadd.f32 %v7802, %v7994
        %v7996 = vpop.f32.mrb[0].mxu0
        %v7997 = vadd.f32 %v7804, %v7996
        %v7998 = vpop.f32.mrb[0].mxu0
        %v7999 = vadd.f32 %v7806, %v7998
        %8000 = vmatprep.mubr.bf16.mxu0 %v5102
        %8001 = vmatmul.mubr.bf16.gmra.mrb[0].mxu0 %v5101
        %v8002 = vpop.f32.mrb[0].mxu0
        %v8003 = vadd.f32 %v7810, %v8002
        %v8004 = vpop.f32.mrb[0].mxu0
        %v8005 = vadd.f32 %v7812, %v8004
        %v8006 = vpop.f32.mrb[0].mxu0
        %v8007 = vadd.f32 %v7814, %v8006
        %v8008 = vpop.f32.mrb[0].mxu0
        %v8009 = vadd.f32 %v7816, %v8008
        %8010 = vmatprep.mubr.bf16.mxu0 %v5114
        %8011 = vmatmul.mubr.bf16.gmra.mrb[0].mxu0 %v5113
        %v8012 = vpop.f32.mrb[0].mxu0
        %v8013 = vadd.f32 %v7820, %v8012
        %v8014 = vpop.f32.mrb[0].mxu0
        %v8015 = vadd.f32 %v7822, %v8014
        %v8016 = vpop.f32.mrb[0].mxu0
        %v8017 = vadd.f32 %v7824, %v8016
        %v8018 = vpop.f32.mrb[0].mxu0
        %v8019 = vadd.f32 %v7826, %v8018
        %8020 = vmatprep.mubr.bf16.mxu0 %v5126
        %8021 = vmatmul.mubr.bf16.gmra.mrb[0].mxu0 %v5125
        %v8022 = vpop.f32.mrb[0].mxu0
        %v8023 = vadd.f32 %v7830, %v8022
        %v8024 = vpop.f32.mrb[0].mxu0
        %v8025 = vadd.f32 %v7832, %v8024
        %v8026 = vpop.f32.mrb[0].mxu0
        %v8027 = vadd.f32 %v7834, %v8026
        %v8028 = vpop.f32.mrb[0].mxu0
        %v8029 = vadd.f32 %v7836, %v8028
        %8030 = vdwg.mxu0
        %8031 = vmatprep.subr.bf16.mxu0 %v6731
        %8032 = vmatpush1.bf16.msra.mxu0 %v6730
        %8033 = vmatprep.subr.bf16.mxu0 %v6734
        %8034 = vmatpush1.bf16.msra.mxu0 %v6733
        %8035 = vmatprep.subr.bf16.mxu0 %v6737
        %8036 = vmatpush1.bf16.msra.mxu0 %v6736
        %8037 = vmatprep.subr.bf16.mxu0 %v6740
        %8038 = vmatpush1.bf16.msra.mxu0 %v6739
        %8039 = vmatprep.subr.bf16.mxu0 %v6743
        %8040 = vmatpush1.bf16.msra.mxu0 %v6742
        %8041 = vmatprep.subr.bf16.mxu0 %v6746
        %8042 = vmatpush1.bf16.msra.mxu0 %v6745
        %8043 = vmatprep.subr.bf16.mxu0 %v6749
        %8044 = vmatpush1.bf16.msra.mxu0 %v6748
        %8045 = vmatprep.subr.bf16.mxu0 %v6752
        %8046 = vmatpush1.bf16.msra.mxu0 %v6751
        %8047 = vmatprep.subr.bf16.mxu0 %v6755
        %8048 = vmatpush1.bf16.msra.mxu0 %v6754
        %8049 = vmatprep.subr.bf16.mxu0 %v6758
        %8050 = vmatpush1.bf16.msra.mxu0 %v6757
        %8051 = vmatprep.subr.bf16.mxu0 %v6761
        %8052 = vmatpush1.bf16.msra.mxu0 %v6760
        %8053 = vmatprep.subr.bf16.mxu0 %v6764
        %8054 = vmatpush1.bf16.msra.mxu0 %v6763
        %8055 = vmatprep.subr.bf16.mxu0 %v6767
        %8056 = vmatpush1.bf16.msra.mxu0 %v6766
        %8057 = vmatprep.subr.bf16.mxu0 %v6770
        %8058 = vmatpush1.bf16.msra.mxu0 %v6769
        %8059 = vmatprep.subr.bf16.mxu0 %v6773
        %8060 = vmatpush1.bf16.msra.mxu0 %v6772
        %8061 = vmatprep.subr.bf16.mxu0 %v6776
        %8062 = vmatpush1.bf16.msra.mxu0 %v6775
        %8063 = vmatprep.mubr.bf16.mxu0 %v4948
        %8064 = vmatmul.mubr.bf16.gmra.mrb[0].mxu0 %v4947
        %v8065 = vpop.f32.mrb[0].mxu0
        %v8066 = vadd.f32 %v7873, %v8065
        %v8067 = vpop.f32.mrb[0].mxu0
        %v8068 = vadd.f32 %v7875, %v8067
        %v8069 = vpop.f32.mrb[0].mxu0
        %v8070 = vadd.f32 %v7877, %v8069
        %v8071 = vpop.f32.mrb[0].mxu0
        %v8072 = vadd.f32 %v7879, %v8071
        %8073 = vmatprep.mubr.bf16.mxu0 %v4960
        %8074 = vmatmul.mubr.bf16.gmra.mrb[0].mxu0 %v4959
        %v8075 = vpop.f32.mrb[0].mxu0
        %v8076 = vadd.f32 %v7883, %v8075
        %v8077 = vpop.f32.mrb[0].mxu0
        %v8078 = vadd.f32 %v7885, %v8077
        %v8079 = vpop.f32.mrb[0].mxu0
        %v8080 = vadd.f32 %v7887, %v8079
        %v8081 = vpop.f32.mrb[0].mxu0
        %v8082 = vadd.f32 %v7889, %v8081
        %8083 = vmatprep.mubr.bf16.mxu0 %v4972
        %8084 = vmatmul.mubr.bf16.gmra.mrb[0].mxu0 %v4971
        %v8085 = vpop.f32.mrb[0].mxu0
        %v8086 = vadd.f32 %v7893, %v8085
        %v8087 = vpop.f32.mrb[0].mxu0
        %v8088 = vadd.f32 %v7895, %v8087
        %v8089 = vpop.f32.mrb[0].mxu0
        %v8090 = vadd.f32 %v7897, %v8089
        %v8091 = vpop.f32.mrb[0].mxu0
        %v8092 = vadd.f32 %v7899, %v8091
        %8093 = vmatprep.mubr.bf16.mxu0 %v4984
        %8094 = vmatmul.mubr.bf16.gmra.mrb[0].mxu0 %v4983
        %v8095 = vpop.f32.mrb[0].mxu0
        %v8096 = vadd.f32 %v7903, %v8095
        %v8097 = vpop.f32.mrb[0].mxu0
        %v8098 = vadd.f32 %v7905, %v8097
        %v8099 = vpop.f32.mrb[0].mxu0
        %v8100 = vadd.f32 %v7907, %v8099
        %v8101 = vpop.f32.mrb[0].mxu0
        %v8102 = vadd.f32 %v7909, %v8101
        %8103 = vmatprep.mubr.bf16.mxu0 %v4996
        %8104 = vmatmul.mubr.bf16.gmra.mrb[0].mxu0 %v4995
        %v8105 = vpop.f32.mrb[0].mxu0
        %v8106 = vadd.f32 %v7913, %v8105
        %v8107 = vpop.f32.mrb[0].mxu0
        %v8108 = vadd.f32 %v7915, %v8107
        %v8109 = vpop.f32.mrb[0].mxu0
        %v8110 = vadd.f32 %v7917, %v8109
        %v8111 = vpop.f32.mrb[0].mxu0
        %v8112 = vadd.f32 %v7919, %v8111
        %8113 = vmatprep.mubr.bf16.mxu0 %v5008
        %8114 = vmatmul.mubr.bf16.gmra.mrb[0].mxu0 %v5007
        %v8115 = vpop.f32.mrb[0].mxu0
        %v8116 = vadd.f32 %v7923, %v8115
        %v8117 = vpop.f32.mrb[0].mxu0
        %v8118 = vadd.f32 %v7925, %v8117
        %v8119 = vpop.f32.mrb[0].mxu0
        %v8120 = vadd.f32 %v7927, %v8119
        %v8121 = vpop.f32.mrb[0].mxu0
        %v8122 = vadd.f32 %v7929, %v8121
        %8123 = vmatprep.mubr.bf16.mxu0 %v5020
        %8124 = vmatmul.mubr.bf16.gmra.mrb[0].mxu0 %v5019
        %v8125 = vpop.f32.mrb[0].mxu0
        %v8126 = vadd.f32 %v7933, %v8125
        %v8127 = vpop.f32.mrb[0].mxu0
        %v8128 = vadd.f32 %v7935, %v8127
        %v8129 = vpop.f32.mrb[0].mxu0
        %v8130 = vadd.f32 %v7937, %v8129
        %v8131 = vpop.f32.mrb[0].mxu0
        %v8132 = vadd.f32 %v7939, %v8131
        %8133 = vmatprep.mubr.bf16.mxu0 %v5032
        %8134 = vmatmul.mubr.bf16.gmra.mrb[0].mxu0 %v5031
        %v8135 = vpop.f32.mrb[0].mxu0
        %v8136 = vadd.f32 %v7943, %v8135
        %v8137 = vpop.f32.mrb[0].mxu0
        %v8138 = vadd.f32 %v7945, %v8137
        %v8139 = vpop.f32.mrb[0].mxu0
        %v8140 = vadd.f32 %v7947, %v8139
        %v8141 = vpop.f32.mrb[0].mxu0
        %v8142 = vadd.f32 %v7949, %v8141
        %8143 = vmatprep.mubr.bf16.mxu0 %v5044
        %8144 = vmatmul.mubr.bf16.gmra.mrb[0].mxu0 %v5043
        %v8145 = vpop.f32.mrb[0].mxu0
        %v8146 = vadd.f32 %v7953, %v8145
        %v8147 = vpop.f32.mrb[0].mxu0
        %v8148 = vadd.f32 %v7955, %v8147
        %v8149 = vpop.f32.mrb[0].mxu0
        %v8150 = vadd.f32 %v7957, %v8149
        %v8151 = vpop.f32.mrb[0].mxu0
        %v8152 = vadd.f32 %v7959, %v8151
        %8153 = vmatprep.mubr.bf16.mxu0 %v5056
        %8154 = vmatmul.mubr.bf16.gmra.mrb[0].mxu0 %v5055
        %v8155 = vpop.f32.mrb[0].mxu0
        %v8156 = vadd.f32 %v7963, %v8155
        %v8157 = vpop.f32.mrb[0].mxu0
        %v8158 = vadd.f32 %v7965, %v8157
        %v8159 = vpop.f32.mrb[0].mxu0
        %v8160 = vadd.f32 %v7967, %v8159
        %v8161 = vpop.f32.mrb[0].mxu0
        %v8162 = vadd.f32 %v7969, %v8161
        %8163 = vmatprep.mubr.bf16.mxu0 %v5068
        %8164 = vmatmul.mubr.bf16.gmra.mrb[0].mxu0 %v5067
        %v8165 = vpop.f32.mrb[0].mxu0
        %v8166 = vadd.f32 %v7973, %v8165
        %v8167 = vpop.f32.mrb[0].mxu0
        %v8168 = vadd.f32 %v7975, %v8167
        %v8169 = vpop.f32.mrb[0].mxu0
        %v8170 = vadd.f32 %v7977, %v8169
        %v8171 = vpop.f32.mrb[0].mxu0
        %v8172 = vadd.f32 %v7979, %v8171
        %8173 = vmatprep.mubr.bf16.mxu0 %v5080
        %8174 = vmatmul.mubr.bf16.gmra.mrb[0].mxu0 %v5079
        %v8175 = vpop.f32.mrb[0].mxu0
        %v8176 = vadd.f32 %v7983, %v8175
        %v8177 = vpop.f32.mrb[0].mxu0
        %v8178 = vadd.f32 %v7985, %v8177
        %v8179 = vpop.f32.mrb[0].mxu0
        %v8180 = vadd.f32 %v7987, %v8179
        %v8181 = vpop.f32.mrb[0].mxu0
        %v8182 = vadd.f32 %v7989, %v8181
        %8183 = vmatprep.mubr.bf16.mxu0 %v5092
        %8184 = vmatmul.mubr.bf16.gmra.mrb[0].mxu0 %v5091
        %v8185 = vpop.f32.mrb[0].mxu0
        %v8186 = vadd.f32 %v7993, %v8185
        %v8187 = vpop.f32.mrb[0].mxu0
        %v8188 = vadd.f32 %v7995, %v8187
        %v8189 = vpop.f32.mrb[0].mxu0
        %v8190 = vadd.f32 %v7997, %v8189
        %v8191 = vpop.f32.mrb[0].mxu0
        %v8192 = vadd.f32 %v7999, %v8191
        %8193 = vmatprep.mubr.bf16.mxu0 %v5104
        %8194 = vmatmul.mubr.bf16.gmra.mrb[0].mxu0 %v5103
        %v8195 = vpop.f32.mrb[0].mxu0
        %v8196 = vadd.f32 %v8003, %v8195
        %v8197 = vpop.f32.mrb[0].mxu0
        %v8198 = vadd.f32 %v8005, %v8197
        %v8199 = vpop.f32.mrb[0].mxu0
        %v8200 = vadd.f32 %v8007, %v8199
        %v8201 = vpop.f32.mrb[0].mxu0
        %v8202 = vadd.f32 %v8009, %v8201
        %8203 = vmatprep.mubr.bf16.mxu0 %v5116
        %8204 = vmatmul.mubr.bf16.gmra.mrb[0].mxu0 %v5115
        %v8205 = vpop.f32.mrb[0].mxu0
        %v8206 = vadd.f32 %v8013, %v8205
        %v8207 = vpop.f32.mrb[0].mxu0
        %v8208 = vadd.f32 %v8015, %v8207
        %v8209 = vpop.f32.mrb[0].mxu0
        %v8210 = vadd.f32 %v8017, %v8209
        %v8211 = vpop.f32.mrb[0].mxu0
        %v8212 = vadd.f32 %v8019, %v8211
        %8213 = vmatprep.mubr.bf16.mxu0 %v5128
        %8214 = vmatmul.mubr.bf16.gmra.mrb[0].mxu0 %v5127
        %v8215 = vpop.f32.mrb[0].mxu0
        %v8216 = vadd.f32 %v8023, %v8215
        %v8217 = vpop.f32.mrb[0].mxu0
        %v8218 = vadd.f32 %v8025, %v8217
        %v8219 = vpop.f32.mrb[0].mxu0
        %v8220 = vadd.f32 %v8027, %v8219
        %v8221 = vpop.f32.mrb[0].mxu0
        %v8222 = vadd.f32 %v8029, %v8221
        %8223 = vdwg.mxu0
        %8224 = vmatprep.subr.bf16.mxu0 0
        %8225 = vmatpush1.bf16.msra.mxu0 %v6492
        %8226 = vmatprep.subr.bf16.mxu0 0
        %8227 = vmatpush1.bf16.msra.mxu0 %v6495
        %8228 = vmatprep.subr.bf16.mxu0 0
        %8229 = vmatpush1.bf16.msra.mxu0 %v6498
        %8230 = vmatprep.subr.bf16.mxu0 0
        %8231 = vmatpush1.bf16.msra.mxu0 %v6501
        %8232 = vmatprep.subr.bf16.mxu0 0
        %8233 = vmatpush1.bf16.msra.mxu0 %v6504
        %8234 = vmatprep.subr.bf16.mxu0 0
        %8235 = vmatpush1.bf16.msra.mxu0 %v6507
        %8236 = vmatprep.subr.bf16.mxu0 0
        %8237 = vmatpush1.bf16.msra.mxu0 %v6510
        %8238 = vmatprep.subr.bf16.mxu0 0
        %8239 = vmatpush1.bf16.msra.mxu0 %v6513
        %8240 = vmatprep.subr.bf16.mxu0 0
        %8241 = vmatpush1.bf16.msra.mxu0 %v6516
        %8242 = vmatprep.subr.bf16.mxu0 0
        %8243 = vmatpush1.bf16.msra.mxu0 %v6519
        %8244 = vmatprep.subr.bf16.mxu0 0
        %8245 = vmatpush1.bf16.msra.mxu0 %v6522
        %8246 = vmatprep.subr.bf16.mxu0 0
        %8247 = vmatpush1.bf16.msra.mxu0 %v6525
        %8248 = vmatprep.subr.bf16.mxu0 0
        %8249 = vmatpush1.bf16.msra.mxu0 %v6528
        %8250 = vmatprep.subr.bf16.mxu0 0
        %8251 = vmatpush1.bf16.msra.mxu0 %v6531
        %8252 = vmatprep.subr.bf16.mxu0 0
        %8253 = vmatpush1.bf16.msra.mxu0 %v6534
        %8254 = vmatprep.subr.bf16.mxu0 0
        %8255 = vmatpush1.bf16.msra.mxu0 %v6537
        %8256 = vmatprep.mubr.bf16.mxu0 %v4938
        %8257 = vmatmul.mubr.bf16.gmra.mrb[0].mxu0 %v4937
        %v8258 = vpop.f32.mrb[0].mxu0
        %v8259 = vadd.f32 %v5526, %v8258
        %v8260 = vpop.f32.mrb[0].mxu0
        %v8261 = vpop.f32.mrb[0].mxu0
        %v8262 = vadd.f32 %v5526, %v8261
        %v8263 = vpop.f32.mrb[0].mxu0
        %8264 = vmatprep.mubr.bf16.mxu0 %v4950
        %8265 = vmatmul.mubr.bf16.gmra.mrb[0].mxu0 %v4949
        %v8266 = vpop.f32.mrb[0].mxu0
        %v8267 = vadd.f32 %v5526, %v8266
        %v8268 = vpop.f32.mrb[0].mxu0
        %v8269 = vpop.f32.mrb[0].mxu0
        %v8270 = vadd.f32 %v5526, %v8269
        %v8271 = vpop.f32.mrb[0].mxu0
        %8272 = vmatprep.mubr.bf16.mxu0 %v4962
        %8273 = vmatmul.mubr.bf16.gmra.mrb[0].mxu0 %v4961
        %v8274 = vpop.f32.mrb[0].mxu0
        %v8275 = vadd.f32 %v5526, %v8274
        %v8276 = vpop.f32.mrb[0].mxu0
        %v8277 = vpop.f32.mrb[0].mxu0
        %v8278 = vadd.f32 %v5526, %v8277
        %v8279 = vpop.f32.mrb[0].mxu0
        %8280 = vmatprep.mubr.bf16.mxu0 %v4974
        %8281 = vmatmul.mubr.bf16.gmra.mrb[0].mxu0 %v4973
        %v8282 = vpop.f32.mrb[0].mxu0
        %v8283 = vadd.f32 %v5526, %v8282
        %v8284 = vpop.f32.mrb[0].mxu0
        %v8285 = vpop.f32.mrb[0].mxu0
        %v8286 = vadd.f32 %v5526, %v8285
        %v8287 = vpop.f32.mrb[0].mxu0
        %8288 = vmatprep.mubr.bf16.mxu0 %v4986
        %8289 = vmatmul.mubr.bf16.gmra.mrb[0].mxu0 %v4985
        %v8290 = vpop.f32.mrb[0].mxu0
        %v8291 = vadd.f32 %v5526, %v8290
        %v8292 = vpop.f32.mrb[0].mxu0
        %v8293 = vpop.f32.mrb[0].mxu0
        %v8294 = vadd.f32 %v5526, %v8293
        %v8295 = vpop.f32.mrb[0].mxu0
        %8296 = vmatprep.mubr.bf16.mxu0 %v4998
        %8297 = vmatmul.mubr.bf16.gmra.mrb[0].mxu0 %v4997
        %v8298 = vpop.f32.mrb[0].mxu0
        %v8299 = vadd.f32 %v5526, %v8298
        %v8300 = vpop.f32.mrb[0].mxu0
        %v8301 = vpop.f32.mrb[0].mxu0
        %v8302 = vadd.f32 %v5526, %v8301
        %v8303 = vpop.f32.mrb[0].mxu0
        %8304 = vmatprep.mubr.bf16.mxu0 %v5010
        %8305 = vmatmul.mubr.bf16.gmra.mrb[0].mxu0 %v5009
        %v8306 = vpop.f32.mrb[0].mxu0
        %v8307 = vadd.f32 %v5526, %v8306
        %v8308 = vpop.f32.mrb[0].mxu0
        %v8309 = vpop.f32.mrb[0].mxu0
        %v8310 = vadd.f32 %v5526, %v8309
        %v8311 = vpop.f32.mrb[0].mxu0
        %8312 = vmatprep.mubr.bf16.mxu0 %v5022
        %8313 = vmatmul.mubr.bf16.gmra.mrb[0].mxu0 %v5021
        %v8314 = vpop.f32.mrb[0].mxu0
        %v8315 = vadd.f32 %v5526, %v8314
        %v8316 = vpop.f32.mrb[0].mxu0
        %v8317 = vpop.f32.mrb[0].mxu0
        %v8318 = vadd.f32 %v5526, %v8317
        %v8319 = vpop.f32.mrb[0].mxu0
        %8320 = vmatprep.mubr.bf16.mxu0 %v5034
        %8321 = vmatmul.mubr.bf16.gmra.mrb[0].mxu0 %v5033
        %v8322 = vpop.f32.mrb[0].mxu0
        %v8323 = vadd.f32 %v5526, %v8322
        %v8324 = vpop.f32.mrb[0].mxu0
        %v8325 = vpop.f32.mrb[0].mxu0
        %v8326 = vadd.f32 %v5526, %v8325
        %v8327 = vpop.f32.mrb[0].mxu0
        %8328 = vmatprep.mubr.bf16.mxu0 %v5046
        %8329 = vmatmul.mubr.bf16.gmra.mrb[0].mxu0 %v5045
        %v8330 = vpop.f32.mrb[0].mxu0
        %v8331 = vadd.f32 %v5526, %v8330
        %v8332 = vpop.f32.mrb[0].mxu0
        %v8333 = vpop.f32.mrb[0].mxu0
        %v8334 = vadd.f32 %v5526, %v8333
        %v8335 = vpop.f32.mrb[0].mxu0
        %8336 = vmatprep.mubr.bf16.mxu0 %v5058
        %8337 = vmatmul.mubr.bf16.gmra.mrb[0].mxu0 %v5057
        %v8338 = vpop.f32.mrb[0].mxu0
        %v8339 = vadd.f32 %v5526, %v8338
        %v8340 = vpop.f32.mrb[0].mxu0
        %v8341 = vpop.f32.mrb[0].mxu0
        %v8342 = vadd.f32 %v5526, %v8341
        %v8343 = vpop.f32.mrb[0].mxu0
        %8344 = vmatprep.mubr.bf16.mxu0 %v5070
        %8345 = vmatmul.mubr.bf16.gmra.mrb[0].mxu0 %v5069
        %v8346 = vpop.f32.mrb[0].mxu0
        %v8347 = vadd.f32 %v5526, %v8346
        %v8348 = vpop.f32.mrb[0].mxu0
        %v8349 = vpop.f32.mrb[0].mxu0
        %v8350 = vadd.f32 %v5526, %v8349
        %v8351 = vpop.f32.mrb[0].mxu0
        %8352 = vmatprep.mubr.bf16.mxu0 %v5082
        %8353 = vmatmul.mubr.bf16.gmra.mrb[0].mxu0 %v5081
        %v8354 = vpop.f32.mrb[0].mxu0
        %v8355 = vadd.f32 %v5526, %v8354
        %v8356 = vpop.f32.mrb[0].mxu0
        %v8357 = vpop.f32.mrb[0].mxu0
        %v8358 = vadd.f32 %v5526, %v8357
        %v8359 = vpop.f32.mrb[0].mxu0
        %8360 = vmatprep.mubr.bf16.mxu0 %v5094
        %8361 = vmatmul.mubr.bf16.gmra.mrb[0].mxu0 %v5093
        %v8362 = vpop.f32.mrb[0].mxu0
        %v8363 = vadd.f32 %v5526, %v8362
        %v8364 = vpop.f32.mrb[0].mxu0
        %v8365 = vpop.f32.mrb[0].mxu0
        %v8366 = vadd.f32 %v5526, %v8365
        %v8367 = vpop.f32.mrb[0].mxu0
        %8368 = vmatprep.mubr.bf16.mxu0 %v5106
        %8369 = vmatmul.mubr.bf16.gmra.mrb[0].mxu0 %v5105
        %v8370 = vpop.f32.mrb[0].mxu0
        %v8371 = vadd.f32 %v5526, %v8370
        %v8372 = vpop.f32.mrb[0].mxu0
        %v8373 = vpop.f32.mrb[0].mxu0
        %v8374 = vadd.f32 %v5526, %v8373
        %v8375 = vpop.f32.mrb[0].mxu0
        %8376 = vmatprep.mubr.bf16.mxu0 %v5118
        %8377 = vmatmul.mubr.bf16.gmra.mrb[0].mxu0 %v5117
        %v8378 = vpop.f32.mrb[0].mxu0
        %v8379 = vadd.f32 %v5526, %v8378
        %v8380 = vpop.f32.mrb[0].mxu0
        %v8381 = vpop.f32.mrb[0].mxu0
        %v8382 = vadd.f32 %v5526, %v8381
        %v8383 = vpop.f32.mrb[0].mxu0
        %8384 = vdwg.mxu0
        %8385 = vmatprep.subr.bf16.mxu0 0
        %8386 = vmatpush1.bf16.msra.mxu0 %v6540
        %8387 = vmatprep.subr.bf16.mxu0 0
        %8388 = vmatpush1.bf16.msra.mxu0 %v6543
        %8389 = vmatprep.subr.bf16.mxu0 0
        %8390 = vmatpush1.bf16.msra.mxu0 %v6546
        %8391 = vmatprep.subr.bf16.mxu0 0
        %8392 = vmatpush1.bf16.msra.mxu0 %v6549
        %8393 = vmatprep.subr.bf16.mxu0 0
        %8394 = vmatpush1.bf16.msra.mxu0 %v6552
        %8395 = vmatprep.subr.bf16.mxu0 0
        %8396 = vmatpush1.bf16.msra.mxu0 %v6555
        %8397 = vmatprep.subr.bf16.mxu0 0
        %8398 = vmatpush1.bf16.msra.mxu0 %v6558
        %8399 = vmatprep.subr.bf16.mxu0 0
        %8400 = vmatpush1.bf16.msra.mxu0 %v6561
        %8401 = vmatprep.subr.bf16.mxu0 0
        %8402 = vmatpush1.bf16.msra.mxu0 %v6564
        %8403 = vmatprep.subr.bf16.mxu0 0
        %8404 = vmatpush1.bf16.msra.mxu0 %v6567
        %8405 = vmatprep.subr.bf16.mxu0 0
        %8406 = vmatpush1.bf16.msra.mxu0 %v6570
        %8407 = vmatprep.subr.bf16.mxu0 0
        %8408 = vmatpush1.bf16.msra.mxu0 %v6573
        %8409 = vmatprep.subr.bf16.mxu0 0
        %8410 = vmatpush1.bf16.msra.mxu0 %v6576
        %8411 = vmatprep.subr.bf16.mxu0 0
        %8412 = vmatpush1.bf16.msra.mxu0 %v6579
        %8413 = vmatprep.subr.bf16.mxu0 0
        %8414 = vmatpush1.bf16.msra.mxu0 %v6582
        %8415 = vmatprep.subr.bf16.mxu0 0
        %8416 = vmatpush1.bf16.msra.mxu0 %v6585
        %8417 = vmatprep.mubr.bf16.mxu0 %v4940
        %8418 = vmatmul.mubr.bf16.gmra.mrb[0].mxu0 %v4939
        %v8419 = vpop.f32.mrb[0].mxu0
        %v8420 = vadd.f32 %v8259, %v8419
        %v8421 = vpop.f32.mrb[0].mxu0
        %v8422 = vpop.f32.mrb[0].mxu0
        %v8423 = vadd.f32 %v8262, %v8422
        %v8424 = vpop.f32.mrb[0].mxu0
        %8425 = vmatprep.mubr.bf16.mxu0 %v4952
        %8426 = vmatmul.mubr.bf16.gmra.mrb[0].mxu0 %v4951
        %v8427 = vpop.f32.mrb[0].mxu0
        %v8428 = vadd.f32 %v8267, %v8427
        %v8429 = vpop.f32.mrb[0].mxu0
        %v8430 = vpop.f32.mrb[0].mxu0
        %v8431 = vadd.f32 %v8270, %v8430
        %v8432 = vpop.f32.mrb[0].mxu0
        %8433 = vmatprep.mubr.bf16.mxu0 %v4964
        %8434 = vmatmul.mubr.bf16.gmra.mrb[0].mxu0 %v4963
        %v8435 = vpop.f32.mrb[0].mxu0
        %v8436 = vadd.f32 %v8275, %v8435
        %v8437 = vpop.f32.mrb[0].mxu0
        %v8438 = vpop.f32.mrb[0].mxu0
        %v8439 = vadd.f32 %v8278, %v8438
        %v8440 = vpop.f32.mrb[0].mxu0
        %8441 = vmatprep.mubr.bf16.mxu0 %v4976
        %8442 = vmatmul.mubr.bf16.gmra.mrb[0].mxu0 %v4975
        %v8443 = vpop.f32.mrb[0].mxu0
        %v8444 = vadd.f32 %v8283, %v8443
        %v8445 = vpop.f32.mrb[0].mxu0
        %v8446 = vpop.f32.mrb[0].mxu0
        %v8447 = vadd.f32 %v8286, %v8446
        %v8448 = vpop.f32.mrb[0].mxu0
        %8449 = vmatprep.mubr.bf16.mxu0 %v4988
        %8450 = vmatmul.mubr.bf16.gmra.mrb[0].mxu0 %v4987
        %v8451 = vpop.f32.mrb[0].mxu0
        %v8452 = vadd.f32 %v8291, %v8451
        %v8453 = vpop.f32.mrb[0].mxu0
        %v8454 = vpop.f32.mrb[0].mxu0
        %v8455 = vadd.f32 %v8294, %v8454
        %v8456 = vpop.f32.mrb[0].mxu0
        %8457 = vmatprep.mubr.bf16.mxu0 %v5000
        %8458 = vmatmul.mubr.bf16.gmra.mrb[0].mxu0 %v4999
        %v8459 = vpop.f32.mrb[0].mxu0
        %v8460 = vadd.f32 %v8299, %v8459
        %v8461 = vpop.f32.mrb[0].mxu0
        %v8462 = vpop.f32.mrb[0].mxu0
        %v8463 = vadd.f32 %v8302, %v8462
        %v8464 = vpop.f32.mrb[0].mxu0
        %8465 = vmatprep.mubr.bf16.mxu0 %v5012
        %8466 = vmatmul.mubr.bf16.gmra.mrb[0].mxu0 %v5011
        %v8467 = vpop.f32.mrb[0].mxu0
        %v8468 = vadd.f32 %v8307, %v8467
        %v8469 = vpop.f32.mrb[0].mxu0
        %v8470 = vpop.f32.mrb[0].mxu0
        %v8471 = vadd.f32 %v8310, %v8470
        %v8472 = vpop.f32.mrb[0].mxu0
        %8473 = vmatprep.mubr.bf16.mxu0 %v5024
        %8474 = vmatmul.mubr.bf16.gmra.mrb[0].mxu0 %v5023
        %v8475 = vpop.f32.mrb[0].mxu0
        %v8476 = vadd.f32 %v8315, %v8475
        %v8477 = vpop.f32.mrb[0].mxu0
        %v8478 = vpop.f32.mrb[0].mxu0
        %v8479 = vadd.f32 %v8318, %v8478
        %v8480 = vpop.f32.mrb[0].mxu0
        %8481 = vmatprep.mubr.bf16.mxu0 %v5036
        %8482 = vmatmul.mubr.bf16.gmra.mrb[0].mxu0 %v5035
        %v8483 = vpop.f32.mrb[0].mxu0
        %v8484 = vadd.f32 %v8323, %v8483
        %v8485 = vpop.f32.mrb[0].mxu0
        %v8486 = vpop.f32.mrb[0].mxu0
        %v8487 = vadd.f32 %v8326, %v8486
        %v8488 = vpop.f32.mrb[0].mxu0
        %8489 = vmatprep.mubr.bf16.mxu0 %v5048
        %8490 = vmatmul.mubr.bf16.gmra.mrb[0].mxu0 %v5047
        %v8491 = vpop.f32.mrb[0].mxu0
        %v8492 = vadd.f32 %v8331, %v8491
        %v8493 = vpop.f32.mrb[0].mxu0
        %v8494 = vpop.f32.mrb[0].mxu0
        %v8495 = vadd.f32 %v8334, %v8494
        %v8496 = vpop.f32.mrb[0].mxu0
        %8497 = vmatprep.mubr.bf16.mxu0 %v5060
        %8498 = vmatmul.mubr.bf16.gmra.mrb[0].mxu0 %v5059
        %v8499 = vpop.f32.mrb[0].mxu0
        %v8500 = vadd.f32 %v8339, %v8499
        %v8501 = vpop.f32.mrb[0].mxu0
        %v8502 = vpop.f32.mrb[0].mxu0
        %v8503 = vadd.f32 %v8342, %v8502
        %v8504 = vpop.f32.mrb[0].mxu0
        %8505 = vmatprep.mubr.bf16.mxu0 %v5072
        %8506 = vmatmul.mubr.bf16.gmra.mrb[0].mxu0 %v5071
        %v8507 = vpop.f32.mrb[0].mxu0
        %v8508 = vadd.f32 %v8347, %v8507
        %v8509 = vpop.f32.mrb[0].mxu0
        %v8510 = vpop.f32.mrb[0].mxu0
        %v8511 = vadd.f32 %v8350, %v8510
        %v8512 = vpop.f32.mrb[0].mxu0
        %8513 = vmatprep.mubr.bf16.mxu0 %v5084
        %8514 = vmatmul.mubr.bf16.gmra.mrb[0].mxu0 %v5083
        %v8515 = vpop.f32.mrb[0].mxu0
        %v8516 = vadd.f32 %v8355, %v8515
        %v8517 = vpop.f32.mrb[0].mxu0
        %v8518 = vpop.f32.mrb[0].mxu0
        %v8519 = vadd.f32 %v8358, %v8518
        %v8520 = vpop.f32.mrb[0].mxu0
        %8521 = vmatprep.mubr.bf16.mxu0 %v5096
        %8522 = vmatmul.mubr.bf16.gmra.mrb[0].mxu0 %v5095
        %v8523 = vpop.f32.mrb[0].mxu0
        %v8524 = vadd.f32 %v8363, %v8523
        %v8525 = vpop.f32.mrb[0].mxu0
        %v8526 = vpop.f32.mrb[0].mxu0
        %v8527 = vadd.f32 %v8366, %v8526
        %v8528 = vpop.f32.mrb[0].mxu0
        %8529 = vmatprep.mubr.bf16.mxu0 %v5108
        %8530 = vmatmul.mubr.bf16.gmra.mrb[0].mxu0 %v5107
        %v8531 = vpop.f32.mrb[0].mxu0
        %v8532 = vadd.f32 %v8371, %v8531
        %v8533 = vpop.f32.mrb[0].mxu0
        %v8534 = vpop.f32.mrb[0].mxu0
        %v8535 = vadd.f32 %v8374, %v8534
        %v8536 = vpop.f32.mrb[0].mxu0
        %8537 = vmatprep.mubr.bf16.mxu0 %v5120
        %8538 = vmatmul.mubr.bf16.gmra.mrb[0].mxu0 %v5119
        %v8539 = vpop.f32.mrb[0].mxu0
        %v8540 = vadd.f32 %v8379, %v8539
        %v8541 = vpop.f32.mrb[0].mxu0
        %v8542 = vpop.f32.mrb[0].mxu0
        %v8543 = vadd.f32 %v8382, %v8542
        %v8544 = vpop.f32.mrb[0].mxu0
        %8545 = vdwg.mxu0
        %8546 = vmatprep.subr.bf16.mxu0 0
        %8547 = vmatpush1.bf16.msra.mxu0 %v6588
        %8548 = vmatprep.subr.bf16.mxu0 0
        %8549 = vmatpush1.bf16.msra.mxu0 %v6591
        %8550 = vmatprep.subr.bf16.mxu0 0
        %8551 = vmatpush1.bf16.msra.mxu0 %v6594
        %8552 = vmatprep.subr.bf16.mxu0 0
        %8553 = vmatpush1.bf16.msra.mxu0 %v6597
        %8554 = vmatprep.subr.bf16.mxu0 0
        %8555 = vmatpush1.bf16.msra.mxu0 %v6600
        %8556 = vmatprep.subr.bf16.mxu0 0
        %8557 = vmatpush1.bf16.msra.mxu0 %v6603
        %8558 = vmatprep.subr.bf16.mxu0 0
        %8559 = vmatpush1.bf16.msra.mxu0 %v6606
        %8560 = vmatprep.subr.bf16.mxu0 0
        %8561 = vmatpush1.bf16.msra.mxu0 %v6609
        %8562 = vmatprep.subr.bf16.mxu0 0
        %8563 = vmatpush1.bf16.msra.mxu0 %v6612
        %8564 = vmatprep.subr.bf16.mxu0 0
        %8565 = vmatpush1.bf16.msra.mxu0 %v6615
        %8566 = vmatprep.subr.bf16.mxu0 0
        %8567 = vmatpush1.bf16.msra.mxu0 %v6618
        %8568 = vmatprep.subr.bf16.mxu0 0
        %8569 = vmatpush1.bf16.msra.mxu0 %v6621
        %8570 = vmatprep.subr.bf16.mxu0 0
        %8571 = vmatpush1.bf16.msra.mxu0 %v6624
        %8572 = vmatprep.subr.bf16.mxu0 0
        %8573 = vmatpush1.bf16.msra.mxu0 %v6627
        %8574 = vmatprep.subr.bf16.mxu0 0
        %8575 = vmatpush1.bf16.msra.mxu0 %v6630
        %8576 = vmatprep.subr.bf16.mxu0 0
        %8577 = vmatpush1.bf16.msra.mxu0 %v6633
        %8578 = vmatprep.mubr.bf16.mxu0 %v4942
        %8579 = vmatmul.mubr.bf16.gmra.mrb[0].mxu0 %v4941
        %v8580 = vpop.f32.mrb[0].mxu0
        %v8581 = vadd.f32 %v8420, %v8580
        %v8582 = vpop.f32.mrb[0].mxu0
        %v8583 = vpop.f32.mrb[0].mxu0
        %v8584 = vadd.f32 %v8423, %v8583
        %v8585 = vpop.f32.mrb[0].mxu0
        %8586 = vmatprep.mubr.bf16.mxu0 %v4954
        %8587 = vmatmul.mubr.bf16.gmra.mrb[0].mxu0 %v4953
        %v8588 = vpop.f32.mrb[0].mxu0
        %v8589 = vadd.f32 %v8428, %v8588
        %v8590 = vpop.f32.mrb[0].mxu0
        %v8591 = vpop.f32.mrb[0].mxu0
        %v8592 = vadd.f32 %v8431, %v8591
        %v8593 = vpop.f32.mrb[0].mxu0
        %8594 = vmatprep.mubr.bf16.mxu0 %v4966
        %8595 = vmatmul.mubr.bf16.gmra.mrb[0].mxu0 %v4965
        %v8596 = vpop.f32.mrb[0].mxu0
        %v8597 = vadd.f32 %v8436, %v8596
        %v8598 = vpop.f32.mrb[0].mxu0
        %v8599 = vpop.f32.mrb[0].mxu0
        %v8600 = vadd.f32 %v8439, %v8599
        %v8601 = vpop.f32.mrb[0].mxu0
        %8602 = vmatprep.mubr.bf16.mxu0 %v4978
        %8603 = vmatmul.mubr.bf16.gmra.mrb[0].mxu0 %v4977
        %v8604 = vpop.f32.mrb[0].mxu0
        %v8605 = vadd.f32 %v8444, %v8604
        %v8606 = vpop.f32.mrb[0].mxu0
        %v8607 = vpop.f32.mrb[0].mxu0
        %v8608 = vadd.f32 %v8447, %v8607
        %v8609 = vpop.f32.mrb[0].mxu0
        %8610 = vmatprep.mubr.bf16.mxu0 %v4990
        %8611 = vmatmul.mubr.bf16.gmra.mrb[0].mxu0 %v4989
        %v8612 = vpop.f32.mrb[0].mxu0
        %v8613 = vadd.f32 %v8452, %v8612
        %v8614 = vpop.f32.mrb[0].mxu0
        %v8615 = vpop.f32.mrb[0].mxu0
        %v8616 = vadd.f32 %v8455, %v8615
        %v8617 = vpop.f32.mrb[0].mxu0
        %8618 = vmatprep.mubr.bf16.mxu0 %v5002
        %8619 = vmatmul.mubr.bf16.gmra.mrb[0].mxu0 %v5001
        %v8620 = vpop.f32.mrb[0].mxu0
        %v8621 = vadd.f32 %v8460, %v8620
        %v8622 = vpop.f32.mrb[0].mxu0
        %v8623 = vpop.f32.mrb[0].mxu0
        %v8624 = vadd.f32 %v8463, %v8623
        %v8625 = vpop.f32.mrb[0].mxu0
        %8626 = vmatprep.mubr.bf16.mxu0 %v5014
        %8627 = vmatmul.mubr.bf16.gmra.mrb[0].mxu0 %v5013
        %v8628 = vpop.f32.mrb[0].mxu0
        %v8629 = vadd.f32 %v8468, %v8628
        %v8630 = vpop.f32.mrb[0].mxu0
        %v8631 = vpop.f32.mrb[0].mxu0
        %v8632 = vadd.f32 %v8471, %v8631
        %v8633 = vpop.f32.mrb[0].mxu0
        %8634 = vmatprep.mubr.bf16.mxu0 %v5026
        %8635 = vmatmul.mubr.bf16.gmra.mrb[0].mxu0 %v5025
        %v8636 = vpop.f32.mrb[0].mxu0
        %v8637 = vadd.f32 %v8476, %v8636
        %v8638 = vpop.f32.mrb[0].mxu0
        %v8639 = vpop.f32.mrb[0].mxu0
        %v8640 = vadd.f32 %v8479, %v8639
        %v8641 = vpop.f32.mrb[0].mxu0
        %8642 = vmatprep.mubr.bf16.mxu0 %v5038
        %8643 = vmatmul.mubr.bf16.gmra.mrb[0].mxu0 %v5037
        %v8644 = vpop.f32.mrb[0].mxu0
        %v8645 = vadd.f32 %v8484, %v8644
        %v8646 = vpop.f32.mrb[0].mxu0
        %v8647 = vpop.f32.mrb[0].mxu0
        %v8648 = vadd.f32 %v8487, %v8647
        %v8649 = vpop.f32.mrb[0].mxu0
        %8650 = vmatprep.mubr.bf16.mxu0 %v5050
        %8651 = vmatmul.mubr.bf16.gmra.mrb[0].mxu0 %v5049
        %v8652 = vpop.f32.mrb[0].mxu0
        %v8653 = vadd.f32 %v8492, %v8652
        %v8654 = vpop.f32.mrb[0].mxu0
        %v8655 = vpop.f32.mrb[0].mxu0
        %v8656 = vadd.f32 %v8495, %v8655
        %v8657 = vpop.f32.mrb[0].mxu0
        %8658 = vmatprep.mubr.bf16.mxu0 %v5062
        %8659 = vmatmul.mubr.bf16.gmra.mrb[0].mxu0 %v5061
        %v8660 = vpop.f32.mrb[0].mxu0
        %v8661 = vadd.f32 %v8500, %v8660
        %v8662 = vpop.f32.mrb[0].mxu0
        %v8663 = vpop.f32.mrb[0].mxu0
        %v8664 = vadd.f32 %v8503, %v8663
        %v8665 = vpop.f32.mrb[0].mxu0
        %8666 = vmatprep.mubr.bf16.mxu0 %v5074
        %8667 = vmatmul.mubr.bf16.gmra.mrb[0].mxu0 %v5073
        %v8668 = vpop.f32.mrb[0].mxu0
        %v8669 = vadd.f32 %v8508, %v8668
        %v8670 = vpop.f32.mrb[0].mxu0
        %v8671 = vpop.f32.mrb[0].mxu0
        %v8672 = vadd.f32 %v8511, %v8671
        %v8673 = vpop.f32.mrb[0].mxu0
        %8674 = vmatprep.mubr.bf16.mxu0 %v5086
        %8675 = vmatmul.mubr.bf16.gmra.mrb[0].mxu0 %v5085
        %v8676 = vpop.f32.mrb[0].mxu0
        %v8677 = vadd.f32 %v8516, %v8676
        %v8678 = vpop.f32.mrb[0].mxu0
        %v8679 = vpop.f32.mrb[0].mxu0
        %v8680 = vadd.f32 %v8519, %v8679
        %v8681 = vpop.f32.mrb[0].mxu0
        %8682 = vmatprep.mubr.bf16.mxu0 %v5098
        %8683 = vmatmul.mubr.bf16.gmra.mrb[0].mxu0 %v5097
        %v8684 = vpop.f32.mrb[0].mxu0
        %v8685 = vadd.f32 %v8524, %v8684
        %v8686 = vpop.f32.mrb[0].mxu0
        %v8687 = vpop.f32.mrb[0].mxu0
        %v8688 = vadd.f32 %v8527, %v8687
        %v8689 = vpop.f32.mrb[0].mxu0
        %8690 = vmatprep.mubr.bf16.mxu0 %v5110
        %8691 = vmatmul.mubr.bf16.gmra.mrb[0].mxu0 %v5109
        %v8692 = vpop.f32.mrb[0].mxu0
        %v8693 = vadd.f32 %v8532, %v8692
        %v8694 = vpop.f32.mrb[0].mxu0
        %v8695 = vpop.f32.mrb[0].mxu0
        %v8696 = vadd.f32 %v8535, %v8695
        %v8697 = vpop.f32.mrb[0].mxu0
        %8698 = vmatprep.mubr.bf16.mxu0 %v5122
        %8699 = vmatmul.mubr.bf16.gmra.mrb[0].mxu0 %v5121
        %v8700 = vpop.f32.mrb[0].mxu0
        %v8701 = vadd.f32 %v8540, %v8700
        %v8702 = vpop.f32.mrb[0].mxu0
        %v8703 = vpop.f32.mrb[0].mxu0
        %v8704 = vadd.f32 %v8543, %v8703
        %v8705 = vpop.f32.mrb[0].mxu0
        %8706 = vdwg.mxu0
        %8707 = vmatprep.subr.bf16.mxu0 0
        %8708 = vmatpush1.bf16.msra.mxu0 %v6636
        %8709 = vmatprep.subr.bf16.mxu0 0
        %8710 = vmatpush1.bf16.msra.mxu0 %v6639
        %8711 = vmatprep.subr.bf16.mxu0 0
        %8712 = vmatpush1.bf16.msra.mxu0 %v6642
        %8713 = vmatprep.subr.bf16.mxu0 0
        %8714 = vmatpush1.bf16.msra.mxu0 %v6645
        %8715 = vmatprep.subr.bf16.mxu0 0
        %8716 = vmatpush1.bf16.msra.mxu0 %v6648
        %8717 = vmatprep.subr.bf16.mxu0 0
        %8718 = vmatpush1.bf16.msra.mxu0 %v6651
        %8719 = vmatprep.subr.bf16.mxu0 0
        %8720 = vmatpush1.bf16.msra.mxu0 %v6654
        %8721 = vmatprep.subr.bf16.mxu0 0
        %8722 = vmatpush1.bf16.msra.mxu0 %v6657
        %8723 = vmatprep.subr.bf16.mxu0 0
        %8724 = vmatpush1.bf16.msra.mxu0 %v6660
        %8725 = vmatprep.subr.bf16.mxu0 0
        %8726 = vmatpush1.bf16.msra.mxu0 %v6663
        %8727 = vmatprep.subr.bf16.mxu0 0
        %8728 = vmatpush1.bf16.msra.mxu0 %v6666
        %8729 = vmatprep.subr.bf16.mxu0 0
        %8730 = vmatpush1.bf16.msra.mxu0 %v6669
        %8731 = vmatprep.subr.bf16.mxu0 0
        %8732 = vmatpush1.bf16.msra.mxu0 %v6672
        %8733 = vmatprep.subr.bf16.mxu0 0
        %8734 = vmatpush1.bf16.msra.mxu0 %v6675
        %8735 = vmatprep.subr.bf16.mxu0 0
        %8736 = vmatpush1.bf16.msra.mxu0 %v6678
        %8737 = vmatprep.subr.bf16.mxu0 0
        %8738 = vmatpush1.bf16.msra.mxu0 %v6681
        %8739 = vmatprep.mubr.bf16.mxu0 %v4944
        %8740 = vmatmul.mubr.bf16.gmra.mrb[0].mxu0 %v4943
        %v8741 = vpop.f32.mrb[0].mxu0
        %v8742 = vadd.f32 %v8581, %v8741
        %v8743 = vpop.f32.mrb[0].mxu0
        %v8744 = vpop.f32.mrb[0].mxu0
        %v8745 = vadd.f32 %v8584, %v8744
        %v8746 = vpop.f32.mrb[0].mxu0
        %8747 = vmatprep.mubr.bf16.mxu0 %v4956
        %8748 = vmatmul.mubr.bf16.gmra.mrb[0].mxu0 %v4955
        %v8749 = vpop.f32.mrb[0].mxu0
        %v8750 = vadd.f32 %v8589, %v8749
        %v8751 = vpop.f32.mrb[0].mxu0
        %v8752 = vpop.f32.mrb[0].mxu0
        %v8753 = vadd.f32 %v8592, %v8752
        %v8754 = vpop.f32.mrb[0].mxu0
        %8755 = vmatprep.mubr.bf16.mxu0 %v4968
        %8756 = vmatmul.mubr.bf16.gmra.mrb[0].mxu0 %v4967
        %v8757 = vpop.f32.mrb[0].mxu0
        %v8758 = vadd.f32 %v8597, %v8757
        %v8759 = vpop.f32.mrb[0].mxu0
        %v8760 = vpop.f32.mrb[0].mxu0
        %v8761 = vadd.f32 %v8600, %v8760
        %v8762 = vpop.f32.mrb[0].mxu0
        %8763 = vmatprep.mubr.bf16.mxu0 %v4980
        %8764 = vmatmul.mubr.bf16.gmra.mrb[0].mxu0 %v4979
        %v8765 = vpop.f32.mrb[0].mxu0
        %v8766 = vadd.f32 %v8605, %v8765
        %v8767 = vpop.f32.mrb[0].mxu0
        %v8768 = vpop.f32.mrb[0].mxu0
        %v8769 = vadd.f32 %v8608, %v8768
        %v8770 = vpop.f32.mrb[0].mxu0
        %8771 = vmatprep.mubr.bf16.mxu0 %v4992
        %8772 = vmatmul.mubr.bf16.gmra.mrb[0].mxu0 %v4991
        %v8773 = vpop.f32.mrb[0].mxu0
        %v8774 = vadd.f32 %v8613, %v8773
        %v8775 = vpop.f32.mrb[0].mxu0
        %v8776 = vpop.f32.mrb[0].mxu0
        %v8777 = vadd.f32 %v8616, %v8776
        %v8778 = vpop.f32.mrb[0].mxu0
        %8779 = vmatprep.mubr.bf16.mxu0 %v5004
        %8780 = vmatmul.mubr.bf16.gmra.mrb[0].mxu0 %v5003
        %v8781 = vpop.f32.mrb[0].mxu0
        %v8782 = vadd.f32 %v8621, %v8781
        %v8783 = vpop.f32.mrb[0].mxu0
        %v8784 = vpop.f32.mrb[0].mxu0
        %v8785 = vadd.f32 %v8624, %v8784
        %v8786 = vpop.f32.mrb[0].mxu0
        %8787 = vmatprep.mubr.bf16.mxu0 %v5016
        %8788 = vmatmul.mubr.bf16.gmra.mrb[0].mxu0 %v5015
        %v8789 = vpop.f32.mrb[0].mxu0
        %v8790 = vadd.f32 %v8629, %v8789
        %v8791 = vpop.f32.mrb[0].mxu0
        %v8792 = vpop.f32.mrb[0].mxu0
        %v8793 = vadd.f32 %v8632, %v8792
        %v8794 = vpop.f32.mrb[0].mxu0
        %8795 = vmatprep.mubr.bf16.mxu0 %v5028
        %8796 = vmatmul.mubr.bf16.gmra.mrb[0].mxu0 %v5027
        %v8797 = vpop.f32.mrb[0].mxu0
        %v8798 = vadd.f32 %v8637, %v8797
        %v8799 = vpop.f32.mrb[0].mxu0
        %v8800 = vpop.f32.mrb[0].mxu0
        %v8801 = vadd.f32 %v8640, %v8800
        %v8802 = vpop.f32.mrb[0].mxu0
        %8803 = vmatprep.mubr.bf16.mxu0 %v5040
        %8804 = vmatmul.mubr.bf16.gmra.mrb[0].mxu0 %v5039
        %v8805 = vpop.f32.mrb[0].mxu0
        %v8806 = vadd.f32 %v8645, %v8805
        %v8807 = vpop.f32.mrb[0].mxu0
        %v8808 = vpop.f32.mrb[0].mxu0
        %v8809 = vadd.f32 %v8648, %v8808
        %v8810 = vpop.f32.mrb[0].mxu0
        %8811 = vmatprep.mubr.bf16.mxu0 %v5052
        %8812 = vmatmul.mubr.bf16.gmra.mrb[0].mxu0 %v5051
        %v8813 = vpop.f32.mrb[0].mxu0
        %v8814 = vadd.f32 %v8653, %v8813
        %v8815 = vpop.f32.mrb[0].mxu0
        %v8816 = vpop.f32.mrb[0].mxu0
        %v8817 = vadd.f32 %v8656, %v8816
        %v8818 = vpop.f32.mrb[0].mxu0
        %8819 = vmatprep.mubr.bf16.mxu0 %v5064
        %8820 = vmatmul.mubr.bf16.gmra.mrb[0].mxu0 %v5063
        %v8821 = vpop.f32.mrb[0].mxu0
        %v8822 = vadd.f32 %v8661, %v8821
        %v8823 = vpop.f32.mrb[0].mxu0
        %v8824 = vpop.f32.mrb[0].mxu0
        %v8825 = vadd.f32 %v8664, %v8824
        %v8826 = vpop.f32.mrb[0].mxu0
        %8827 = vmatprep.mubr.bf16.mxu0 %v5076
        %8828 = vmatmul.mubr.bf16.gmra.mrb[0].mxu0 %v5075
        %v8829 = vpop.f32.mrb[0].mxu0
        %v8830 = vadd.f32 %v8669, %v8829
        %v8831 = vpop.f32.mrb[0].mxu0
        %v8832 = vpop.f32.mrb[0].mxu0
        %v8833 = vadd.f32 %v8672, %v8832
        %v8834 = vpop.f32.mrb[0].mxu0
        %8835 = vmatprep.mubr.bf16.mxu0 %v5088
        %8836 = vmatmul.mubr.bf16.gmra.mrb[0].mxu0 %v5087
        %v8837 = vpop.f32.mrb[0].mxu0
        %v8838 = vadd.f32 %v8677, %v8837
        %v8839 = vpop.f32.mrb[0].mxu0
        %v8840 = vpop.f32.mrb[0].mxu0
        %v8841 = vadd.f32 %v8680, %v8840
        %v8842 = vpop.f32.mrb[0].mxu0
        %8843 = vmatprep.mubr.bf16.mxu0 %v5100
        %8844 = vmatmul.mubr.bf16.gmra.mrb[0].mxu0 %v5099
        %v8845 = vpop.f32.mrb[0].mxu0
        %v8846 = vadd.f32 %v8685, %v8845
        %v8847 = vpop.f32.mrb[0].mxu0
        %v8848 = vpop.f32.mrb[0].mxu0
        %v8849 = vadd.f32 %v8688, %v8848
        %v8850 = vpop.f32.mrb[0].mxu0
        %8851 = vmatprep.mubr.bf16.mxu0 %v5112
        %8852 = vmatmul.mubr.bf16.gmra.mrb[0].mxu0 %v5111
        %v8853 = vpop.f32.mrb[0].mxu0
        %v8854 = vadd.f32 %v8693, %v8853
        %v8855 = vpop.f32.mrb[0].mxu0
        %v8856 = vpop.f32.mrb[0].mxu0
        %v8857 = vadd.f32 %v8696, %v8856
        %v8858 = vpop.f32.mrb[0].mxu0
        %8859 = vmatprep.mubr.bf16.mxu0 %v5124
        %8860 = vmatmul.mubr.bf16.gmra.mrb[0].mxu0 %v5123
        %v8861 = vpop.f32.mrb[0].mxu0
        %v8862 = vadd.f32 %v8701, %v8861
        %v8863 = vpop.f32.mrb[0].mxu0
        %v8864 = vpop.f32.mrb[0].mxu0
        %v8865 = vadd.f32 %v8704, %v8864
        %v8866 = vpop.f32.mrb[0].mxu0
        %8867 = vdwg.mxu0
        %8868 = vmatprep.subr.bf16.mxu0 0
        %8869 = vmatpush1.bf16.msra.mxu0 %v6684
        %8870 = vmatprep.subr.bf16.mxu0 0
        %8871 = vmatpush1.bf16.msra.mxu0 %v6687
        %8872 = vmatprep.subr.bf16.mxu0 0
        %8873 = vmatpush1.bf16.msra.mxu0 %v6690
        %8874 = vmatprep.subr.bf16.mxu0 0
        %8875 = vmatpush1.bf16.msra.mxu0 %v6693
        %8876 = vmatprep.subr.bf16.mxu0 0
        %8877 = vmatpush1.bf16.msra.mxu0 %v6696
        %8878 = vmatprep.subr.bf16.mxu0 0
        %8879 = vmatpush1.bf16.msra.mxu0 %v6699
        %8880 = vmatprep.subr.bf16.mxu0 0
        %8881 = vmatpush1.bf16.msra.mxu0 %v6702
        %8882 = vmatprep.subr.bf16.mxu0 0
        %8883 = vmatpush1.bf16.msra.mxu0 %v6705
        %8884 = vmatprep.subr.bf16.mxu0 0
        %8885 = vmatpush1.bf16.msra.mxu0 %v6708
        %8886 = vmatprep.subr.bf16.mxu0 0
        %8887 = vmatpush1.bf16.msra.mxu0 %v6711
        %8888 = vmatprep.subr.bf16.mxu0 0
        %8889 = vmatpush1.bf16.msra.mxu0 %v6714
        %8890 = vmatprep.subr.bf16.mxu0 0
        %8891 = vmatpush1.bf16.msra.mxu0 %v6717
        %8892 = vmatprep.subr.bf16.mxu0 0
        %8893 = vmatpush1.bf16.msra.mxu0 %v6720
        %8894 = vmatprep.subr.bf16.mxu0 0
        %8895 = vmatpush1.bf16.msra.mxu0 %v6723
        %8896 = vmatprep.subr.bf16.mxu0 0
        %8897 = vmatpush1.bf16.msra.mxu0 %v6726
        %8898 = vmatprep.subr.bf16.mxu0 0
        %8899 = vmatpush1.bf16.msra.mxu0 %v6729
        %8900 = vmatprep.mubr.bf16.mxu0 %v4946
        %8901 = vmatmul.mubr.bf16.gmra.mrb[0].mxu0 %v4945
        %v8902 = vpop.f32.mrb[0].mxu0
        %v8903 = vadd.f32 %v8742, %v8902
        %v8904 = vpop.f32.mrb[0].mxu0
        %v8905 = vpop.f32.mrb[0].mxu0
        %v8906 = vadd.f32 %v8745, %v8905
        %v8907 = vpop.f32.mrb[0].mxu0
        %8908 = vmatprep.mubr.bf16.mxu0 %v4958
        %8909 = vmatmul.mubr.bf16.gmra.mrb[0].mxu0 %v4957
        %v8910 = vpop.f32.mrb[0].mxu0
        %v8911 = vadd.f32 %v8750, %v8910
        %v8912 = vpop.f32.mrb[0].mxu0
        %v8913 = vpop.f32.mrb[0].mxu0
        %v8914 = vadd.f32 %v8753, %v8913
        %v8915 = vpop.f32.mrb[0].mxu0
        %8916 = vmatprep.mubr.bf16.mxu0 %v4970
        %8917 = vmatmul.mubr.bf16.gmra.mrb[0].mxu0 %v4969
        %v8918 = vpop.f32.mrb[0].mxu0
        %v8919 = vadd.f32 %v8758, %v8918
        %v8920 = vpop.f32.mrb[0].mxu0
        %v8921 = vpop.f32.mrb[0].mxu0
        %v8922 = vadd.f32 %v8761, %v8921
        %v8923 = vpop.f32.mrb[0].mxu0
        %8924 = vmatprep.mubr.bf16.mxu0 %v4982
        %8925 = vmatmul.mubr.bf16.gmra.mrb[0].mxu0 %v4981
        %v8926 = vpop.f32.mrb[0].mxu0
        %v8927 = vadd.f32 %v8766, %v8926
        %v8928 = vpop.f32.mrb[0].mxu0
        %v8929 = vpop.f32.mrb[0].mxu0
        %v8930 = vadd.f32 %v8769, %v8929
        %v8931 = vpop.f32.mrb[0].mxu0
        %8932 = vmatprep.mubr.bf16.mxu0 %v4994
        %8933 = vmatmul.mubr.bf16.gmra.mrb[0].mxu0 %v4993
        %v8934 = vpop.f32.mrb[0].mxu0
        %v8935 = vadd.f32 %v8774, %v8934
        %v8936 = vpop.f32.mrb[0].mxu0
        %v8937 = vpop.f32.mrb[0].mxu0
        %v8938 = vadd.f32 %v8777, %v8937
        %v8939 = vpop.f32.mrb[0].mxu0
        %8940 = vmatprep.mubr.bf16.mxu0 %v5006
        %8941 = vmatmul.mubr.bf16.gmra.mrb[0].mxu0 %v5005
        %v8942 = vpop.f32.mrb[0].mxu0
        %v8943 = vadd.f32 %v8782, %v8942
        %v8944 = vpop.f32.mrb[0].mxu0
        %v8945 = vpop.f32.mrb[0].mxu0
        %v8946 = vadd.f32 %v8785, %v8945
        %v8947 = vpop.f32.mrb[0].mxu0
        %8948 = vmatprep.mubr.bf16.mxu0 %v5018
        %8949 = vmatmul.mubr.bf16.gmra.mrb[0].mxu0 %v5017
        %v8950 = vpop.f32.mrb[0].mxu0
        %v8951 = vadd.f32 %v8790, %v8950
        %v8952 = vpop.f32.mrb[0].mxu0
        %v8953 = vpop.f32.mrb[0].mxu0
        %v8954 = vadd.f32 %v8793, %v8953
        %v8955 = vpop.f32.mrb[0].mxu0
        %8956 = vmatprep.mubr.bf16.mxu0 %v5030
        %8957 = vmatmul.mubr.bf16.gmra.mrb[0].mxu0 %v5029
        %v8958 = vpop.f32.mrb[0].mxu0
        %v8959 = vadd.f32 %v8798, %v8958
        %v8960 = vpop.f32.mrb[0].mxu0
        %v8961 = vpop.f32.mrb[0].mxu0
        %v8962 = vadd.f32 %v8801, %v8961
        %v8963 = vpop.f32.mrb[0].mxu0
        %8964 = vmatprep.mubr.bf16.mxu0 %v5042
        %8965 = vmatmul.mubr.bf16.gmra.mrb[0].mxu0 %v5041
        %v8966 = vpop.f32.mrb[0].mxu0
        %v8967 = vadd.f32 %v8806, %v8966
        %v8968 = vpop.f32.mrb[0].mxu0
        %v8969 = vpop.f32.mrb[0].mxu0
        %v8970 = vadd.f32 %v8809, %v8969
        %v8971 = vpop.f32.mrb[0].mxu0
        %8972 = vmatprep.mubr.bf16.mxu0 %v5054
        %8973 = vmatmul.mubr.bf16.gmra.mrb[0].mxu0 %v5053
        %v8974 = vpop.f32.mrb[0].mxu0
        %v8975 = vadd.f32 %v8814, %v8974
        %v8976 = vpop.f32.mrb[0].mxu0
        %v8977 = vpop.f32.mrb[0].mxu0
        %v8978 = vadd.f32 %v8817, %v8977
        %v8979 = vpop.f32.mrb[0].mxu0
        %8980 = vmatprep.mubr.bf16.mxu0 %v5066
        %8981 = vmatmul.mubr.bf16.gmra.mrb[0].mxu0 %v5065
        %v8982 = vpop.f32.mrb[0].mxu0
        %v8983 = vadd.f32 %v8822, %v8982
        %v8984 = vpop.f32.mrb[0].mxu0
        %v8985 = vpop.f32.mrb[0].mxu0
        %v8986 = vadd.f32 %v8825, %v8985
        %v8987 = vpop.f32.mrb[0].mxu0
        %8988 = vmatprep.mubr.bf16.mxu0 %v5078
        %8989 = vmatmul.mubr.bf16.gmra.mrb[0].mxu0 %v5077
        %v8990 = vpop.f32.mrb[0].mxu0
        %v8991 = vadd.f32 %v8830, %v8990
        %v8992 = vpop.f32.mrb[0].mxu0
        %v8993 = vpop.f32.mrb[0].mxu0
        %v8994 = vadd.f32 %v8833, %v8993
        %v8995 = vpop.f32.mrb[0].mxu0
        %8996 = vmatprep.mubr.bf16.mxu0 %v5090
        %8997 = vmatmul.mubr.bf16.gmra.mrb[0].mxu0 %v5089
        %v8998 = vpop.f32.mrb[0].mxu0
        %v8999 = vadd.f32 %v8838, %v8998
        %v9000 = vpop.f32.mrb[0].mxu0
        %v9001 = vpop.f32.mrb[0].mxu0
        %v9002 = vadd.f32 %v8841, %v9001
        %v9003 = vpop.f32.mrb[0].mxu0
        %9004 = vmatprep.mubr.bf16.mxu0 %v5102
        %9005 = vmatmul.mubr.bf16.gmra.mrb[0].mxu0 %v5101
        %v9006 = vpop.f32.mrb[0].mxu0
        %v9007 = vadd.f32 %v8846, %v9006
        %v9008 = vpop.f32.mrb[0].mxu0
        %v9009 = vpop.f32.mrb[0].mxu0
        %v9010 = vadd.f32 %v8849, %v9009
        %v9011 = vpop.f32.mrb[0].mxu0
        %9012 = vmatprep.mubr.bf16.mxu0 %v5114
        %9013 = vmatmul.mubr.bf16.gmra.mrb[0].mxu0 %v5113
        %v9014 = vpop.f32.mrb[0].mxu0
        %v9015 = vadd.f32 %v8854, %v9014
        %v9016 = vpop.f32.mrb[0].mxu0
        %v9017 = vpop.f32.mrb[0].mxu0
        %v9018 = vadd.f32 %v8857, %v9017
        %v9019 = vpop.f32.mrb[0].mxu0
        %9020 = vmatprep.mubr.bf16.mxu0 %v5126
        %9021 = vmatmul.mubr.bf16.gmra.mrb[0].mxu0 %v5125
        %v9022 = vpop.f32.mrb[0].mxu0
        %v9023 = vadd.f32 %v8862, %v9022
        %v9024 = vpop.f32.mrb[0].mxu0
        %v9025 = vpop.f32.mrb[0].mxu0
        %v9026 = vadd.f32 %v8865, %v9025
        %v9027 = vpop.f32.mrb[0].mxu0
        %9028 = vdwg.mxu0
        %9029 = vmatprep.subr.bf16.mxu0 0
        %9030 = vmatpush1.bf16.msra.mxu0 %v6732
        %9031 = vmatprep.subr.bf16.mxu0 0
        %9032 = vmatpush1.bf16.msra.mxu0 %v6735
        %9033 = vmatprep.subr.bf16.mxu0 0
        %9034 = vmatpush1.bf16.msra.mxu0 %v6738
        %9035 = vmatprep.subr.bf16.mxu0 0
        %9036 = vmatpush1.bf16.msra.mxu0 %v6741
        %9037 = vmatprep.subr.bf16.mxu0 0
        %9038 = vmatpush1.bf16.msra.mxu0 %v6744
        %9039 = vmatprep.subr.bf16.mxu0 0
        %9040 = vmatpush1.bf16.msra.mxu0 %v6747
        %9041 = vmatprep.subr.bf16.mxu0 0
        %9042 = vmatpush1.bf16.msra.mxu0 %v6750
        %9043 = vmatprep.subr.bf16.mxu0 0
        %9044 = vmatpush1.bf16.msra.mxu0 %v6753
        %9045 = vmatprep.subr.bf16.mxu0 0
        %9046 = vmatpush1.bf16.msra.mxu0 %v6756
        %9047 = vmatprep.subr.bf16.mxu0 0
        %9048 = vmatpush1.bf16.msra.mxu0 %v6759
        %9049 = vmatprep.subr.bf16.mxu0 0
        %9050 = vmatpush1.bf16.msra.mxu0 %v6762
        %9051 = vmatprep.subr.bf16.mxu0 0
        %9052 = vmatpush1.bf16.msra.mxu0 %v6765
        %9053 = vmatprep.subr.bf16.mxu0 0
        %9054 = vmatpush1.bf16.msra.mxu0 %v6768
        %9055 = vmatprep.subr.bf16.mxu0 0
        %9056 = vmatpush1.bf16.msra.mxu0 %v6771
        %9057 = vmatprep.subr.bf16.mxu0 0
        %9058 = vmatpush1.bf16.msra.mxu0 %v6774
        %9059 = vmatprep.subr.bf16.mxu0 0
        %9060 = vmatpush1.bf16.msra.mxu0 %v6777
        %9061 = vmatprep.mubr.bf16.mxu0 %v4948
        %9062 = vmatmul.mubr.bf16.gmra.mrb[0].mxu0 %v4947
        %v9063 = vpop.f32.mrb[0].mxu0
        %v9064 = vadd.f32 %v8903, %v9063
        %v9065 = vpop.f32.mrb[0].mxu0
        %v9066 = vpop.f32.mrb[0].mxu0
        %v9067 = vadd.f32 %v8906, %v9066
        %v9068 = vpop.f32.mrb[0].mxu0
        %9069 = vmatprep.mubr.bf16.mxu0 %v4960
        %9070 = vmatmul.mubr.bf16.gmra.mrb[0].mxu0 %v4959
        %v9071 = vpop.f32.mrb[0].mxu0
        %v9072 = vadd.f32 %v8911, %v9071
        %v9073 = vpop.f32.mrb[0].mxu0
        %v9074 = vpop.f32.mrb[0].mxu0
        %v9075 = vadd.f32 %v8914, %v9074
        %v9076 = vpop.f32.mrb[0].mxu0
        %9077 = vmatprep.mubr.bf16.mxu0 %v4972
        %9078 = vmatmul.mubr.bf16.gmra.mrb[0].mxu0 %v4971
        %v9079 = vpop.f32.mrb[0].mxu0
        %v9080 = vadd.f32 %v8919, %v9079
        %v9081 = vpop.f32.mrb[0].mxu0
        %v9082 = vpop.f32.mrb[0].mxu0
        %v9083 = vadd.f32 %v8922, %v9082
        %v9084 = vpop.f32.mrb[0].mxu0
        %9085 = vmatprep.mubr.bf16.mxu0 %v4984
        %9086 = vmatmul.mubr.bf16.gmra.mrb[0].mxu0 %v4983
        %v9087 = vpop.f32.mrb[0].mxu0
        %v9088 = vadd.f32 %v8927, %v9087
        %v9089 = vpop.f32.mrb[0].mxu0
        %v9090 = vpop.f32.mrb[0].mxu0
        %v9091 = vadd.f32 %v8930, %v9090
        %v9092 = vpop.f32.mrb[0].mxu0
        %9093 = vmatprep.mubr.bf16.mxu0 %v4996
        %9094 = vmatmul.mubr.bf16.gmra.mrb[0].mxu0 %v4995
        %v9095 = vpop.f32.mrb[0].mxu0
        %v9096 = vadd.f32 %v8935, %v9095
        %v9097 = vpop.f32.mrb[0].mxu0
        %v9098 = vpop.f32.mrb[0].mxu0
        %v9099 = vadd.f32 %v8938, %v9098
        %v9100 = vpop.f32.mrb[0].mxu0
        %9101 = vmatprep.mubr.bf16.mxu0 %v5008
        %9102 = vmatmul.mubr.bf16.gmra.mrb[0].mxu0 %v5007
        %v9103 = vpop.f32.mrb[0].mxu0
        %v9104 = vadd.f32 %v8943, %v9103
        %v9105 = vpop.f32.mrb[0].mxu0
        %v9106 = vpop.f32.mrb[0].mxu0
        %v9107 = vadd.f32 %v8946, %v9106
        %v9108 = vpop.f32.mrb[0].mxu0
        %9109 = vmatprep.mubr.bf16.mxu0 %v5020
        %9110 = vmatmul.mubr.bf16.gmra.mrb[0].mxu0 %v5019
        %v9111 = vpop.f32.mrb[0].mxu0
        %v9112 = vadd.f32 %v8951, %v9111
        %v9113 = vpop.f32.mrb[0].mxu0
        %v9114 = vpop.f32.mrb[0].mxu0
        %v9115 = vadd.f32 %v8954, %v9114
        %v9116 = vpop.f32.mrb[0].mxu0
        %9117 = vmatprep.mubr.bf16.mxu0 %v5032
        %9118 = vmatmul.mubr.bf16.gmra.mrb[0].mxu0 %v5031
        %v9119 = vpop.f32.mrb[0].mxu0
        %v9120 = vadd.f32 %v8959, %v9119
        %v9121 = vpop.f32.mrb[0].mxu0
        %v9122 = vpop.f32.mrb[0].mxu0
        %v9123 = vadd.f32 %v8962, %v9122
        %v9124 = vpop.f32.mrb[0].mxu0
        %9125 = vmatprep.mubr.bf16.mxu0 %v5044
        %9126 = vmatmul.mubr.bf16.gmra.mrb[0].mxu0 %v5043
        %v9127 = vpop.f32.mrb[0].mxu0
        %v9128 = vadd.f32 %v8967, %v9127
        %v9129 = vpop.f32.mrb[0].mxu0
        %v9130 = vpop.f32.mrb[0].mxu0
        %v9131 = vadd.f32 %v8970, %v9130
        %v9132 = vpop.f32.mrb[0].mxu0
        %9133 = vmatprep.mubr.bf16.mxu0 %v5056
        %9134 = vmatmul.mubr.bf16.gmra.mrb[0].mxu0 %v5055
        %v9135 = vpop.f32.mrb[0].mxu0
        %v9136 = vadd.f32 %v8975, %v9135
        %v9137 = vpop.f32.mrb[0].mxu0
        %v9138 = vpop.f32.mrb[0].mxu0
        %v9139 = vadd.f32 %v8978, %v9138
        %v9140 = vpop.f32.mrb[0].mxu0
        %9141 = vmatprep.mubr.bf16.mxu0 %v5068
        %9142 = vmatmul.mubr.bf16.gmra.mrb[0].mxu0 %v5067
        %v9143 = vpop.f32.mrb[0].mxu0
        %v9144 = vadd.f32 %v8983, %v9143
        %v9145 = vpop.f32.mrb[0].mxu0
        %v9146 = vpop.f32.mrb[0].mxu0
        %v9147 = vadd.f32 %v8986, %v9146
        %v9148 = vpop.f32.mrb[0].mxu0
        %9149 = vmatprep.mubr.bf16.mxu0 %v5080
        %9150 = vmatmul.mubr.bf16.gmra.mrb[0].mxu0 %v5079
        %v9151 = vpop.f32.mrb[0].mxu0
        %v9152 = vadd.f32 %v8991, %v9151
        %v9153 = vpop.f32.mrb[0].mxu0
        %v9154 = vpop.f32.mrb[0].mxu0
        %v9155 = vadd.f32 %v8994, %v9154
        %v9156 = vpop.f32.mrb[0].mxu0
        %9157 = vmatprep.mubr.bf16.mxu0 %v5092
        %9158 = vmatmul.mubr.bf16.gmra.mrb[0].mxu0 %v5091
        %v9159 = vpop.f32.mrb[0].mxu0
        %v9160 = vadd.f32 %v8999, %v9159
        %v9161 = vpop.f32.mrb[0].mxu0
        %v9162 = vpop.f32.mrb[0].mxu0
        %v9163 = vadd.f32 %v9002, %v9162
        %v9164 = vpop.f32.mrb[0].mxu0
        %9165 = vmatprep.mubr.bf16.mxu0 %v5104
        %9166 = vmatmul.mubr.bf16.gmra.mrb[0].mxu0 %v5103
        %v9167 = vpop.f32.mrb[0].mxu0
        %v9168 = vadd.f32 %v9007, %v9167
        %v9169 = vpop.f32.mrb[0].mxu0
        %v9170 = vpop.f32.mrb[0].mxu0
        %v9171 = vadd.f32 %v9010, %v9170
        %v9172 = vpop.f32.mrb[0].mxu0
        %9173 = vmatprep.mubr.bf16.mxu0 %v5116
        %9174 = vmatmul.mubr.bf16.gmra.mrb[0].mxu0 %v5115
        %v9175 = vpop.f32.mrb[0].mxu0
        %v9176 = vadd.f32 %v9015, %v9175
        %v9177 = vpop.f32.mrb[0].mxu0
        %v9178 = vpop.f32.mrb[0].mxu0
        %v9179 = vadd.f32 %v9018, %v9178
        %v9180 = vpop.f32.mrb[0].mxu0
        %9181 = vmatprep.mubr.bf16.mxu0 %v5128
        %9182 = vmatmul.mubr.bf16.gmra.mrb[0].mxu0 %v5127
        %v9183 = vpop.f32.mrb[0].mxu0
        %v9184 = vadd.f32 %v9023, %v9183
        %v9185 = vpop.f32.mrb[0].mxu0
        %v9186 = vpop.f32.mrb[0].mxu0
        %v9187 = vadd.f32 %v9026, %v9186
        %v9188 = vpop.f32.mrb[0].mxu0
        %9189 = vdwg.mxu0
        %9190 = vst [vmem:[%s297] sm:$0xff] %v8066
        %9191 = vst [vmem:[%s297 + $0x8] sm:$0xff] %v8068
        %9192 = vst [vmem:[%s297 + $0x10] sm:$0xff] %v9064
        %9193 = vst [vmem:[%s297 + $0x18] sm:$0xff] %v8070
        %9194 = vst [vmem:[%s297 + $0x20] sm:$0xff] %v8072
        %9195 = vst [vmem:[%s297 + $0x28] sm:$0xff] %v9067
        %9196 = vst [vmem:[%s297 + $0x30] sm:$0xff] %v8076
        %9197 = vst [vmem:[%s297 + $0x38] sm:$0xff] %v8078
        %9198 = vst [vmem:[%s297 + $0x40] sm:$0xff] %v9072
        %9199 = vst [vmem:[%s297 + $0x48] sm:$0xff] %v8080
        %9200 = vst [vmem:[%s297 + $0x50] sm:$0xff] %v8082
        %9201 = vst [vmem:[%s297 + $0x58] sm:$0xff] %v9075
        %9202 = vst [vmem:[%s297 + $0x60] sm:$0xff] %v8086
        %9203 = vst [vmem:[%s297 + $0x68] sm:$0xff] %v8088
        %9204 = vst [vmem:[%s297 + $0x70] sm:$0xff] %v9080
        %9205 = vst [vmem:[%s297 + $0x78] sm:$0xff] %v8090
        %9206 = vst [vmem:[%s297 + $0x80] sm:$0xff] %v8092
        %9207 = vst [vmem:[%s297 + $0x88] sm:$0xff] %v9083
        %9208 = vst [vmem:[%s297 + $0x90] sm:$0xff] %v8096
        %9209 = vst [vmem:[%s297 + $0x98] sm:$0xff] %v8098
        %9210 = vst [vmem:[%s297 + $0xa0] sm:$0xff] %v9088
        %9211 = vst [vmem:[%s297 + $0xa8] sm:$0xff] %v8100
        %9212 = vst [vmem:[%s297 + $0xb0] sm:$0xff] %v8102
        %9213 = vst [vmem:[%s297 + $0xb8] sm:$0xff] %v9091
        %9214 = vst [vmem:[%s297 + $0xc0] sm:$0xff] %v8106
        %9215 = vst [vmem:[%s297 + $0xc8] sm:$0xff] %v8108
        %9216 = vst [vmem:[%s297 + $0xd0] sm:$0xff] %v9096
        %9217 = vst [vmem:[%s297 + $0xd8] sm:$0xff] %v8110
        %9218 = vst [vmem:[%s297 + $0xe0] sm:$0xff] %v8112
        %9219 = vst [vmem:[%s297 + $0xe8] sm:$0xff] %v9099
        %9220 = vst [vmem:[%s297 + $0xf0] sm:$0xff] %v8116
        %9221 = vst [vmem:[%s297 + $0xf8] sm:$0xff] %v8118
        %9222 = vst [vmem:[%s297 + $0x100] sm:$0xff] %v9104
        %9223 = vst [vmem:[%s297 + $0x108] sm:$0xff] %v8120
        %9224 = vst [vmem:[%s297 + $0x110] sm:$0xff] %v8122
        %9225 = vst [vmem:[%s297 + $0x118] sm:$0xff] %v9107
        %9226 = vst [vmem:[%s297 + $0x120] sm:$0xff] %v8126
        %9227 = vst [vmem:[%s297 + $0x128] sm:$0xff] %v8128
        %9228 = vst [vmem:[%s297 + $0x130] sm:$0xff] %v9112
        %9229 = vst [vmem:[%s297 + $0x138] sm:$0xff] %v8130
        %9230 = vst [vmem:[%s297 + $0x140] sm:$0xff] %v8132
        %9231 = vst [vmem:[%s297 + $0x148] sm:$0xff] %v9115
        %9232 = vst [vmem:[%s297 + $0x150] sm:$0xff] %v8136
        %9233 = vst [vmem:[%s297 + $0x158] sm:$0xff] %v8138
        %9234 = vst [vmem:[%s297 + $0x160] sm:$0xff] %v9120
        %9235 = vst [vmem:[%s297 + $0x168] sm:$0xff] %v8140
        %9236 = vst [vmem:[%s297 + $0x170] sm:$0xff] %v8142
        %9237 = vst [vmem:[%s297 + $0x178] sm:$0xff] %v9123
        %9238 = vst [vmem:[%s297 + $0x180] sm:$0xff] %v8146
        %9239 = vst [vmem:[%s297 + $0x188] sm:$0xff] %v8148
        %9240 = vst [vmem:[%s297 + $0x190] sm:$0xff] %v9128
        %9241 = vst [vmem:[%s297 + $0x198] sm:$0xff] %v8150
        %9242 = vst [vmem:[%s297 + $0x1a0] sm:$0xff] %v8152
        %9243 = vst [vmem:[%s297 + $0x1a8] sm:$0xff] %v9131
        %9244 = vst [vmem:[%s297 + $0x1b0] sm:$0xff] %v8156
        %9245 = vst [vmem:[%s297 + $0x1b8] sm:$0xff] %v8158
        %9246 = vst [vmem:[%s297 + $0x1c0] sm:$0xff] %v9136
        %9247 = vst [vmem:[%s297 + $0x1c8] sm:$0xff] %v8160
        %9248 = vst [vmem:[%s297 + $0x1d0] sm:$0xff] %v8162
        %9249 = vst [vmem:[%s297 + $0x1d8] sm:$0xff] %v9139
        %9250 = vst [vmem:[%s297 + $0x1e0] sm:$0xff] %v8166
        %9251 = vst [vmem:[%s297 + $0x1e8] sm:$0xff] %v8168
        %9252 = vst [vmem:[%s297 + $0x1f0] sm:$0xff] %v9144
        %9253 = vst [vmem:[%s297 + $0x1f8] sm:$0xff] %v8170
        %9254 = vst [vmem:[%s297 + $0x200] sm:$0xff] %v8172
        %9255 = vst [vmem:[%s297 + $0x208] sm:$0xff] %v9147
        %9256 = vst [vmem:[%s297 + $0x210] sm:$0xff] %v8176
        %9257 = vst [vmem:[%s297 + $0x218] sm:$0xff] %v8178
        %9258 = vst [vmem:[%s297 + $0x220] sm:$0xff] %v9152
        %9259 = vst [vmem:[%s297 + $0x228] sm:$0xff] %v8180
        %9260 = vst [vmem:[%s297 + $0x230] sm:$0xff] %v8182
        %9261 = vst [vmem:[%s297 + $0x238] sm:$0xff] %v9155
        %9262 = vst [vmem:[%s297 + $0x240] sm:$0xff] %v8186
        %9263 = vst [vmem:[%s297 + $0x248] sm:$0xff] %v8188
        %9264 = vst [vmem:[%s297 + $0x250] sm:$0xff] %v9160
        %9265 = vst [vmem:[%s297 + $0x258] sm:$0xff] %v8190
        %9266 = vst [vmem:[%s297 + $0x260] sm:$0xff] %v8192
        %9267 = vst [vmem:[%s297 + $0x268] sm:$0xff] %v9163
        %9268 = vst [vmem:[%s297 + $0x270] sm:$0xff] %v8196
        %9269 = vst [vmem:[%s297 + $0x278] sm:$0xff] %v8198
        %9270 = vst [vmem:[%s297 + $0x280] sm:$0xff] %v9168
        %9271 = vst [vmem:[%s297 + $0x288] sm:$0xff] %v8200
        %9272 = vst [vmem:[%s297 + $0x290] sm:$0xff] %v8202
        %9273 = vst [vmem:[%s297 + $0x298] sm:$0xff] %v9171
        %9274 = vst [vmem:[%s297 + $0x2a0] sm:$0xff] %v8206
        %9275 = vst [vmem:[%s297 + $0x2a8] sm:$0xff] %v8208
        %9276 = vst [vmem:[%s297 + $0x2b0] sm:$0xff] %v9176
        %9277 = vst [vmem:[%s297 + $0x2b8] sm:$0xff] %v8210
        %9278 = vst [vmem:[%s297 + $0x2c0] sm:$0xff] %v8212
        %9279 = vst [vmem:[%s297 + $0x2c8] sm:$0xff] %v9179
        %9280 = vst [vmem:[%s297 + $0x2d0] sm:$0xff] %v8216
        %9281 = vst [vmem:[%s297 + $0x2d8] sm:$0xff] %v8218
        %9282 = vst [vmem:[%s297 + $0x2e0] sm:$0xff] %v9184
        %9283 = vst [vmem:[%s297 + $0x2e8] sm:$0xff] %v8220
        %9284 = vst [vmem:[%s297 + $0x2f0] sm:$0xff] %v8222
        %9285 = vst [vmem:[%s297 + $0x2f8] sm:$0xff] %v9187
        %s9286 = sand.u32 %s142, 1
        %s9287 = scalar_lea.sflag [#allocation4], %s9286
        %s9288 = sand.u32 %s142, 1
        %s9289 = smul.addr %s9288, 768
        %s9290 = scalar_lea.vmem [#allocation11], %s9289
        // Predicated region
        $region61: #{tpu_custom_call.1} parent=39 // pred_check
          %p9291 = pneg %p152
        $region62: #{tpu_custom_call.1} parent=39 // pred_check_branch
          %9293 = sbr.rel (%p9291) target = $region64
        $region63: #{tpu_custom_call.1} parent=39 // pred_region
          %s9294 = smul.u32 32, %s24
          %s9296 = ssub.s32 12288, 12288
          %9297 = vsyncadd %s9287, %s9296
          %s9298 = smul.addr %s9294, 3
          %s9299 = smul.addr %s9298, 128
          %s9300 = scalar_lea.hbm %s5, %s9299
          %s9301 = sshll.u32 %s9290, 4
          %s9302 = int_to_ptr.vmem [resolvable:$true] %s9301
          %9307 = dma.vmem_to_hbm [thread:$0]  %s9302, 12288, %s9300, %s9287, 384, 384, 24
        $region64: #{tpu_custom_call.1} parent=39 // pred_fallthru
          _
      $region40: #{tpu_custom_call.1} parent=5 // pred_fallthru
        _
      %p9308 = scmp.le.s32.totalorder 2, %s19
      // Predicated region
      $region65: #{tpu_custom_call.1} parent=5 // pred_check
        %p9309 = pneg %p9308
      $region66: #{tpu_custom_call.1} parent=5 // pred_check_branch
        %9311 = sbr.rel (%p9309) target = $region68
      $region67: #{tpu_custom_call.1} parent=5 // pred_region
        %s9312 = ssub.s32 %s19, 2
        // Predicated region
        $region69: #{tpu_custom_call.1} parent=67 // pred_check
          %p9313 = pneg %p158
        $region70: #{tpu_custom_call.1} parent=67 // pred_check_branch
          %9315 = sbr.rel (%p9313) target = $region72
        $region71: #{tpu_custom_call.1} parent=67 // pred_region
          %s9316 = sand.u32 %s143, 1
          %s9317 = scalar_lea.sflag [#allocation4], %s9316
          %s9318 = sand.u32 %s143, 1
          %s9319 = smul.addr %s9318, 768
          %s9320 = scalar_lea.vmem [#allocation11], %s9319
          %9321 = dma.done %s9317, 12288
        $region72: #{tpu_custom_call.1} parent=67 // pred_fallthru
          _
      $region68: #{tpu_custom_call.1} parent=5 // pred_fallthru
        _
    $region6: #{tpu_custom_call.1} parent=1 // loop_footer
      %s23 = sadd.s32 1, %s19
    $region7: #{tpu_custom_call.1} parent=1 // loop_footer_branch
      %18 = sbr.rel target = $region3
    $region8: #{tpu_custom_call.1} parent=1 // loop_exit
      _
    %9322 = vsyncpa [#allocation3], 1
    %s9323 = scalar_lea.sflag [#allocation3], 1
    %9324 = vsyncpa %s9323, 1
    %9325 = vsyncpa [#allocation6], 1
    %9326 = vsyncpa [#allocation9], 1
    %9327 = vsyncpa [#allocation4], 1
    %s9328 = scalar_lea.sflag [#allocation4], 1
    %9329 = vsyncpa %s9328, 1

</llo_original>
